<compile_context>
chip_gen: v5e
topology: v5e:2x2
jax: 0.10.0
libtpu: 0.0.40
codegen_flags: <defaults>
</compile_context>

<pallas_src>
import functools

import jax
import jax.numpy as jnp
from jax.experimental import pallas as pl
from jax.experimental.pallas import tpu as pltpu

LATENT_DIM = 100
HIDDEN = (256, 512, 1024)


def _round_up(x, m):
    return (x + m - 1) // m * m


# --------------------------------------------------------------------------- #
# Hardware / tiling selection (runs once, outside jit)
# --------------------------------------------------------------------------- #
def _tpu_vmem_capacity_bytes():
    try:
        info = pltpu.get_tpu_info()
        for attr in ("vmem_capacity_bytes", "vmem_bytes", "vmem_capacity"):
            v = getattr(info, attr, None)
            if v:
                return int(v)
    except Exception:
        pass
    return 64 << 20  # conservative default: v7x per-TC VMEM


def _select_tiling(out_features):
    """Generation-gated N-tile size and VMEM scoped limit."""
    vmem = _tpu_vmem_capacity_bytes()
    big_vmem = vmem >= (100 << 20)          # v5e/v6e: 128 MiB; v7x: 64 MiB
    if out_features <= 6144:
        tile_n = _round_up(out_features, 128)   # small demo: one lane-dense tile
    elif big_vmem:
        tile_n = 10240                          # 430080 / 10240 = 42 exact
    else:
        tile_n = 6144                           # 430080 / 6144  = 70 exact
    n_pad = _round_up(out_features, tile_n)
    vmem_limit = (96 << 20) if big_vmem else (48 << 20)
    return tile_n, n_pad, vmem_limit


def _streamed_spec(block_shape, index_map, n_tiles):
    """BlockSpec for the streamed w4/b4 tiles; triple-buffered when it matters."""
    if n_tiles >= 3:
        try:
            return pl.BlockSpec(block_shape, index_map,
                                pipeline_mode=pl.Buffered(3))
        except TypeError:       # older jax without pipeline_mode kwarg
            pass
    return pl.BlockSpec(block_shape, index_map)


# --------------------------------------------------------------------------- #
# Kernels
# --------------------------------------------------------------------------- #
def _hidden_kernel(z_ref, w1_ref, b1_ref, w2_ref, b2_ref, w3_ref, b3_ref,
                   h_ref):
    """Fused layers 1-3 (all VMEM-resident): h3 = ReLU(L3(ReLU(L2(ReLU(L1(z))))))."""
    h = jnp.dot(z_ref[...], w1_ref[...], preferred_element_type=jnp.float32)
    h = jnp.maximum(h + b1_ref[...], 0.0)

    h = jnp.dot(h.astype(w2_ref.dtype), w2_ref[...],
                preferred_element_type=jnp.float32)
    h = jnp.maximum(h + b2_ref[...], 0.0)

    h = jnp.dot(h.astype(w3_ref.dtype), w3_ref[...],
                preferred_element_type=jnp.float32)
    h = jnp.maximum(h + b3_ref[...], 0.0)

    h_ref[...] = h.astype(h_ref.dtype)


def _output_kernel(h_ref, w4_ref, b4_ref, out_ref):
    """One (B_pad, tile_n) tile of layer 4: tanh(h3 @ w4_tile + b4_tile)."""
    acc = jnp.dot(h_ref[...], w4_ref[...], preferred_element_type=jnp.float32)
    out_ref[...] = jnp.tanh(acc + b4_ref[...]).astype(out_ref.dtype)


# --------------------------------------------------------------------------- #
# Parameter prep (outside jit) + forward
# --------------------------------------------------------------------------- #
def prepare_generator_params(params, img_shape):
    """One-time weight prep: bf16 cast of weights + column padding of w4/b4.

    Hoisted out of the jitted forward so the 1.64 GiB (full-size) f32->bf16
    cast of w4 does not happen per call.  Returns (prepared_pytree, config).
    """
    C, H, W = img_shape
    out_features = C * H * W
    tile_n, n_pad, vmem_limit = _select_tiling(out_features)

    (w1, b1), (w2, b2), (w3, b3), (w4, b4) = params
    w1, w2, w3, w4 = (jnp.asarray(w, jnp.bfloat16) for w in (w1, w2, w3, w4))
    b1, b2, b3, b4 = (jnp.asarray(b, jnp.float32).reshape(1, -1)
                      for b in (b1, b2, b3, b4))

    if n_pad != out_features:
        # tanh(0) = 0 in padded columns; sliced off in the wrapper.
        w4 = jnp.pad(w4, ((0, 0), (0, n_pad - out_features)))
        b4 = jnp.pad(b4, ((0, 0), (0, n_pad - out_features)))

    prepared = {"w1": w1, "b1": b1, "w2": w2, "b2": b2,
                "w3": w3, "b3": b3, "w4": w4, "b4": b4}
    config = {"tile_n": tile_n, "vmem_limit_bytes": vmem_limit}
    return prepared, config


@functools.partial(jax.jit,
                   static_argnames=("img_shape", "tile_n", "vmem_limit_bytes",
                                    "out_dtype"))
def generator_forward(z, prepared, *, img_shape, tile_n, vmem_limit_bytes,
                      out_dtype=jnp.float32):
    """Forward pass of the Generator. `prepared` comes from prepare_generator_params."""
    B = z.shape[0]
    C, H, W = img_shape
    out_features = C * H * W

    w1, b1 = prepared["w1"], prepared["b1"]
    w2, b2 = prepared["w2"], prepared["b2"]
    w3, b3 = prepared["w3"], prepared["b3"]
    w4, b4 = prepared["w4"], prepared["b4"]

    latent = w1.shape[0]
    d1, d2, d3 = w1.shape[1], w2.shape[1], w3.shape[1]
    n_pad = w4.shape[1]
    n_tiles = n_pad // tile_n

    # bf16-sublane-packed batch; extra rows are nearly free (weight-BW bound).
    B_pad = _round_up(max(B, 16), 16)
    z_bf = z.astype(jnp.bfloat16)
    if B_pad != B:
        z_bf = jnp.pad(z_bf, ((0, B_pad - B), (0, 0)))

    # ---- stage 1: layers 1-3, single fully-resident step -------------------
    h3 = pl.pallas_call(
        _hidden_kernel,
        out_shape=jax.ShapeDtypeStruct((B_pad, d3), jnp.bfloat16),
        grid_spec=pltpu.PrefetchScalarGridSpec(
            num_scalar_prefetch=0,
            grid=(1,),
            in_specs=[
                pl.BlockSpec((B_pad, latent), lambda i: (0, 0)),
                pl.BlockSpec((latent, d1),    lambda i: (0, 0)),
                pl.BlockSpec((1, d1),         lambda i: (0, 0)),
                pl.BlockSpec((d1, d2),        lambda i: (0, 0)),
                pl.BlockSpec((1, d2),         lambda i: (0, 0)),
                pl.BlockSpec((d2, d3),        lambda i: (0, 0)),
                pl.BlockSpec((1, d3),         lambda i: (0, 0)),
            ],
            out_specs=pl.BlockSpec((B_pad, d3), lambda i: (0, 0)),
        ),
        compiler_params=pltpu.CompilerParams(
            dimension_semantics=("arbitrary",),
        ),
    )(z_bf, w1, b1, w2, b2, w3, b3)

    # ---- stage 2: layer 4, stream w4 over the N-tile grid -------------------
    flops = 2 * B_pad * d3 * n_pad
    bytes_accessed = (h3.size * 2 + w4.size * 2 + b4.size * 4
                      + B_pad * n_pad * jnp.dtype(out_dtype).itemsize)
    cost = pl.CostEstimate(flops=int(flops),
                           transcendentals=int(B_pad * n_pad),
                           bytes_accessed=int(bytes_accessed))

    flat = pl.pallas_call(
        _output_kernel,
        out_shape=jax.ShapeDtypeStruct((B_pad, n_pad), out_dtype),
        grid_spec=pltpu.PrefetchScalarGridSpec(
            num_scalar_prefetch=0,
            grid=(n_tiles,),
            in_specs=[
                pl.BlockSpec((B_pad, d3), lambda j: (0, 0)),        # h3 (resident)
                _streamed_spec((d3, tile_n), lambda j: (0, j), n_tiles),  # w4 tile
                _streamed_spec((1, tile_n),  lambda j: (0, j), n_tiles),  # b4 tile
            ],
            out_specs=pl.BlockSpec((B_pad, tile_n), lambda j: (0, j)),
        ),
        compiler_params=pltpu.CompilerParams(
            dimension_semantics=("parallel",),       # shards N-tiles across TCs
            vmem_limit_bytes=vmem_limit_bytes,       # 48 MiB v7x / 96 MiB v5e-v6e
        ),
        cost_estimate=cost,
    )(h3, w4, b4)

    # Drop padding, then img.view(B, C, H, W) semantics.
    return flat[:B, :out_features].reshape(B, C, H, W)


# --------------------------------------------------------------------------- #
# Init / reference / demo
# --------------------------------------------------------------------------- #
def init_generator_params(key, latent_dim, hidden, out_features):
    """Deterministic init mimicking torch.nn.Linear default (U(-1/sqrt(fan_in), +))."""
    dims = (latent_dim,) + tuple(hidden) + (out_features,)
    params = []
    for i in range(len(dims) - 1):
        fan_in, fan_out = dims[i], dims[i + 1]
        key, kw, kb = jax.random.split(key, 3)
        bound = 1.0 / jnp.sqrt(float(fan_in))
        w = jax.random.uniform(kw, (fan_in, fan_out), jnp.float32, -bound, bound)
        b = jax.random.uniform(kb, (1, fan_out), jnp.float32, -bound, bound)
        params.append((w, b))
    return params


def _reference_forward(z, params, img_shape):
    """Pure-JAX mirror of the kernel numerics (bf16 weights, f32 accumulation)."""
    h = z.astype(jnp.bfloat16)
    out = None
    n = len(params)
    for i, (w, b) in enumerate(params):
        acc = jnp.dot(h, jnp.asarray(w, jnp.bfloat16),
                      preferred_element_type=jnp.float32)
        acc = acc + jnp.asarray(b, jnp.float32).reshape(1, -1)
        if i < n - 1:
            h = jnp.maximum(acc, 0.0).astype(jnp.bfloat16)
        else:
            out = jnp.tanh(acc)
    C, H, W = img_shape
    return out.reshape(z.shape[0], C, H, W)


if __name__ == "__main__":
    # Small shapes consistent with the module: full-size image is (3, 448, 320);
    # here spatial dims are scaled by 16 -> (3, 28, 20).  Hidden sizes and
    # latent dim are exactly those of the PyTorch Generator.
    B = 4
    IMG = (3, 28, 20)
    OUT_FEATURES = IMG[0] * IMG[1] * IMG[2]

    key = jax.random.PRNGKey(0)
    key, zkey = jax.random.split(key)
    z = jax.random.normal(zkey, (B, LATENT_DIM), jnp.float32)

    params = init_generator_params(key, LATENT_DIM, HIDDEN, OUT_FEATURES)
    prepared, cfg = prepare_generator_params(params, IMG)

    img = generator_forward(z, prepared, img_shape=IMG,
                            tile_n=cfg["tile_n"],
                            vmem_limit_bytes=cfg["vmem_limit_bytes"])
    img = jax.block_until_ready(img)

    assert img.shape == (B,) + IMG, img.shape
    ref = _reference_forward(z, params, IMG)
    max_err = float(jnp.max(jnp.abs(img.astype(jnp.float32) - ref)))
    assert max_err < 2e-3, f"mismatch vs. reference: max abs err {max_err}"

    print("KERNEL_OK")
</pallas_src>

<mosaic_0001>
module attributes {stable_mosaic.version = 11 : i64} {
  func.func @_hidden_kernel(%arg0: i32, %arg1: memref<16x100xbf16, #tpu.memory_space<vmem>>, %arg2: memref<100x256xbf16, #tpu.memory_space<vmem>>, %arg3: memref<1x256xf32, #tpu.memory_space<vmem>>, %arg4: memref<256x512xbf16, #tpu.memory_space<vmem>>, %arg5: memref<1x512xf32, #tpu.memory_space<vmem>>, %arg6: memref<512x1024xbf16, #tpu.memory_space<vmem>>, %arg7: memref<1x1024xf32, #tpu.memory_space<vmem>>, %arg8: memref<16x1024xbf16, #tpu.memory_space<vmem>>) attributes {dimension_semantics = [#tpu.dimension_semantics<arbitrary>], iteration_bounds = array<i64: 1>, scalar_prefetch = 0 : i64, scratch_operands = 0 : i64, tpu.core_type = #tpu.core_type<tc>, window_params = [{pipeline_mode = #tpu.pipeline_mode<synchronous>, transform_indices = @transform_0, window_bounds = array<i64: 16, 100>}, {pipeline_mode = #tpu.pipeline_mode<synchronous>, transform_indices = @transform_1, window_bounds = array<i64: 100, 256>}, {pipeline_mode = #tpu.pipeline_mode<synchronous>, transform_indices = @transform_2, window_bounds = array<i64: 1, 256>}, {pipeline_mode = #tpu.pipeline_mode<synchronous>, transform_indices = @transform_3, window_bounds = array<i64: 256, 512>}, {pipeline_mode = #tpu.pipeline_mode<synchronous>, transform_indices = @transform_4, window_bounds = array<i64: 1, 512>}, {pipeline_mode = #tpu.pipeline_mode<synchronous>, transform_indices = @transform_5, window_bounds = array<i64: 512, 1024>}, {pipeline_mode = #tpu.pipeline_mode<synchronous>, transform_indices = @transform_6, window_bounds = array<i64: 1, 1024>}, {pipeline_mode = #tpu.pipeline_mode<synchronous>, transform_indices = @transform_7, window_bounds = array<i64: 16, 1024>}]} {
    %c0 = arith.constant 0 : index
    %c0_0 = arith.constant 0 : index
    %0 = vector.load %arg1[%c0, %c0_0] : memref<16x100xbf16, #tpu.memory_space<vmem>>, vector<16x100xbf16>
    %c0_1 = arith.constant 0 : index
    %c0_2 = arith.constant 0 : index
    %1 = vector.load %arg2[%c0_1, %c0_2] : memref<100x256xbf16, #tpu.memory_space<vmem>>, vector<100x256xbf16>
    %cst = arith.constant dense<0.000000e+00> : vector<16x256xf32>
    %2 = tpu.matmul %0, %1, %cst {dimension_numbers = #tpu.dot_dimension_numbers<[1], [0], [0], [1], [0, 0, 1, 1], [], []>} : vector<16x100xbf16>, vector<100x256xbf16>, vector<16x256xf32> -> vector<16x256xf32>
    %c0_3 = arith.constant 0 : index
    %c0_4 = arith.constant 0 : index
    %3 = vector.load %arg3[%c0_3, %c0_4] : memref<1x256xf32, #tpu.memory_space<vmem>>, vector<1x256xf32>
    %4 = vector.broadcast %3 : vector<1x256xf32> to vector<16x256xf32>
    %5 = arith.addf %2, %4 : vector<16x256xf32>
    %cst_5 = arith.constant 0.000000e+00 : f32
    %6 = vector.broadcast %cst_5 : f32 to vector<16x256xf32>
    %7 = arith.maximumf %5, %6 : vector<16x256xf32>
    %8 = arith.truncf %7 : vector<16x256xf32> to vector<16x256xbf16>
    %c0_6 = arith.constant 0 : index
    %c0_7 = arith.constant 0 : index
    %9 = vector.load %arg4[%c0_6, %c0_7] : memref<256x512xbf16, #tpu.memory_space<vmem>>, vector<256x512xbf16>
    %cst_8 = arith.constant dense<0.000000e+00> : vector<16x512xf32>
    %10 = tpu.matmul %8, %9, %cst_8 {dimension_numbers = #tpu.dot_dimension_numbers<[1], [0], [0], [1], [0, 0, 1, 1], [], []>} : vector<16x256xbf16>, vector<256x512xbf16>, vector<16x512xf32> -> vector<16x512xf32>
    %c0_9 = arith.constant 0 : index
    %c0_10 = arith.constant 0 : index
    %11 = vector.load %arg5[%c0_9, %c0_10] : memref<1x512xf32, #tpu.memory_space<vmem>>, vector<1x512xf32>
    %12 = vector.broadcast %11 : vector<1x512xf32> to vector<16x512xf32>
    %13 = arith.addf %10, %12 : vector<16x512xf32>
    %cst_11 = arith.constant 0.000000e+00 : f32
    %14 = vector.broadcast %cst_11 : f32 to vector<16x512xf32>
    %15 = arith.maximumf %13, %14 : vector<16x512xf32>
    %16 = arith.truncf %15 : vector<16x512xf32> to vector<16x512xbf16>
    %c0_12 = arith.constant 0 : index
    %c0_13 = arith.constant 0 : index
    %17 = vector.load %arg6[%c0_12, %c0_13] : memref<512x1024xbf16, #tpu.memory_space<vmem>>, vector<512x1024xbf16>
    %cst_14 = arith.constant dense<0.000000e+00> : vector<16x1024xf32>
    %18 = tpu.matmul %16, %17, %cst_14 {dimension_numbers = #tpu.dot_dimension_numbers<[1], [0], [0], [1], [0, 0, 1, 1], [], []>} : vector<16x512xbf16>, vector<512x1024xbf16>, vector<16x1024xf32> -> vector<16x1024xf32>
    %c0_15 = arith.constant 0 : index
    %c0_16 = arith.constant 0 : index
    %19 = vector.load %arg7[%c0_15, %c0_16] : memref<1x1024xf32, #tpu.memory_space<vmem>>, vector<1x1024xf32>
    %20 = vector.broadcast %19 : vector<1x1024xf32> to vector<16x1024xf32>
    %21 = arith.addf %18, %20 : vector<16x1024xf32>
    %cst_17 = arith.constant 0.000000e+00 : f32
    %22 = vector.broadcast %cst_17 : f32 to vector<16x1024xf32>
    %23 = arith.maximumf %21, %22 : vector<16x1024xf32>
    %24 = arith.truncf %23 : vector<16x1024xf32> to vector<16x1024xbf16>
    %c0_18 = arith.constant 0 : index
    %c0_19 = arith.constant 0 : index
    %25 = vector.load %arg8[%c0_18, %c0_19] : memref<16x1024xbf16, #tpu.memory_space<vmem>>, vector<16x1024xbf16>
    tpu.vector_store %arg8[%c0_18, %c0_19], %24 {strides = array<i32>} : memref<16x1024xbf16, #tpu.memory_space<vmem>>, vector<16x1024xbf16>,
    return
  }
  func.func @transform_0(%arg0: i32) -> (i32, i32) {
    %c0_i32 = arith.constant 0 : i32
    %c0_i32_0 = arith.constant 0 : i32
    %c0_i32_1 = arith.constant 0 : i32
    return %c0_i32, %c0_i32_0 : i32, i32
  }
  func.func @transform_1(%arg0: i32) -> (i32, i32) {
    %c0_i32 = arith.constant 0 : i32
    %c0_i32_0 = arith.constant 0 : i32
    %c0_i32_1 = arith.constant 0 : i32
    return %c0_i32, %c0_i32_0 : i32, i32
  }
  func.func @transform_2(%arg0: i32) -> (i32, i32) {
    %c0_i32 = arith.constant 0 : i32
    %c0_i32_0 = arith.constant 0 : i32
    %c0_i32_1 = arith.constant 0 : i32
    return %c0_i32, %c0_i32_0 : i32, i32
  }
  func.func @transform_3(%arg0: i32) -> (i32, i32) {
    %c0_i32 = arith.constant 0 : i32
    %c0_i32_0 = arith.constant 0 : i32
    %c0_i32_1 = arith.constant 0 : i32
    return %c0_i32, %c0_i32_0 : i32, i32
  }
  func.func @transform_4(%arg0: i32) -> (i32, i32) {
    %c0_i32 = arith.constant 0 : i32
    %c0_i32_0 = arith.constant 0 : i32
    %c0_i32_1 = arith.constant 0 : i32
    return %c0_i32, %c0_i32_0 : i32, i32
  }
  func.func @transform_5(%arg0: i32) -> (i32, i32) {
    %c0_i32 = arith.constant 0 : i32
    %c0_i32_0 = arith.constant 0 : i32
    %c0_i32_1 = arith.constant 0 : i32
    return %c0_i32, %c0_i32_0 : i32, i32
  }
  func.func @transform_6(%arg0: i32) -> (i32, i32) {
    %c0_i32 = arith.constant 0 : i32
    %c0_i32_0 = arith.constant 0 : i32
    %c0_i32_1 = arith.constant 0 : i32
    return %c0_i32, %c0_i32_0 : i32, i32
  }
  func.func @transform_7(%arg0: i32) -> (i32, i32) {
    %c0_i32 = arith.constant 0 : i32
    %c0_i32_0 = arith.constant 0 : i32
    %c0_i32_1 = arith.constant 0 : i32
    return %c0_i32, %c0_i32_0 : i32, i32
  }
}

module attributes {stable_mosaic.version = 11 : i64} {
  func.func @_output_kernel(%arg0: i32, %arg1: memref<16x1024xbf16, #tpu.memory_space<vmem>>, %arg2: memref<1024x1792xbf16, #tpu.memory_space<vmem>>, %arg3: memref<1x1792xf32, #tpu.memory_space<vmem>>, %arg4: memref<16x1792xf32, #tpu.memory_space<vmem>>) attributes {dimension_semantics = [#tpu.dimension_semantics<parallel>], iteration_bounds = array<i64: 1>, scalar_prefetch = 0 : i64, scratch_operands = 0 : i64, tpu.core_type = #tpu.core_type<tc>, window_params = [{pipeline_mode = #tpu.pipeline_mode<synchronous>, transform_indices = @transform_0, window_bounds = array<i64: 16, 1024>}, {transform_indices = @transform_1, window_bounds = array<i64: 1024, 1792>}, {transform_indices = @transform_2, window_bounds = array<i64: 1, 1792>}, {transform_indices = @transform_3, window_bounds = array<i64: 16, 1792>}]} {
    %c0 = arith.constant 0 : index
    %c0_0 = arith.constant 0 : index
    %0 = vector.load %arg1[%c0, %c0_0] : memref<16x1024xbf16, #tpu.memory_space<vmem>>, vector<16x1024xbf16>
    %c0_1 = arith.constant 0 : index
    %c0_2 = arith.constant 0 : index
    %1 = vector.load %arg2[%c0_1, %c0_2] : memref<1024x1792xbf16, #tpu.memory_space<vmem>>, vector<1024x1792xbf16>
    %cst = arith.constant dense<0.000000e+00> : vector<16x1792xf32>
    %2 = tpu.matmul %0, %1, %cst {dimension_numbers = #tpu.dot_dimension_numbers<[1], [0], [0], [1], [0, 0, 1, 1], [], []>} : vector<16x1024xbf16>, vector<1024x1792xbf16>, vector<16x1792xf32> -> vector<16x1792xf32>
    %c0_3 = arith.constant 0 : index
    %c0_4 = arith.constant 0 : index
    %3 = vector.load %arg3[%c0_3, %c0_4] : memref<1x1792xf32, #tpu.memory_space<vmem>>, vector<1x1792xf32>
    %4 = vector.broadcast %3 : vector<1x1792xf32> to vector<16x1792xf32>
    %5 = arith.addf %2, %4 : vector<16x1792xf32>
    %6 = math.tanh %5 : vector<16x1792xf32>
    %c0_5 = arith.constant 0 : index
    %c0_6 = arith.constant 0 : index
    %7 = vector.load %arg4[%c0_5, %c0_6] : memref<16x1792xf32, #tpu.memory_space<vmem>>, vector<16x1792xf32>
    tpu.vector_store %arg4[%c0_5, %c0_6], %6 {strides = array<i32>} : memref<16x1792xf32, #tpu.memory_space<vmem>>, vector<16x1792xf32>,
    return
  }
  func.func @transform_0(%arg0: i32) -> (i32, i32) {
    %c0_i32 = arith.constant 0 : i32
    %c0_i32_0 = arith.constant 0 : i32
    %c0_i32_1 = arith.constant 0 : i32
    return %c0_i32, %c0_i32_0 : i32, i32
  }
  func.func @transform_1(%arg0: i32) -> (i32, i32) {
    %c0_i32 = arith.constant 0 : i32
    %c0_i32_0 = arith.constant 0 : i32
    return %c0_i32, %arg0 : i32, i32
  }
  func.func @transform_2(%arg0: i32) -> (i32, i32) {
    %c0_i32 = arith.constant 0 : i32
    %c0_i32_0 = arith.constant 0 : i32
    return %c0_i32, %arg0 : i32, i32
  }
  func.func @transform_3(%arg0: i32) -> (i32, i32) {
    %c0_i32 = arith.constant 0 : i32
    %c0_i32_0 = arith.constant 0 : i32
    return %c0_i32, %arg0 : i32, i32
  }
}

</mosaic_0001>

<llo_original>
// kernel: generator_forward.2
$region0: #{generator_forward.2}
  #allocation0 [shape = 'u32[]', space=smem, size = 0x4, offset = 0x4, fixed_abs, tag = 'smem constant byte address 0x4 - core index']
  #allocation1 [shape = 'u32[72,128]{1,0:T(1,128)}', space=vmem, size = 0x9000, scoped, tag = 'internal scratch']
  %s0 = inlined_call_operand.vmem [shape: bf16[16,100], index: 0, kind: input, shape index: {}]
  %s1 = inlined_call_operand.hbm [shape: bf16[100,256], index: 1, kind: input, shape index: {}]
  %s2 = inlined_call_operand.hbm [shape: f32[1,256], index: 2, kind: input, shape index: {}]
  %s3 = inlined_call_operand.hbm [shape: bf16[256,512], index: 3, kind: input, shape index: {}]
  %s4 = inlined_call_operand.hbm [shape: f32[1,512], index: 4, kind: input, shape index: {}]
  %s5 = inlined_call_operand.hbm [shape: bf16[512,1024], index: 5, kind: input, shape index: {}]
  %s6 = inlined_call_operand.hbm [shape: f32[1,1024], index: 6, kind: input, shape index: {}]
  %s7 = inlined_call_operand.vmem [shape: bf16[16,1024], index: 7, kind: output, shape index: {}]
  %s8 = sld [smem:[#allocation0]]
  $region62: #{generator_forward.2} parent=0
    _
  %s10 = ssub.s32 1, %s8
  %s11 = scalar_select 0, %s10, %s8
  $region1: #{generator_forward.2} parent=0
    #allocation2 [shape = 'u8[53248]{0}', space=vmem, size = 0xd000, scoped, tag = 'input window, operand 1, single buffered']
    #allocation3 [shape = 's32[1]{0}', space=sflag, size = 0x4, scoped, tag = 'scoped memory for generator_forward.2']
    #allocation4 [shape = 'u8[1024]{0}', space=vmem, size = 0x400, scoped, tag = 'input window, operand 2, single buffered']
    #allocation5 [shape = 's32[1]{0}', space=sflag, size = 0x4, scoped, tag = 'scoped memory for generator_forward.2']
    #allocation6 [shape = 'u8[262144]{0}', space=vmem, size = 0x40000, scoped, tag = 'input window, operand 3, single buffered']
    #allocation7 [shape = 'u8[2048]{0}', space=vmem, size = 0x800, scoped, tag = 'input window, operand 4, single buffered']
    #allocation8 [shape = 's32[1]{0}', space=sflag, size = 0x4, scoped, tag = 'scoped memory for generator_forward.2']
    #allocation9 [shape = 'u8[1048576]{0}', space=vmem, size = 0x100000, scoped, tag = 'input window, operand 5, single buffered']
    #allocation10 [shape = 'u8[4096]{0}', space=vmem, size = 0x1000, scoped, tag = 'input window, operand 6, single buffered']
    #allocation11 [shape = 's32[1]{0}', space=sflag, size = 0x4, scoped, tag = 'scoped memory for generator_forward.2']
    %12 = vsyncpa [#allocation3], 0
    %13 = vsyncpa [#allocation5], 0
    %14 = vsyncpa [#allocation8], 0
    %15 = vsyncpa [#allocation11], 0
    // Predicated region
    $region2: #{generator_forward.2} parent=1 // pred_check
      _
    $region3: #{generator_forward.2} parent=1 // pred_check_branch
      %17 = sbr.rel (0) target = $region5
    $region4: #{generator_forward.2} parent=1 // pred_region
      _
    $region5: #{generator_forward.2} parent=1 // pred_fallthru
      _
    // Predicated region
    $region6: #{generator_forward.2} parent=1 // pred_check
      _
    $region7: #{generator_forward.2} parent=1 // pred_check_branch
      %19 = sbr.rel (0) target = $region9
    $region8: #{generator_forward.2} parent=1 // pred_region
      %21 = vsyncadd [#allocation3], 0
      %s22 = sshll.u32 %s1, 4
      %s23 = int_to_ptr.hbm [resolvable:$true] %s22
      %s24 = sshll.u32 [#allocation2], 4
      %s25 = int_to_ptr.vmem [resolvable:$true] %s24
      %30 = dma.hbm_to_vmem [thread:$0]  %s23, 1664, %s25, [#allocation3], 128, 128, 8
    $region9: #{generator_forward.2} parent=1 // pred_fallthru
      _
    // Predicated region
    $region10: #{generator_forward.2} parent=1 // pred_check
      _
    $region11: #{generator_forward.2} parent=1 // pred_check_branch
      %32 = sbr.rel (0) target = $region13
    $region12: #{generator_forward.2} parent=1 // pred_region
      %34 = vsyncadd [#allocation5], 0
      %s36 = sshll.u32 %s2, 4
      %s37 = int_to_ptr.hbm [resolvable:$true] %s36
      %s38 = sshll.u32 [#allocation4], 4
      %s39 = int_to_ptr.vmem [resolvable:$true] %s38
      %41 = dma.hbm_to_vmem [thread:$0]  %s37, 32, %s39, [#allocation5]
    $region13: #{generator_forward.2} parent=1 // pred_fallthru
      _
    // Predicated region
    $region14: #{generator_forward.2} parent=1 // pred_check
      _
    $region15: #{generator_forward.2} parent=1 // pred_check_branch
      %43 = sbr.rel (0) target = $region17
    $region16: #{generator_forward.2} parent=1 // pred_region
      %45 = vsyncadd [#allocation5], 0
      %s46 = sshll.u32 %s3, 4
      %s47 = int_to_ptr.hbm [resolvable:$true] %s46
      %s48 = sshll.u32 [#allocation6], 4
      %s49 = int_to_ptr.vmem [resolvable:$true] %s48
      %54 = dma.hbm_to_vmem [thread:$0]  %s47, 8192, %s49, [#allocation5], 256, 256, 16
    $region17: #{generator_forward.2} parent=1 // pred_fallthru
      _
    // Predicated region
    $region18: #{generator_forward.2} parent=1 // pred_check
      _
    $region19: #{generator_forward.2} parent=1 // pred_check_branch
      %56 = sbr.rel (0) target = $region21
    $region20: #{generator_forward.2} parent=1 // pred_region
      %58 = vsyncadd [#allocation8], 0
      %s60 = sshll.u32 %s4, 4
      %s61 = int_to_ptr.hbm [resolvable:$true] %s60
      %s62 = sshll.u32 [#allocation7], 4
      %s63 = int_to_ptr.vmem [resolvable:$true] %s62
      %65 = dma.hbm_to_vmem [thread:$0]  %s61, 64, %s63, [#allocation8]
    $region21: #{generator_forward.2} parent=1 // pred_fallthru
      _
    // Predicated region
    $region22: #{generator_forward.2} parent=1 // pred_check
      _
    $region23: #{generator_forward.2} parent=1 // pred_check_branch
      %67 = sbr.rel (0) target = $region25
    $region24: #{generator_forward.2} parent=1 // pred_region
      %69 = vsyncadd [#allocation8], 0
      %s70 = sshll.u32 %s5, 4
      %s71 = int_to_ptr.hbm [resolvable:$true] %s70
      %s72 = sshll.u32 [#allocation9], 4
      %s73 = int_to_ptr.vmem [resolvable:$true] %s72
      %78 = dma.hbm_to_vmem [thread:$0]  %s71, 32768, %s73, [#allocation8], 512, 512, 32
    $region25: #{generator_forward.2} parent=1 // pred_fallthru
      _
    // Predicated region
    $region26: #{generator_forward.2} parent=1 // pred_check
      _
    $region27: #{generator_forward.2} parent=1 // pred_check_branch
      %80 = sbr.rel (0) target = $region29
    $region28: #{generator_forward.2} parent=1 // pred_region
      %82 = vsyncadd [#allocation11], 0
      %s84 = sshll.u32 %s6, 4
      %s85 = int_to_ptr.hbm [resolvable:$true] %s84
      %s86 = sshll.u32 [#allocation10], 4
      %s87 = int_to_ptr.vmem [resolvable:$true] %s86
      %89 = dma.hbm_to_vmem [thread:$0]  %s85, 128, %s87, [#allocation11]
    $region29: #{generator_forward.2} parent=1 // pred_fallthru
      _
    // Predicated region
    $region30: #{generator_forward.2} parent=1 // pred_check
      _
    $region31: #{generator_forward.2} parent=1 // pred_check_branch
      %91 = sbr.rel (0) target = $region33
    $region32: #{generator_forward.2} parent=1 // pred_region
      %93 = dma.done [#allocation3], 1664
    $region33: #{generator_forward.2} parent=1 // pred_fallthru
      _
    // Predicated region
    $region34: #{generator_forward.2} parent=1 // pred_check
      _
    $region35: #{generator_forward.2} parent=1 // pred_check_branch
      %95 = sbr.rel (0) target = $region37
    $region36: #{generator_forward.2} parent=1 // pred_region
      %97 = dma.done [#allocation5], 32
    $region37: #{generator_forward.2} parent=1 // pred_fallthru
      _
    // Predicated region
    $region38: #{generator_forward.2} parent=1 // pred_check
      _
    $region39: #{generator_forward.2} parent=1 // pred_check_branch
      %99 = sbr.rel (0) target = $region41
    $region40: #{generator_forward.2} parent=1 // pred_region
      %101 = dma.done [#allocation5], 8192
    $region41: #{generator_forward.2} parent=1 // pred_fallthru
      _
    // Predicated region
    $region42: #{generator_forward.2} parent=1 // pred_check
      _
    $region43: #{generator_forward.2} parent=1 // pred_check_branch
      %103 = sbr.rel (0) target = $region45
    $region44: #{generator_forward.2} parent=1 // pred_region
      %105 = dma.done [#allocation8], 64
    $region45: #{generator_forward.2} parent=1 // pred_fallthru
      _
    // Predicated region
    $region46: #{generator_forward.2} parent=1 // pred_check
      _
    $region47: #{generator_forward.2} parent=1 // pred_check_branch
      %107 = sbr.rel (0) target = $region49
    $region48: #{generator_forward.2} parent=1 // pred_region
      %109 = dma.done [#allocation8], 32768
    $region49: #{generator_forward.2} parent=1 // pred_fallthru
      _
    // Predicated region
    $region50: #{generator_forward.2} parent=1 // pred_check
      _
    $region51: #{generator_forward.2} parent=1 // pred_check_branch
      %111 = sbr.rel (0) target = $region53
    $region52: #{generator_forward.2} parent=1 // pred_region
      %113 = dma.done [#allocation11], 128
    $region53: #{generator_forward.2} parent=1 // pred_fallthru
      _
    %v115 = vld [vmem:[%s0] sm:$0xf]
    %v116 = vld [vmem:[%s0 + $0x4] sm:$0xf]
    %v117 = vld [vmem:[#allocation2] sm:$0xff]
    %v118 = vld [vmem:[#allocation2 + $0x8] sm:$0xff]
    %v119 = vld [vmem:[#allocation2 + $0x10] sm:$0xff]
    %v120 = vld [vmem:[#allocation2 + $0x18] sm:$0xff]
    %v121 = vld [vmem:[#allocation2 + $0x20] sm:$0xff]
    %v122 = vld [vmem:[#allocation2 + $0x28] sm:$0xff]
    %v123 = vld [vmem:[#allocation2 + $0x30] sm:$0xff]
    %v124 = vld [vmem:[#allocation2 + $0x38] sm:$0xff]
    %v125 = vld [vmem:[#allocation2 + $0x40] sm:$0xff]
    %v126 = vld [vmem:[#allocation2 + $0x48] sm:$0xff]
    %v127 = vld [vmem:[#allocation2 + $0x50] sm:$0xff]
    %v128 = vld [vmem:[#allocation2 + $0x58] sm:$0xff]
    %v129 = vld [vmem:[#allocation2 + $0x60] sm:$0x33]
    %v130 = vld [vmem:[#allocation4] sm:$0x3]
    %v132 = vperm.slane %v130, 0
    %v133 = vperm.slane %v130, 1
    %v138 = vunpack.c.l.b16 %v115
    %v139 = vunpack.c.l.b16 %v116
    %v140 = vpack.c.b16 %v139, %v138
    %v154 = vunpack.c.l.b16 %v117
    %v155 = vunpack.c.h.b16 %v117
    %v156 = vunpack.c.l.b16 %v118
    %v157 = vunpack.c.h.b16 %v118
    %v158 = vunpack.c.l.b16 %v119
    %v159 = vunpack.c.h.b16 %v119
    %v160 = vunpack.c.l.b16 %v120
    %v161 = vunpack.c.h.b16 %v120
    %v162 = vunpack.c.l.b16 %v121
    %v163 = vunpack.c.h.b16 %v121
    %v164 = vunpack.c.l.b16 %v122
    %v165 = vunpack.c.h.b16 %v122
    %v166 = vunpack.c.l.b16 %v123
    %v167 = vunpack.c.h.b16 %v123
    %v168 = vunpack.c.l.b16 %v124
    %v169 = vunpack.c.h.b16 %v124
    %v170 = vunpack.c.l.b16 %v125
    %v171 = vunpack.c.h.b16 %v125
    %v172 = vunpack.c.l.b16 %v126
    %v173 = vunpack.c.h.b16 %v126
    %v174 = vunpack.c.l.b16 %v127
    %v175 = vunpack.c.h.b16 %v127
    %v176 = vunpack.c.l.b16 %v128
    %v177 = vunpack.c.h.b16 %v128
    %v178 = vunpack.c.l.b16 %v129
    %v179 = vunpack.c.h.b16 %v129
    %v180 = vpack.c.b16 %v156, %v154
    %v181 = vpack.c.b16 %v157, %v155
    %v182 = vpack.c.b16 %v160, %v158
    %v183 = vpack.c.b16 %v161, %v159
    %v184 = vpack.c.b16 %v164, %v162
    %v185 = vpack.c.b16 %v165, %v163
    %v186 = vpack.c.b16 %v168, %v166
    %v187 = vpack.c.b16 %v169, %v167
    %v188 = vpack.c.b16 %v172, %v170
    %v189 = vpack.c.b16 %v173, %v171
    %v190 = vpack.c.b16 %v176, %v174
    %v191 = vpack.c.b16 %v177, %v175
    %v192 = vpack.c.b16 %v178, %v178
    %v193 = vpack.c.b16 %v179, %v179
    %vm206 = vcmask 818176
    %v208 = vsel %vm206, %v140, 0
    %vm210 = vcmask 1041408
    %v212 = vsel %vm210, %v192, 0
    %v215 = vsel %vm210, %v193, 0
    %217 = vmatpush.bf16.msra.mxu0 0
    %218 = vmatpush.bf16.msra.mxu0 %v212
    %219 = vmatpush.bf16.msra.mxu0 %v190
    %220 = vmatpush.bf16.msra.mxu0 %v188
    %221 = vmatpush.bf16.msra.mxu0 %v186
    %222 = vmatpush.bf16.msra.mxu0 %v184
    %223 = vmatpush.bf16.msra.mxu0 %v182
    %224 = vmatpush.bf16.msra.mxu0 %v180
    %225 = vmatmul.bf16.gmra.mxu0 %v208
    %v226 = vpop.f32.mrf.mxu0
    %v227 = vadd.f32 %v132, %v226
    %v228 = vpop.f32.mrf.mxu0
    %v229 = vadd.f32 %v132, %v228
    %230 = vdwg.mxu0
    %231 = vmatpush.bf16.msra.mxu0 0
    %232 = vmatpush.bf16.msra.mxu0 %v215
    %233 = vmatpush.bf16.msra.mxu0 %v191
    %234 = vmatpush.bf16.msra.mxu0 %v189
    %235 = vmatpush.bf16.msra.mxu0 %v187
    %236 = vmatpush.bf16.msra.mxu0 %v185
    %237 = vmatpush.bf16.msra.mxu0 %v183
    %238 = vmatpush.bf16.msra.mxu0 %v181
    %239 = vmatmul.bf16.gmra.mxu0 %v208
    %v240 = vpop.f32.mrf.mxu0
    %v241 = vadd.f32 %v133, %v240
    %v242 = vpop.f32.mrf.mxu0
    %v243 = vadd.f32 %v133, %v242
    %244 = vdwg.mxu0
    %v245 = vmax.f32 %v227, 0.0
    %v246 = vmax.f32 %v241, 0.0
    %v247 = vmax.f32 %v229, 0.0
    %v248 = vmax.f32 %v243, 0.0
    %v249 = vpack.c.bf16 %v247, %v245
    %v250 = vpack.c.bf16 %v248, %v246
    %v251 = vld [vmem:[#allocation6] sm:$0xff]
    %v252 = vld [vmem:[#allocation6 + $0x8] sm:$0xff]
    %v253 = vld [vmem:[#allocation6 + $0x10] sm:$0xff]
    %v254 = vld [vmem:[#allocation6 + $0x18] sm:$0xff]
    %v255 = vld [vmem:[#allocation6 + $0x20] sm:$0xff]
    %v256 = vld [vmem:[#allocation6 + $0x28] sm:$0xff]
    %v257 = vld [vmem:[#allocation6 + $0x30] sm:$0xff]
    %v258 = vld [vmem:[#allocation6 + $0x38] sm:$0xff]
    %v259 = vld [vmem:[#allocation6 + $0x40] sm:$0xff]
    %v260 = vld [vmem:[#allocation6 + $0x48] sm:$0xff]
    %v261 = vld [vmem:[#allocation6 + $0x50] sm:$0xff]
    %v262 = vld [vmem:[#allocation6 + $0x58] sm:$0xff]
    %v263 = vld [vmem:[#allocation6 + $0x60] sm:$0xff]
    %v264 = vld [vmem:[#allocation6 + $0x68] sm:$0xff]
    %v265 = vld [vmem:[#allocation6 + $0x70] sm:$0xff]
    %v266 = vld [vmem:[#allocation6 + $0x78] sm:$0xff]
    %v267 = vld [vmem:[#allocation6 + $0x80] sm:$0xff]
    %v268 = vld [vmem:[#allocation6 + $0x88] sm:$0xff]
    %v269 = vld [vmem:[#allocation6 + $0x90] sm:$0xff]
    %v270 = vld [vmem:[#allocation6 + $0x98] sm:$0xff]
    %v271 = vld [vmem:[#allocation6 + $0xa0] sm:$0xff]
    %v272 = vld [vmem:[#allocation6 + $0xa8] sm:$0xff]
    %v273 = vld [vmem:[#allocation6 + $0xb0] sm:$0xff]
    %v274 = vld [vmem:[#allocation6 + $0xb8] sm:$0xff]
    %v275 = vld [vmem:[#allocation6 + $0xc0] sm:$0xff]
    %v276 = vld [vmem:[#allocation6 + $0xc8] sm:$0xff]
    %v277 = vld [vmem:[#allocation6 + $0xd0] sm:$0xff]
    %v278 = vld [vmem:[#allocation6 + $0xd8] sm:$0xff]
    %v279 = vld [vmem:[#allocation6 + $0xe0] sm:$0xff]
    %v280 = vld [vmem:[#allocation6 + $0xe8] sm:$0xff]
    %v281 = vld [vmem:[#allocation6 + $0xf0] sm:$0xff]
    %v282 = vld [vmem:[#allocation6 + $0xf8] sm:$0xff]
    %v283 = vld [vmem:[#allocation6 + $0x100] sm:$0xff]
    %v284 = vld [vmem:[#allocation6 + $0x108] sm:$0xff]
    %v285 = vld [vmem:[#allocation6 + $0x110] sm:$0xff]
    %v286 = vld [vmem:[#allocation6 + $0x118] sm:$0xff]
    %v287 = vld [vmem:[#allocation6 + $0x120] sm:$0xff]
    %v288 = vld [vmem:[#allocation6 + $0x128] sm:$0xff]
    %v289 = vld [vmem:[#allocation6 + $0x130] sm:$0xff]
    %v290 = vld [vmem:[#allocation6 + $0x138] sm:$0xff]
    %v291 = vld [vmem:[#allocation6 + $0x140] sm:$0xff]
    %v292 = vld [vmem:[#allocation6 + $0x148] sm:$0xff]
    %v293 = vld [vmem:[#allocation6 + $0x150] sm:$0xff]
    %v294 = vld [vmem:[#allocation6 + $0x158] sm:$0xff]
    %v295 = vld [vmem:[#allocation6 + $0x160] sm:$0xff]
    %v296 = vld [vmem:[#allocation6 + $0x168] sm:$0xff]
    %v297 = vld [vmem:[#allocation6 + $0x170] sm:$0xff]
    %v298 = vld [vmem:[#allocation6 + $0x178] sm:$0xff]
    %v299 = vld [vmem:[#allocation6 + $0x180] sm:$0xff]
    %v300 = vld [vmem:[#allocation6 + $0x188] sm:$0xff]
    %v301 = vld [vmem:[#allocation6 + $0x190] sm:$0xff]
    %v302 = vld [vmem:[#allocation6 + $0x198] sm:$0xff]
    %v303 = vld [vmem:[#allocation6 + $0x1a0] sm:$0xff]
    %v304 = vld [vmem:[#allocation6 + $0x1a8] sm:$0xff]
    %v305 = vld [vmem:[#allocation6 + $0x1b0] sm:$0xff]
    %v306 = vld [vmem:[#allocation6 + $0x1b8] sm:$0xff]
    %v307 = vld [vmem:[#allocation6 + $0x1c0] sm:$0xff]
    %v308 = vld [vmem:[#allocation6 + $0x1c8] sm:$0xff]
    %v309 = vld [vmem:[#allocation6 + $0x1d0] sm:$0xff]
    %v310 = vld [vmem:[#allocation6 + $0x1d8] sm:$0xff]
    %v311 = vld [vmem:[#allocation6 + $0x1e0] sm:$0xff]
    %v312 = vld [vmem:[#allocation6 + $0x1e8] sm:$0xff]
    %v313 = vld [vmem:[#allocation6 + $0x1f0] sm:$0xff]
    %v314 = vld [vmem:[#allocation6 + $0x1f8] sm:$0xff]
    %v315 = vld [vmem:[#allocation7] sm:$0xf]
    %v317 = vperm.slane %v315, 0
    %v318 = vperm.slane %v315, 1
    %v319 = vperm.slane %v315, 2
    %v320 = vperm.slane %v315, 3
    %v389 = vunpack.c.l.b16 %v251
    %v390 = vunpack.c.h.b16 %v251
    %v391 = vunpack.c.l.b16 %v252
    %v392 = vunpack.c.h.b16 %v252
    %v393 = vunpack.c.l.b16 %v253
    %v394 = vunpack.c.h.b16 %v253
    %v395 = vunpack.c.l.b16 %v254
    %v396 = vunpack.c.h.b16 %v254
    %v397 = vunpack.c.l.b16 %v255
    %v398 = vunpack.c.h.b16 %v255
    %v399 = vunpack.c.l.b16 %v256
    %v400 = vunpack.c.h.b16 %v256
    %v401 = vunpack.c.l.b16 %v257
    %v402 = vunpack.c.h.b16 %v257
    %v403 = vunpack.c.l.b16 %v258
    %v404 = vunpack.c.h.b16 %v258
    %v405 = vunpack.c.l.b16 %v259
    %v406 = vunpack.c.h.b16 %v259
    %v407 = vunpack.c.l.b16 %v260
    %v408 = vunpack.c.h.b16 %v260
    %v409 = vunpack.c.l.b16 %v261
    %v410 = vunpack.c.h.b16 %v261
    %v411 = vunpack.c.l.b16 %v262
    %v412 = vunpack.c.h.b16 %v262
    %v413 = vunpack.c.l.b16 %v263
    %v414 = vunpack.c.h.b16 %v263
    %v415 = vunpack.c.l.b16 %v264
    %v416 = vunpack.c.h.b16 %v264
    %v417 = vunpack.c.l.b16 %v265
    %v418 = vunpack.c.h.b16 %v265
    %v419 = vunpack.c.l.b16 %v266
    %v420 = vunpack.c.h.b16 %v266
    %v421 = vunpack.c.l.b16 %v267
    %v422 = vunpack.c.h.b16 %v267
    %v423 = vunpack.c.l.b16 %v268
    %v424 = vunpack.c.h.b16 %v268
    %v425 = vunpack.c.l.b16 %v269
    %v426 = vunpack.c.h.b16 %v269
    %v427 = vunpack.c.l.b16 %v270
    %v428 = vunpack.c.h.b16 %v270
    %v429 = vunpack.c.l.b16 %v271
    %v430 = vunpack.c.h.b16 %v271
    %v431 = vunpack.c.l.b16 %v272
    %v432 = vunpack.c.h.b16 %v272
    %v433 = vunpack.c.l.b16 %v273
    %v434 = vunpack.c.h.b16 %v273
    %v435 = vunpack.c.l.b16 %v274
    %v436 = vunpack.c.h.b16 %v274
    %v437 = vunpack.c.l.b16 %v275
    %v438 = vunpack.c.h.b16 %v275
    %v439 = vunpack.c.l.b16 %v276
    %v440 = vunpack.c.h.b16 %v276
    %v441 = vunpack.c.l.b16 %v277
    %v442 = vunpack.c.h.b16 %v277
    %v443 = vunpack.c.l.b16 %v278
    %v444 = vunpack.c.h.b16 %v278
    %v445 = vunpack.c.l.b16 %v279
    %v446 = vunpack.c.h.b16 %v279
    %v447 = vunpack.c.l.b16 %v280
    %v448 = vunpack.c.h.b16 %v280
    %v449 = vunpack.c.l.b16 %v281
    %v450 = vunpack.c.h.b16 %v281
    %v451 = vunpack.c.l.b16 %v282
    %v452 = vunpack.c.h.b16 %v282
    %v453 = vunpack.c.l.b16 %v283
    %v454 = vunpack.c.h.b16 %v283
    %v455 = vunpack.c.l.b16 %v284
    %v456 = vunpack.c.h.b16 %v284
    %v457 = vunpack.c.l.b16 %v285
    %v458 = vunpack.c.h.b16 %v285
    %v459 = vunpack.c.l.b16 %v286
    %v460 = vunpack.c.h.b16 %v286
    %v461 = vunpack.c.l.b16 %v287
    %v462 = vunpack.c.h.b16 %v287
    %v463 = vunpack.c.l.b16 %v288
    %v464 = vunpack.c.h.b16 %v288
    %v465 = vunpack.c.l.b16 %v289
    %v466 = vunpack.c.h.b16 %v289
    %v467 = vunpack.c.l.b16 %v290
    %v468 = vunpack.c.h.b16 %v290
    %v469 = vunpack.c.l.b16 %v291
    %v470 = vunpack.c.h.b16 %v291
    %v471 = vunpack.c.l.b16 %v292
    %v472 = vunpack.c.h.b16 %v292
    %v473 = vunpack.c.l.b16 %v293
    %v474 = vunpack.c.h.b16 %v293
    %v475 = vunpack.c.l.b16 %v294
    %v476 = vunpack.c.h.b16 %v294
    %v477 = vunpack.c.l.b16 %v295
    %v478 = vunpack.c.h.b16 %v295
    %v479 = vunpack.c.l.b16 %v296
    %v480 = vunpack.c.h.b16 %v296
    %v481 = vunpack.c.l.b16 %v297
    %v482 = vunpack.c.h.b16 %v297
    %v483 = vunpack.c.l.b16 %v298
    %v484 = vunpack.c.h.b16 %v298
    %v485 = vunpack.c.l.b16 %v299
    %v486 = vunpack.c.h.b16 %v299
    %v487 = vunpack.c.l.b16 %v300
    %v488 = vunpack.c.h.b16 %v300
    %v489 = vunpack.c.l.b16 %v301
    %v490 = vunpack.c.h.b16 %v301
    %v491 = vunpack.c.l.b16 %v302
    %v492 = vunpack.c.h.b16 %v302
    %v493 = vunpack.c.l.b16 %v303
    %v494 = vunpack.c.h.b16 %v303
    %v495 = vunpack.c.l.b16 %v304
    %v496 = vunpack.c.h.b16 %v304
    %v497 = vunpack.c.l.b16 %v305
    %v498 = vunpack.c.h.b16 %v305
    %v499 = vunpack.c.l.b16 %v306
    %v500 = vunpack.c.h.b16 %v306
    %v501 = vunpack.c.l.b16 %v307
    %v502 = vunpack.c.h.b16 %v307
    %v503 = vunpack.c.l.b16 %v308
    %v504 = vunpack.c.h.b16 %v308
    %v505 = vunpack.c.l.b16 %v309
    %v506 = vunpack.c.h.b16 %v309
    %v507 = vunpack.c.l.b16 %v310
    %v508 = vunpack.c.h.b16 %v310
    %v509 = vunpack.c.l.b16 %v311
    %v510 = vunpack.c.h.b16 %v311
    %v511 = vunpack.c.l.b16 %v312
    %v512 = vunpack.c.h.b16 %v312
    %v513 = vunpack.c.l.b16 %v313
    %v514 = vunpack.c.h.b16 %v313
    %v515 = vunpack.c.l.b16 %v314
    %v516 = vunpack.c.h.b16 %v314
    %v517 = vpack.c.b16 %v393, %v389
    %v518 = vpack.c.b16 %v394, %v390
    %v519 = vpack.c.b16 %v395, %v391
    %v520 = vpack.c.b16 %v396, %v392
    %v521 = vpack.c.b16 %v401, %v397
    %v522 = vpack.c.b16 %v402, %v398
    %v523 = vpack.c.b16 %v403, %v399
    %v524 = vpack.c.b16 %v404, %v400
    %v525 = vpack.c.b16 %v409, %v405
    %v526 = vpack.c.b16 %v410, %v406
    %v527 = vpack.c.b16 %v411, %v407
    %v528 = vpack.c.b16 %v412, %v408
    %v529 = vpack.c.b16 %v417, %v413
    %v530 = vpack.c.b16 %v418, %v414
    %v531 = vpack.c.b16 %v419, %v415
    %v532 = vpack.c.b16 %v420, %v416
    %v533 = vpack.c.b16 %v425, %v421
    %v534 = vpack.c.b16 %v426, %v422
    %v535 = vpack.c.b16 %v427, %v423
    %v536 = vpack.c.b16 %v428, %v424
    %v537 = vpack.c.b16 %v433, %v429
    %v538 = vpack.c.b16 %v434, %v430
    %v539 = vpack.c.b16 %v435, %v431
    %v540 = vpack.c.b16 %v436, %v432
    %v541 = vpack.c.b16 %v441, %v437
    %v542 = vpack.c.b16 %v442, %v438
    %v543 = vpack.c.b16 %v443, %v439
    %v544 = vpack.c.b16 %v444, %v440
    %v545 = vpack.c.b16 %v449, %v445
    %v546 = vpack.c.b16 %v450, %v446
    %v547 = vpack.c.b16 %v451, %v447
    %v548 = vpack.c.b16 %v452, %v448
    %v549 = vpack.c.b16 %v457, %v453
    %v550 = vpack.c.b16 %v458, %v454
    %v551 = vpack.c.b16 %v459, %v455
    %v552 = vpack.c.b16 %v460, %v456
    %v553 = vpack.c.b16 %v465, %v461
    %v554 = vpack.c.b16 %v466, %v462
    %v555 = vpack.c.b16 %v467, %v463
    %v556 = vpack.c.b16 %v468, %v464
    %v557 = vpack.c.b16 %v473, %v469
    %v558 = vpack.c.b16 %v474, %v470
    %v559 = vpack.c.b16 %v475, %v471
    %v560 = vpack.c.b16 %v476, %v472
    %v561 = vpack.c.b16 %v481, %v477
    %v562 = vpack.c.b16 %v482, %v478
    %v563 = vpack.c.b16 %v483, %v479
    %v564 = vpack.c.b16 %v484, %v480
    %v565 = vpack.c.b16 %v489, %v485
    %v566 = vpack.c.b16 %v490, %v486
    %v567 = vpack.c.b16 %v491, %v487
    %v568 = vpack.c.b16 %v492, %v488
    %v569 = vpack.c.b16 %v497, %v493
    %v570 = vpack.c.b16 %v498, %v494
    %v571 = vpack.c.b16 %v499, %v495
    %v572 = vpack.c.b16 %v500, %v496
    %v573 = vpack.c.b16 %v505, %v501
    %v574 = vpack.c.b16 %v506, %v502
    %v575 = vpack.c.b16 %v507, %v503
    %v576 = vpack.c.b16 %v508, %v504
    %v577 = vpack.c.b16 %v513, %v509
    %v578 = vpack.c.b16 %v514, %v510
    %v579 = vpack.c.b16 %v515, %v511
    %v580 = vpack.c.b16 %v516, %v512
    %645 = vmatpush.bf16.msra.mxu0 %v545
    %646 = vmatpush.bf16.msra.mxu0 %v541
    %647 = vmatpush.bf16.msra.mxu0 %v537
    %648 = vmatpush.bf16.msra.mxu0 %v533
    %649 = vmatpush.bf16.msra.mxu0 %v529
    %650 = vmatpush.bf16.msra.mxu0 %v525
    %651 = vmatpush.bf16.msra.mxu0 %v521
    %652 = vmatpush.bf16.msra.mxu0 %v517
    %653 = vmatmul.bf16.gmra.mxu0 %v249
    %v654 = vpop.f32.mrf.mxu0
    %v655 = vadd.f32 %v317, %v654
    %v656 = vpop.f32.mrf.mxu0
    %v657 = vadd.f32 %v317, %v656
    %658 = vdwg.mxu0
    %659 = vmatpush.bf16.msra.mxu0 %v577
    %660 = vmatpush.bf16.msra.mxu0 %v573
    %661 = vmatpush.bf16.msra.mxu0 %v569
    %662 = vmatpush.bf16.msra.mxu0 %v565
    %663 = vmatpush.bf16.msra.mxu0 %v561
    %664 = vmatpush.bf16.msra.mxu0 %v557
    %665 = vmatpush.bf16.msra.mxu0 %v553
    %666 = vmatpush.bf16.msra.mxu0 %v549
    %667 = vmatmul.bf16.gmra.mxu0 %v250
    %v668 = vpop.f32.mrf.mxu0
    %v669 = vadd.f32 %v655, %v668
    %v670 = vpop.f32.mrf.mxu0
    %v671 = vadd.f32 %v657, %v670
    %672 = vdwg.mxu0
    %673 = vmatpush.bf16.msra.mxu0 %v546
    %674 = vmatpush.bf16.msra.mxu0 %v542
    %675 = vmatpush.bf16.msra.mxu0 %v538
    %676 = vmatpush.bf16.msra.mxu0 %v534
    %677 = vmatpush.bf16.msra.mxu0 %v530
    %678 = vmatpush.bf16.msra.mxu0 %v526
    %679 = vmatpush.bf16.msra.mxu0 %v522
    %680 = vmatpush.bf16.msra.mxu0 %v518
    %681 = vmatmul.bf16.gmra.mxu0 %v249
    %v682 = vpop.f32.mrf.mxu0
    %v683 = vadd.f32 %v318, %v682
    %v684 = vpop.f32.mrf.mxu0
    %v685 = vadd.f32 %v318, %v684
    %686 = vdwg.mxu0
    %687 = vmatpush.bf16.msra.mxu0 %v578
    %688 = vmatpush.bf16.msra.mxu0 %v574
    %689 = vmatpush.bf16.msra.mxu0 %v570
    %690 = vmatpush.bf16.msra.mxu0 %v566
    %691 = vmatpush.bf16.msra.mxu0 %v562
    %692 = vmatpush.bf16.msra.mxu0 %v558
    %693 = vmatpush.bf16.msra.mxu0 %v554
    %694 = vmatpush.bf16.msra.mxu0 %v550
    %695 = vmatmul.bf16.gmra.mxu0 %v250
    %v696 = vpop.f32.mrf.mxu0
    %v697 = vadd.f32 %v683, %v696
    %v698 = vpop.f32.mrf.mxu0
    %v699 = vadd.f32 %v685, %v698
    %700 = vdwg.mxu0
    %701 = vmatpush.bf16.msra.mxu0 %v547
    %702 = vmatpush.bf16.msra.mxu0 %v543
    %703 = vmatpush.bf16.msra.mxu0 %v539
    %704 = vmatpush.bf16.msra.mxu0 %v535
    %705 = vmatpush.bf16.msra.mxu0 %v531
    %706 = vmatpush.bf16.msra.mxu0 %v527
    %707 = vmatpush.bf16.msra.mxu0 %v523
    %708 = vmatpush.bf16.msra.mxu0 %v519
    %709 = vmatmul.bf16.gmra.mxu0 %v249
    %v710 = vpop.f32.mrf.mxu0
    %v711 = vadd.f32 %v319, %v710
    %v712 = vpop.f32.mrf.mxu0
    %v713 = vadd.f32 %v319, %v712
    %714 = vdwg.mxu0
    %715 = vmatpush.bf16.msra.mxu0 %v579
    %716 = vmatpush.bf16.msra.mxu0 %v575
    %717 = vmatpush.bf16.msra.mxu0 %v571
    %718 = vmatpush.bf16.msra.mxu0 %v567
    %719 = vmatpush.bf16.msra.mxu0 %v563
    %720 = vmatpush.bf16.msra.mxu0 %v559
    %721 = vmatpush.bf16.msra.mxu0 %v555
    %722 = vmatpush.bf16.msra.mxu0 %v551
    %723 = vmatmul.bf16.gmra.mxu0 %v250
    %v724 = vpop.f32.mrf.mxu0
    %v725 = vadd.f32 %v711, %v724
    %v726 = vpop.f32.mrf.mxu0
    %v727 = vadd.f32 %v713, %v726
    %728 = vdwg.mxu0
    %729 = vmatpush.bf16.msra.mxu0 %v548
    %730 = vmatpush.bf16.msra.mxu0 %v544
    %731 = vmatpush.bf16.msra.mxu0 %v540
    %732 = vmatpush.bf16.msra.mxu0 %v536
    %733 = vmatpush.bf16.msra.mxu0 %v532
    %734 = vmatpush.bf16.msra.mxu0 %v528
    %735 = vmatpush.bf16.msra.mxu0 %v524
    %736 = vmatpush.bf16.msra.mxu0 %v520
    %737 = vmatmul.bf16.gmra.mxu0 %v249
    %v738 = vpop.f32.mrf.mxu0
    %v739 = vadd.f32 %v320, %v738
    %v740 = vpop.f32.mrf.mxu0
    %v741 = vadd.f32 %v320, %v740
    %742 = vdwg.mxu0
    %743 = vmatpush.bf16.msra.mxu0 %v580
    %744 = vmatpush.bf16.msra.mxu0 %v576
    %745 = vmatpush.bf16.msra.mxu0 %v572
    %746 = vmatpush.bf16.msra.mxu0 %v568
    %747 = vmatpush.bf16.msra.mxu0 %v564
    %748 = vmatpush.bf16.msra.mxu0 %v560
    %749 = vmatpush.bf16.msra.mxu0 %v556
    %750 = vmatpush.bf16.msra.mxu0 %v552
    %751 = vmatmul.bf16.gmra.mxu0 %v250
    %v752 = vpop.f32.mrf.mxu0
    %v753 = vadd.f32 %v739, %v752
    %v754 = vpop.f32.mrf.mxu0
    %v755 = vadd.f32 %v741, %v754
    %756 = vdwg.mxu0
    %v757 = vmax.f32 %v669, 0.0
    %v758 = vmax.f32 %v697, 0.0
    %v759 = vmax.f32 %v725, 0.0
    %v760 = vmax.f32 %v753, 0.0
    %v761 = vmax.f32 %v671, 0.0
    %v762 = vmax.f32 %v699, 0.0
    %v763 = vmax.f32 %v727, 0.0
    %v764 = vmax.f32 %v755, 0.0
    %v765 = vpack.c.bf16 %v761, %v757
    %v766 = vpack.c.bf16 %v762, %v758
    %v767 = vpack.c.bf16 %v763, %v759
    %v768 = vpack.c.bf16 %v764, %v760
    %v769 = vld [vmem:[#allocation9] sm:$0xff]
    %v770 = vld [vmem:[#allocation9 + $0x8] sm:$0xff]
    %v771 = vld [vmem:[#allocation9 + $0x10] sm:$0xff]
    %v772 = vld [vmem:[#allocation9 + $0x18] sm:$0xff]
    %v773 = vld [vmem:[#allocation9 + $0x20] sm:$0xff]
    %v774 = vld [vmem:[#allocation9 + $0x28] sm:$0xff]
    %v775 = vld [vmem:[#allocation9 + $0x30] sm:$0xff]
    %v776 = vld [vmem:[#allocation9 + $0x38] sm:$0xff]
    %v777 = vld [vmem:[#allocation9 + $0x40] sm:$0xff]
    %v778 = vld [vmem:[#allocation9 + $0x48] sm:$0xff]
    %v779 = vld [vmem:[#allocation9 + $0x50] sm:$0xff]
    %v780 = vld [vmem:[#allocation9 + $0x58] sm:$0xff]
    %v781 = vld [vmem:[#allocation9 + $0x60] sm:$0xff]
    %v782 = vld [vmem:[#allocation9 + $0x68] sm:$0xff]
    %v783 = vld [vmem:[#allocation9 + $0x70] sm:$0xff]
    %v784 = vld [vmem:[#allocation9 + $0x78] sm:$0xff]
    %v785 = vld [vmem:[#allocation9 + $0x80] sm:$0xff]
    %v786 = vld [vmem:[#allocation9 + $0x88] sm:$0xff]
    %v787 = vld [vmem:[#allocation9 + $0x90] sm:$0xff]
    %v788 = vld [vmem:[#allocation9 + $0x98] sm:$0xff]
    %v789 = vld [vmem:[#allocation9 + $0xa0] sm:$0xff]
    %v790 = vld [vmem:[#allocation9 + $0xa8] sm:$0xff]
    %v791 = vld [vmem:[#allocation9 + $0xb0] sm:$0xff]
    %v792 = vld [vmem:[#allocation9 + $0xb8] sm:$0xff]
    %v793 = vld [vmem:[#allocation9 + $0xc0] sm:$0xff]
    %v794 = vld [vmem:[#allocation9 + $0xc8] sm:$0xff]
    %v795 = vld [vmem:[#allocation9 + $0xd0] sm:$0xff]
    %v796 = vld [vmem:[#allocation9 + $0xd8] sm:$0xff]
    %v797 = vld [vmem:[#allocation9 + $0xe0] sm:$0xff]
    %v798 = vld [vmem:[#allocation9 + $0xe8] sm:$0xff]
    %v799 = vld [vmem:[#allocation9 + $0xf0] sm:$0xff]
    %v800 = vld [vmem:[#allocation9 + $0xf8] sm:$0xff]
    %v801 = vld [vmem:[#allocation9 + $0x100] sm:$0xff]
    %v802 = vld [vmem:[#allocation9 + $0x108] sm:$0xff]
    %v803 = vld [vmem:[#allocation9 + $0x110] sm:$0xff]
    %v804 = vld [vmem:[#allocation9 + $0x118] sm:$0xff]
    %v805 = vld [vmem:[#allocation9 + $0x120] sm:$0xff]
    %v806 = vld [vmem:[#allocation9 + $0x128] sm:$0xff]
    %v807 = vld [vmem:[#allocation9 + $0x130] sm:$0xff]
    %v808 = vld [vmem:[#allocation9 + $0x138] sm:$0xff]
    %v809 = vld [vmem:[#allocation9 + $0x140] sm:$0xff]
    %v810 = vld [vmem:[#allocation9 + $0x148] sm:$0xff]
    %v811 = vld [vmem:[#allocation9 + $0x150] sm:$0xff]
    %v812 = vld [vmem:[#allocation9 + $0x158] sm:$0xff]
    %v813 = vld [vmem:[#allocation9 + $0x160] sm:$0xff]
    %v814 = vld [vmem:[#allocation9 + $0x168] sm:$0xff]
    %v815 = vld [vmem:[#allocation9 + $0x170] sm:$0xff]
    %v816 = vld [vmem:[#allocation9 + $0x178] sm:$0xff]
    %v817 = vld [vmem:[#allocation9 + $0x180] sm:$0xff]
    %v818 = vld [vmem:[#allocation9 + $0x188] sm:$0xff]
    %v819 = vld [vmem:[#allocation9 + $0x190] sm:$0xff]
    %v820 = vld [vmem:[#allocation9 + $0x198] sm:$0xff]
    %v821 = vld [vmem:[#allocation9 + $0x1a0] sm:$0xff]
    %v822 = vld [vmem:[#allocation9 + $0x1a8] sm:$0xff]
    %v823 = vld [vmem:[#allocation9 + $0x1b0] sm:$0xff]
    %v824 = vld [vmem:[#allocation9 + $0x1b8] sm:$0xff]
    %v825 = vld [vmem:[#allocation9 + $0x1c0] sm:$0xff]
    %v826 = vld [vmem:[#allocation9 + $0x1c8] sm:$0xff]
    %v827 = vld [vmem:[#allocation9 + $0x1d0] sm:$0xff]
    %v828 = vld [vmem:[#allocation9 + $0x1d8] sm:$0xff]
    %v829 = vld [vmem:[#allocation9 + $0x1e0] sm:$0xff]
    %v830 = vld [vmem:[#allocation9 + $0x1e8] sm:$0xff]
    %v831 = vld [vmem:[#allocation9 + $0x1f0] sm:$0xff]
    %v832 = vld [vmem:[#allocation9 + $0x1f8] sm:$0xff]
    %v833 = vld [vmem:[#allocation9 + $0x200] sm:$0xff]
    %v834 = vld [vmem:[#allocation9 + $0x208] sm:$0xff]
    %v835 = vld [vmem:[#allocation9 + $0x210] sm:$0xff]
    %v836 = vld [vmem:[#allocation9 + $0x218] sm:$0xff]
    %v837 = vld [vmem:[#allocation9 + $0x220] sm:$0xff]
    %v838 = vld [vmem:[#allocation9 + $0x228] sm:$0xff]
    %v839 = vld [vmem:[#allocation9 + $0x230] sm:$0xff]
    %v840 = vld [vmem:[#allocation9 + $0x238] sm:$0xff]
    %v841 = vld [vmem:[#allocation9 + $0x240] sm:$0xff]
    %v842 = vld [vmem:[#allocation9 + $0x248] sm:$0xff]
    %v843 = vld [vmem:[#allocation9 + $0x250] sm:$0xff]
    %v844 = vld [vmem:[#allocation9 + $0x258] sm:$0xff]
    %v845 = vld [vmem:[#allocation9 + $0x260] sm:$0xff]
    %v846 = vld [vmem:[#allocation9 + $0x268] sm:$0xff]
    %v847 = vld [vmem:[#allocation9 + $0x270] sm:$0xff]
    %v848 = vld [vmem:[#allocation9 + $0x278] sm:$0xff]
    %v849 = vld [vmem:[#allocation9 + $0x280] sm:$0xff]
    %v850 = vld [vmem:[#allocation9 + $0x288] sm:$0xff]
    %v851 = vld [vmem:[#allocation9 + $0x290] sm:$0xff]
    %v852 = vld [vmem:[#allocation9 + $0x298] sm:$0xff]
    %v853 = vld [vmem:[#allocation9 + $0x2a0] sm:$0xff]
    %v854 = vld [vmem:[#allocation9 + $0x2a8] sm:$0xff]
    %v855 = vld [vmem:[#allocation9 + $0x2b0] sm:$0xff]
    %v856 = vld [vmem:[#allocation9 + $0x2b8] sm:$0xff]
    %v857 = vld [vmem:[#allocation9 + $0x2c0] sm:$0xff]
    %v858 = vld [vmem:[#allocation9 + $0x2c8] sm:$0xff]
    %v859 = vld [vmem:[#allocation9 + $0x2d0] sm:$0xff]
    %v860 = vld [vmem:[#allocation9 + $0x2d8] sm:$0xff]
    %v861 = vld [vmem:[#allocation9 + $0x2e0] sm:$0xff]
    %v862 = vld [vmem:[#allocation9 + $0x2e8] sm:$0xff]
    %v863 = vld [vmem:[#allocation9 + $0x2f0] sm:$0xff]
    %v864 = vld [vmem:[#allocation9 + $0x2f8] sm:$0xff]
    %v865 = vld [vmem:[#allocation9 + $0x300] sm:$0xff]
    %v866 = vld [vmem:[#allocation9 + $0x308] sm:$0xff]
    %v867 = vld [vmem:[#allocation9 + $0x310] sm:$0xff]
    %v868 = vld [vmem:[#allocation9 + $0x318] sm:$0xff]
    %v869 = vld [vmem:[#allocation9 + $0x320] sm:$0xff]
    %v870 = vld [vmem:[#allocation9 + $0x328] sm:$0xff]
    %v871 = vld [vmem:[#allocation9 + $0x330] sm:$0xff]
    %v872 = vld [vmem:[#allocation9 + $0x338] sm:$0xff]
    %v873 = vld [vmem:[#allocation9 + $0x340] sm:$0xff]
    %v874 = vld [vmem:[#allocation9 + $0x348] sm:$0xff]
    %v875 = vld [vmem:[#allocation9 + $0x350] sm:$0xff]
    %v876 = vld [vmem:[#allocation9 + $0x358] sm:$0xff]
    %v877 = vld [vmem:[#allocation9 + $0x360] sm:$0xff]
    %v878 = vld [vmem:[#allocation9 + $0x368] sm:$0xff]
    %v879 = vld [vmem:[#allocation9 + $0x370] sm:$0xff]
    %v880 = vld [vmem:[#allocation9 + $0x378] sm:$0xff]
    %v881 = vld [vmem:[#allocation9 + $0x380] sm:$0xff]
    %v882 = vld [vmem:[#allocation9 + $0x388] sm:$0xff]
    %v883 = vld [vmem:[#allocation9 + $0x390] sm:$0xff]
    %v884 = vld [vmem:[#allocation9 + $0x398] sm:$0xff]
    %v885 = vld [vmem:[#allocation9 + $0x3a0] sm:$0xff]
    %v886 = vld [vmem:[#allocation9 + $0x3a8] sm:$0xff]
    %v887 = vld [vmem:[#allocation9 + $0x3b0] sm:$0xff]
    %v888 = vld [vmem:[#allocation9 + $0x3b8] sm:$0xff]
    %v889 = vld [vmem:[#allocation9 + $0x3c0] sm:$0xff]
    %v890 = vld [vmem:[#allocation9 + $0x3c8] sm:$0xff]
    %v891 = vld [vmem:[#allocation9 + $0x3d0] sm:$0xff]
    %v892 = vld [vmem:[#allocation9 + $0x3d8] sm:$0xff]
    %v893 = vld [vmem:[#allocation9 + $0x3e0] sm:$0xff]
    %v894 = vld [vmem:[#allocation9 + $0x3e8] sm:$0xff]
    %v895 = vld [vmem:[#allocation9 + $0x3f0] sm:$0xff]
    %v896 = vld [vmem:[#allocation9 + $0x3f8] sm:$0xff]
    %v897 = vld [vmem:[#allocation9 + $0x400] sm:$0xff]
    %v898 = vld [vmem:[#allocation9 + $0x408] sm:$0xff]
    %v899 = vld [vmem:[#allocation9 + $0x410] sm:$0xff]
    %v900 = vld [vmem:[#allocation9 + $0x418] sm:$0xff]
    %v901 = vld [vmem:[#allocation9 + $0x420] sm:$0xff]
    %v902 = vld [vmem:[#allocation9 + $0x428] sm:$0xff]
    %v903 = vld [vmem:[#allocation9 + $0x430] sm:$0xff]
    %v904 = vld [vmem:[#allocation9 + $0x438] sm:$0xff]
    %v905 = vld [vmem:[#allocation9 + $0x440] sm:$0xff]
    %v906 = vld [vmem:[#allocation9 + $0x448] sm:$0xff]
    %v907 = vld [vmem:[#allocation9 + $0x450] sm:$0xff]
    %v908 = vld [vmem:[#allocation9 + $0x458] sm:$0xff]
    %v909 = vld [vmem:[#allocation9 + $0x460] sm:$0xff]
    %v910 = vld [vmem:[#allocation9 + $0x468] sm:$0xff]
    %v911 = vld [vmem:[#allocation9 + $0x470] sm:$0xff]
    %v912 = vld [vmem:[#allocation9 + $0x478] sm:$0xff]
    %v913 = vld [vmem:[#allocation9 + $0x480] sm:$0xff]
    %v914 = vld [vmem:[#allocation9 + $0x488] sm:$0xff]
    %v915 = vld [vmem:[#allocation9 + $0x490] sm:$0xff]
    %v916 = vld [vmem:[#allocation9 + $0x498] sm:$0xff]
    %v917 = vld [vmem:[#allocation9 + $0x4a0] sm:$0xff]
    %v918 = vld [vmem:[#allocation9 + $0x4a8] sm:$0xff]
    %v919 = vld [vmem:[#allocation9 + $0x4b0] sm:$0xff]
    %v920 = vld [vmem:[#allocation9 + $0x4b8] sm:$0xff]
    %v921 = vld [vmem:[#allocation9 + $0x4c0] sm:$0xff]
    %v922 = vld [vmem:[#allocation9 + $0x4c8] sm:$0xff]
    %v923 = vld [vmem:[#allocation9 + $0x4d0] sm:$0xff]
    %v924 = vld [vmem:[#allocation9 + $0x4d8] sm:$0xff]
    %v925 = vld [vmem:[#allocation9 + $0x4e0] sm:$0xff]
    %v926 = vld [vmem:[#allocation9 + $0x4e8] sm:$0xff]
    %v927 = vld [vmem:[#allocation9 + $0x4f0] sm:$0xff]
    %v928 = vld [vmem:[#allocation9 + $0x4f8] sm:$0xff]
    %v929 = vld [vmem:[#allocation9 + $0x500] sm:$0xff]
    %v930 = vld [vmem:[#allocation9 + $0x508] sm:$0xff]
    %v931 = vld [vmem:[#allocation9 + $0x510] sm:$0xff]
    %v932 = vld [vmem:[#allocation9 + $0x518] sm:$0xff]
    %v933 = vld [vmem:[#allocation9 + $0x520] sm:$0xff]
    %v934 = vld [vmem:[#allocation9 + $0x528] sm:$0xff]
    %v935 = vld [vmem:[#allocation9 + $0x530] sm:$0xff]
    %v936 = vld [vmem:[#allocation9 + $0x538] sm:$0xff]
    %v937 = vld [vmem:[#allocation9 + $0x540] sm:$0xff]
    %v938 = vld [vmem:[#allocation9 + $0x548] sm:$0xff]
    %v939 = vld [vmem:[#allocation9 + $0x550] sm:$0xff]
    %v940 = vld [vmem:[#allocation9 + $0x558] sm:$0xff]
    %v941 = vld [vmem:[#allocation9 + $0x560] sm:$0xff]
    %v942 = vld [vmem:[#allocation9 + $0x568] sm:$0xff]
    %v943 = vld [vmem:[#allocation9 + $0x570] sm:$0xff]
    %v944 = vld [vmem:[#allocation9 + $0x578] sm:$0xff]
    %v945 = vld [vmem:[#allocation9 + $0x580] sm:$0xff]
    %v946 = vld [vmem:[#allocation9 + $0x588] sm:$0xff]
    %v947 = vld [vmem:[#allocation9 + $0x590] sm:$0xff]
    %v948 = vld [vmem:[#allocation9 + $0x598] sm:$0xff]
    %v949 = vld [vmem:[#allocation9 + $0x5a0] sm:$0xff]
    %v950 = vld [vmem:[#allocation9 + $0x5a8] sm:$0xff]
    %v951 = vld [vmem:[#allocation9 + $0x5b0] sm:$0xff]
    %v952 = vld [vmem:[#allocation9 + $0x5b8] sm:$0xff]
    %v953 = vld [vmem:[#allocation9 + $0x5c0] sm:$0xff]
    %v954 = vld [vmem:[#allocation9 + $0x5c8] sm:$0xff]
    %v955 = vld [vmem:[#allocation9 + $0x5d0] sm:$0xff]
    %v956 = vld [vmem:[#allocation9 + $0x5d8] sm:$0xff]
    %v957 = vld [vmem:[#allocation9 + $0x5e0] sm:$0xff]
    %v958 = vld [vmem:[#allocation9 + $0x5e8] sm:$0xff]
    %v959 = vld [vmem:[#allocation9 + $0x5f0] sm:$0xff]
    %v960 = vld [vmem:[#allocation9 + $0x5f8] sm:$0xff]
    %v961 = vld [vmem:[#allocation9 + $0x600] sm:$0xff]
    %v962 = vld [vmem:[#allocation9 + $0x608] sm:$0xff]
    %v963 = vld [vmem:[#allocation9 + $0x610] sm:$0xff]
    %v964 = vld [vmem:[#allocation9 + $0x618] sm:$0xff]
    %v965 = vld [vmem:[#allocation9 + $0x620] sm:$0xff]
    %v966 = vld [vmem:[#allocation9 + $0x628] sm:$0xff]
    %v967 = vld [vmem:[#allocation9 + $0x630] sm:$0xff]
    %v968 = vld [vmem:[#allocation9 + $0x638] sm:$0xff]
    %v969 = vld [vmem:[#allocation9 + $0x640] sm:$0xff]
    %v970 = vld [vmem:[#allocation9 + $0x648] sm:$0xff]
    %v971 = vld [vmem:[#allocation9 + $0x650] sm:$0xff]
    %v972 = vld [vmem:[#allocation9 + $0x658] sm:$0xff]
    %v973 = vld [vmem:[#allocation9 + $0x660] sm:$0xff]
    %v974 = vld [vmem:[#allocation9 + $0x668] sm:$0xff]
    %v975 = vld [vmem:[#allocation9 + $0x670] sm:$0xff]
    %v976 = vld [vmem:[#allocation9 + $0x678] sm:$0xff]
    %v977 = vld [vmem:[#allocation9 + $0x680] sm:$0xff]
    %v978 = vld [vmem:[#allocation9 + $0x688] sm:$0xff]
    %v979 = vld [vmem:[#allocation9 + $0x690] sm:$0xff]
    %v980 = vld [vmem:[#allocation9 + $0x698] sm:$0xff]
    %v981 = vld [vmem:[#allocation9 + $0x6a0] sm:$0xff]
    %v982 = vld [vmem:[#allocation9 + $0x6a8] sm:$0xff]
    %v983 = vld [vmem:[#allocation9 + $0x6b0] sm:$0xff]
    %v984 = vld [vmem:[#allocation9 + $0x6b8] sm:$0xff]
    %v985 = vld [vmem:[#allocation9 + $0x6c0] sm:$0xff]
    %v986 = vld [vmem:[#allocation9 + $0x6c8] sm:$0xff]
    %v987 = vld [vmem:[#allocation9 + $0x6d0] sm:$0xff]
    %v988 = vld [vmem:[#allocation9 + $0x6d8] sm:$0xff]
    %v989 = vld [vmem:[#allocation9 + $0x6e0] sm:$0xff]
    %v990 = vld [vmem:[#allocation9 + $0x6e8] sm:$0xff]
    %v991 = vld [vmem:[#allocation9 + $0x6f0] sm:$0xff]
    %v992 = vld [vmem:[#allocation9 + $0x6f8] sm:$0xff]
    %v993 = vld [vmem:[#allocation9 + $0x700] sm:$0xff]
    %v994 = vld [vmem:[#allocation9 + $0x708] sm:$0xff]
    %v995 = vld [vmem:[#allocation9 + $0x710] sm:$0xff]
    %v996 = vld [vmem:[#allocation9 + $0x718] sm:$0xff]
    %v997 = vld [vmem:[#allocation9 + $0x720] sm:$0xff]
    %v998 = vld [vmem:[#allocation9 + $0x728] sm:$0xff]
    %v999 = vld [vmem:[#allocation9 + $0x730] sm:$0xff]
    %v1000 = vld [vmem:[#allocation9 + $0x738] sm:$0xff]
    %v1001 = vld [vmem:[#allocation9 + $0x740] sm:$0xff]
    %v1002 = vld [vmem:[#allocation9 + $0x748] sm:$0xff]
    %v1003 = vld [vmem:[#allocation9 + $0x750] sm:$0xff]
    %v1004 = vld [vmem:[#allocation9 + $0x758] sm:$0xff]
    %v1005 = vld [vmem:[#allocation9 + $0x760] sm:$0xff]
    %v1006 = vld [vmem:[#allocation9 + $0x768] sm:$0xff]
    %v1007 = vld [vmem:[#allocation9 + $0x770] sm:$0xff]
    %v1008 = vld [vmem:[#allocation9 + $0x778] sm:$0xff]
    %v1009 = vld [vmem:[#allocation9 + $0x780] sm:$0xff]
    %v1010 = vld [vmem:[#allocation9 + $0x788] sm:$0xff]
    %v1011 = vld [vmem:[#allocation9 + $0x790] sm:$0xff]
    %v1012 = vld [vmem:[#allocation9 + $0x798] sm:$0xff]
    %v1013 = vld [vmem:[#allocation9 + $0x7a0] sm:$0xff]
    %v1014 = vld [vmem:[#allocation9 + $0x7a8] sm:$0xff]
    %v1015 = vld [vmem:[#allocation9 + $0x7b0] sm:$0xff]
    %v1016 = vld [vmem:[#allocation9 + $0x7b8] sm:$0xff]
    %v1017 = vld [vmem:[#allocation9 + $0x7c0] sm:$0xff]
    %v1018 = vld [vmem:[#allocation9 + $0x7c8] sm:$0xff]
    %v1019 = vld [vmem:[#allocation9 + $0x7d0] sm:$0xff]
    %v1020 = vld [vmem:[#allocation9 + $0x7d8] sm:$0xff]
    %v1021 = vld [vmem:[#allocation9 + $0x7e0] sm:$0xff]
    %v1022 = vld [vmem:[#allocation9 + $0x7e8] sm:$0xff]
    %v1023 = vld [vmem:[#allocation9 + $0x7f0] sm:$0xff]
    %v1024 = vld [vmem:[#allocation9 + $0x7f8] sm:$0xff]
    %v1025 = vld [vmem:[#allocation10] sm:$0xff]
    %v1027 = vperm.slane %v1025, 0
    %v1028 = vperm.slane %v1025, 1
    %v1029 = vperm.slane %v1025, 2
    %v1030 = vperm.slane %v1025, 3
    %v1031 = vperm.slane %v1025, 4
    %v1032 = vperm.slane %v1025, 5
    %v1033 = vperm.slane %v1025, 6
    %v1034 = vperm.slane %v1025, 7
    %v1299 = vunpack.c.l.b16 %v769
    %v1300 = vunpack.c.h.b16 %v769
    %v1301 = vunpack.c.l.b16 %v770
    %v1302 = vunpack.c.h.b16 %v770
    %v1303 = vunpack.c.l.b16 %v771
    %v1304 = vunpack.c.h.b16 %v771
    %v1305 = vunpack.c.l.b16 %v772
    %v1306 = vunpack.c.h.b16 %v772
    %v1307 = vunpack.c.l.b16 %v773
    %v1308 = vunpack.c.h.b16 %v773
    %v1309 = vunpack.c.l.b16 %v774
    %v1310 = vunpack.c.h.b16 %v774
    %v1311 = vunpack.c.l.b16 %v775
    %v1312 = vunpack.c.h.b16 %v775
    %v1313 = vunpack.c.l.b16 %v776
    %v1314 = vunpack.c.h.b16 %v776
    %v1315 = vunpack.c.l.b16 %v777
    %v1316 = vunpack.c.h.b16 %v777
    %v1317 = vunpack.c.l.b16 %v778
    %v1318 = vunpack.c.h.b16 %v778
    %v1319 = vunpack.c.l.b16 %v779
    %v1320 = vunpack.c.h.b16 %v779
    %v1321 = vunpack.c.l.b16 %v780
    %v1322 = vunpack.c.h.b16 %v780
    %v1323 = vunpack.c.l.b16 %v781
    %v1324 = vunpack.c.h.b16 %v781
    %v1325 = vunpack.c.l.b16 %v782
    %v1326 = vunpack.c.h.b16 %v782
    %v1327 = vunpack.c.l.b16 %v783
    %v1328 = vunpack.c.h.b16 %v783
    %v1329 = vunpack.c.l.b16 %v784
    %v1330 = vunpack.c.h.b16 %v784
    %v1331 = vunpack.c.l.b16 %v785
    %v1332 = vunpack.c.h.b16 %v785
    %v1333 = vunpack.c.l.b16 %v786
    %v1334 = vunpack.c.h.b16 %v786
    %v1335 = vunpack.c.l.b16 %v787
    %v1336 = vunpack.c.h.b16 %v787
    %v1337 = vunpack.c.l.b16 %v788
    %v1338 = vunpack.c.h.b16 %v788
    %v1339 = vunpack.c.l.b16 %v789
    %v1340 = vunpack.c.h.b16 %v789
    %v1341 = vunpack.c.l.b16 %v790
    %v1342 = vunpack.c.h.b16 %v790
    %v1343 = vunpack.c.l.b16 %v791
    %v1344 = vunpack.c.h.b16 %v791
    %v1345 = vunpack.c.l.b16 %v792
    %v1346 = vunpack.c.h.b16 %v792
    %v1347 = vunpack.c.l.b16 %v793
    %v1348 = vunpack.c.h.b16 %v793
    %v1349 = vunpack.c.l.b16 %v794
    %v1350 = vunpack.c.h.b16 %v794
    %v1351 = vunpack.c.l.b16 %v795
    %v1352 = vunpack.c.h.b16 %v795
    %v1353 = vunpack.c.l.b16 %v796
    %v1354 = vunpack.c.h.b16 %v796
    %v1355 = vunpack.c.l.b16 %v797
    %v1356 = vunpack.c.h.b16 %v797
    %v1357 = vunpack.c.l.b16 %v798
    %v1358 = vunpack.c.h.b16 %v798
    %v1359 = vunpack.c.l.b16 %v799
    %v1360 = vunpack.c.h.b16 %v799
    %v1361 = vunpack.c.l.b16 %v800
    %v1362 = vunpack.c.h.b16 %v800
    %v1363 = vunpack.c.l.b16 %v801
    %v1364 = vunpack.c.h.b16 %v801
    %v1365 = vunpack.c.l.b16 %v802
    %v1366 = vunpack.c.h.b16 %v802
    %v1367 = vunpack.c.l.b16 %v803
    %v1368 = vunpack.c.h.b16 %v803
    %v1369 = vunpack.c.l.b16 %v804
    %v1370 = vunpack.c.h.b16 %v804
    %v1371 = vunpack.c.l.b16 %v805
    %v1372 = vunpack.c.h.b16 %v805
    %v1373 = vunpack.c.l.b16 %v806
    %v1374 = vunpack.c.h.b16 %v806
    %v1375 = vunpack.c.l.b16 %v807
    %v1376 = vunpack.c.h.b16 %v807
    %v1377 = vunpack.c.l.b16 %v808
    %v1378 = vunpack.c.h.b16 %v808
    %v1379 = vunpack.c.l.b16 %v809
    %v1380 = vunpack.c.h.b16 %v809
    %v1381 = vunpack.c.l.b16 %v810
    %v1382 = vunpack.c.h.b16 %v810
    %v1383 = vunpack.c.l.b16 %v811
    %v1384 = vunpack.c.h.b16 %v811
    %v1385 = vunpack.c.l.b16 %v812
    %v1386 = vunpack.c.h.b16 %v812
    %v1387 = vunpack.c.l.b16 %v813
    %v1388 = vunpack.c.h.b16 %v813
    %v1389 = vunpack.c.l.b16 %v814
    %v1390 = vunpack.c.h.b16 %v814
    %v1391 = vunpack.c.l.b16 %v815
    %v1392 = vunpack.c.h.b16 %v815
    %v1393 = vunpack.c.l.b16 %v816
    %v1394 = vunpack.c.h.b16 %v816
    %v1395 = vunpack.c.l.b16 %v817
    %v1396 = vunpack.c.h.b16 %v817
    %v1397 = vunpack.c.l.b16 %v818
    %v1398 = vunpack.c.h.b16 %v818
    %v1399 = vunpack.c.l.b16 %v819
    %v1400 = vunpack.c.h.b16 %v819
    %v1401 = vunpack.c.l.b16 %v820
    %v1402 = vunpack.c.h.b16 %v820
    %v1403 = vunpack.c.l.b16 %v821
    %v1404 = vunpack.c.h.b16 %v821
    %v1405 = vunpack.c.l.b16 %v822
    %v1406 = vunpack.c.h.b16 %v822
    %v1407 = vunpack.c.l.b16 %v823
    %v1408 = vunpack.c.h.b16 %v823
    %v1409 = vunpack.c.l.b16 %v824
    %v1410 = vunpack.c.h.b16 %v824
    %v1411 = vunpack.c.l.b16 %v825
    %v1412 = vunpack.c.h.b16 %v825
    %v1413 = vunpack.c.l.b16 %v826
    %v1414 = vunpack.c.h.b16 %v826
    %v1415 = vunpack.c.l.b16 %v827
    %v1416 = vunpack.c.h.b16 %v827
    %v1417 = vunpack.c.l.b16 %v828
    %v1418 = vunpack.c.h.b16 %v828
    %v1419 = vunpack.c.l.b16 %v829
    %v1420 = vunpack.c.h.b16 %v829
    %v1421 = vunpack.c.l.b16 %v830
    %v1422 = vunpack.c.h.b16 %v830
    %v1423 = vunpack.c.l.b16 %v831
    %v1424 = vunpack.c.h.b16 %v831
    %v1425 = vunpack.c.l.b16 %v832
    %v1426 = vunpack.c.h.b16 %v832
    %v1427 = vunpack.c.l.b16 %v833
    %v1428 = vunpack.c.h.b16 %v833
    %v1429 = vunpack.c.l.b16 %v834
    %v1430 = vunpack.c.h.b16 %v834
    %v1431 = vunpack.c.l.b16 %v835
    %v1432 = vunpack.c.h.b16 %v835
    %v1433 = vunpack.c.l.b16 %v836
    %v1434 = vunpack.c.h.b16 %v836
    %v1435 = vunpack.c.l.b16 %v837
    %v1436 = vunpack.c.h.b16 %v837
    %v1437 = vunpack.c.l.b16 %v838
    %v1438 = vunpack.c.h.b16 %v838
    %v1439 = vunpack.c.l.b16 %v839
    %v1440 = vunpack.c.h.b16 %v839
    %v1441 = vunpack.c.l.b16 %v840
    %v1442 = vunpack.c.h.b16 %v840
    %v1443 = vunpack.c.l.b16 %v841
    %v1444 = vunpack.c.h.b16 %v841
    %v1445 = vunpack.c.l.b16 %v842
    %v1446 = vunpack.c.h.b16 %v842
    %v1447 = vunpack.c.l.b16 %v843
    %v1448 = vunpack.c.h.b16 %v843
    %v1449 = vunpack.c.l.b16 %v844
    %v1450 = vunpack.c.h.b16 %v844
    %v1451 = vunpack.c.l.b16 %v845
    %v1452 = vunpack.c.h.b16 %v845
    %v1453 = vunpack.c.l.b16 %v846
    %v1454 = vunpack.c.h.b16 %v846
    %v1455 = vunpack.c.l.b16 %v847
    %v1456 = vunpack.c.h.b16 %v847
    %v1457 = vunpack.c.l.b16 %v848
    %v1458 = vunpack.c.h.b16 %v848
    %v1459 = vunpack.c.l.b16 %v849
    %v1460 = vunpack.c.h.b16 %v849
    %v1461 = vunpack.c.l.b16 %v850
    %v1462 = vunpack.c.h.b16 %v850
    %v1463 = vunpack.c.l.b16 %v851
    %v1464 = vunpack.c.h.b16 %v851
    %v1465 = vunpack.c.l.b16 %v852
    %v1466 = vunpack.c.h.b16 %v852
    %v1467 = vunpack.c.l.b16 %v853
    %v1468 = vunpack.c.h.b16 %v853
    %v1469 = vunpack.c.l.b16 %v854
    %v1470 = vunpack.c.h.b16 %v854
    %v1471 = vunpack.c.l.b16 %v855
    %v1472 = vunpack.c.h.b16 %v855
    %v1473 = vunpack.c.l.b16 %v856
    %v1474 = vunpack.c.h.b16 %v856
    %v1475 = vunpack.c.l.b16 %v857
    %v1476 = vunpack.c.h.b16 %v857
    %v1477 = vunpack.c.l.b16 %v858
    %v1478 = vunpack.c.h.b16 %v858
    %v1479 = vunpack.c.l.b16 %v859
    %v1480 = vunpack.c.h.b16 %v859
    %v1481 = vunpack.c.l.b16 %v860
    %v1482 = vunpack.c.h.b16 %v860
    %v1483 = vunpack.c.l.b16 %v861
    %v1484 = vunpack.c.h.b16 %v861
    %v1485 = vunpack.c.l.b16 %v862
    %v1486 = vunpack.c.h.b16 %v862
    %v1487 = vunpack.c.l.b16 %v863
    %v1488 = vunpack.c.h.b16 %v863
    %v1489 = vunpack.c.l.b16 %v864
    %v1490 = vunpack.c.h.b16 %v864
    %v1491 = vunpack.c.l.b16 %v865
    %v1492 = vunpack.c.h.b16 %v865
    %v1493 = vunpack.c.l.b16 %v866
    %v1494 = vunpack.c.h.b16 %v866
    %v1495 = vunpack.c.l.b16 %v867
    %v1496 = vunpack.c.h.b16 %v867
    %v1497 = vunpack.c.l.b16 %v868
    %v1498 = vunpack.c.h.b16 %v868
    %v1499 = vunpack.c.l.b16 %v869
    %v1500 = vunpack.c.h.b16 %v869
    %v1501 = vunpack.c.l.b16 %v870
    %v1502 = vunpack.c.h.b16 %v870
    %v1503 = vunpack.c.l.b16 %v871
    %v1504 = vunpack.c.h.b16 %v871
    %v1505 = vunpack.c.l.b16 %v872
    %v1506 = vunpack.c.h.b16 %v872
    %v1507 = vunpack.c.l.b16 %v873
    %v1508 = vunpack.c.h.b16 %v873
    %v1509 = vunpack.c.l.b16 %v874
    %v1510 = vunpack.c.h.b16 %v874
    %v1511 = vunpack.c.l.b16 %v875
    %v1512 = vunpack.c.h.b16 %v875
    %v1513 = vunpack.c.l.b16 %v876
    %v1514 = vunpack.c.h.b16 %v876
    %v1515 = vunpack.c.l.b16 %v877
    %v1516 = vunpack.c.h.b16 %v877
    %v1517 = vunpack.c.l.b16 %v878
    %v1518 = vunpack.c.h.b16 %v878
    %v1519 = vunpack.c.l.b16 %v879
    %v1520 = vunpack.c.h.b16 %v879
    %v1521 = vunpack.c.l.b16 %v880
    %v1522 = vunpack.c.h.b16 %v880
    %v1523 = vunpack.c.l.b16 %v881
    %v1524 = vunpack.c.h.b16 %v881
    %v1525 = vunpack.c.l.b16 %v882
    %v1526 = vunpack.c.h.b16 %v882
    %v1527 = vunpack.c.l.b16 %v883
    %v1528 = vunpack.c.h.b16 %v883
    %v1529 = vunpack.c.l.b16 %v884
    %v1530 = vunpack.c.h.b16 %v884
    %v1531 = vunpack.c.l.b16 %v885
    %v1532 = vunpack.c.h.b16 %v885
    %v1533 = vunpack.c.l.b16 %v886
    %v1534 = vunpack.c.h.b16 %v886
    %v1535 = vunpack.c.l.b16 %v887
    %v1536 = vunpack.c.h.b16 %v887
    %v1537 = vunpack.c.l.b16 %v888
    %v1538 = vunpack.c.h.b16 %v888
    %v1539 = vunpack.c.l.b16 %v889
    %v1540 = vunpack.c.h.b16 %v889
    %v1541 = vunpack.c.l.b16 %v890
    %v1542 = vunpack.c.h.b16 %v890
    %v1543 = vunpack.c.l.b16 %v891
    %v1544 = vunpack.c.h.b16 %v891
    %v1545 = vunpack.c.l.b16 %v892
    %v1546 = vunpack.c.h.b16 %v892
    %v1547 = vunpack.c.l.b16 %v893
    %v1548 = vunpack.c.h.b16 %v893
    %v1549 = vunpack.c.l.b16 %v894
    %v1550 = vunpack.c.h.b16 %v894
    %v1551 = vunpack.c.l.b16 %v895
    %v1552 = vunpack.c.h.b16 %v895
    %v1553 = vunpack.c.l.b16 %v896
    %v1554 = vunpack.c.h.b16 %v896
    %v1555 = vunpack.c.l.b16 %v897
    %v1556 = vunpack.c.h.b16 %v897
    %v1557 = vunpack.c.l.b16 %v898
    %v1558 = vunpack.c.h.b16 %v898
    %v1559 = vunpack.c.l.b16 %v899
    %v1560 = vunpack.c.h.b16 %v899
    %v1561 = vunpack.c.l.b16 %v900
    %v1562 = vunpack.c.h.b16 %v900
    %v1563 = vunpack.c.l.b16 %v901
    %v1564 = vunpack.c.h.b16 %v901
    %v1565 = vunpack.c.l.b16 %v902
    %v1566 = vunpack.c.h.b16 %v902
    %v1567 = vunpack.c.l.b16 %v903
    %v1568 = vunpack.c.h.b16 %v903
    %v1569 = vunpack.c.l.b16 %v904
    %v1570 = vunpack.c.h.b16 %v904
    %v1571 = vunpack.c.l.b16 %v905
    %v1572 = vunpack.c.h.b16 %v905
    %v1573 = vunpack.c.l.b16 %v906
    %v1574 = vunpack.c.h.b16 %v906
    %v1575 = vunpack.c.l.b16 %v907
    %v1576 = vunpack.c.h.b16 %v907
    %v1577 = vunpack.c.l.b16 %v908
    %v1578 = vunpack.c.h.b16 %v908
    %v1579 = vunpack.c.l.b16 %v909
    %v1580 = vunpack.c.h.b16 %v909
    %v1581 = vunpack.c.l.b16 %v910
    %v1582 = vunpack.c.h.b16 %v910
    %v1583 = vunpack.c.l.b16 %v911
    %v1584 = vunpack.c.h.b16 %v911
    %v1585 = vunpack.c.l.b16 %v912
    %v1586 = vunpack.c.h.b16 %v912
    %v1587 = vunpack.c.l.b16 %v913
    %v1588 = vunpack.c.h.b16 %v913
    %v1589 = vunpack.c.l.b16 %v914
    %v1590 = vunpack.c.h.b16 %v914
    %v1591 = vunpack.c.l.b16 %v915
    %v1592 = vunpack.c.h.b16 %v915
    %v1593 = vunpack.c.l.b16 %v916
    %v1594 = vunpack.c.h.b16 %v916
    %v1595 = vunpack.c.l.b16 %v917
    %v1596 = vunpack.c.h.b16 %v917
    %v1597 = vunpack.c.l.b16 %v918
    %v1598 = vunpack.c.h.b16 %v918
    %v1599 = vunpack.c.l.b16 %v919
    %v1600 = vunpack.c.h.b16 %v919
    %v1601 = vunpack.c.l.b16 %v920
    %v1602 = vunpack.c.h.b16 %v920
    %v1603 = vunpack.c.l.b16 %v921
    %v1604 = vunpack.c.h.b16 %v921
    %v1605 = vunpack.c.l.b16 %v922
    %v1606 = vunpack.c.h.b16 %v922
    %v1607 = vunpack.c.l.b16 %v923
    %v1608 = vunpack.c.h.b16 %v923
    %v1609 = vunpack.c.l.b16 %v924
    %v1610 = vunpack.c.h.b16 %v924
    %v1611 = vunpack.c.l.b16 %v925
    %v1612 = vunpack.c.h.b16 %v925
    %v1613 = vunpack.c.l.b16 %v926
    %v1614 = vunpack.c.h.b16 %v926
    %v1615 = vunpack.c.l.b16 %v927
    %v1616 = vunpack.c.h.b16 %v927
    %v1617 = vunpack.c.l.b16 %v928
    %v1618 = vunpack.c.h.b16 %v928
    %v1619 = vunpack.c.l.b16 %v929
    %v1620 = vunpack.c.h.b16 %v929
    %v1621 = vunpack.c.l.b16 %v930
    %v1622 = vunpack.c.h.b16 %v930
    %v1623 = vunpack.c.l.b16 %v931
    %v1624 = vunpack.c.h.b16 %v931
    %v1625 = vunpack.c.l.b16 %v932
    %v1626 = vunpack.c.h.b16 %v932
    %v1627 = vunpack.c.l.b16 %v933
    %v1628 = vunpack.c.h.b16 %v933
    %v1629 = vunpack.c.l.b16 %v934
    %v1630 = vunpack.c.h.b16 %v934
    %v1631 = vunpack.c.l.b16 %v935
    %v1632 = vunpack.c.h.b16 %v935
    %v1633 = vunpack.c.l.b16 %v936
    %v1634 = vunpack.c.h.b16 %v936
    %v1635 = vunpack.c.l.b16 %v937
    %v1636 = vunpack.c.h.b16 %v937
    %v1637 = vunpack.c.l.b16 %v938
    %v1638 = vunpack.c.h.b16 %v938
    %v1639 = vunpack.c.l.b16 %v939
    %v1640 = vunpack.c.h.b16 %v939
    %v1641 = vunpack.c.l.b16 %v940
    %v1642 = vunpack.c.h.b16 %v940
    %v1643 = vunpack.c.l.b16 %v941
    %v1644 = vunpack.c.h.b16 %v941
    %v1645 = vunpack.c.l.b16 %v942
    %v1646 = vunpack.c.h.b16 %v942
    %v1647 = vunpack.c.l.b16 %v943
    %v1648 = vunpack.c.h.b16 %v943
    %v1649 = vunpack.c.l.b16 %v944
    %v1650 = vunpack.c.h.b16 %v944
    %v1651 = vunpack.c.l.b16 %v945
    %v1652 = vunpack.c.h.b16 %v945
    %v1653 = vunpack.c.l.b16 %v946
    %v1654 = vunpack.c.h.b16 %v946
    %v1655 = vunpack.c.l.b16 %v947
    %v1656 = vunpack.c.h.b16 %v947
    %v1657 = vunpack.c.l.b16 %v948
    %v1658 = vunpack.c.h.b16 %v948
    %v1659 = vunpack.c.l.b16 %v949
    %v1660 = vunpack.c.h.b16 %v949
    %v1661 = vunpack.c.l.b16 %v950
    %v1662 = vunpack.c.h.b16 %v950
    %v1663 = vunpack.c.l.b16 %v951
    %v1664 = vunpack.c.h.b16 %v951
    %v1665 = vunpack.c.l.b16 %v952
    %v1666 = vunpack.c.h.b16 %v952
    %v1667 = vunpack.c.l.b16 %v953
    %v1668 = vunpack.c.h.b16 %v953
    %v1669 = vunpack.c.l.b16 %v954
    %v1670 = vunpack.c.h.b16 %v954
    %v1671 = vunpack.c.l.b16 %v955
    %v1672 = vunpack.c.h.b16 %v955
    %v1673 = vunpack.c.l.b16 %v956
    %v1674 = vunpack.c.h.b16 %v956
    %v1675 = vunpack.c.l.b16 %v957
    %v1676 = vunpack.c.h.b16 %v957
    %v1677 = vunpack.c.l.b16 %v958
    %v1678 = vunpack.c.h.b16 %v958
    %v1679 = vunpack.c.l.b16 %v959
    %v1680 = vunpack.c.h.b16 %v959
    %v1681 = vunpack.c.l.b16 %v960
    %v1682 = vunpack.c.h.b16 %v960
    %v1683 = vunpack.c.l.b16 %v961
    %v1684 = vunpack.c.h.b16 %v961
    %v1685 = vunpack.c.l.b16 %v962
    %v1686 = vunpack.c.h.b16 %v962
    %v1687 = vunpack.c.l.b16 %v963
    %v1688 = vunpack.c.h.b16 %v963
    %v1689 = vunpack.c.l.b16 %v964
    %v1690 = vunpack.c.h.b16 %v964
    %v1691 = vunpack.c.l.b16 %v965
    %v1692 = vunpack.c.h.b16 %v965
    %v1693 = vunpack.c.l.b16 %v966
    %v1694 = vunpack.c.h.b16 %v966
    %v1695 = vunpack.c.l.b16 %v967
    %v1696 = vunpack.c.h.b16 %v967
    %v1697 = vunpack.c.l.b16 %v968
    %v1698 = vunpack.c.h.b16 %v968
    %v1699 = vunpack.c.l.b16 %v969
    %v1700 = vunpack.c.h.b16 %v969
    %v1701 = vunpack.c.l.b16 %v970
    %v1702 = vunpack.c.h.b16 %v970
    %v1703 = vunpack.c.l.b16 %v971
    %v1704 = vunpack.c.h.b16 %v971
    %v1705 = vunpack.c.l.b16 %v972
    %v1706 = vunpack.c.h.b16 %v972
    %v1707 = vunpack.c.l.b16 %v973
    %v1708 = vunpack.c.h.b16 %v973
    %v1709 = vunpack.c.l.b16 %v974
    %v1710 = vunpack.c.h.b16 %v974
    %v1711 = vunpack.c.l.b16 %v975
    %v1712 = vunpack.c.h.b16 %v975
    %v1713 = vunpack.c.l.b16 %v976
    %v1714 = vunpack.c.h.b16 %v976
    %v1715 = vunpack.c.l.b16 %v977
    %v1716 = vunpack.c.h.b16 %v977
    %v1717 = vunpack.c.l.b16 %v978
    %v1718 = vunpack.c.h.b16 %v978
    %v1719 = vunpack.c.l.b16 %v979
    %v1720 = vunpack.c.h.b16 %v979
    %v1721 = vunpack.c.l.b16 %v980
    %v1722 = vunpack.c.h.b16 %v980
    %v1723 = vunpack.c.l.b16 %v981
    %v1724 = vunpack.c.h.b16 %v981
    %v1725 = vunpack.c.l.b16 %v982
    %v1726 = vunpack.c.h.b16 %v982
    %v1727 = vunpack.c.l.b16 %v983
    %v1728 = vunpack.c.h.b16 %v983
    %v1729 = vunpack.c.l.b16 %v984
    %v1730 = vunpack.c.h.b16 %v984
    %v1731 = vunpack.c.l.b16 %v985
    %v1732 = vunpack.c.h.b16 %v985
    %v1733 = vunpack.c.l.b16 %v986
    %v1734 = vunpack.c.h.b16 %v986
    %v1735 = vunpack.c.l.b16 %v987
    %v1736 = vunpack.c.h.b16 %v987
    %v1737 = vunpack.c.l.b16 %v988
    %v1738 = vunpack.c.h.b16 %v988
    %v1739 = vunpack.c.l.b16 %v989
    %v1740 = vunpack.c.h.b16 %v989
    %v1741 = vunpack.c.l.b16 %v990
    %v1742 = vunpack.c.h.b16 %v990
    %v1743 = vunpack.c.l.b16 %v991
    %v1744 = vunpack.c.h.b16 %v991
    %v1745 = vunpack.c.l.b16 %v992
    %v1746 = vunpack.c.h.b16 %v992
    %v1747 = vunpack.c.l.b16 %v993
    %v1748 = vunpack.c.h.b16 %v993
    %v1749 = vunpack.c.l.b16 %v994
    %v1750 = vunpack.c.h.b16 %v994
    %v1751 = vunpack.c.l.b16 %v995
    %v1752 = vunpack.c.h.b16 %v995
    %v1753 = vunpack.c.l.b16 %v996
    %v1754 = vunpack.c.h.b16 %v996
    %v1755 = vunpack.c.l.b16 %v997
    %v1756 = vunpack.c.h.b16 %v997
    %v1757 = vunpack.c.l.b16 %v998
    %v1758 = vunpack.c.h.b16 %v998
    %v1759 = vunpack.c.l.b16 %v999
    %v1760 = vunpack.c.h.b16 %v999
    %v1761 = vunpack.c.l.b16 %v1000
    %v1762 = vunpack.c.h.b16 %v1000
    %v1763 = vunpack.c.l.b16 %v1001
    %v1764 = vunpack.c.h.b16 %v1001
    %v1765 = vunpack.c.l.b16 %v1002
    %v1766 = vunpack.c.h.b16 %v1002
    %v1767 = vunpack.c.l.b16 %v1003
    %v1768 = vunpack.c.h.b16 %v1003
    %v1769 = vunpack.c.l.b16 %v1004
    %v1770 = vunpack.c.h.b16 %v1004
    %v1771 = vunpack.c.l.b16 %v1005
    %v1772 = vunpack.c.h.b16 %v1005
    %v1773 = vunpack.c.l.b16 %v1006
    %v1774 = vunpack.c.h.b16 %v1006
    %v1775 = vunpack.c.l.b16 %v1007
    %v1776 = vunpack.c.h.b16 %v1007
    %v1777 = vunpack.c.l.b16 %v1008
    %v1778 = vunpack.c.h.b16 %v1008
    %v1779 = vunpack.c.l.b16 %v1009
    %v1780 = vunpack.c.h.b16 %v1009
    %v1781 = vunpack.c.l.b16 %v1010
    %v1782 = vunpack.c.h.b16 %v1010
    %v1783 = vunpack.c.l.b16 %v1011
    %v1784 = vunpack.c.h.b16 %v1011
    %v1785 = vunpack.c.l.b16 %v1012
    %v1786 = vunpack.c.h.b16 %v1012
    %v1787 = vunpack.c.l.b16 %v1013
    %v1788 = vunpack.c.h.b16 %v1013
    %v1789 = vunpack.c.l.b16 %v1014
    %v1790 = vunpack.c.h.b16 %v1014
    %v1791 = vunpack.c.l.b16 %v1015
    %v1792 = vunpack.c.h.b16 %v1015
    %v1793 = vunpack.c.l.b16 %v1016
    %v1794 = vunpack.c.h.b16 %v1016
    %v1795 = vunpack.c.l.b16 %v1017
    %v1796 = vunpack.c.h.b16 %v1017
    %v1797 = vunpack.c.l.b16 %v1018
    %v1798 = vunpack.c.h.b16 %v1018
    %v1799 = vunpack.c.l.b16 %v1019
    %v1800 = vunpack.c.h.b16 %v1019
    %v1801 = vunpack.c.l.b16 %v1020
    %v1802 = vunpack.c.h.b16 %v1020
    %v1803 = vunpack.c.l.b16 %v1021
    %v1804 = vunpack.c.h.b16 %v1021
    %v1805 = vunpack.c.l.b16 %v1022
    %v1806 = vunpack.c.h.b16 %v1022
    %v1807 = vunpack.c.l.b16 %v1023
    %v1808 = vunpack.c.h.b16 %v1023
    %v1809 = vunpack.c.l.b16 %v1024
    %v1810 = vunpack.c.h.b16 %v1024
    %v1811 = vpack.c.b16 %v1307, %v1299
    %v1812 = vpack.c.b16 %v1308, %v1300
    %v1813 = vpack.c.b16 %v1309, %v1301
    %v1814 = vpack.c.b16 %v1310, %v1302
    %v1815 = vpack.c.b16 %v1311, %v1303
    %v1816 = vpack.c.b16 %v1312, %v1304
    %v1817 = vpack.c.b16 %v1313, %v1305
    %v1818 = vpack.c.b16 %v1314, %v1306
    %v1819 = vpack.c.b16 %v1323, %v1315
    %v1820 = vpack.c.b16 %v1324, %v1316
    %v1821 = vpack.c.b16 %v1325, %v1317
    %v1822 = vpack.c.b16 %v1326, %v1318
    %v1823 = vpack.c.b16 %v1327, %v1319
    %v1824 = vpack.c.b16 %v1328, %v1320
    %v1825 = vpack.c.b16 %v1329, %v1321
    %v1826 = vpack.c.b16 %v1330, %v1322
    %v1827 = vpack.c.b16 %v1339, %v1331
    %v1828 = vpack.c.b16 %v1340, %v1332
    %v1829 = vpack.c.b16 %v1341, %v1333
    %v1830 = vpack.c.b16 %v1342, %v1334
    %v1831 = vpack.c.b16 %v1343, %v1335
    %v1832 = vpack.c.b16 %v1344, %v1336
    %v1833 = vpack.c.b16 %v1345, %v1337
    %v1834 = vpack.c.b16 %v1346, %v1338
    %v1835 = vpack.c.b16 %v1355, %v1347
    %v1836 = vpack.c.b16 %v1356, %v1348
    %v1837 = vpack.c.b16 %v1357, %v1349
    %v1838 = vpack.c.b16 %v1358, %v1350
    %v1839 = vpack.c.b16 %v1359, %v1351
    %v1840 = vpack.c.b16 %v1360, %v1352
    %v1841 = vpack.c.b16 %v1361, %v1353
    %v1842 = vpack.c.b16 %v1362, %v1354
    %v1843 = vpack.c.b16 %v1371, %v1363
    %v1844 = vpack.c.b16 %v1372, %v1364
    %v1845 = vpack.c.b16 %v1373, %v1365
    %v1846 = vpack.c.b16 %v1374, %v1366
    %v1847 = vpack.c.b16 %v1375, %v1367
    %v1848 = vpack.c.b16 %v1376, %v1368
    %v1849 = vpack.c.b16 %v1377, %v1369
    %v1850 = vpack.c.b16 %v1378, %v1370
    %v1851 = vpack.c.b16 %v1387, %v1379
    %v1852 = vpack.c.b16 %v1388, %v1380
    %v1853 = vpack.c.b16 %v1389, %v1381
    %v1854 = vpack.c.b16 %v1390, %v1382
    %v1855 = vpack.c.b16 %v1391, %v1383
    %v1856 = vpack.c.b16 %v1392, %v1384
    %v1857 = vpack.c.b16 %v1393, %v1385
    %v1858 = vpack.c.b16 %v1394, %v1386
    %v1859 = vpack.c.b16 %v1403, %v1395
    %v1860 = vpack.c.b16 %v1404, %v1396
    %v1861 = vpack.c.b16 %v1405, %v1397
    %v1862 = vpack.c.b16 %v1406, %v1398
    %v1863 = vpack.c.b16 %v1407, %v1399
    %v1864 = vpack.c.b16 %v1408, %v1400
    %v1865 = vpack.c.b16 %v1409, %v1401
    %v1866 = vpack.c.b16 %v1410, %v1402
    %v1867 = vpack.c.b16 %v1419, %v1411
    %v1868 = vpack.c.b16 %v1420, %v1412
    %v1869 = vpack.c.b16 %v1421, %v1413
    %v1870 = vpack.c.b16 %v1422, %v1414
    %v1871 = vpack.c.b16 %v1423, %v1415
    %v1872 = vpack.c.b16 %v1424, %v1416
    %v1873 = vpack.c.b16 %v1425, %v1417
    %v1874 = vpack.c.b16 %v1426, %v1418
    %v1875 = vpack.c.b16 %v1435, %v1427
    %v1876 = vpack.c.b16 %v1436, %v1428
    %v1877 = vpack.c.b16 %v1437, %v1429
    %v1878 = vpack.c.b16 %v1438, %v1430
    %v1879 = vpack.c.b16 %v1439, %v1431
    %v1880 = vpack.c.b16 %v1440, %v1432
    %v1881 = vpack.c.b16 %v1441, %v1433
    %v1882 = vpack.c.b16 %v1442, %v1434
    %v1883 = vpack.c.b16 %v1451, %v1443
    %v1884 = vpack.c.b16 %v1452, %v1444
    %v1885 = vpack.c.b16 %v1453, %v1445
    %v1886 = vpack.c.b16 %v1454, %v1446
    %v1887 = vpack.c.b16 %v1455, %v1447
    %v1888 = vpack.c.b16 %v1456, %v1448
    %v1889 = vpack.c.b16 %v1457, %v1449
    %v1890 = vpack.c.b16 %v1458, %v1450
    %v1891 = vpack.c.b16 %v1467, %v1459
    %v1892 = vpack.c.b16 %v1468, %v1460
    %v1893 = vpack.c.b16 %v1469, %v1461
    %v1894 = vpack.c.b16 %v1470, %v1462
    %v1895 = vpack.c.b16 %v1471, %v1463
    %v1896 = vpack.c.b16 %v1472, %v1464
    %v1897 = vpack.c.b16 %v1473, %v1465
    %v1898 = vpack.c.b16 %v1474, %v1466
    %v1899 = vpack.c.b16 %v1483, %v1475
    %v1900 = vpack.c.b16 %v1484, %v1476
    %v1901 = vpack.c.b16 %v1485, %v1477
    %v1902 = vpack.c.b16 %v1486, %v1478
    %v1903 = vpack.c.b16 %v1487, %v1479
    %v1904 = vpack.c.b16 %v1488, %v1480
    %v1905 = vpack.c.b16 %v1489, %v1481
    %v1906 = vpack.c.b16 %v1490, %v1482
    %v1907 = vpack.c.b16 %v1499, %v1491
    %v1908 = vpack.c.b16 %v1500, %v1492
    %v1909 = vpack.c.b16 %v1501, %v1493
    %v1910 = vpack.c.b16 %v1502, %v1494
    %v1911 = vpack.c.b16 %v1503, %v1495
    %v1912 = vpack.c.b16 %v1504, %v1496
    %v1913 = vpack.c.b16 %v1505, %v1497
    %v1914 = vpack.c.b16 %v1506, %v1498
    %v1915 = vpack.c.b16 %v1515, %v1507
    %v1916 = vpack.c.b16 %v1516, %v1508
    %v1917 = vpack.c.b16 %v1517, %v1509
    %v1918 = vpack.c.b16 %v1518, %v1510
    %v1919 = vpack.c.b16 %v1519, %v1511
    %v1920 = vpack.c.b16 %v1520, %v1512
    %v1921 = vpack.c.b16 %v1521, %v1513
    %v1922 = vpack.c.b16 %v1522, %v1514
    %v1923 = vpack.c.b16 %v1531, %v1523
    %v1924 = vpack.c.b16 %v1532, %v1524
    %v1925 = vpack.c.b16 %v1533, %v1525
    %v1926 = vpack.c.b16 %v1534, %v1526
    %v1927 = vpack.c.b16 %v1535, %v1527
    %v1928 = vpack.c.b16 %v1536, %v1528
    %v1929 = vpack.c.b16 %v1537, %v1529
    %v1930 = vpack.c.b16 %v1538, %v1530
    %v1931 = vpack.c.b16 %v1547, %v1539
    %v1932 = vpack.c.b16 %v1548, %v1540
    %v1933 = vpack.c.b16 %v1549, %v1541
    %v1934 = vpack.c.b16 %v1550, %v1542
    %v1935 = vpack.c.b16 %v1551, %v1543
    %v1936 = vpack.c.b16 %v1552, %v1544
    %v1937 = vpack.c.b16 %v1553, %v1545
    %v1938 = vpack.c.b16 %v1554, %v1546
    %v1939 = vpack.c.b16 %v1563, %v1555
    %v1940 = vpack.c.b16 %v1564, %v1556
    %v1941 = vpack.c.b16 %v1565, %v1557
    %v1942 = vpack.c.b16 %v1566, %v1558
    %v1943 = vpack.c.b16 %v1567, %v1559
    %v1944 = vpack.c.b16 %v1568, %v1560
    %v1945 = vpack.c.b16 %v1569, %v1561
    %v1946 = vpack.c.b16 %v1570, %v1562
    %v1947 = vpack.c.b16 %v1579, %v1571
    %v1948 = vpack.c.b16 %v1580, %v1572
    %v1949 = vpack.c.b16 %v1581, %v1573
    %v1950 = vpack.c.b16 %v1582, %v1574
    %v1951 = vpack.c.b16 %v1583, %v1575
    %v1952 = vpack.c.b16 %v1584, %v1576
    %v1953 = vpack.c.b16 %v1585, %v1577
    %v1954 = vpack.c.b16 %v1586, %v1578
    %v1955 = vpack.c.b16 %v1595, %v1587
    %v1956 = vpack.c.b16 %v1596, %v1588
    %v1957 = vpack.c.b16 %v1597, %v1589
    %v1958 = vpack.c.b16 %v1598, %v1590
    %v1959 = vpack.c.b16 %v1599, %v1591
    %v1960 = vpack.c.b16 %v1600, %v1592
    %v1961 = vpack.c.b16 %v1601, %v1593
    %v1962 = vpack.c.b16 %v1602, %v1594
    %v1963 = vpack.c.b16 %v1611, %v1603
    %v1964 = vpack.c.b16 %v1612, %v1604
    %v1965 = vpack.c.b16 %v1613, %v1605
    %v1966 = vpack.c.b16 %v1614, %v1606
    %v1967 = vpack.c.b16 %v1615, %v1607
    %v1968 = vpack.c.b16 %v1616, %v1608
    %v1969 = vpack.c.b16 %v1617, %v1609
    %v1970 = vpack.c.b16 %v1618, %v1610
    %v1971 = vpack.c.b16 %v1627, %v1619
    %v1972 = vpack.c.b16 %v1628, %v1620
    %v1973 = vpack.c.b16 %v1629, %v1621
    %v1974 = vpack.c.b16 %v1630, %v1622
    %v1975 = vpack.c.b16 %v1631, %v1623
    %v1976 = vpack.c.b16 %v1632, %v1624
    %v1977 = vpack.c.b16 %v1633, %v1625
    %v1978 = vpack.c.b16 %v1634, %v1626
    %v1979 = vpack.c.b16 %v1643, %v1635
    %v1980 = vpack.c.b16 %v1644, %v1636
    %v1981 = vpack.c.b16 %v1645, %v1637
    %v1982 = vpack.c.b16 %v1646, %v1638
    %v1983 = vpack.c.b16 %v1647, %v1639
    %v1984 = vpack.c.b16 %v1648, %v1640
    %v1985 = vpack.c.b16 %v1649, %v1641
    %v1986 = vpack.c.b16 %v1650, %v1642
    %v1987 = vpack.c.b16 %v1659, %v1651
    %v1988 = vpack.c.b16 %v1660, %v1652
    %v1989 = vpack.c.b16 %v1661, %v1653
    %v1990 = vpack.c.b16 %v1662, %v1654
    %v1991 = vpack.c.b16 %v1663, %v1655
    %v1992 = vpack.c.b16 %v1664, %v1656
    %v1993 = vpack.c.b16 %v1665, %v1657
    %v1994 = vpack.c.b16 %v1666, %v1658
    %v1995 = vpack.c.b16 %v1675, %v1667
    %v1996 = vpack.c.b16 %v1676, %v1668
    %v1997 = vpack.c.b16 %v1677, %v1669
    %v1998 = vpack.c.b16 %v1678, %v1670
    %v1999 = vpack.c.b16 %v1679, %v1671
    %v2000 = vpack.c.b16 %v1680, %v1672
    %v2001 = vpack.c.b16 %v1681, %v1673
    %v2002 = vpack.c.b16 %v1682, %v1674
    %v2003 = vpack.c.b16 %v1691, %v1683
    %v2004 = vpack.c.b16 %v1692, %v1684
    %v2005 = vpack.c.b16 %v1693, %v1685
    %v2006 = vpack.c.b16 %v1694, %v1686
    %v2007 = vpack.c.b16 %v1695, %v1687
    %v2008 = vpack.c.b16 %v1696, %v1688
    %v2009 = vpack.c.b16 %v1697, %v1689
    %v2010 = vpack.c.b16 %v1698, %v1690
    %v2011 = vpack.c.b16 %v1707, %v1699
    %v2012 = vpack.c.b16 %v1708, %v1700
    %v2013 = vpack.c.b16 %v1709, %v1701
    %v2014 = vpack.c.b16 %v1710, %v1702
    %v2015 = vpack.c.b16 %v1711, %v1703
    %v2016 = vpack.c.b16 %v1712, %v1704
    %v2017 = vpack.c.b16 %v1713, %v1705
    %v2018 = vpack.c.b16 %v1714, %v1706
    %v2019 = vpack.c.b16 %v1723, %v1715
    %v2020 = vpack.c.b16 %v1724, %v1716
    %v2021 = vpack.c.b16 %v1725, %v1717
    %v2022 = vpack.c.b16 %v1726, %v1718
    %v2023 = vpack.c.b16 %v1727, %v1719
    %v2024 = vpack.c.b16 %v1728, %v1720
    %v2025 = vpack.c.b16 %v1729, %v1721
    %v2026 = vpack.c.b16 %v1730, %v1722
    %v2027 = vpack.c.b16 %v1739, %v1731
    %v2028 = vpack.c.b16 %v1740, %v1732
    %v2029 = vpack.c.b16 %v1741, %v1733
    %v2030 = vpack.c.b16 %v1742, %v1734
    %v2031 = vpack.c.b16 %v1743, %v1735
    %v2032 = vpack.c.b16 %v1744, %v1736
    %v2033 = vpack.c.b16 %v1745, %v1737
    %v2034 = vpack.c.b16 %v1746, %v1738
    %v2035 = vpack.c.b16 %v1755, %v1747
    %v2036 = vpack.c.b16 %v1756, %v1748
    %v2037 = vpack.c.b16 %v1757, %v1749
    %v2038 = vpack.c.b16 %v1758, %v1750
    %v2039 = vpack.c.b16 %v1759, %v1751
    %v2040 = vpack.c.b16 %v1760, %v1752
    %v2041 = vpack.c.b16 %v1761, %v1753
    %v2042 = vpack.c.b16 %v1762, %v1754
    %v2043 = vpack.c.b16 %v1771, %v1763
    %v2044 = vpack.c.b16 %v1772, %v1764
    %v2045 = vpack.c.b16 %v1773, %v1765
    %v2046 = vpack.c.b16 %v1774, %v1766
    %v2047 = vpack.c.b16 %v1775, %v1767
    %v2048 = vpack.c.b16 %v1776, %v1768
    %v2049 = vpack.c.b16 %v1777, %v1769
    %v2050 = vpack.c.b16 %v1778, %v1770
    %v2051 = vpack.c.b16 %v1787, %v1779
    %v2052 = vpack.c.b16 %v1788, %v1780
    %v2053 = vpack.c.b16 %v1789, %v1781
    %v2054 = vpack.c.b16 %v1790, %v1782
    %v2055 = vpack.c.b16 %v1791, %v1783
    %v2056 = vpack.c.b16 %v1792, %v1784
    %v2057 = vpack.c.b16 %v1793, %v1785
    %v2058 = vpack.c.b16 %v1794, %v1786
    %v2059 = vpack.c.b16 %v1803, %v1795
    %v2060 = vpack.c.b16 %v1804, %v1796
    %v2061 = vpack.c.b16 %v1805, %v1797
    %v2062 = vpack.c.b16 %v1806, %v1798
    %v2063 = vpack.c.b16 %v1807, %v1799
    %v2064 = vpack.c.b16 %v1808, %v1800
    %v2065 = vpack.c.b16 %v1809, %v1801
    %v2066 = vpack.c.b16 %v1810, %v1802
    %2323 = vmatpush.bf16.msra.mxu0 %v1867
    %2324 = vmatpush.bf16.msra.mxu0 %v1859
    %2325 = vmatpush.bf16.msra.mxu0 %v1851
    %2326 = vmatpush.bf16.msra.mxu0 %v1843
    %2327 = vmatpush.bf16.msra.mxu0 %v1835
    %2328 = vmatpush.bf16.msra.mxu0 %v1827
    %2329 = vmatpush.bf16.msra.mxu0 %v1819
    %2330 = vmatpush.bf16.msra.mxu0 %v1811
    %2331 = vmatmul.bf16.gmra.mxu0 %v765
    %v2332 = vpop.f32.mrf.mxu0
    %v2333 = vadd.f32 %v1027, %v2332
    %v2334 = vpop.f32.mrf.mxu0
    %v2335 = vadd.f32 %v1027, %v2334
    %2336 = vdwg.mxu0
    %2337 = vmatpush.bf16.msra.mxu0 %v1931
    %2338 = vmatpush.bf16.msra.mxu0 %v1923
    %2339 = vmatpush.bf16.msra.mxu0 %v1915
    %2340 = vmatpush.bf16.msra.mxu0 %v1907
    %2341 = vmatpush.bf16.msra.mxu0 %v1899
    %2342 = vmatpush.bf16.msra.mxu0 %v1891
    %2343 = vmatpush.bf16.msra.mxu0 %v1883
    %2344 = vmatpush.bf16.msra.mxu0 %v1875
    %2345 = vmatmul.bf16.gmra.mxu0 %v766
    %v2346 = vpop.f32.mrf.mxu0
    %v2347 = vadd.f32 %v2333, %v2346
    %v2348 = vpop.f32.mrf.mxu0
    %v2349 = vadd.f32 %v2335, %v2348
    %2350 = vdwg.mxu0
    %2351 = vmatpush.bf16.msra.mxu0 %v1995
    %2352 = vmatpush.bf16.msra.mxu0 %v1987
    %2353 = vmatpush.bf16.msra.mxu0 %v1979
    %2354 = vmatpush.bf16.msra.mxu0 %v1971
    %2355 = vmatpush.bf16.msra.mxu0 %v1963
    %2356 = vmatpush.bf16.msra.mxu0 %v1955
    %2357 = vmatpush.bf16.msra.mxu0 %v1947
    %2358 = vmatpush.bf16.msra.mxu0 %v1939
    %2359 = vmatmul.bf16.gmra.mxu0 %v767
    %v2360 = vpop.f32.mrf.mxu0
    %v2361 = vadd.f32 %v2347, %v2360
    %v2362 = vpop.f32.mrf.mxu0
    %v2363 = vadd.f32 %v2349, %v2362
    %2364 = vdwg.mxu0
    %2365 = vmatpush.bf16.msra.mxu0 %v2059
    %2366 = vmatpush.bf16.msra.mxu0 %v2051
    %2367 = vmatpush.bf16.msra.mxu0 %v2043
    %2368 = vmatpush.bf16.msra.mxu0 %v2035
    %2369 = vmatpush.bf16.msra.mxu0 %v2027
    %2370 = vmatpush.bf16.msra.mxu0 %v2019
    %2371 = vmatpush.bf16.msra.mxu0 %v2011
    %2372 = vmatpush.bf16.msra.mxu0 %v2003
    %2373 = vmatmul.bf16.gmra.mxu0 %v768
    %v2374 = vpop.f32.mrf.mxu0
    %v2375 = vadd.f32 %v2361, %v2374
    %v2376 = vpop.f32.mrf.mxu0
    %v2377 = vadd.f32 %v2363, %v2376
    %2378 = vdwg.mxu0
    %2379 = vmatpush.bf16.msra.mxu0 %v1868
    %2380 = vmatpush.bf16.msra.mxu0 %v1860
    %2381 = vmatpush.bf16.msra.mxu0 %v1852
    %2382 = vmatpush.bf16.msra.mxu0 %v1844
    %2383 = vmatpush.bf16.msra.mxu0 %v1836
    %2384 = vmatpush.bf16.msra.mxu0 %v1828
    %2385 = vmatpush.bf16.msra.mxu0 %v1820
    %2386 = vmatpush.bf16.msra.mxu0 %v1812
    %2387 = vmatmul.bf16.gmra.mxu0 %v765
    %v2388 = vpop.f32.mrf.mxu0
    %v2389 = vadd.f32 %v1028, %v2388
    %v2390 = vpop.f32.mrf.mxu0
    %v2391 = vadd.f32 %v1028, %v2390
    %2392 = vdwg.mxu0
    %2393 = vmatpush.bf16.msra.mxu0 %v1932
    %2394 = vmatpush.bf16.msra.mxu0 %v1924
    %2395 = vmatpush.bf16.msra.mxu0 %v1916
    %2396 = vmatpush.bf16.msra.mxu0 %v1908
    %2397 = vmatpush.bf16.msra.mxu0 %v1900
    %2398 = vmatpush.bf16.msra.mxu0 %v1892
    %2399 = vmatpush.bf16.msra.mxu0 %v1884
    %2400 = vmatpush.bf16.msra.mxu0 %v1876
    %2401 = vmatmul.bf16.gmra.mxu0 %v766
    %v2402 = vpop.f32.mrf.mxu0
    %v2403 = vadd.f32 %v2389, %v2402
    %v2404 = vpop.f32.mrf.mxu0
    %v2405 = vadd.f32 %v2391, %v2404
    %2406 = vdwg.mxu0
    %2407 = vmatpush.bf16.msra.mxu0 %v1996
    %2408 = vmatpush.bf16.msra.mxu0 %v1988
    %2409 = vmatpush.bf16.msra.mxu0 %v1980
    %2410 = vmatpush.bf16.msra.mxu0 %v1972
    %2411 = vmatpush.bf16.msra.mxu0 %v1964
    %2412 = vmatpush.bf16.msra.mxu0 %v1956
    %2413 = vmatpush.bf16.msra.mxu0 %v1948
    %2414 = vmatpush.bf16.msra.mxu0 %v1940
    %2415 = vmatmul.bf16.gmra.mxu0 %v767
    %v2416 = vpop.f32.mrf.mxu0
    %v2417 = vadd.f32 %v2403, %v2416
    %v2418 = vpop.f32.mrf.mxu0
    %v2419 = vadd.f32 %v2405, %v2418
    %2420 = vdwg.mxu0
    %2421 = vmatpush.bf16.msra.mxu0 %v2060
    %2422 = vmatpush.bf16.msra.mxu0 %v2052
    %2423 = vmatpush.bf16.msra.mxu0 %v2044
    %2424 = vmatpush.bf16.msra.mxu0 %v2036
    %2425 = vmatpush.bf16.msra.mxu0 %v2028
    %2426 = vmatpush.bf16.msra.mxu0 %v2020
    %2427 = vmatpush.bf16.msra.mxu0 %v2012
    %2428 = vmatpush.bf16.msra.mxu0 %v2004
    %2429 = vmatmul.bf16.gmra.mxu0 %v768
    %v2430 = vpop.f32.mrf.mxu0
    %v2431 = vadd.f32 %v2417, %v2430
    %v2432 = vpop.f32.mrf.mxu0
    %v2433 = vadd.f32 %v2419, %v2432
    %2434 = vdwg.mxu0
    %2435 = vmatpush.bf16.msra.mxu0 %v1869
    %2436 = vmatpush.bf16.msra.mxu0 %v1861
    %2437 = vmatpush.bf16.msra.mxu0 %v1853
    %2438 = vmatpush.bf16.msra.mxu0 %v1845
    %2439 = vmatpush.bf16.msra.mxu0 %v1837
    %2440 = vmatpush.bf16.msra.mxu0 %v1829
    %2441 = vmatpush.bf16.msra.mxu0 %v1821
    %2442 = vmatpush.bf16.msra.mxu0 %v1813
    %2443 = vmatmul.bf16.gmra.mxu0 %v765
    %v2444 = vpop.f32.mrf.mxu0
    %v2445 = vadd.f32 %v1029, %v2444
    %v2446 = vpop.f32.mrf.mxu0
    %v2447 = vadd.f32 %v1029, %v2446
    %2448 = vdwg.mxu0
    %2449 = vmatpush.bf16.msra.mxu0 %v1933
    %2450 = vmatpush.bf16.msra.mxu0 %v1925
    %2451 = vmatpush.bf16.msra.mxu0 %v1917
    %2452 = vmatpush.bf16.msra.mxu0 %v1909
    %2453 = vmatpush.bf16.msra.mxu0 %v1901
    %2454 = vmatpush.bf16.msra.mxu0 %v1893
    %2455 = vmatpush.bf16.msra.mxu0 %v1885
    %2456 = vmatpush.bf16.msra.mxu0 %v1877
    %2457 = vmatmul.bf16.gmra.mxu0 %v766
    %v2458 = vpop.f32.mrf.mxu0
    %v2459 = vadd.f32 %v2445, %v2458
    %v2460 = vpop.f32.mrf.mxu0
    %v2461 = vadd.f32 %v2447, %v2460
    %2462 = vdwg.mxu0
    %2463 = vmatpush.bf16.msra.mxu0 %v1997
    %2464 = vmatpush.bf16.msra.mxu0 %v1989
    %2465 = vmatpush.bf16.msra.mxu0 %v1981
    %2466 = vmatpush.bf16.msra.mxu0 %v1973
    %2467 = vmatpush.bf16.msra.mxu0 %v1965
    %2468 = vmatpush.bf16.msra.mxu0 %v1957
    %2469 = vmatpush.bf16.msra.mxu0 %v1949
    %2470 = vmatpush.bf16.msra.mxu0 %v1941
    %2471 = vmatmul.bf16.gmra.mxu0 %v767
    %v2472 = vpop.f32.mrf.mxu0
    %v2473 = vadd.f32 %v2459, %v2472
    %v2474 = vpop.f32.mrf.mxu0
    %v2475 = vadd.f32 %v2461, %v2474
    %2476 = vdwg.mxu0
    %2477 = vmatpush.bf16.msra.mxu0 %v2061
    %2478 = vmatpush.bf16.msra.mxu0 %v2053
    %2479 = vmatpush.bf16.msra.mxu0 %v2045
    %2480 = vmatpush.bf16.msra.mxu0 %v2037
    %2481 = vmatpush.bf16.msra.mxu0 %v2029
    %2482 = vmatpush.bf16.msra.mxu0 %v2021
    %2483 = vmatpush.bf16.msra.mxu0 %v2013
    %2484 = vmatpush.bf16.msra.mxu0 %v2005
    %2485 = vmatmul.bf16.gmra.mxu0 %v768
    %v2486 = vpop.f32.mrf.mxu0
    %v2487 = vadd.f32 %v2473, %v2486
    %v2488 = vpop.f32.mrf.mxu0
    %v2489 = vadd.f32 %v2475, %v2488
    %2490 = vdwg.mxu0
    %2491 = vmatpush.bf16.msra.mxu0 %v1870
    %2492 = vmatpush.bf16.msra.mxu0 %v1862
    %2493 = vmatpush.bf16.msra.mxu0 %v1854
    %2494 = vmatpush.bf16.msra.mxu0 %v1846
    %2495 = vmatpush.bf16.msra.mxu0 %v1838
    %2496 = vmatpush.bf16.msra.mxu0 %v1830
    %2497 = vmatpush.bf16.msra.mxu0 %v1822
    %2498 = vmatpush.bf16.msra.mxu0 %v1814
    %2499 = vmatmul.bf16.gmra.mxu0 %v765
    %v2500 = vpop.f32.mrf.mxu0
    %v2501 = vadd.f32 %v1030, %v2500
    %v2502 = vpop.f32.mrf.mxu0
    %v2503 = vadd.f32 %v1030, %v2502
    %2504 = vdwg.mxu0
    %2505 = vmatpush.bf16.msra.mxu0 %v1934
    %2506 = vmatpush.bf16.msra.mxu0 %v1926
    %2507 = vmatpush.bf16.msra.mxu0 %v1918
    %2508 = vmatpush.bf16.msra.mxu0 %v1910
    %2509 = vmatpush.bf16.msra.mxu0 %v1902
    %2510 = vmatpush.bf16.msra.mxu0 %v1894
    %2511 = vmatpush.bf16.msra.mxu0 %v1886
    %2512 = vmatpush.bf16.msra.mxu0 %v1878
    %2513 = vmatmul.bf16.gmra.mxu0 %v766
    %v2514 = vpop.f32.mrf.mxu0
    %v2515 = vadd.f32 %v2501, %v2514
    %v2516 = vpop.f32.mrf.mxu0
    %v2517 = vadd.f32 %v2503, %v2516
    %2518 = vdwg.mxu0
    %2519 = vmatpush.bf16.msra.mxu0 %v1998
    %2520 = vmatpush.bf16.msra.mxu0 %v1990
    %2521 = vmatpush.bf16.msra.mxu0 %v1982
    %2522 = vmatpush.bf16.msra.mxu0 %v1974
    %2523 = vmatpush.bf16.msra.mxu0 %v1966
    %2524 = vmatpush.bf16.msra.mxu0 %v1958
    %2525 = vmatpush.bf16.msra.mxu0 %v1950
    %2526 = vmatpush.bf16.msra.mxu0 %v1942
    %2527 = vmatmul.bf16.gmra.mxu0 %v767
    %v2528 = vpop.f32.mrf.mxu0
    %v2529 = vadd.f32 %v2515, %v2528
    %v2530 = vpop.f32.mrf.mxu0
    %v2531 = vadd.f32 %v2517, %v2530
    %2532 = vdwg.mxu0
    %2533 = vmatpush.bf16.msra.mxu0 %v2062
    %2534 = vmatpush.bf16.msra.mxu0 %v2054
    %2535 = vmatpush.bf16.msra.mxu0 %v2046
    %2536 = vmatpush.bf16.msra.mxu0 %v2038
    %2537 = vmatpush.bf16.msra.mxu0 %v2030
    %2538 = vmatpush.bf16.msra.mxu0 %v2022
    %2539 = vmatpush.bf16.msra.mxu0 %v2014
    %2540 = vmatpush.bf16.msra.mxu0 %v2006
    %2541 = vmatmul.bf16.gmra.mxu0 %v768
    %v2542 = vpop.f32.mrf.mxu0
    %v2543 = vadd.f32 %v2529, %v2542
    %v2544 = vpop.f32.mrf.mxu0
    %v2545 = vadd.f32 %v2531, %v2544
    %2546 = vdwg.mxu0
    %2547 = vmatpush.bf16.msra.mxu0 %v1871
    %2548 = vmatpush.bf16.msra.mxu0 %v1863
    %2549 = vmatpush.bf16.msra.mxu0 %v1855
    %2550 = vmatpush.bf16.msra.mxu0 %v1847
    %2551 = vmatpush.bf16.msra.mxu0 %v1839
    %2552 = vmatpush.bf16.msra.mxu0 %v1831
    %2553 = vmatpush.bf16.msra.mxu0 %v1823
    %2554 = vmatpush.bf16.msra.mxu0 %v1815
    %2555 = vmatmul.bf16.gmra.mxu0 %v765
    %v2556 = vpop.f32.mrf.mxu0
    %v2557 = vadd.f32 %v1031, %v2556
    %v2558 = vpop.f32.mrf.mxu0
    %v2559 = vadd.f32 %v1031, %v2558
    %2560 = vdwg.mxu0
    %2561 = vmatpush.bf16.msra.mxu0 %v1935
    %2562 = vmatpush.bf16.msra.mxu0 %v1927
    %2563 = vmatpush.bf16.msra.mxu0 %v1919
    %2564 = vmatpush.bf16.msra.mxu0 %v1911
    %2565 = vmatpush.bf16.msra.mxu0 %v1903
    %2566 = vmatpush.bf16.msra.mxu0 %v1895
    %2567 = vmatpush.bf16.msra.mxu0 %v1887
    %2568 = vmatpush.bf16.msra.mxu0 %v1879
    %2569 = vmatmul.bf16.gmra.mxu0 %v766
    %v2570 = vpop.f32.mrf.mxu0
    %v2571 = vadd.f32 %v2557, %v2570
    %v2572 = vpop.f32.mrf.mxu0
    %v2573 = vadd.f32 %v2559, %v2572
    %2574 = vdwg.mxu0
    %2575 = vmatpush.bf16.msra.mxu0 %v1999
    %2576 = vmatpush.bf16.msra.mxu0 %v1991
    %2577 = vmatpush.bf16.msra.mxu0 %v1983
    %2578 = vmatpush.bf16.msra.mxu0 %v1975
    %2579 = vmatpush.bf16.msra.mxu0 %v1967
    %2580 = vmatpush.bf16.msra.mxu0 %v1959
    %2581 = vmatpush.bf16.msra.mxu0 %v1951
    %2582 = vmatpush.bf16.msra.mxu0 %v1943
    %2583 = vmatmul.bf16.gmra.mxu0 %v767
    %v2584 = vpop.f32.mrf.mxu0
    %v2585 = vadd.f32 %v2571, %v2584
    %v2586 = vpop.f32.mrf.mxu0
    %v2587 = vadd.f32 %v2573, %v2586
    %2588 = vdwg.mxu0
    %2589 = vmatpush.bf16.msra.mxu0 %v2063
    %2590 = vmatpush.bf16.msra.mxu0 %v2055
    %2591 = vmatpush.bf16.msra.mxu0 %v2047
    %2592 = vmatpush.bf16.msra.mxu0 %v2039
    %2593 = vmatpush.bf16.msra.mxu0 %v2031
    %2594 = vmatpush.bf16.msra.mxu0 %v2023
    %2595 = vmatpush.bf16.msra.mxu0 %v2015
    %2596 = vmatpush.bf16.msra.mxu0 %v2007
    %2597 = vmatmul.bf16.gmra.mxu0 %v768
    %v2598 = vpop.f32.mrf.mxu0
    %v2599 = vadd.f32 %v2585, %v2598
    %v2600 = vpop.f32.mrf.mxu0
    %v2601 = vadd.f32 %v2587, %v2600
    %2602 = vdwg.mxu0
    %2603 = vmatpush.bf16.msra.mxu0 %v1872
    %2604 = vmatpush.bf16.msra.mxu0 %v1864
    %2605 = vmatpush.bf16.msra.mxu0 %v1856
    %2606 = vmatpush.bf16.msra.mxu0 %v1848
    %2607 = vmatpush.bf16.msra.mxu0 %v1840
    %2608 = vmatpush.bf16.msra.mxu0 %v1832
    %2609 = vmatpush.bf16.msra.mxu0 %v1824
    %2610 = vmatpush.bf16.msra.mxu0 %v1816
    %2611 = vmatmul.bf16.gmra.mxu0 %v765
    %v2612 = vpop.f32.mrf.mxu0
    %v2613 = vadd.f32 %v1032, %v2612
    %v2614 = vpop.f32.mrf.mxu0
    %v2615 = vadd.f32 %v1032, %v2614
    %2616 = vdwg.mxu0
    %2617 = vmatpush.bf16.msra.mxu0 %v1936
    %2618 = vmatpush.bf16.msra.mxu0 %v1928
    %2619 = vmatpush.bf16.msra.mxu0 %v1920
    %2620 = vmatpush.bf16.msra.mxu0 %v1912
    %2621 = vmatpush.bf16.msra.mxu0 %v1904
    %2622 = vmatpush.bf16.msra.mxu0 %v1896
    %2623 = vmatpush.bf16.msra.mxu0 %v1888
    %2624 = vmatpush.bf16.msra.mxu0 %v1880
    %2625 = vmatmul.bf16.gmra.mxu0 %v766
    %v2626 = vpop.f32.mrf.mxu0
    %v2627 = vadd.f32 %v2613, %v2626
    %v2628 = vpop.f32.mrf.mxu0
    %v2629 = vadd.f32 %v2615, %v2628
    %2630 = vdwg.mxu0
    %2631 = vmatpush.bf16.msra.mxu0 %v2000
    %2632 = vmatpush.bf16.msra.mxu0 %v1992
    %2633 = vmatpush.bf16.msra.mxu0 %v1984
    %2634 = vmatpush.bf16.msra.mxu0 %v1976
    %2635 = vmatpush.bf16.msra.mxu0 %v1968
    %2636 = vmatpush.bf16.msra.mxu0 %v1960
    %2637 = vmatpush.bf16.msra.mxu0 %v1952
    %2638 = vmatpush.bf16.msra.mxu0 %v1944
    %2639 = vmatmul.bf16.gmra.mxu0 %v767
    %v2640 = vpop.f32.mrf.mxu0
    %v2641 = vadd.f32 %v2627, %v2640
    %v2642 = vpop.f32.mrf.mxu0
    %v2643 = vadd.f32 %v2629, %v2642
    %2644 = vdwg.mxu0
    %2645 = vmatpush.bf16.msra.mxu0 %v2064
    %2646 = vmatpush.bf16.msra.mxu0 %v2056
    %2647 = vmatpush.bf16.msra.mxu0 %v2048
    %2648 = vmatpush.bf16.msra.mxu0 %v2040
    %2649 = vmatpush.bf16.msra.mxu0 %v2032
    %2650 = vmatpush.bf16.msra.mxu0 %v2024
    %2651 = vmatpush.bf16.msra.mxu0 %v2016
    %2652 = vmatpush.bf16.msra.mxu0 %v2008
    %2653 = vmatmul.bf16.gmra.mxu0 %v768
    %v2654 = vpop.f32.mrf.mxu0
    %v2655 = vadd.f32 %v2641, %v2654
    %v2656 = vpop.f32.mrf.mxu0
    %v2657 = vadd.f32 %v2643, %v2656
    %2658 = vdwg.mxu0
    %2659 = vmatpush.bf16.msra.mxu0 %v1873
    %2660 = vmatpush.bf16.msra.mxu0 %v1865
    %2661 = vmatpush.bf16.msra.mxu0 %v1857
    %2662 = vmatpush.bf16.msra.mxu0 %v1849
    %2663 = vmatpush.bf16.msra.mxu0 %v1841
    %2664 = vmatpush.bf16.msra.mxu0 %v1833
    %2665 = vmatpush.bf16.msra.mxu0 %v1825
    %2666 = vmatpush.bf16.msra.mxu0 %v1817
    %2667 = vmatmul.bf16.gmra.mxu0 %v765
    %v2668 = vpop.f32.mrf.mxu0
    %v2669 = vadd.f32 %v1033, %v2668
    %v2670 = vpop.f32.mrf.mxu0
    %v2671 = vadd.f32 %v1033, %v2670
    %2672 = vdwg.mxu0
    %2673 = vmatpush.bf16.msra.mxu0 %v1937
    %2674 = vmatpush.bf16.msra.mxu0 %v1929
    %2675 = vmatpush.bf16.msra.mxu0 %v1921
    %2676 = vmatpush.bf16.msra.mxu0 %v1913
    %2677 = vmatpush.bf16.msra.mxu0 %v1905
    %2678 = vmatpush.bf16.msra.mxu0 %v1897
    %2679 = vmatpush.bf16.msra.mxu0 %v1889
    %2680 = vmatpush.bf16.msra.mxu0 %v1881
    %2681 = vmatmul.bf16.gmra.mxu0 %v766
    %v2682 = vpop.f32.mrf.mxu0
    %v2683 = vadd.f32 %v2669, %v2682
    %v2684 = vpop.f32.mrf.mxu0
    %v2685 = vadd.f32 %v2671, %v2684
    %2686 = vdwg.mxu0
    %2687 = vmatpush.bf16.msra.mxu0 %v2001
    %2688 = vmatpush.bf16.msra.mxu0 %v1993
    %2689 = vmatpush.bf16.msra.mxu0 %v1985
    %2690 = vmatpush.bf16.msra.mxu0 %v1977
    %2691 = vmatpush.bf16.msra.mxu0 %v1969
    %2692 = vmatpush.bf16.msra.mxu0 %v1961
    %2693 = vmatpush.bf16.msra.mxu0 %v1953
    %2694 = vmatpush.bf16.msra.mxu0 %v1945
    %2695 = vmatmul.bf16.gmra.mxu0 %v767
    %v2696 = vpop.f32.mrf.mxu0
    %v2697 = vadd.f32 %v2683, %v2696
    %v2698 = vpop.f32.mrf.mxu0
    %v2699 = vadd.f32 %v2685, %v2698
    %2700 = vdwg.mxu0
    %2701 = vmatpush.bf16.msra.mxu0 %v2065
    %2702 = vmatpush.bf16.msra.mxu0 %v2057
    %2703 = vmatpush.bf16.msra.mxu0 %v2049
    %2704 = vmatpush.bf16.msra.mxu0 %v2041
    %2705 = vmatpush.bf16.msra.mxu0 %v2033
    %2706 = vmatpush.bf16.msra.mxu0 %v2025
    %2707 = vmatpush.bf16.msra.mxu0 %v2017
    %2708 = vmatpush.bf16.msra.mxu0 %v2009
    %2709 = vmatmul.bf16.gmra.mxu0 %v768
    %v2710 = vpop.f32.mrf.mxu0
    %v2711 = vadd.f32 %v2697, %v2710
    %v2712 = vpop.f32.mrf.mxu0
    %v2713 = vadd.f32 %v2699, %v2712
    %2714 = vdwg.mxu0
    %2715 = vmatpush.bf16.msra.mxu0 %v1874
    %2716 = vmatpush.bf16.msra.mxu0 %v1866
    %2717 = vmatpush.bf16.msra.mxu0 %v1858
    %2718 = vmatpush.bf16.msra.mxu0 %v1850
    %2719 = vmatpush.bf16.msra.mxu0 %v1842
    %2720 = vmatpush.bf16.msra.mxu0 %v1834
    %2721 = vmatpush.bf16.msra.mxu0 %v1826
    %2722 = vmatpush.bf16.msra.mxu0 %v1818
    %2723 = vmatmul.bf16.gmra.mxu0 %v765
    %v2724 = vpop.f32.mrf.mxu0
    %v2725 = vadd.f32 %v1034, %v2724
    %v2726 = vpop.f32.mrf.mxu0
    %v2727 = vadd.f32 %v1034, %v2726
    %2728 = vdwg.mxu0
    %2729 = vmatpush.bf16.msra.mxu0 %v1938
    %2730 = vmatpush.bf16.msra.mxu0 %v1930
    %2731 = vmatpush.bf16.msra.mxu0 %v1922
    %2732 = vmatpush.bf16.msra.mxu0 %v1914
    %2733 = vmatpush.bf16.msra.mxu0 %v1906
    %2734 = vmatpush.bf16.msra.mxu0 %v1898
    %2735 = vmatpush.bf16.msra.mxu0 %v1890
    %2736 = vmatpush.bf16.msra.mxu0 %v1882
    %2737 = vmatmul.bf16.gmra.mxu0 %v766
    %v2738 = vpop.f32.mrf.mxu0
    %v2739 = vadd.f32 %v2725, %v2738
    %v2740 = vpop.f32.mrf.mxu0
    %v2741 = vadd.f32 %v2727, %v2740
    %2742 = vdwg.mxu0
    %2743 = vmatpush.bf16.msra.mxu0 %v2002
    %2744 = vmatpush.bf16.msra.mxu0 %v1994
    %2745 = vmatpush.bf16.msra.mxu0 %v1986
    %2746 = vmatpush.bf16.msra.mxu0 %v1978
    %2747 = vmatpush.bf16.msra.mxu0 %v1970
    %2748 = vmatpush.bf16.msra.mxu0 %v1962
    %2749 = vmatpush.bf16.msra.mxu0 %v1954
    %2750 = vmatpush.bf16.msra.mxu0 %v1946
    %2751 = vmatmul.bf16.gmra.mxu0 %v767
    %v2752 = vpop.f32.mrf.mxu0
    %v2753 = vadd.f32 %v2739, %v2752
    %v2754 = vpop.f32.mrf.mxu0
    %v2755 = vadd.f32 %v2741, %v2754
    %2756 = vdwg.mxu0
    %2757 = vmatpush.bf16.msra.mxu0 %v2066
    %2758 = vmatpush.bf16.msra.mxu0 %v2058
    %2759 = vmatpush.bf16.msra.mxu0 %v2050
    %2760 = vmatpush.bf16.msra.mxu0 %v2042
    %2761 = vmatpush.bf16.msra.mxu0 %v2034
    %2762 = vmatpush.bf16.msra.mxu0 %v2026
    %2763 = vmatpush.bf16.msra.mxu0 %v2018
    %2764 = vmatpush.bf16.msra.mxu0 %v2010
    %2765 = vmatmul.bf16.gmra.mxu0 %v768
    %v2766 = vpop.f32.mrf.mxu0
    %v2767 = vadd.f32 %v2753, %v2766
    %v2768 = vpop.f32.mrf.mxu0
    %v2769 = vadd.f32 %v2755, %v2768
    %2770 = vdwg.mxu0
    %v2771 = vmax.f32 %v2375, 0.0
    %v2772 = vmax.f32 %v2431, 0.0
    %v2773 = vmax.f32 %v2487, 0.0
    %v2774 = vmax.f32 %v2543, 0.0
    %v2775 = vmax.f32 %v2599, 0.0
    %v2776 = vmax.f32 %v2655, 0.0
    %v2777 = vmax.f32 %v2711, 0.0
    %v2778 = vmax.f32 %v2767, 0.0
    %v2779 = vmax.f32 %v2377, 0.0
    %v2780 = vmax.f32 %v2433, 0.0
    %v2781 = vmax.f32 %v2489, 0.0
    %v2782 = vmax.f32 %v2545, 0.0
    %v2783 = vmax.f32 %v2601, 0.0
    %v2784 = vmax.f32 %v2657, 0.0
    %v2785 = vmax.f32 %v2713, 0.0
    %v2786 = vmax.f32 %v2769, 0.0
    %v2787 = vpack.c.bf16 %v2772, %v2771
    %v2788 = vpack.c.bf16 %v2774, %v2773
    %v2789 = vpack.c.bf16 %v2776, %v2775
    %v2790 = vpack.c.bf16 %v2778, %v2777
    %v2791 = vpack.c.bf16 %v2780, %v2779
    %v2792 = vpack.c.bf16 %v2782, %v2781
    %v2793 = vpack.c.bf16 %v2784, %v2783
    %v2794 = vpack.c.bf16 %v2786, %v2785
    %2795 = vst [vmem:[%s7] sm:$0xff] %v2787
    %2796 = vst [vmem:[%s7 + $0x8] sm:$0xff] %v2788
    %2797 = vst [vmem:[%s7 + $0x10] sm:$0xff] %v2789
    %2798 = vst [vmem:[%s7 + $0x18] sm:$0xff] %v2790
    %2799 = vst [vmem:[%s7 + $0x20] sm:$0xff] %v2791
    %2800 = vst [vmem:[%s7 + $0x28] sm:$0xff] %v2792
    %2801 = vst [vmem:[%s7 + $0x30] sm:$0xff] %v2793
    %2802 = vst [vmem:[%s7 + $0x38] sm:$0xff] %v2794
    // Predicated region
    $region54: #{generator_forward.2} parent=1 // pred_check
      _
    $region55: #{generator_forward.2} parent=1 // pred_check_branch
      %2804 = sbr.rel (0) target = $region57
    $region56: #{generator_forward.2} parent=1 // pred_region
      _
    $region57: #{generator_forward.2} parent=1 // pred_fallthru
      _
    // Predicated region
    $region58: #{generator_forward.2} parent=1 // pred_check
      _
    $region59: #{generator_forward.2} parent=1 // pred_check_branch
      %2806 = sbr.rel (0) target = $region61
    $region60: #{generator_forward.2} parent=1 // pred_region
      _
    $region61: #{generator_forward.2} parent=1 // pred_fallthru
      _
    %2807 = vsyncpa [#allocation3], 1
    %2808 = vsyncpa [#allocation5], 1
    %2809 = vsyncpa [#allocation8], 1
    %2810 = vsyncpa [#allocation11], 1

// kernel: generator_forward.3
$region0: #{generator_forward.3}
  #allocation0 [shape = 'u32[]', space=smem, size = 0x4, offset = 0x4, fixed_abs, tag = 'smem constant byte address 0x4 - core index']
  #allocation1 [shape = 'u32[72,128]{1,0:T(1,128)}', space=vmem, size = 0x9000, scoped, tag = 'internal scratch']
  %s0 = inlined_call_operand.vmem [shape: bf16[16,1024], index: 0, kind: input, shape index: {}]
  %s1 = inlined_call_operand.hbm [shape: bf16[1024,1792], index: 1, kind: input, shape index: {}]
  %s2 = inlined_call_operand.hbm [shape: f32[1,1792], index: 2, kind: input, shape index: {}]
  %s3 = inlined_call_operand.vmem [shape: f32[16,1792], index: 3, kind: output, shape index: {}]
  %s4 = sld [smem:[#allocation0]]
  $region30: #{generator_forward.3} parent=0
    _
  %s6 = ssub.s32 1, %s4
  %s7 = scalar_select 0, %s6, %s4
  $region1: #{generator_forward.3} parent=0
    #allocation2 [shape = 'u8[3670016]{0}', space=vmem, size = 0x380000, scoped, tag = 'input window, operand 1, single buffered']
    #allocation3 [shape = 's32[1]{0}', space=sflag, size = 0x4, scoped, tag = 'scoped memory for generator_forward.3']
    #allocation4 [shape = 'u8[7168]{0}', space=vmem, size = 0x1c00, scoped, tag = 'input window, operand 2, single buffered']
    #allocation5 [shape = 's32[1]{0}', space=sflag, size = 0x4, scoped, tag = 'scoped memory for generator_forward.3']
    %8 = vsyncpa [#allocation3], 0
    %9 = vsyncpa [#allocation5], 0
    // Predicated region
    $region2: #{generator_forward.3} parent=1 // pred_check
      _
    $region3: #{generator_forward.3} parent=1 // pred_check_branch
      %11 = sbr.rel (0) target = $region5
    $region4: #{generator_forward.3} parent=1 // pred_region
      _
    $region5: #{generator_forward.3} parent=1 // pred_fallthru
      _
    // Predicated region
    $region6: #{generator_forward.3} parent=1 // pred_check
      _
    $region7: #{generator_forward.3} parent=1 // pred_check_branch
      %13 = sbr.rel (0) target = $region9
    $region8: #{generator_forward.3} parent=1 // pred_region
      %15 = vsyncadd [#allocation3], 0
      %s16 = sshll.u32 %s1, 4
      %s17 = int_to_ptr.hbm [resolvable:$true] %s16
      %s18 = sshll.u32 [#allocation2], 4
      %s19 = int_to_ptr.vmem [resolvable:$true] %s18
      %24 = dma.hbm_to_vmem [thread:$0]  %s17, 114688, %s19, [#allocation3], 896, 896, 56
    $region9: #{generator_forward.3} parent=1 // pred_fallthru
      _
    // Predicated region
    $region10: #{generator_forward.3} parent=1 // pred_check
      _
    $region11: #{generator_forward.3} parent=1 // pred_check_branch
      %26 = sbr.rel (0) target = $region13
    $region12: #{generator_forward.3} parent=1 // pred_region
      %28 = vsyncadd [#allocation5], 0
      %s30 = sshll.u32 %s2, 4
      %s31 = int_to_ptr.hbm [resolvable:$true] %s30
      %s32 = sshll.u32 [#allocation4], 4
      %s33 = int_to_ptr.vmem [resolvable:$true] %s32
      %35 = dma.hbm_to_vmem [thread:$0]  %s31, 224, %s33, [#allocation5]
    $region13: #{generator_forward.3} parent=1 // pred_fallthru
      _
    // Predicated region
    $region14: #{generator_forward.3} parent=1 // pred_check
      _
    $region15: #{generator_forward.3} parent=1 // pred_check_branch
      %37 = sbr.rel (0) target = $region17
    $region16: #{generator_forward.3} parent=1 // pred_region
      %39 = dma.done [#allocation3], 114688
    $region17: #{generator_forward.3} parent=1 // pred_fallthru
      _
    // Predicated region
    $region18: #{generator_forward.3} parent=1 // pred_check
      _
    $region19: #{generator_forward.3} parent=1 // pred_check_branch
      %41 = sbr.rel (0) target = $region21
    $region20: #{generator_forward.3} parent=1 // pred_region
      %43 = dma.done [#allocation5], 224
    $region21: #{generator_forward.3} parent=1 // pred_fallthru
      _
    %v44 = vld [vmem:[%s0] sm:$0xff]
    %v45 = vld [vmem:[%s0 + $0x8] sm:$0xff]
    %v46 = vld [vmem:[%s0 + $0x10] sm:$0xff]
    %v47 = vld [vmem:[%s0 + $0x18] sm:$0xff]
    %v48 = vld [vmem:[%s0 + $0x20] sm:$0xff]
    %v49 = vld [vmem:[%s0 + $0x28] sm:$0xff]
    %v50 = vld [vmem:[%s0 + $0x30] sm:$0xff]
    %v51 = vld [vmem:[%s0 + $0x38] sm:$0xff]
    %v52 = vld [vmem:[#allocation2] sm:$0xff]
    %v53 = vld [vmem:[#allocation2 + $0x8] sm:$0xff]
    %v54 = vld [vmem:[#allocation2 + $0x10] sm:$0xff]
    %v55 = vld [vmem:[#allocation2 + $0x18] sm:$0xff]
    %v56 = vld [vmem:[#allocation2 + $0x20] sm:$0xff]
    %v57 = vld [vmem:[#allocation2 + $0x28] sm:$0xff]
    %v58 = vld [vmem:[#allocation2 + $0x30] sm:$0xff]
    %v59 = vld [vmem:[#allocation2 + $0x38] sm:$0xff]
    %v60 = vld [vmem:[#allocation2 + $0x40] sm:$0xff]
    %v61 = vld [vmem:[#allocation2 + $0x48] sm:$0xff]
    %v62 = vld [vmem:[#allocation2 + $0x50] sm:$0xff]
    %v63 = vld [vmem:[#allocation2 + $0x58] sm:$0xff]
    %v64 = vld [vmem:[#allocation2 + $0x60] sm:$0xff]
    %v65 = vld [vmem:[#allocation2 + $0x68] sm:$0xff]
    %v66 = vld [vmem:[#allocation2 + $0x70] sm:$0xff]
    %v67 = vld [vmem:[#allocation2 + $0x78] sm:$0xff]
    %v68 = vld [vmem:[#allocation2 + $0x80] sm:$0xff]
    %v69 = vld [vmem:[#allocation2 + $0x88] sm:$0xff]
    %v70 = vld [vmem:[#allocation2 + $0x90] sm:$0xff]
    %v71 = vld [vmem:[#allocation2 + $0x98] sm:$0xff]
    %v72 = vld [vmem:[#allocation2 + $0xa0] sm:$0xff]
    %v73 = vld [vmem:[#allocation2 + $0xa8] sm:$0xff]
    %v74 = vld [vmem:[#allocation2 + $0xb0] sm:$0xff]
    %v75 = vld [vmem:[#allocation2 + $0xb8] sm:$0xff]
    %v76 = vld [vmem:[#allocation2 + $0xc0] sm:$0xff]
    %v77 = vld [vmem:[#allocation2 + $0xc8] sm:$0xff]
    %v78 = vld [vmem:[#allocation2 + $0xd0] sm:$0xff]
    %v79 = vld [vmem:[#allocation2 + $0xd8] sm:$0xff]
    %v80 = vld [vmem:[#allocation2 + $0xe0] sm:$0xff]
    %v81 = vld [vmem:[#allocation2 + $0xe8] sm:$0xff]
    %v82 = vld [vmem:[#allocation2 + $0xf0] sm:$0xff]
    %v83 = vld [vmem:[#allocation2 + $0xf8] sm:$0xff]
    %v84 = vld [vmem:[#allocation2 + $0x100] sm:$0xff]
    %v85 = vld [vmem:[#allocation2 + $0x108] sm:$0xff]
    %v86 = vld [vmem:[#allocation2 + $0x110] sm:$0xff]
    %v87 = vld [vmem:[#allocation2 + $0x118] sm:$0xff]
    %v88 = vld [vmem:[#allocation2 + $0x120] sm:$0xff]
    %v89 = vld [vmem:[#allocation2 + $0x128] sm:$0xff]
    %v90 = vld [vmem:[#allocation2 + $0x130] sm:$0xff]
    %v91 = vld [vmem:[#allocation2 + $0x138] sm:$0xff]
    %v92 = vld [vmem:[#allocation2 + $0x140] sm:$0xff]
    %v93 = vld [vmem:[#allocation2 + $0x148] sm:$0xff]
    %v94 = vld [vmem:[#allocation2 + $0x150] sm:$0xff]
    %v95 = vld [vmem:[#allocation2 + $0x158] sm:$0xff]
    %v96 = vld [vmem:[#allocation2 + $0x160] sm:$0xff]
    %v97 = vld [vmem:[#allocation2 + $0x168] sm:$0xff]
    %v98 = vld [vmem:[#allocation2 + $0x170] sm:$0xff]
    %v99 = vld [vmem:[#allocation2 + $0x178] sm:$0xff]
    %v100 = vld [vmem:[#allocation2 + $0x180] sm:$0xff]
    %v101 = vld [vmem:[#allocation2 + $0x188] sm:$0xff]
    %v102 = vld [vmem:[#allocation2 + $0x190] sm:$0xff]
    %v103 = vld [vmem:[#allocation2 + $0x198] sm:$0xff]
    %v104 = vld [vmem:[#allocation2 + $0x1a0] sm:$0xff]
    %v105 = vld [vmem:[#allocation2 + $0x1a8] sm:$0xff]
    %v106 = vld [vmem:[#allocation2 + $0x1b0] sm:$0xff]
    %v107 = vld [vmem:[#allocation2 + $0x1b8] sm:$0xff]
    %v108 = vld [vmem:[#allocation2 + $0x1c0] sm:$0xff]
    %v109 = vld [vmem:[#allocation2 + $0x1c8] sm:$0xff]
    %v110 = vld [vmem:[#allocation2 + $0x1d0] sm:$0xff]
    %v111 = vld [vmem:[#allocation2 + $0x1d8] sm:$0xff]
    %v112 = vld [vmem:[#allocation2 + $0x1e0] sm:$0xff]
    %v113 = vld [vmem:[#allocation2 + $0x1e8] sm:$0xff]
    %v114 = vld [vmem:[#allocation2 + $0x1f0] sm:$0xff]
    %v115 = vld [vmem:[#allocation2 + $0x1f8] sm:$0xff]
    %v116 = vld [vmem:[#allocation2 + $0x200] sm:$0xff]
    %v117 = vld [vmem:[#allocation2 + $0x208] sm:$0xff]
    %v118 = vld [vmem:[#allocation2 + $0x210] sm:$0xff]
    %v119 = vld [vmem:[#allocation2 + $0x218] sm:$0xff]
    %v120 = vld [vmem:[#allocation2 + $0x220] sm:$0xff]
    %v121 = vld [vmem:[#allocation2 + $0x228] sm:$0xff]
    %v122 = vld [vmem:[#allocation2 + $0x230] sm:$0xff]
    %v123 = vld [vmem:[#allocation2 + $0x238] sm:$0xff]
    %v124 = vld [vmem:[#allocation2 + $0x240] sm:$0xff]
    %v125 = vld [vmem:[#allocation2 + $0x248] sm:$0xff]
    %v126 = vld [vmem:[#allocation2 + $0x250] sm:$0xff]
    %v127 = vld [vmem:[#allocation2 + $0x258] sm:$0xff]
    %v128 = vld [vmem:[#allocation2 + $0x260] sm:$0xff]
    %v129 = vld [vmem:[#allocation2 + $0x268] sm:$0xff]
    %v130 = vld [vmem:[#allocation2 + $0x270] sm:$0xff]
    %v131 = vld [vmem:[#allocation2 + $0x278] sm:$0xff]
    %v132 = vld [vmem:[#allocation2 + $0x280] sm:$0xff]
    %v133 = vld [vmem:[#allocation2 + $0x288] sm:$0xff]
    %v134 = vld [vmem:[#allocation2 + $0x290] sm:$0xff]
    %v135 = vld [vmem:[#allocation2 + $0x298] sm:$0xff]
    %v136 = vld [vmem:[#allocation2 + $0x2a0] sm:$0xff]
    %v137 = vld [vmem:[#allocation2 + $0x2a8] sm:$0xff]
    %v138 = vld [vmem:[#allocation2 + $0x2b0] sm:$0xff]
    %v139 = vld [vmem:[#allocation2 + $0x2b8] sm:$0xff]
    %v140 = vld [vmem:[#allocation2 + $0x2c0] sm:$0xff]
    %v141 = vld [vmem:[#allocation2 + $0x2c8] sm:$0xff]
    %v142 = vld [vmem:[#allocation2 + $0x2d0] sm:$0xff]
    %v143 = vld [vmem:[#allocation2 + $0x2d8] sm:$0xff]
    %v144 = vld [vmem:[#allocation2 + $0x2e0] sm:$0xff]
    %v145 = vld [vmem:[#allocation2 + $0x2e8] sm:$0xff]
    %v146 = vld [vmem:[#allocation2 + $0x2f0] sm:$0xff]
    %v147 = vld [vmem:[#allocation2 + $0x2f8] sm:$0xff]
    %v148 = vld [vmem:[#allocation2 + $0x300] sm:$0xff]
    %v149 = vld [vmem:[#allocation2 + $0x308] sm:$0xff]
    %v150 = vld [vmem:[#allocation2 + $0x310] sm:$0xff]
    %v151 = vld [vmem:[#allocation2 + $0x318] sm:$0xff]
    %v152 = vld [vmem:[#allocation2 + $0x320] sm:$0xff]
    %v153 = vld [vmem:[#allocation2 + $0x328] sm:$0xff]
    %v154 = vld [vmem:[#allocation2 + $0x330] sm:$0xff]
    %v155 = vld [vmem:[#allocation2 + $0x338] sm:$0xff]
    %v156 = vld [vmem:[#allocation2 + $0x340] sm:$0xff]
    %v157 = vld [vmem:[#allocation2 + $0x348] sm:$0xff]
    %v158 = vld [vmem:[#allocation2 + $0x350] sm:$0xff]
    %v159 = vld [vmem:[#allocation2 + $0x358] sm:$0xff]
    %v160 = vld [vmem:[#allocation2 + $0x360] sm:$0xff]
    %v161 = vld [vmem:[#allocation2 + $0x368] sm:$0xff]
    %v162 = vld [vmem:[#allocation2 + $0x370] sm:$0xff]
    %v163 = vld [vmem:[#allocation2 + $0x378] sm:$0xff]
    %v164 = vld [vmem:[#allocation2 + $0x380] sm:$0xff]
    %v165 = vld [vmem:[#allocation2 + $0x388] sm:$0xff]
    %v166 = vld [vmem:[#allocation2 + $0x390] sm:$0xff]
    %v167 = vld [vmem:[#allocation2 + $0x398] sm:$0xff]
    %v168 = vld [vmem:[#allocation2 + $0x3a0] sm:$0xff]
    %v169 = vld [vmem:[#allocation2 + $0x3a8] sm:$0xff]
    %v170 = vld [vmem:[#allocation2 + $0x3b0] sm:$0xff]
    %v171 = vld [vmem:[#allocation2 + $0x3b8] sm:$0xff]
    %v172 = vld [vmem:[#allocation2 + $0x3c0] sm:$0xff]
    %v173 = vld [vmem:[#allocation2 + $0x3c8] sm:$0xff]
    %v174 = vld [vmem:[#allocation2 + $0x3d0] sm:$0xff]
    %v175 = vld [vmem:[#allocation2 + $0x3d8] sm:$0xff]
    %v176 = vld [vmem:[#allocation2 + $0x3e0] sm:$0xff]
    %v177 = vld [vmem:[#allocation2 + $0x3e8] sm:$0xff]
    %v178 = vld [vmem:[#allocation2 + $0x3f0] sm:$0xff]
    %v179 = vld [vmem:[#allocation2 + $0x3f8] sm:$0xff]
    %v180 = vld [vmem:[#allocation2 + $0x400] sm:$0xff]
    %v181 = vld [vmem:[#allocation2 + $0x408] sm:$0xff]
    %v182 = vld [vmem:[#allocation2 + $0x410] sm:$0xff]
    %v183 = vld [vmem:[#allocation2 + $0x418] sm:$0xff]
    %v184 = vld [vmem:[#allocation2 + $0x420] sm:$0xff]
    %v185 = vld [vmem:[#allocation2 + $0x428] sm:$0xff]
    %v186 = vld [vmem:[#allocation2 + $0x430] sm:$0xff]
    %v187 = vld [vmem:[#allocation2 + $0x438] sm:$0xff]
    %v188 = vld [vmem:[#allocation2 + $0x440] sm:$0xff]
    %v189 = vld [vmem:[#allocation2 + $0x448] sm:$0xff]
    %v190 = vld [vmem:[#allocation2 + $0x450] sm:$0xff]
    %v191 = vld [vmem:[#allocation2 + $0x458] sm:$0xff]
    %v192 = vld [vmem:[#allocation2 + $0x460] sm:$0xff]
    %v193 = vld [vmem:[#allocation2 + $0x468] sm:$0xff]
    %v194 = vld [vmem:[#allocation2 + $0x470] sm:$0xff]
    %v195 = vld [vmem:[#allocation2 + $0x478] sm:$0xff]
    %v196 = vld [vmem:[#allocation2 + $0x480] sm:$0xff]
    %v197 = vld [vmem:[#allocation2 + $0x488] sm:$0xff]
    %v198 = vld [vmem:[#allocation2 + $0x490] sm:$0xff]
    %v199 = vld [vmem:[#allocation2 + $0x498] sm:$0xff]
    %v200 = vld [vmem:[#allocation2 + $0x4a0] sm:$0xff]
    %v201 = vld [vmem:[#allocation2 + $0x4a8] sm:$0xff]
    %v202 = vld [vmem:[#allocation2 + $0x4b0] sm:$0xff]
    %v203 = vld [vmem:[#allocation2 + $0x4b8] sm:$0xff]
    %v204 = vld [vmem:[#allocation2 + $0x4c0] sm:$0xff]
    %v205 = vld [vmem:[#allocation2 + $0x4c8] sm:$0xff]
    %v206 = vld [vmem:[#allocation2 + $0x4d0] sm:$0xff]
    %v207 = vld [vmem:[#allocation2 + $0x4d8] sm:$0xff]
    %v208 = vld [vmem:[#allocation2 + $0x4e0] sm:$0xff]
    %v209 = vld [vmem:[#allocation2 + $0x4e8] sm:$0xff]
    %v210 = vld [vmem:[#allocation2 + $0x4f0] sm:$0xff]
    %v211 = vld [vmem:[#allocation2 + $0x4f8] sm:$0xff]
    %v212 = vld [vmem:[#allocation2 + $0x500] sm:$0xff]
    %v213 = vld [vmem:[#allocation2 + $0x508] sm:$0xff]
    %v214 = vld [vmem:[#allocation2 + $0x510] sm:$0xff]
    %v215 = vld [vmem:[#allocation2 + $0x518] sm:$0xff]
    %v216 = vld [vmem:[#allocation2 + $0x520] sm:$0xff]
    %v217 = vld [vmem:[#allocation2 + $0x528] sm:$0xff]
    %v218 = vld [vmem:[#allocation2 + $0x530] sm:$0xff]
    %v219 = vld [vmem:[#allocation2 + $0x538] sm:$0xff]
    %v220 = vld [vmem:[#allocation2 + $0x540] sm:$0xff]
    %v221 = vld [vmem:[#allocation2 + $0x548] sm:$0xff]
    %v222 = vld [vmem:[#allocation2 + $0x550] sm:$0xff]
    %v223 = vld [vmem:[#allocation2 + $0x558] sm:$0xff]
    %v224 = vld [vmem:[#allocation2 + $0x560] sm:$0xff]
    %v225 = vld [vmem:[#allocation2 + $0x568] sm:$0xff]
    %v226 = vld [vmem:[#allocation2 + $0x570] sm:$0xff]
    %v227 = vld [vmem:[#allocation2 + $0x578] sm:$0xff]
    %v228 = vld [vmem:[#allocation2 + $0x580] sm:$0xff]
    %v229 = vld [vmem:[#allocation2 + $0x588] sm:$0xff]
    %v230 = vld [vmem:[#allocation2 + $0x590] sm:$0xff]
    %v231 = vld [vmem:[#allocation2 + $0x598] sm:$0xff]
    %v232 = vld [vmem:[#allocation2 + $0x5a0] sm:$0xff]
    %v233 = vld [vmem:[#allocation2 + $0x5a8] sm:$0xff]
    %v234 = vld [vmem:[#allocation2 + $0x5b0] sm:$0xff]
    %v235 = vld [vmem:[#allocation2 + $0x5b8] sm:$0xff]
    %v236 = vld [vmem:[#allocation2 + $0x5c0] sm:$0xff]
    %v237 = vld [vmem:[#allocation2 + $0x5c8] sm:$0xff]
    %v238 = vld [vmem:[#allocation2 + $0x5d0] sm:$0xff]
    %v239 = vld [vmem:[#allocation2 + $0x5d8] sm:$0xff]
    %v240 = vld [vmem:[#allocation2 + $0x5e0] sm:$0xff]
    %v241 = vld [vmem:[#allocation2 + $0x5e8] sm:$0xff]
    %v242 = vld [vmem:[#allocation2 + $0x5f0] sm:$0xff]
    %v243 = vld [vmem:[#allocation2 + $0x5f8] sm:$0xff]
    %v244 = vld [vmem:[#allocation2 + $0x600] sm:$0xff]
    %v245 = vld [vmem:[#allocation2 + $0x608] sm:$0xff]
    %v246 = vld [vmem:[#allocation2 + $0x610] sm:$0xff]
    %v247 = vld [vmem:[#allocation2 + $0x618] sm:$0xff]
    %v248 = vld [vmem:[#allocation2 + $0x620] sm:$0xff]
    %v249 = vld [vmem:[#allocation2 + $0x628] sm:$0xff]
    %v250 = vld [vmem:[#allocation2 + $0x630] sm:$0xff]
    %v251 = vld [vmem:[#allocation2 + $0x638] sm:$0xff]
    %v252 = vld [vmem:[#allocation2 + $0x640] sm:$0xff]
    %v253 = vld [vmem:[#allocation2 + $0x648] sm:$0xff]
    %v254 = vld [vmem:[#allocation2 + $0x650] sm:$0xff]
    %v255 = vld [vmem:[#allocation2 + $0x658] sm:$0xff]
    %v256 = vld [vmem:[#allocation2 + $0x660] sm:$0xff]
    %v257 = vld [vmem:[#allocation2 + $0x668] sm:$0xff]
    %v258 = vld [vmem:[#allocation2 + $0x670] sm:$0xff]
    %v259 = vld [vmem:[#allocation2 + $0x678] sm:$0xff]
    %v260 = vld [vmem:[#allocation2 + $0x680] sm:$0xff]
    %v261 = vld [vmem:[#allocation2 + $0x688] sm:$0xff]
    %v262 = vld [vmem:[#allocation2 + $0x690] sm:$0xff]
    %v263 = vld [vmem:[#allocation2 + $0x698] sm:$0xff]
    %v264 = vld [vmem:[#allocation2 + $0x6a0] sm:$0xff]
    %v265 = vld [vmem:[#allocation2 + $0x6a8] sm:$0xff]
    %v266 = vld [vmem:[#allocation2 + $0x6b0] sm:$0xff]
    %v267 = vld [vmem:[#allocation2 + $0x6b8] sm:$0xff]
    %v268 = vld [vmem:[#allocation2 + $0x6c0] sm:$0xff]
    %v269 = vld [vmem:[#allocation2 + $0x6c8] sm:$0xff]
    %v270 = vld [vmem:[#allocation2 + $0x6d0] sm:$0xff]
    %v271 = vld [vmem:[#allocation2 + $0x6d8] sm:$0xff]
    %v272 = vld [vmem:[#allocation2 + $0x6e0] sm:$0xff]
    %v273 = vld [vmem:[#allocation2 + $0x6e8] sm:$0xff]
    %v274 = vld [vmem:[#allocation2 + $0x6f0] sm:$0xff]
    %v275 = vld [vmem:[#allocation2 + $0x6f8] sm:$0xff]
    %v276 = vld [vmem:[#allocation2 + $0x700] sm:$0xff]
    %v277 = vld [vmem:[#allocation2 + $0x708] sm:$0xff]
    %v278 = vld [vmem:[#allocation2 + $0x710] sm:$0xff]
    %v279 = vld [vmem:[#allocation2 + $0x718] sm:$0xff]
    %v280 = vld [vmem:[#allocation2 + $0x720] sm:$0xff]
    %v281 = vld [vmem:[#allocation2 + $0x728] sm:$0xff]
    %v282 = vld [vmem:[#allocation2 + $0x730] sm:$0xff]
    %v283 = vld [vmem:[#allocation2 + $0x738] sm:$0xff]
    %v284 = vld [vmem:[#allocation2 + $0x740] sm:$0xff]
    %v285 = vld [vmem:[#allocation2 + $0x748] sm:$0xff]
    %v286 = vld [vmem:[#allocation2 + $0x750] sm:$0xff]
    %v287 = vld [vmem:[#allocation2 + $0x758] sm:$0xff]
    %v288 = vld [vmem:[#allocation2 + $0x760] sm:$0xff]
    %v289 = vld [vmem:[#allocation2 + $0x768] sm:$0xff]
    %v290 = vld [vmem:[#allocation2 + $0x770] sm:$0xff]
    %v291 = vld [vmem:[#allocation2 + $0x778] sm:$0xff]
    %v292 = vld [vmem:[#allocation2 + $0x780] sm:$0xff]
    %v293 = vld [vmem:[#allocation2 + $0x788] sm:$0xff]
    %v294 = vld [vmem:[#allocation2 + $0x790] sm:$0xff]
    %v295 = vld [vmem:[#allocation2 + $0x798] sm:$0xff]
    %v296 = vld [vmem:[#allocation2 + $0x7a0] sm:$0xff]
    %v297 = vld [vmem:[#allocation2 + $0x7a8] sm:$0xff]
    %v298 = vld [vmem:[#allocation2 + $0x7b0] sm:$0xff]
    %v299 = vld [vmem:[#allocation2 + $0x7b8] sm:$0xff]
    %v300 = vld [vmem:[#allocation2 + $0x7c0] sm:$0xff]
    %v301 = vld [vmem:[#allocation2 + $0x7c8] sm:$0xff]
    %v302 = vld [vmem:[#allocation2 + $0x7d0] sm:$0xff]
    %v303 = vld [vmem:[#allocation2 + $0x7d8] sm:$0xff]
    %v304 = vld [vmem:[#allocation2 + $0x7e0] sm:$0xff]
    %v305 = vld [vmem:[#allocation2 + $0x7e8] sm:$0xff]
    %v306 = vld [vmem:[#allocation2 + $0x7f0] sm:$0xff]
    %v307 = vld [vmem:[#allocation2 + $0x7f8] sm:$0xff]
    %v308 = vld [vmem:[#allocation2 + $0x800] sm:$0xff]
    %v309 = vld [vmem:[#allocation2 + $0x808] sm:$0xff]
    %v310 = vld [vmem:[#allocation2 + $0x810] sm:$0xff]
    %v311 = vld [vmem:[#allocation2 + $0x818] sm:$0xff]
    %v312 = vld [vmem:[#allocation2 + $0x820] sm:$0xff]
    %v313 = vld [vmem:[#allocation2 + $0x828] sm:$0xff]
    %v314 = vld [vmem:[#allocation2 + $0x830] sm:$0xff]
    %v315 = vld [vmem:[#allocation2 + $0x838] sm:$0xff]
    %v316 = vld [vmem:[#allocation2 + $0x840] sm:$0xff]
    %v317 = vld [vmem:[#allocation2 + $0x848] sm:$0xff]
    %v318 = vld [vmem:[#allocation2 + $0x850] sm:$0xff]
    %v319 = vld [vmem:[#allocation2 + $0x858] sm:$0xff]
    %v320 = vld [vmem:[#allocation2 + $0x860] sm:$0xff]
    %v321 = vld [vmem:[#allocation2 + $0x868] sm:$0xff]
    %v322 = vld [vmem:[#allocation2 + $0x870] sm:$0xff]
    %v323 = vld [vmem:[#allocation2 + $0x878] sm:$0xff]
    %v324 = vld [vmem:[#allocation2 + $0x880] sm:$0xff]
    %v325 = vld [vmem:[#allocation2 + $0x888] sm:$0xff]
    %v326 = vld [vmem:[#allocation2 + $0x890] sm:$0xff]
    %v327 = vld [vmem:[#allocation2 + $0x898] sm:$0xff]
    %v328 = vld [vmem:[#allocation2 + $0x8a0] sm:$0xff]
    %v329 = vld [vmem:[#allocation2 + $0x8a8] sm:$0xff]
    %v330 = vld [vmem:[#allocation2 + $0x8b0] sm:$0xff]
    %v331 = vld [vmem:[#allocation2 + $0x8b8] sm:$0xff]
    %v332 = vld [vmem:[#allocation2 + $0x8c0] sm:$0xff]
    %v333 = vld [vmem:[#allocation2 + $0x8c8] sm:$0xff]
    %v334 = vld [vmem:[#allocation2 + $0x8d0] sm:$0xff]
    %v335 = vld [vmem:[#allocation2 + $0x8d8] sm:$0xff]
    %v336 = vld [vmem:[#allocation2 + $0x8e0] sm:$0xff]
    %v337 = vld [vmem:[#allocation2 + $0x8e8] sm:$0xff]
    %v338 = vld [vmem:[#allocation2 + $0x8f0] sm:$0xff]
    %v339 = vld [vmem:[#allocation2 + $0x8f8] sm:$0xff]
    %v340 = vld [vmem:[#allocation2 + $0x900] sm:$0xff]
    %v341 = vld [vmem:[#allocation2 + $0x908] sm:$0xff]
    %v342 = vld [vmem:[#allocation2 + $0x910] sm:$0xff]
    %v343 = vld [vmem:[#allocation2 + $0x918] sm:$0xff]
    %v344 = vld [vmem:[#allocation2 + $0x920] sm:$0xff]
    %v345 = vld [vmem:[#allocation2 + $0x928] sm:$0xff]
    %v346 = vld [vmem:[#allocation2 + $0x930] sm:$0xff]
    %v347 = vld [vmem:[#allocation2 + $0x938] sm:$0xff]
    %v348 = vld [vmem:[#allocation2 + $0x940] sm:$0xff]
    %v349 = vld [vmem:[#allocation2 + $0x948] sm:$0xff]
    %v350 = vld [vmem:[#allocation2 + $0x950] sm:$0xff]
    %v351 = vld [vmem:[#allocation2 + $0x958] sm:$0xff]
    %v352 = vld [vmem:[#allocation2 + $0x960] sm:$0xff]
    %v353 = vld [vmem:[#allocation2 + $0x968] sm:$0xff]
    %v354 = vld [vmem:[#allocation2 + $0x970] sm:$0xff]
    %v355 = vld [vmem:[#allocation2 + $0x978] sm:$0xff]
    %v356 = vld [vmem:[#allocation2 + $0x980] sm:$0xff]
    %v357 = vld [vmem:[#allocation2 + $0x988] sm:$0xff]
    %v358 = vld [vmem:[#allocation2 + $0x990] sm:$0xff]
    %v359 = vld [vmem:[#allocation2 + $0x998] sm:$0xff]
    %v360 = vld [vmem:[#allocation2 + $0x9a0] sm:$0xff]
    %v361 = vld [vmem:[#allocation2 + $0x9a8] sm:$0xff]
    %v362 = vld [vmem:[#allocation2 + $0x9b0] sm:$0xff]
    %v363 = vld [vmem:[#allocation2 + $0x9b8] sm:$0xff]
    %v364 = vld [vmem:[#allocation2 + $0x9c0] sm:$0xff]
    %v365 = vld [vmem:[#allocation2 + $0x9c8] sm:$0xff]
    %v366 = vld [vmem:[#allocation2 + $0x9d0] sm:$0xff]
    %v367 = vld [vmem:[#allocation2 + $0x9d8] sm:$0xff]
    %v368 = vld [vmem:[#allocation2 + $0x9e0] sm:$0xff]
    %v369 = vld [vmem:[#allocation2 + $0x9e8] sm:$0xff]
    %v370 = vld [vmem:[#allocation2 + $0x9f0] sm:$0xff]
    %v371 = vld [vmem:[#allocation2 + $0x9f8] sm:$0xff]
    %v372 = vld [vmem:[#allocation2 + $0xa00] sm:$0xff]
    %v373 = vld [vmem:[#allocation2 + $0xa08] sm:$0xff]
    %v374 = vld [vmem:[#allocation2 + $0xa10] sm:$0xff]
    %v375 = vld [vmem:[#allocation2 + $0xa18] sm:$0xff]
    %v376 = vld [vmem:[#allocation2 + $0xa20] sm:$0xff]
    %v377 = vld [vmem:[#allocation2 + $0xa28] sm:$0xff]
    %v378 = vld [vmem:[#allocation2 + $0xa30] sm:$0xff]
    %v379 = vld [vmem:[#allocation2 + $0xa38] sm:$0xff]
    %v380 = vld [vmem:[#allocation2 + $0xa40] sm:$0xff]
    %v381 = vld [vmem:[#allocation2 + $0xa48] sm:$0xff]
    %v382 = vld [vmem:[#allocation2 + $0xa50] sm:$0xff]
    %v383 = vld [vmem:[#allocation2 + $0xa58] sm:$0xff]
    %v384 = vld [vmem:[#allocation2 + $0xa60] sm:$0xff]
    %v385 = vld [vmem:[#allocation2 + $0xa68] sm:$0xff]
    %v386 = vld [vmem:[#allocation2 + $0xa70] sm:$0xff]
    %v387 = vld [vmem:[#allocation2 + $0xa78] sm:$0xff]
    %v388 = vld [vmem:[#allocation2 + $0xa80] sm:$0xff]
    %v389 = vld [vmem:[#allocation2 + $0xa88] sm:$0xff]
    %v390 = vld [vmem:[#allocation2 + $0xa90] sm:$0xff]
    %v391 = vld [vmem:[#allocation2 + $0xa98] sm:$0xff]
    %v392 = vld [vmem:[#allocation2 + $0xaa0] sm:$0xff]
    %v393 = vld [vmem:[#allocation2 + $0xaa8] sm:$0xff]
    %v394 = vld [vmem:[#allocation2 + $0xab0] sm:$0xff]
    %v395 = vld [vmem:[#allocation2 + $0xab8] sm:$0xff]
    %v396 = vld [vmem:[#allocation2 + $0xac0] sm:$0xff]
    %v397 = vld [vmem:[#allocation2 + $0xac8] sm:$0xff]
    %v398 = vld [vmem:[#allocation2 + $0xad0] sm:$0xff]
    %v399 = vld [vmem:[#allocation2 + $0xad8] sm:$0xff]
    %v400 = vld [vmem:[#allocation2 + $0xae0] sm:$0xff]
    %v401 = vld [vmem:[#allocation2 + $0xae8] sm:$0xff]
    %v402 = vld [vmem:[#allocation2 + $0xaf0] sm:$0xff]
    %v403 = vld [vmem:[#allocation2 + $0xaf8] sm:$0xff]
    %v404 = vld [vmem:[#allocation2 + $0xb00] sm:$0xff]
    %v405 = vld [vmem:[#allocation2 + $0xb08] sm:$0xff]
    %v406 = vld [vmem:[#allocation2 + $0xb10] sm:$0xff]
    %v407 = vld [vmem:[#allocation2 + $0xb18] sm:$0xff]
    %v408 = vld [vmem:[#allocation2 + $0xb20] sm:$0xff]
    %v409 = vld [vmem:[#allocation2 + $0xb28] sm:$0xff]
    %v410 = vld [vmem:[#allocation2 + $0xb30] sm:$0xff]
    %v411 = vld [vmem:[#allocation2 + $0xb38] sm:$0xff]
    %v412 = vld [vmem:[#allocation2 + $0xb40] sm:$0xff]
    %v413 = vld [vmem:[#allocation2 + $0xb48] sm:$0xff]
    %v414 = vld [vmem:[#allocation2 + $0xb50] sm:$0xff]
    %v415 = vld [vmem:[#allocation2 + $0xb58] sm:$0xff]
    %v416 = vld [vmem:[#allocation2 + $0xb60] sm:$0xff]
    %v417 = vld [vmem:[#allocation2 + $0xb68] sm:$0xff]
    %v418 = vld [vmem:[#allocation2 + $0xb70] sm:$0xff]
    %v419 = vld [vmem:[#allocation2 + $0xb78] sm:$0xff]
    %v420 = vld [vmem:[#allocation2 + $0xb80] sm:$0xff]
    %v421 = vld [vmem:[#allocation2 + $0xb88] sm:$0xff]
    %v422 = vld [vmem:[#allocation2 + $0xb90] sm:$0xff]
    %v423 = vld [vmem:[#allocation2 + $0xb98] sm:$0xff]
    %v424 = vld [vmem:[#allocation2 + $0xba0] sm:$0xff]
    %v425 = vld [vmem:[#allocation2 + $0xba8] sm:$0xff]
    %v426 = vld [vmem:[#allocation2 + $0xbb0] sm:$0xff]
    %v427 = vld [vmem:[#allocation2 + $0xbb8] sm:$0xff]
    %v428 = vld [vmem:[#allocation2 + $0xbc0] sm:$0xff]
    %v429 = vld [vmem:[#allocation2 + $0xbc8] sm:$0xff]
    %v430 = vld [vmem:[#allocation2 + $0xbd0] sm:$0xff]
    %v431 = vld [vmem:[#allocation2 + $0xbd8] sm:$0xff]
    %v432 = vld [vmem:[#allocation2 + $0xbe0] sm:$0xff]
    %v433 = vld [vmem:[#allocation2 + $0xbe8] sm:$0xff]
    %v434 = vld [vmem:[#allocation2 + $0xbf0] sm:$0xff]
    %v435 = vld [vmem:[#allocation2 + $0xbf8] sm:$0xff]
    %v436 = vld [vmem:[#allocation2 + $0xc00] sm:$0xff]
    %v437 = vld [vmem:[#allocation2 + $0xc08] sm:$0xff]
    %v438 = vld [vmem:[#allocation2 + $0xc10] sm:$0xff]
    %v439 = vld [vmem:[#allocation2 + $0xc18] sm:$0xff]
    %v440 = vld [vmem:[#allocation2 + $0xc20] sm:$0xff]
    %v441 = vld [vmem:[#allocation2 + $0xc28] sm:$0xff]
    %v442 = vld [vmem:[#allocation2 + $0xc30] sm:$0xff]
    %v443 = vld [vmem:[#allocation2 + $0xc38] sm:$0xff]
    %v444 = vld [vmem:[#allocation2 + $0xc40] sm:$0xff]
    %v445 = vld [vmem:[#allocation2 + $0xc48] sm:$0xff]
    %v446 = vld [vmem:[#allocation2 + $0xc50] sm:$0xff]
    %v447 = vld [vmem:[#allocation2 + $0xc58] sm:$0xff]
    %v448 = vld [vmem:[#allocation2 + $0xc60] sm:$0xff]
    %v449 = vld [vmem:[#allocation2 + $0xc68] sm:$0xff]
    %v450 = vld [vmem:[#allocation2 + $0xc70] sm:$0xff]
    %v451 = vld [vmem:[#allocation2 + $0xc78] sm:$0xff]
    %v452 = vld [vmem:[#allocation2 + $0xc80] sm:$0xff]
    %v453 = vld [vmem:[#allocation2 + $0xc88] sm:$0xff]
    %v454 = vld [vmem:[#allocation2 + $0xc90] sm:$0xff]
    %v455 = vld [vmem:[#allocation2 + $0xc98] sm:$0xff]
    %v456 = vld [vmem:[#allocation2 + $0xca0] sm:$0xff]
    %v457 = vld [vmem:[#allocation2 + $0xca8] sm:$0xff]
    %v458 = vld [vmem:[#allocation2 + $0xcb0] sm:$0xff]
    %v459 = vld [vmem:[#allocation2 + $0xcb8] sm:$0xff]
    %v460 = vld [vmem:[#allocation2 + $0xcc0] sm:$0xff]
    %v461 = vld [vmem:[#allocation2 + $0xcc8] sm:$0xff]
    %v462 = vld [vmem:[#allocation2 + $0xcd0] sm:$0xff]
    %v463 = vld [vmem:[#allocation2 + $0xcd8] sm:$0xff]
    %v464 = vld [vmem:[#allocation2 + $0xce0] sm:$0xff]
    %v465 = vld [vmem:[#allocation2 + $0xce8] sm:$0xff]
    %v466 = vld [vmem:[#allocation2 + $0xcf0] sm:$0xff]
    %v467 = vld [vmem:[#allocation2 + $0xcf8] sm:$0xff]
    %v468 = vld [vmem:[#allocation2 + $0xd00] sm:$0xff]
    %v469 = vld [vmem:[#allocation2 + $0xd08] sm:$0xff]
    %v470 = vld [vmem:[#allocation2 + $0xd10] sm:$0xff]
    %v471 = vld [vmem:[#allocation2 + $0xd18] sm:$0xff]
    %v472 = vld [vmem:[#allocation2 + $0xd20] sm:$0xff]
    %v473 = vld [vmem:[#allocation2 + $0xd28] sm:$0xff]
    %v474 = vld [vmem:[#allocation2 + $0xd30] sm:$0xff]
    %v475 = vld [vmem:[#allocation2 + $0xd38] sm:$0xff]
    %v476 = vld [vmem:[#allocation2 + $0xd40] sm:$0xff]
    %v477 = vld [vmem:[#allocation2 + $0xd48] sm:$0xff]
    %v478 = vld [vmem:[#allocation2 + $0xd50] sm:$0xff]
    %v479 = vld [vmem:[#allocation2 + $0xd58] sm:$0xff]
    %v480 = vld [vmem:[#allocation2 + $0xd60] sm:$0xff]
    %v481 = vld [vmem:[#allocation2 + $0xd68] sm:$0xff]
    %v482 = vld [vmem:[#allocation2 + $0xd70] sm:$0xff]
    %v483 = vld [vmem:[#allocation2 + $0xd78] sm:$0xff]
    %v484 = vld [vmem:[#allocation2 + $0xd80] sm:$0xff]
    %v485 = vld [vmem:[#allocation2 + $0xd88] sm:$0xff]
    %v486 = vld [vmem:[#allocation2 + $0xd90] sm:$0xff]
    %v487 = vld [vmem:[#allocation2 + $0xd98] sm:$0xff]
    %v488 = vld [vmem:[#allocation2 + $0xda0] sm:$0xff]
    %v489 = vld [vmem:[#allocation2 + $0xda8] sm:$0xff]
    %v490 = vld [vmem:[#allocation2 + $0xdb0] sm:$0xff]
    %v491 = vld [vmem:[#allocation2 + $0xdb8] sm:$0xff]
    %v492 = vld [vmem:[#allocation2 + $0xdc0] sm:$0xff]
    %v493 = vld [vmem:[#allocation2 + $0xdc8] sm:$0xff]
    %v494 = vld [vmem:[#allocation2 + $0xdd0] sm:$0xff]
    %v495 = vld [vmem:[#allocation2 + $0xdd8] sm:$0xff]
    %v496 = vld [vmem:[#allocation2 + $0xde0] sm:$0xff]
    %v497 = vld [vmem:[#allocation2 + $0xde8] sm:$0xff]
    %v498 = vld [vmem:[#allocation2 + $0xdf0] sm:$0xff]
    %v499 = vld [vmem:[#allocation2 + $0xdf8] sm:$0xff]
    %v500 = vld [vmem:[#allocation2 + $0xe00] sm:$0xff]
    %v501 = vld [vmem:[#allocation2 + $0xe08] sm:$0xff]
    %v502 = vld [vmem:[#allocation2 + $0xe10] sm:$0xff]
    %v503 = vld [vmem:[#allocation2 + $0xe18] sm:$0xff]
    %v504 = vld [vmem:[#allocation2 + $0xe20] sm:$0xff]
    %v505 = vld [vmem:[#allocation2 + $0xe28] sm:$0xff]
    %v506 = vld [vmem:[#allocation2 + $0xe30] sm:$0xff]
    %v507 = vld [vmem:[#allocation2 + $0xe38] sm:$0xff]
    %v508 = vld [vmem:[#allocation2 + $0xe40] sm:$0xff]
    %v509 = vld [vmem:[#allocation2 + $0xe48] sm:$0xff]
    %v510 = vld [vmem:[#allocation2 + $0xe50] sm:$0xff]
    %v511 = vld [vmem:[#allocation2 + $0xe58] sm:$0xff]
    %v512 = vld [vmem:[#allocation2 + $0xe60] sm:$0xff]
    %v513 = vld [vmem:[#allocation2 + $0xe68] sm:$0xff]
    %v514 = vld [vmem:[#allocation2 + $0xe70] sm:$0xff]
    %v515 = vld [vmem:[#allocation2 + $0xe78] sm:$0xff]
    %v516 = vld [vmem:[#allocation2 + $0xe80] sm:$0xff]
    %v517 = vld [vmem:[#allocation2 + $0xe88] sm:$0xff]
    %v518 = vld [vmem:[#allocation2 + $0xe90] sm:$0xff]
    %v519 = vld [vmem:[#allocation2 + $0xe98] sm:$0xff]
    %v520 = vld [vmem:[#allocation2 + $0xea0] sm:$0xff]
    %v521 = vld [vmem:[#allocation2 + $0xea8] sm:$0xff]
    %v522 = vld [vmem:[#allocation2 + $0xeb0] sm:$0xff]
    %v523 = vld [vmem:[#allocation2 + $0xeb8] sm:$0xff]
    %v524 = vld [vmem:[#allocation2 + $0xec0] sm:$0xff]
    %v525 = vld [vmem:[#allocation2 + $0xec8] sm:$0xff]
    %v526 = vld [vmem:[#allocation2 + $0xed0] sm:$0xff]
    %v527 = vld [vmem:[#allocation2 + $0xed8] sm:$0xff]
    %v528 = vld [vmem:[#allocation2 + $0xee0] sm:$0xff]
    %v529 = vld [vmem:[#allocation2 + $0xee8] sm:$0xff]
    %v530 = vld [vmem:[#allocation2 + $0xef0] sm:$0xff]
    %v531 = vld [vmem:[#allocation2 + $0xef8] sm:$0xff]
    %v532 = vld [vmem:[#allocation2 + $0xf00] sm:$0xff]
    %v533 = vld [vmem:[#allocation2 + $0xf08] sm:$0xff]
    %v534 = vld [vmem:[#allocation2 + $0xf10] sm:$0xff]
    %v535 = vld [vmem:[#allocation2 + $0xf18] sm:$0xff]
    %v536 = vld [vmem:[#allocation2 + $0xf20] sm:$0xff]
    %v537 = vld [vmem:[#allocation2 + $0xf28] sm:$0xff]
    %v538 = vld [vmem:[#allocation2 + $0xf30] sm:$0xff]
    %v539 = vld [vmem:[#allocation2 + $0xf38] sm:$0xff]
    %v540 = vld [vmem:[#allocation2 + $0xf40] sm:$0xff]
    %v541 = vld [vmem:[#allocation2 + $0xf48] sm:$0xff]
    %v542 = vld [vmem:[#allocation2 + $0xf50] sm:$0xff]
    %v543 = vld [vmem:[#allocation2 + $0xf58] sm:$0xff]
    %v544 = vld [vmem:[#allocation2 + $0xf60] sm:$0xff]
    %v545 = vld [vmem:[#allocation2 + $0xf68] sm:$0xff]
    %v546 = vld [vmem:[#allocation2 + $0xf70] sm:$0xff]
    %v547 = vld [vmem:[#allocation2 + $0xf78] sm:$0xff]
    %v548 = vld [vmem:[#allocation2 + $0xf80] sm:$0xff]
    %v549 = vld [vmem:[#allocation2 + $0xf88] sm:$0xff]
    %v550 = vld [vmem:[#allocation2 + $0xf90] sm:$0xff]
    %v551 = vld [vmem:[#allocation2 + $0xf98] sm:$0xff]
    %v552 = vld [vmem:[#allocation2 + $0xfa0] sm:$0xff]
    %v553 = vld [vmem:[#allocation2 + $0xfa8] sm:$0xff]
    %v554 = vld [vmem:[#allocation2 + $0xfb0] sm:$0xff]
    %v555 = vld [vmem:[#allocation2 + $0xfb8] sm:$0xff]
    %v556 = vld [vmem:[#allocation2 + $0xfc0] sm:$0xff]
    %v557 = vld [vmem:[#allocation2 + $0xfc8] sm:$0xff]
    %v558 = vld [vmem:[#allocation2 + $0xfd0] sm:$0xff]
    %v559 = vld [vmem:[#allocation2 + $0xfd8] sm:$0xff]
    %v560 = vld [vmem:[#allocation2 + $0xfe0] sm:$0xff]
    %v561 = vld [vmem:[#allocation2 + $0xfe8] sm:$0xff]
    %v562 = vld [vmem:[#allocation2 + $0xff0] sm:$0xff]
    %v563 = vld [vmem:[#allocation2 + $0xff8] sm:$0xff]
    %v564 = vld [vmem:[#allocation2 + $0x1000] sm:$0xff]
    %v565 = vld [vmem:[#allocation2 + $0x1008] sm:$0xff]
    %v566 = vld [vmem:[#allocation2 + $0x1010] sm:$0xff]
    %v567 = vld [vmem:[#allocation2 + $0x1018] sm:$0xff]
    %v568 = vld [vmem:[#allocation2 + $0x1020] sm:$0xff]
    %v569 = vld [vmem:[#allocation2 + $0x1028] sm:$0xff]
    %v570 = vld [vmem:[#allocation2 + $0x1030] sm:$0xff]
    %v571 = vld [vmem:[#allocation2 + $0x1038] sm:$0xff]
    %v572 = vld [vmem:[#allocation2 + $0x1040] sm:$0xff]
    %v573 = vld [vmem:[#allocation2 + $0x1048] sm:$0xff]
    %v574 = vld [vmem:[#allocation2 + $0x1050] sm:$0xff]
    %v575 = vld [vmem:[#allocation2 + $0x1058] sm:$0xff]
    %v576 = vld [vmem:[#allocation2 + $0x1060] sm:$0xff]
    %v577 = vld [vmem:[#allocation2 + $0x1068] sm:$0xff]
    %v578 = vld [vmem:[#allocation2 + $0x1070] sm:$0xff]
    %v579 = vld [vmem:[#allocation2 + $0x1078] sm:$0xff]
    %v580 = vld [vmem:[#allocation2 + $0x1080] sm:$0xff]
    %v581 = vld [vmem:[#allocation2 + $0x1088] sm:$0xff]
    %v582 = vld [vmem:[#allocation2 + $0x1090] sm:$0xff]
    %v583 = vld [vmem:[#allocation2 + $0x1098] sm:$0xff]
    %v584 = vld [vmem:[#allocation2 + $0x10a0] sm:$0xff]
    %v585 = vld [vmem:[#allocation2 + $0x10a8] sm:$0xff]
    %v586 = vld [vmem:[#allocation2 + $0x10b0] sm:$0xff]
    %v587 = vld [vmem:[#allocation2 + $0x10b8] sm:$0xff]
    %v588 = vld [vmem:[#allocation2 + $0x10c0] sm:$0xff]
    %v589 = vld [vmem:[#allocation2 + $0x10c8] sm:$0xff]
    %v590 = vld [vmem:[#allocation2 + $0x10d0] sm:$0xff]
    %v591 = vld [vmem:[#allocation2 + $0x10d8] sm:$0xff]
    %v592 = vld [vmem:[#allocation2 + $0x10e0] sm:$0xff]
    %v593 = vld [vmem:[#allocation2 + $0x10e8] sm:$0xff]
    %v594 = vld [vmem:[#allocation2 + $0x10f0] sm:$0xff]
    %v595 = vld [vmem:[#allocation2 + $0x10f8] sm:$0xff]
    %v596 = vld [vmem:[#allocation2 + $0x1100] sm:$0xff]
    %v597 = vld [vmem:[#allocation2 + $0x1108] sm:$0xff]
    %v598 = vld [vmem:[#allocation2 + $0x1110] sm:$0xff]
    %v599 = vld [vmem:[#allocation2 + $0x1118] sm:$0xff]
    %v600 = vld [vmem:[#allocation2 + $0x1120] sm:$0xff]
    %v601 = vld [vmem:[#allocation2 + $0x1128] sm:$0xff]
    %v602 = vld [vmem:[#allocation2 + $0x1130] sm:$0xff]
    %v603 = vld [vmem:[#allocation2 + $0x1138] sm:$0xff]
    %v604 = vld [vmem:[#allocation2 + $0x1140] sm:$0xff]
    %v605 = vld [vmem:[#allocation2 + $0x1148] sm:$0xff]
    %v606 = vld [vmem:[#allocation2 + $0x1150] sm:$0xff]
    %v607 = vld [vmem:[#allocation2 + $0x1158] sm:$0xff]
    %v608 = vld [vmem:[#allocation2 + $0x1160] sm:$0xff]
    %v609 = vld [vmem:[#allocation2 + $0x1168] sm:$0xff]
    %v610 = vld [vmem:[#allocation2 + $0x1170] sm:$0xff]
    %v611 = vld [vmem:[#allocation2 + $0x1178] sm:$0xff]
    %v612 = vld [vmem:[#allocation2 + $0x1180] sm:$0xff]
    %v613 = vld [vmem:[#allocation2 + $0x1188] sm:$0xff]
    %v614 = vld [vmem:[#allocation2 + $0x1190] sm:$0xff]
    %v615 = vld [vmem:[#allocation2 + $0x1198] sm:$0xff]
    %v616 = vld [vmem:[#allocation2 + $0x11a0] sm:$0xff]
    %v617 = vld [vmem:[#allocation2 + $0x11a8] sm:$0xff]
    %v618 = vld [vmem:[#allocation2 + $0x11b0] sm:$0xff]
    %v619 = vld [vmem:[#allocation2 + $0x11b8] sm:$0xff]
    %v620 = vld [vmem:[#allocation2 + $0x11c0] sm:$0xff]
    %v621 = vld [vmem:[#allocation2 + $0x11c8] sm:$0xff]
    %v622 = vld [vmem:[#allocation2 + $0x11d0] sm:$0xff]
    %v623 = vld [vmem:[#allocation2 + $0x11d8] sm:$0xff]
    %v624 = vld [vmem:[#allocation2 + $0x11e0] sm:$0xff]
    %v625 = vld [vmem:[#allocation2 + $0x11e8] sm:$0xff]
    %v626 = vld [vmem:[#allocation2 + $0x11f0] sm:$0xff]
    %v627 = vld [vmem:[#allocation2 + $0x11f8] sm:$0xff]
    %v628 = vld [vmem:[#allocation2 + $0x1200] sm:$0xff]
    %v629 = vld [vmem:[#allocation2 + $0x1208] sm:$0xff]
    %v630 = vld [vmem:[#allocation2 + $0x1210] sm:$0xff]
    %v631 = vld [vmem:[#allocation2 + $0x1218] sm:$0xff]
    %v632 = vld [vmem:[#allocation2 + $0x1220] sm:$0xff]
    %v633 = vld [vmem:[#allocation2 + $0x1228] sm:$0xff]
    %v634 = vld [vmem:[#allocation2 + $0x1230] sm:$0xff]
    %v635 = vld [vmem:[#allocation2 + $0x1238] sm:$0xff]
    %v636 = vld [vmem:[#allocation2 + $0x1240] sm:$0xff]
    %v637 = vld [vmem:[#allocation2 + $0x1248] sm:$0xff]
    %v638 = vld [vmem:[#allocation2 + $0x1250] sm:$0xff]
    %v639 = vld [vmem:[#allocation2 + $0x1258] sm:$0xff]
    %v640 = vld [vmem:[#allocation2 + $0x1260] sm:$0xff]
    %v641 = vld [vmem:[#allocation2 + $0x1268] sm:$0xff]
    %v642 = vld [vmem:[#allocation2 + $0x1270] sm:$0xff]
    %v643 = vld [vmem:[#allocation2 + $0x1278] sm:$0xff]
    %v644 = vld [vmem:[#allocation2 + $0x1280] sm:$0xff]
    %v645 = vld [vmem:[#allocation2 + $0x1288] sm:$0xff]
    %v646 = vld [vmem:[#allocation2 + $0x1290] sm:$0xff]
    %v647 = vld [vmem:[#allocation2 + $0x1298] sm:$0xff]
    %v648 = vld [vmem:[#allocation2 + $0x12a0] sm:$0xff]
    %v649 = vld [vmem:[#allocation2 + $0x12a8] sm:$0xff]
    %v650 = vld [vmem:[#allocation2 + $0x12b0] sm:$0xff]
    %v651 = vld [vmem:[#allocation2 + $0x12b8] sm:$0xff]
    %v652 = vld [vmem:[#allocation2 + $0x12c0] sm:$0xff]
    %v653 = vld [vmem:[#allocation2 + $0x12c8] sm:$0xff]
    %v654 = vld [vmem:[#allocation2 + $0x12d0] sm:$0xff]
    %v655 = vld [vmem:[#allocation2 + $0x12d8] sm:$0xff]
    %v656 = vld [vmem:[#allocation2 + $0x12e0] sm:$0xff]
    %v657 = vld [vmem:[#allocation2 + $0x12e8] sm:$0xff]
    %v658 = vld [vmem:[#allocation2 + $0x12f0] sm:$0xff]
    %v659 = vld [vmem:[#allocation2 + $0x12f8] sm:$0xff]
    %v660 = vld [vmem:[#allocation2 + $0x1300] sm:$0xff]
    %v661 = vld [vmem:[#allocation2 + $0x1308] sm:$0xff]
    %v662 = vld [vmem:[#allocation2 + $0x1310] sm:$0xff]
    %v663 = vld [vmem:[#allocation2 + $0x1318] sm:$0xff]
    %v664 = vld [vmem:[#allocation2 + $0x1320] sm:$0xff]
    %v665 = vld [vmem:[#allocation2 + $0x1328] sm:$0xff]
    %v666 = vld [vmem:[#allocation2 + $0x1330] sm:$0xff]
    %v667 = vld [vmem:[#allocation2 + $0x1338] sm:$0xff]
    %v668 = vld [vmem:[#allocation2 + $0x1340] sm:$0xff]
    %v669 = vld [vmem:[#allocation2 + $0x1348] sm:$0xff]
    %v670 = vld [vmem:[#allocation2 + $0x1350] sm:$0xff]
    %v671 = vld [vmem:[#allocation2 + $0x1358] sm:$0xff]
    %v672 = vld [vmem:[#allocation2 + $0x1360] sm:$0xff]
    %v673 = vld [vmem:[#allocation2 + $0x1368] sm:$0xff]
    %v674 = vld [vmem:[#allocation2 + $0x1370] sm:$0xff]
    %v675 = vld [vmem:[#allocation2 + $0x1378] sm:$0xff]
    %v676 = vld [vmem:[#allocation2 + $0x1380] sm:$0xff]
    %v677 = vld [vmem:[#allocation2 + $0x1388] sm:$0xff]
    %v678 = vld [vmem:[#allocation2 + $0x1390] sm:$0xff]
    %v679 = vld [vmem:[#allocation2 + $0x1398] sm:$0xff]
    %v680 = vld [vmem:[#allocation2 + $0x13a0] sm:$0xff]
    %v681 = vld [vmem:[#allocation2 + $0x13a8] sm:$0xff]
    %v682 = vld [vmem:[#allocation2 + $0x13b0] sm:$0xff]
    %v683 = vld [vmem:[#allocation2 + $0x13b8] sm:$0xff]
    %v684 = vld [vmem:[#allocation2 + $0x13c0] sm:$0xff]
    %v685 = vld [vmem:[#allocation2 + $0x13c8] sm:$0xff]
    %v686 = vld [vmem:[#allocation2 + $0x13d0] sm:$0xff]
    %v687 = vld [vmem:[#allocation2 + $0x13d8] sm:$0xff]
    %v688 = vld [vmem:[#allocation2 + $0x13e0] sm:$0xff]
    %v689 = vld [vmem:[#allocation2 + $0x13e8] sm:$0xff]
    %v690 = vld [vmem:[#allocation2 + $0x13f0] sm:$0xff]
    %v691 = vld [vmem:[#allocation2 + $0x13f8] sm:$0xff]
    %v692 = vld [vmem:[#allocation2 + $0x1400] sm:$0xff]
    %v693 = vld [vmem:[#allocation2 + $0x1408] sm:$0xff]
    %v694 = vld [vmem:[#allocation2 + $0x1410] sm:$0xff]
    %v695 = vld [vmem:[#allocation2 + $0x1418] sm:$0xff]
    %v696 = vld [vmem:[#allocation2 + $0x1420] sm:$0xff]
    %v697 = vld [vmem:[#allocation2 + $0x1428] sm:$0xff]
    %v698 = vld [vmem:[#allocation2 + $0x1430] sm:$0xff]
    %v699 = vld [vmem:[#allocation2 + $0x1438] sm:$0xff]
    %v700 = vld [vmem:[#allocation2 + $0x1440] sm:$0xff]
    %v701 = vld [vmem:[#allocation2 + $0x1448] sm:$0xff]
    %v702 = vld [vmem:[#allocation2 + $0x1450] sm:$0xff]
    %v703 = vld [vmem:[#allocation2 + $0x1458] sm:$0xff]
    %v704 = vld [vmem:[#allocation2 + $0x1460] sm:$0xff]
    %v705 = vld [vmem:[#allocation2 + $0x1468] sm:$0xff]
    %v706 = vld [vmem:[#allocation2 + $0x1470] sm:$0xff]
    %v707 = vld [vmem:[#allocation2 + $0x1478] sm:$0xff]
    %v708 = vld [vmem:[#allocation2 + $0x1480] sm:$0xff]
    %v709 = vld [vmem:[#allocation2 + $0x1488] sm:$0xff]
    %v710 = vld [vmem:[#allocation2 + $0x1490] sm:$0xff]
    %v711 = vld [vmem:[#allocation2 + $0x1498] sm:$0xff]
    %v712 = vld [vmem:[#allocation2 + $0x14a0] sm:$0xff]
    %v713 = vld [vmem:[#allocation2 + $0x14a8] sm:$0xff]
    %v714 = vld [vmem:[#allocation2 + $0x14b0] sm:$0xff]
    %v715 = vld [vmem:[#allocation2 + $0x14b8] sm:$0xff]
    %v716 = vld [vmem:[#allocation2 + $0x14c0] sm:$0xff]
    %v717 = vld [vmem:[#allocation2 + $0x14c8] sm:$0xff]
    %v718 = vld [vmem:[#allocation2 + $0x14d0] sm:$0xff]
    %v719 = vld [vmem:[#allocation2 + $0x14d8] sm:$0xff]
    %v720 = vld [vmem:[#allocation2 + $0x14e0] sm:$0xff]
    %v721 = vld [vmem:[#allocation2 + $0x14e8] sm:$0xff]
    %v722 = vld [vmem:[#allocation2 + $0x14f0] sm:$0xff]
    %v723 = vld [vmem:[#allocation2 + $0x14f8] sm:$0xff]
    %v724 = vld [vmem:[#allocation2 + $0x1500] sm:$0xff]
    %v725 = vld [vmem:[#allocation2 + $0x1508] sm:$0xff]
    %v726 = vld [vmem:[#allocation2 + $0x1510] sm:$0xff]
    %v727 = vld [vmem:[#allocation2 + $0x1518] sm:$0xff]
    %v728 = vld [vmem:[#allocation2 + $0x1520] sm:$0xff]
    %v729 = vld [vmem:[#allocation2 + $0x1528] sm:$0xff]
    %v730 = vld [vmem:[#allocation2 + $0x1530] sm:$0xff]
    %v731 = vld [vmem:[#allocation2 + $0x1538] sm:$0xff]
    %v732 = vld [vmem:[#allocation2 + $0x1540] sm:$0xff]
    %v733 = vld [vmem:[#allocation2 + $0x1548] sm:$0xff]
    %v734 = vld [vmem:[#allocation2 + $0x1550] sm:$0xff]
    %v735 = vld [vmem:[#allocation2 + $0x1558] sm:$0xff]
    %v736 = vld [vmem:[#allocation2 + $0x1560] sm:$0xff]
    %v737 = vld [vmem:[#allocation2 + $0x1568] sm:$0xff]
    %v738 = vld [vmem:[#allocation2 + $0x1570] sm:$0xff]
    %v739 = vld [vmem:[#allocation2 + $0x1578] sm:$0xff]
    %v740 = vld [vmem:[#allocation2 + $0x1580] sm:$0xff]
    %v741 = vld [vmem:[#allocation2 + $0x1588] sm:$0xff]
    %v742 = vld [vmem:[#allocation2 + $0x1590] sm:$0xff]
    %v743 = vld [vmem:[#allocation2 + $0x1598] sm:$0xff]
    %v744 = vld [vmem:[#allocation2 + $0x15a0] sm:$0xff]
    %v745 = vld [vmem:[#allocation2 + $0x15a8] sm:$0xff]
    %v746 = vld [vmem:[#allocation2 + $0x15b0] sm:$0xff]
    %v747 = vld [vmem:[#allocation2 + $0x15b8] sm:$0xff]
    %v748 = vld [vmem:[#allocation2 + $0x15c0] sm:$0xff]
    %v749 = vld [vmem:[#allocation2 + $0x15c8] sm:$0xff]
    %v750 = vld [vmem:[#allocation2 + $0x15d0] sm:$0xff]
    %v751 = vld [vmem:[#allocation2 + $0x15d8] sm:$0xff]
    %v752 = vld [vmem:[#allocation2 + $0x15e0] sm:$0xff]
    %v753 = vld [vmem:[#allocation2 + $0x15e8] sm:$0xff]
    %v754 = vld [vmem:[#allocation2 + $0x15f0] sm:$0xff]
    %v755 = vld [vmem:[#allocation2 + $0x15f8] sm:$0xff]
    %v756 = vld [vmem:[#allocation2 + $0x1600] sm:$0xff]
    %v757 = vld [vmem:[#allocation2 + $0x1608] sm:$0xff]
    %v758 = vld [vmem:[#allocation2 + $0x1610] sm:$0xff]
    %v759 = vld [vmem:[#allocation2 + $0x1618] sm:$0xff]
    %v760 = vld [vmem:[#allocation2 + $0x1620] sm:$0xff]
    %v761 = vld [vmem:[#allocation2 + $0x1628] sm:$0xff]
    %v762 = vld [vmem:[#allocation2 + $0x1630] sm:$0xff]
    %v763 = vld [vmem:[#allocation2 + $0x1638] sm:$0xff]
    %v764 = vld [vmem:[#allocation2 + $0x1640] sm:$0xff]
    %v765 = vld [vmem:[#allocation2 + $0x1648] sm:$0xff]
    %v766 = vld [vmem:[#allocation2 + $0x1650] sm:$0xff]
    %v767 = vld [vmem:[#allocation2 + $0x1658] sm:$0xff]
    %v768 = vld [vmem:[#allocation2 + $0x1660] sm:$0xff]
    %v769 = vld [vmem:[#allocation2 + $0x1668] sm:$0xff]
    %v770 = vld [vmem:[#allocation2 + $0x1670] sm:$0xff]
    %v771 = vld [vmem:[#allocation2 + $0x1678] sm:$0xff]
    %v772 = vld [vmem:[#allocation2 + $0x1680] sm:$0xff]
    %v773 = vld [vmem:[#allocation2 + $0x1688] sm:$0xff]
    %v774 = vld [vmem:[#allocation2 + $0x1690] sm:$0xff]
    %v775 = vld [vmem:[#allocation2 + $0x1698] sm:$0xff]
    %v776 = vld [vmem:[#allocation2 + $0x16a0] sm:$0xff]
    %v777 = vld [vmem:[#allocation2 + $0x16a8] sm:$0xff]
    %v778 = vld [vmem:[#allocation2 + $0x16b0] sm:$0xff]
    %v779 = vld [vmem:[#allocation2 + $0x16b8] sm:$0xff]
    %v780 = vld [vmem:[#allocation2 + $0x16c0] sm:$0xff]
    %v781 = vld [vmem:[#allocation2 + $0x16c8] sm:$0xff]
    %v782 = vld [vmem:[#allocation2 + $0x16d0] sm:$0xff]
    %v783 = vld [vmem:[#allocation2 + $0x16d8] sm:$0xff]
    %v784 = vld [vmem:[#allocation2 + $0x16e0] sm:$0xff]
    %v785 = vld [vmem:[#allocation2 + $0x16e8] sm:$0xff]
    %v786 = vld [vmem:[#allocation2 + $0x16f0] sm:$0xff]
    %v787 = vld [vmem:[#allocation2 + $0x16f8] sm:$0xff]
    %v788 = vld [vmem:[#allocation2 + $0x1700] sm:$0xff]
    %v789 = vld [vmem:[#allocation2 + $0x1708] sm:$0xff]
    %v790 = vld [vmem:[#allocation2 + $0x1710] sm:$0xff]
    %v791 = vld [vmem:[#allocation2 + $0x1718] sm:$0xff]
    %v792 = vld [vmem:[#allocation2 + $0x1720] sm:$0xff]
    %v793 = vld [vmem:[#allocation2 + $0x1728] sm:$0xff]
    %v794 = vld [vmem:[#allocation2 + $0x1730] sm:$0xff]
    %v795 = vld [vmem:[#allocation2 + $0x1738] sm:$0xff]
    %v796 = vld [vmem:[#allocation2 + $0x1740] sm:$0xff]
    %v797 = vld [vmem:[#allocation2 + $0x1748] sm:$0xff]
    %v798 = vld [vmem:[#allocation2 + $0x1750] sm:$0xff]
    %v799 = vld [vmem:[#allocation2 + $0x1758] sm:$0xff]
    %v800 = vld [vmem:[#allocation2 + $0x1760] sm:$0xff]
    %v801 = vld [vmem:[#allocation2 + $0x1768] sm:$0xff]
    %v802 = vld [vmem:[#allocation2 + $0x1770] sm:$0xff]
    %v803 = vld [vmem:[#allocation2 + $0x1778] sm:$0xff]
    %v804 = vld [vmem:[#allocation2 + $0x1780] sm:$0xff]
    %v805 = vld [vmem:[#allocation2 + $0x1788] sm:$0xff]
    %v806 = vld [vmem:[#allocation2 + $0x1790] sm:$0xff]
    %v807 = vld [vmem:[#allocation2 + $0x1798] sm:$0xff]
    %v808 = vld [vmem:[#allocation2 + $0x17a0] sm:$0xff]
    %v809 = vld [vmem:[#allocation2 + $0x17a8] sm:$0xff]
    %v810 = vld [vmem:[#allocation2 + $0x17b0] sm:$0xff]
    %v811 = vld [vmem:[#allocation2 + $0x17b8] sm:$0xff]
    %v812 = vld [vmem:[#allocation2 + $0x17c0] sm:$0xff]
    %v813 = vld [vmem:[#allocation2 + $0x17c8] sm:$0xff]
    %v814 = vld [vmem:[#allocation2 + $0x17d0] sm:$0xff]
    %v815 = vld [vmem:[#allocation2 + $0x17d8] sm:$0xff]
    %v816 = vld [vmem:[#allocation2 + $0x17e0] sm:$0xff]
    %v817 = vld [vmem:[#allocation2 + $0x17e8] sm:$0xff]
    %v818 = vld [vmem:[#allocation2 + $0x17f0] sm:$0xff]
    %v819 = vld [vmem:[#allocation2 + $0x17f8] sm:$0xff]
    %v820 = vld [vmem:[#allocation2 + $0x1800] sm:$0xff]
    %v821 = vld [vmem:[#allocation2 + $0x1808] sm:$0xff]
    %v822 = vld [vmem:[#allocation2 + $0x1810] sm:$0xff]
    %v823 = vld [vmem:[#allocation2 + $0x1818] sm:$0xff]
    %v824 = vld [vmem:[#allocation2 + $0x1820] sm:$0xff]
    %v825 = vld [vmem:[#allocation2 + $0x1828] sm:$0xff]
    %v826 = vld [vmem:[#allocation2 + $0x1830] sm:$0xff]
    %v827 = vld [vmem:[#allocation2 + $0x1838] sm:$0xff]
    %v828 = vld [vmem:[#allocation2 + $0x1840] sm:$0xff]
    %v829 = vld [vmem:[#allocation2 + $0x1848] sm:$0xff]
    %v830 = vld [vmem:[#allocation2 + $0x1850] sm:$0xff]
    %v831 = vld [vmem:[#allocation2 + $0x1858] sm:$0xff]
    %v832 = vld [vmem:[#allocation2 + $0x1860] sm:$0xff]
    %v833 = vld [vmem:[#allocation2 + $0x1868] sm:$0xff]
    %v834 = vld [vmem:[#allocation2 + $0x1870] sm:$0xff]
    %v835 = vld [vmem:[#allocation2 + $0x1878] sm:$0xff]
    %v836 = vld [vmem:[#allocation2 + $0x1880] sm:$0xff]
    %v837 = vld [vmem:[#allocation2 + $0x1888] sm:$0xff]
    %v838 = vld [vmem:[#allocation2 + $0x1890] sm:$0xff]
    %v839 = vld [vmem:[#allocation2 + $0x1898] sm:$0xff]
    %v840 = vld [vmem:[#allocation2 + $0x18a0] sm:$0xff]
    %v841 = vld [vmem:[#allocation2 + $0x18a8] sm:$0xff]
    %v842 = vld [vmem:[#allocation2 + $0x18b0] sm:$0xff]
    %v843 = vld [vmem:[#allocation2 + $0x18b8] sm:$0xff]
    %v844 = vld [vmem:[#allocation2 + $0x18c0] sm:$0xff]
    %v845 = vld [vmem:[#allocation2 + $0x18c8] sm:$0xff]
    %v846 = vld [vmem:[#allocation2 + $0x18d0] sm:$0xff]
    %v847 = vld [vmem:[#allocation2 + $0x18d8] sm:$0xff]
    %v848 = vld [vmem:[#allocation2 + $0x18e0] sm:$0xff]
    %v849 = vld [vmem:[#allocation2 + $0x18e8] sm:$0xff]
    %v850 = vld [vmem:[#allocation2 + $0x18f0] sm:$0xff]
    %v851 = vld [vmem:[#allocation2 + $0x18f8] sm:$0xff]
    %v852 = vld [vmem:[#allocation2 + $0x1900] sm:$0xff]
    %v853 = vld [vmem:[#allocation2 + $0x1908] sm:$0xff]
    %v854 = vld [vmem:[#allocation2 + $0x1910] sm:$0xff]
    %v855 = vld [vmem:[#allocation2 + $0x1918] sm:$0xff]
    %v856 = vld [vmem:[#allocation2 + $0x1920] sm:$0xff]
    %v857 = vld [vmem:[#allocation2 + $0x1928] sm:$0xff]
    %v858 = vld [vmem:[#allocation2 + $0x1930] sm:$0xff]
    %v859 = vld [vmem:[#allocation2 + $0x1938] sm:$0xff]
    %v860 = vld [vmem:[#allocation2 + $0x1940] sm:$0xff]
    %v861 = vld [vmem:[#allocation2 + $0x1948] sm:$0xff]
    %v862 = vld [vmem:[#allocation2 + $0x1950] sm:$0xff]
    %v863 = vld [vmem:[#allocation2 + $0x1958] sm:$0xff]
    %v864 = vld [vmem:[#allocation2 + $0x1960] sm:$0xff]
    %v865 = vld [vmem:[#allocation2 + $0x1968] sm:$0xff]
    %v866 = vld [vmem:[#allocation2 + $0x1970] sm:$0xff]
    %v867 = vld [vmem:[#allocation2 + $0x1978] sm:$0xff]
    %v868 = vld [vmem:[#allocation2 + $0x1980] sm:$0xff]
    %v869 = vld [vmem:[#allocation2 + $0x1988] sm:$0xff]
    %v870 = vld [vmem:[#allocation2 + $0x1990] sm:$0xff]
    %v871 = vld [vmem:[#allocation2 + $0x1998] sm:$0xff]
    %v872 = vld [vmem:[#allocation2 + $0x19a0] sm:$0xff]
    %v873 = vld [vmem:[#allocation2 + $0x19a8] sm:$0xff]
    %v874 = vld [vmem:[#allocation2 + $0x19b0] sm:$0xff]
    %v875 = vld [vmem:[#allocation2 + $0x19b8] sm:$0xff]
    %v876 = vld [vmem:[#allocation2 + $0x19c0] sm:$0xff]
    %v877 = vld [vmem:[#allocation2 + $0x19c8] sm:$0xff]
    %v878 = vld [vmem:[#allocation2 + $0x19d0] sm:$0xff]
    %v879 = vld [vmem:[#allocation2 + $0x19d8] sm:$0xff]
    %v880 = vld [vmem:[#allocation2 + $0x19e0] sm:$0xff]
    %v881 = vld [vmem:[#allocation2 + $0x19e8] sm:$0xff]
    %v882 = vld [vmem:[#allocation2 + $0x19f0] sm:$0xff]
    %v883 = vld [vmem:[#allocation2 + $0x19f8] sm:$0xff]
    %v884 = vld [vmem:[#allocation2 + $0x1a00] sm:$0xff]
    %v885 = vld [vmem:[#allocation2 + $0x1a08] sm:$0xff]
    %v886 = vld [vmem:[#allocation2 + $0x1a10] sm:$0xff]
    %v887 = vld [vmem:[#allocation2 + $0x1a18] sm:$0xff]
    %v888 = vld [vmem:[#allocation2 + $0x1a20] sm:$0xff]
    %v889 = vld [vmem:[#allocation2 + $0x1a28] sm:$0xff]
    %v890 = vld [vmem:[#allocation2 + $0x1a30] sm:$0xff]
    %v891 = vld [vmem:[#allocation2 + $0x1a38] sm:$0xff]
    %v892 = vld [vmem:[#allocation2 + $0x1a40] sm:$0xff]
    %v893 = vld [vmem:[#allocation2 + $0x1a48] sm:$0xff]
    %v894 = vld [vmem:[#allocation2 + $0x1a50] sm:$0xff]
    %v895 = vld [vmem:[#allocation2 + $0x1a58] sm:$0xff]
    %v896 = vld [vmem:[#allocation2 + $0x1a60] sm:$0xff]
    %v897 = vld [vmem:[#allocation2 + $0x1a68] sm:$0xff]
    %v898 = vld [vmem:[#allocation2 + $0x1a70] sm:$0xff]
    %v899 = vld [vmem:[#allocation2 + $0x1a78] sm:$0xff]
    %v900 = vld [vmem:[#allocation2 + $0x1a80] sm:$0xff]
    %v901 = vld [vmem:[#allocation2 + $0x1a88] sm:$0xff]
    %v902 = vld [vmem:[#allocation2 + $0x1a90] sm:$0xff]
    %v903 = vld [vmem:[#allocation2 + $0x1a98] sm:$0xff]
    %v904 = vld [vmem:[#allocation2 + $0x1aa0] sm:$0xff]
    %v905 = vld [vmem:[#allocation2 + $0x1aa8] sm:$0xff]
    %v906 = vld [vmem:[#allocation2 + $0x1ab0] sm:$0xff]
    %v907 = vld [vmem:[#allocation2 + $0x1ab8] sm:$0xff]
    %v908 = vld [vmem:[#allocation2 + $0x1ac0] sm:$0xff]
    %v909 = vld [vmem:[#allocation2 + $0x1ac8] sm:$0xff]
    %v910 = vld [vmem:[#allocation2 + $0x1ad0] sm:$0xff]
    %v911 = vld [vmem:[#allocation2 + $0x1ad8] sm:$0xff]
    %v912 = vld [vmem:[#allocation2 + $0x1ae0] sm:$0xff]
    %v913 = vld [vmem:[#allocation2 + $0x1ae8] sm:$0xff]
    %v914 = vld [vmem:[#allocation2 + $0x1af0] sm:$0xff]
    %v915 = vld [vmem:[#allocation2 + $0x1af8] sm:$0xff]
    %v916 = vld [vmem:[#allocation2 + $0x1b00] sm:$0xff]
    %v917 = vld [vmem:[#allocation2 + $0x1b08] sm:$0xff]
    %v918 = vld [vmem:[#allocation2 + $0x1b10] sm:$0xff]
    %v919 = vld [vmem:[#allocation2 + $0x1b18] sm:$0xff]
    %v920 = vld [vmem:[#allocation2 + $0x1b20] sm:$0xff]
    %v921 = vld [vmem:[#allocation2 + $0x1b28] sm:$0xff]
    %v922 = vld [vmem:[#allocation2 + $0x1b30] sm:$0xff]
    %v923 = vld [vmem:[#allocation2 + $0x1b38] sm:$0xff]
    %v924 = vld [vmem:[#allocation2 + $0x1b40] sm:$0xff]
    %v925 = vld [vmem:[#allocation2 + $0x1b48] sm:$0xff]
    %v926 = vld [vmem:[#allocation2 + $0x1b50] sm:$0xff]
    %v927 = vld [vmem:[#allocation2 + $0x1b58] sm:$0xff]
    %v928 = vld [vmem:[#allocation2 + $0x1b60] sm:$0xff]
    %v929 = vld [vmem:[#allocation2 + $0x1b68] sm:$0xff]
    %v930 = vld [vmem:[#allocation2 + $0x1b70] sm:$0xff]
    %v931 = vld [vmem:[#allocation2 + $0x1b78] sm:$0xff]
    %v932 = vld [vmem:[#allocation2 + $0x1b80] sm:$0xff]
    %v933 = vld [vmem:[#allocation2 + $0x1b88] sm:$0xff]
    %v934 = vld [vmem:[#allocation2 + $0x1b90] sm:$0xff]
    %v935 = vld [vmem:[#allocation2 + $0x1b98] sm:$0xff]
    %v936 = vld [vmem:[#allocation2 + $0x1ba0] sm:$0xff]
    %v937 = vld [vmem:[#allocation2 + $0x1ba8] sm:$0xff]
    %v938 = vld [vmem:[#allocation2 + $0x1bb0] sm:$0xff]
    %v939 = vld [vmem:[#allocation2 + $0x1bb8] sm:$0xff]
    %v940 = vld [vmem:[#allocation2 + $0x1bc0] sm:$0xff]
    %v941 = vld [vmem:[#allocation2 + $0x1bc8] sm:$0xff]
    %v942 = vld [vmem:[#allocation2 + $0x1bd0] sm:$0xff]
    %v943 = vld [vmem:[#allocation2 + $0x1bd8] sm:$0xff]
    %v944 = vld [vmem:[#allocation2 + $0x1be0] sm:$0xff]
    %v945 = vld [vmem:[#allocation2 + $0x1be8] sm:$0xff]
    %v946 = vld [vmem:[#allocation2 + $0x1bf0] sm:$0xff]
    %v947 = vld [vmem:[#allocation2 + $0x1bf8] sm:$0xff]
    %v948 = vld [vmem:[#allocation4] sm:$0xff]
    %v949 = vld [vmem:[#allocation4 + $0x8] sm:$0x3f]
    %v952 = vperm.slane %v948, 0
    %v953 = vperm.slane %v948, 1
    %v954 = vperm.slane %v948, 2
    %v955 = vperm.slane %v948, 3
    %v956 = vperm.slane %v948, 4
    %v957 = vperm.slane %v948, 5
    %v958 = vperm.slane %v948, 6
    %v959 = vperm.slane %v948, 7
    %v960 = vperm.slane %v949, 0
    %v961 = vperm.slane %v949, 1
    %v962 = vperm.slane %v949, 2
    %v963 = vperm.slane %v949, 3
    %v964 = vperm.slane %v949, 4
    %v965 = vperm.slane %v949, 5
    %v988 = vunpack.c.l.b16 %v44
    %v989 = vunpack.c.h.b16 %v44
    %v990 = vunpack.c.l.b16 %v45
    %v991 = vunpack.c.h.b16 %v45
    %v992 = vunpack.c.l.b16 %v46
    %v993 = vunpack.c.h.b16 %v46
    %v994 = vunpack.c.l.b16 %v47
    %v995 = vunpack.c.h.b16 %v47
    %v996 = vunpack.c.l.b16 %v48
    %v997 = vunpack.c.h.b16 %v48
    %v998 = vunpack.c.l.b16 %v49
    %v999 = vunpack.c.h.b16 %v49
    %v1000 = vunpack.c.l.b16 %v50
    %v1001 = vunpack.c.h.b16 %v50
    %v1002 = vunpack.c.l.b16 %v51
    %v1003 = vunpack.c.h.b16 %v51
    %v1004 = vpack.c.b16 %v996, %v988
    %v1005 = vpack.c.b16 %v997, %v989
    %v1006 = vpack.c.b16 %v998, %v990
    %v1007 = vpack.c.b16 %v999, %v991
    %v1008 = vpack.c.b16 %v1000, %v992
    %v1009 = vpack.c.b16 %v1001, %v993
    %v1010 = vpack.c.b16 %v1002, %v994
    %v1011 = vpack.c.b16 %v1003, %v995
    %v1916 = vunpack.c.l.b16 %v52
    %v1917 = vunpack.c.h.b16 %v52
    %v1918 = vunpack.c.l.b16 %v53
    %v1919 = vunpack.c.h.b16 %v53
    %v1920 = vunpack.c.l.b16 %v54
    %v1921 = vunpack.c.h.b16 %v54
    %v1922 = vunpack.c.l.b16 %v55
    %v1923 = vunpack.c.h.b16 %v55
    %v1924 = vunpack.c.l.b16 %v56
    %v1925 = vunpack.c.h.b16 %v56
    %v1926 = vunpack.c.l.b16 %v57
    %v1927 = vunpack.c.h.b16 %v57
    %v1928 = vunpack.c.l.b16 %v58
    %v1929 = vunpack.c.h.b16 %v58
    %v1930 = vunpack.c.l.b16 %v59
    %v1931 = vunpack.c.h.b16 %v59
    %v1932 = vunpack.c.l.b16 %v60
    %v1933 = vunpack.c.h.b16 %v60
    %v1934 = vunpack.c.l.b16 %v61
    %v1935 = vunpack.c.h.b16 %v61
    %v1936 = vunpack.c.l.b16 %v62
    %v1937 = vunpack.c.h.b16 %v62
    %v1938 = vunpack.c.l.b16 %v63
    %v1939 = vunpack.c.h.b16 %v63
    %v1940 = vunpack.c.l.b16 %v64
    %v1941 = vunpack.c.h.b16 %v64
    %v1942 = vunpack.c.l.b16 %v65
    %v1943 = vunpack.c.h.b16 %v65
    %v1944 = vunpack.c.l.b16 %v66
    %v1945 = vunpack.c.h.b16 %v66
    %v1946 = vunpack.c.l.b16 %v67
    %v1947 = vunpack.c.h.b16 %v67
    %v1948 = vunpack.c.l.b16 %v68
    %v1949 = vunpack.c.h.b16 %v68
    %v1950 = vunpack.c.l.b16 %v69
    %v1951 = vunpack.c.h.b16 %v69
    %v1952 = vunpack.c.l.b16 %v70
    %v1953 = vunpack.c.h.b16 %v70
    %v1954 = vunpack.c.l.b16 %v71
    %v1955 = vunpack.c.h.b16 %v71
    %v1956 = vunpack.c.l.b16 %v72
    %v1957 = vunpack.c.h.b16 %v72
    %v1958 = vunpack.c.l.b16 %v73
    %v1959 = vunpack.c.h.b16 %v73
    %v1960 = vunpack.c.l.b16 %v74
    %v1961 = vunpack.c.h.b16 %v74
    %v1962 = vunpack.c.l.b16 %v75
    %v1963 = vunpack.c.h.b16 %v75
    %v1964 = vunpack.c.l.b16 %v76
    %v1965 = vunpack.c.h.b16 %v76
    %v1966 = vunpack.c.l.b16 %v77
    %v1967 = vunpack.c.h.b16 %v77
    %v1968 = vunpack.c.l.b16 %v78
    %v1969 = vunpack.c.h.b16 %v78
    %v1970 = vunpack.c.l.b16 %v79
    %v1971 = vunpack.c.h.b16 %v79
    %v1972 = vunpack.c.l.b16 %v80
    %v1973 = vunpack.c.h.b16 %v80
    %v1974 = vunpack.c.l.b16 %v81
    %v1975 = vunpack.c.h.b16 %v81
    %v1976 = vunpack.c.l.b16 %v82
    %v1977 = vunpack.c.h.b16 %v82
    %v1978 = vunpack.c.l.b16 %v83
    %v1979 = vunpack.c.h.b16 %v83
    %v1980 = vunpack.c.l.b16 %v84
    %v1981 = vunpack.c.h.b16 %v84
    %v1982 = vunpack.c.l.b16 %v85
    %v1983 = vunpack.c.h.b16 %v85
    %v1984 = vunpack.c.l.b16 %v86
    %v1985 = vunpack.c.h.b16 %v86
    %v1986 = vunpack.c.l.b16 %v87
    %v1987 = vunpack.c.h.b16 %v87
    %v1988 = vunpack.c.l.b16 %v88
    %v1989 = vunpack.c.h.b16 %v88
    %v1990 = vunpack.c.l.b16 %v89
    %v1991 = vunpack.c.h.b16 %v89
    %v1992 = vunpack.c.l.b16 %v90
    %v1993 = vunpack.c.h.b16 %v90
    %v1994 = vunpack.c.l.b16 %v91
    %v1995 = vunpack.c.h.b16 %v91
    %v1996 = vunpack.c.l.b16 %v92
    %v1997 = vunpack.c.h.b16 %v92
    %v1998 = vunpack.c.l.b16 %v93
    %v1999 = vunpack.c.h.b16 %v93
    %v2000 = vunpack.c.l.b16 %v94
    %v2001 = vunpack.c.h.b16 %v94
    %v2002 = vunpack.c.l.b16 %v95
    %v2003 = vunpack.c.h.b16 %v95
    %v2004 = vunpack.c.l.b16 %v96
    %v2005 = vunpack.c.h.b16 %v96
    %v2006 = vunpack.c.l.b16 %v97
    %v2007 = vunpack.c.h.b16 %v97
    %v2008 = vunpack.c.l.b16 %v98
    %v2009 = vunpack.c.h.b16 %v98
    %v2010 = vunpack.c.l.b16 %v99
    %v2011 = vunpack.c.h.b16 %v99
    %v2012 = vunpack.c.l.b16 %v100
    %v2013 = vunpack.c.h.b16 %v100
    %v2014 = vunpack.c.l.b16 %v101
    %v2015 = vunpack.c.h.b16 %v101
    %v2016 = vunpack.c.l.b16 %v102
    %v2017 = vunpack.c.h.b16 %v102
    %v2018 = vunpack.c.l.b16 %v103
    %v2019 = vunpack.c.h.b16 %v103
    %v2020 = vunpack.c.l.b16 %v104
    %v2021 = vunpack.c.h.b16 %v104
    %v2022 = vunpack.c.l.b16 %v105
    %v2023 = vunpack.c.h.b16 %v105
    %v2024 = vunpack.c.l.b16 %v106
    %v2025 = vunpack.c.h.b16 %v106
    %v2026 = vunpack.c.l.b16 %v107
    %v2027 = vunpack.c.h.b16 %v107
    %v2028 = vunpack.c.l.b16 %v108
    %v2029 = vunpack.c.h.b16 %v108
    %v2030 = vunpack.c.l.b16 %v109
    %v2031 = vunpack.c.h.b16 %v109
    %v2032 = vunpack.c.l.b16 %v110
    %v2033 = vunpack.c.h.b16 %v110
    %v2034 = vunpack.c.l.b16 %v111
    %v2035 = vunpack.c.h.b16 %v111
    %v2036 = vunpack.c.l.b16 %v112
    %v2037 = vunpack.c.h.b16 %v112
    %v2038 = vunpack.c.l.b16 %v113
    %v2039 = vunpack.c.h.b16 %v113
    %v2040 = vunpack.c.l.b16 %v114
    %v2041 = vunpack.c.h.b16 %v114
    %v2042 = vunpack.c.l.b16 %v115
    %v2043 = vunpack.c.h.b16 %v115
    %v2044 = vunpack.c.l.b16 %v116
    %v2045 = vunpack.c.h.b16 %v116
    %v2046 = vunpack.c.l.b16 %v117
    %v2047 = vunpack.c.h.b16 %v117
    %v2048 = vunpack.c.l.b16 %v118
    %v2049 = vunpack.c.h.b16 %v118
    %v2050 = vunpack.c.l.b16 %v119
    %v2051 = vunpack.c.h.b16 %v119
    %v2052 = vunpack.c.l.b16 %v120
    %v2053 = vunpack.c.h.b16 %v120
    %v2054 = vunpack.c.l.b16 %v121
    %v2055 = vunpack.c.h.b16 %v121
    %v2056 = vunpack.c.l.b16 %v122
    %v2057 = vunpack.c.h.b16 %v122
    %v2058 = vunpack.c.l.b16 %v123
    %v2059 = vunpack.c.h.b16 %v123
    %v2060 = vunpack.c.l.b16 %v124
    %v2061 = vunpack.c.h.b16 %v124
    %v2062 = vunpack.c.l.b16 %v125
    %v2063 = vunpack.c.h.b16 %v125
    %v2064 = vunpack.c.l.b16 %v126
    %v2065 = vunpack.c.h.b16 %v126
    %v2066 = vunpack.c.l.b16 %v127
    %v2067 = vunpack.c.h.b16 %v127
    %v2068 = vunpack.c.l.b16 %v128
    %v2069 = vunpack.c.h.b16 %v128
    %v2070 = vunpack.c.l.b16 %v129
    %v2071 = vunpack.c.h.b16 %v129
    %v2072 = vunpack.c.l.b16 %v130
    %v2073 = vunpack.c.h.b16 %v130
    %v2074 = vunpack.c.l.b16 %v131
    %v2075 = vunpack.c.h.b16 %v131
    %v2076 = vunpack.c.l.b16 %v132
    %v2077 = vunpack.c.h.b16 %v132
    %v2078 = vunpack.c.l.b16 %v133
    %v2079 = vunpack.c.h.b16 %v133
    %v2080 = vunpack.c.l.b16 %v134
    %v2081 = vunpack.c.h.b16 %v134
    %v2082 = vunpack.c.l.b16 %v135
    %v2083 = vunpack.c.h.b16 %v135
    %v2084 = vunpack.c.l.b16 %v136
    %v2085 = vunpack.c.h.b16 %v136
    %v2086 = vunpack.c.l.b16 %v137
    %v2087 = vunpack.c.h.b16 %v137
    %v2088 = vunpack.c.l.b16 %v138
    %v2089 = vunpack.c.h.b16 %v138
    %v2090 = vunpack.c.l.b16 %v139
    %v2091 = vunpack.c.h.b16 %v139
    %v2092 = vunpack.c.l.b16 %v140
    %v2093 = vunpack.c.h.b16 %v140
    %v2094 = vunpack.c.l.b16 %v141
    %v2095 = vunpack.c.h.b16 %v141
    %v2096 = vunpack.c.l.b16 %v142
    %v2097 = vunpack.c.h.b16 %v142
    %v2098 = vunpack.c.l.b16 %v143
    %v2099 = vunpack.c.h.b16 %v143
    %v2100 = vunpack.c.l.b16 %v144
    %v2101 = vunpack.c.h.b16 %v144
    %v2102 = vunpack.c.l.b16 %v145
    %v2103 = vunpack.c.h.b16 %v145
    %v2104 = vunpack.c.l.b16 %v146
    %v2105 = vunpack.c.h.b16 %v146
    %v2106 = vunpack.c.l.b16 %v147
    %v2107 = vunpack.c.h.b16 %v147
    %v2108 = vunpack.c.l.b16 %v148
    %v2109 = vunpack.c.h.b16 %v148
    %v2110 = vunpack.c.l.b16 %v149
    %v2111 = vunpack.c.h.b16 %v149
    %v2112 = vunpack.c.l.b16 %v150
    %v2113 = vunpack.c.h.b16 %v150
    %v2114 = vunpack.c.l.b16 %v151
    %v2115 = vunpack.c.h.b16 %v151
    %v2116 = vunpack.c.l.b16 %v152
    %v2117 = vunpack.c.h.b16 %v152
    %v2118 = vunpack.c.l.b16 %v153
    %v2119 = vunpack.c.h.b16 %v153
    %v2120 = vunpack.c.l.b16 %v154
    %v2121 = vunpack.c.h.b16 %v154
    %v2122 = vunpack.c.l.b16 %v155
    %v2123 = vunpack.c.h.b16 %v155
    %v2124 = vunpack.c.l.b16 %v156
    %v2125 = vunpack.c.h.b16 %v156
    %v2126 = vunpack.c.l.b16 %v157
    %v2127 = vunpack.c.h.b16 %v157
    %v2128 = vunpack.c.l.b16 %v158
    %v2129 = vunpack.c.h.b16 %v158
    %v2130 = vunpack.c.l.b16 %v159
    %v2131 = vunpack.c.h.b16 %v159
    %v2132 = vunpack.c.l.b16 %v160
    %v2133 = vunpack.c.h.b16 %v160
    %v2134 = vunpack.c.l.b16 %v161
    %v2135 = vunpack.c.h.b16 %v161
    %v2136 = vunpack.c.l.b16 %v162
    %v2137 = vunpack.c.h.b16 %v162
    %v2138 = vunpack.c.l.b16 %v163
    %v2139 = vunpack.c.h.b16 %v163
    %v2140 = vunpack.c.l.b16 %v164
    %v2141 = vunpack.c.h.b16 %v164
    %v2142 = vunpack.c.l.b16 %v165
    %v2143 = vunpack.c.h.b16 %v165
    %v2144 = vunpack.c.l.b16 %v166
    %v2145 = vunpack.c.h.b16 %v166
    %v2146 = vunpack.c.l.b16 %v167
    %v2147 = vunpack.c.h.b16 %v167
    %v2148 = vunpack.c.l.b16 %v168
    %v2149 = vunpack.c.h.b16 %v168
    %v2150 = vunpack.c.l.b16 %v169
    %v2151 = vunpack.c.h.b16 %v169
    %v2152 = vunpack.c.l.b16 %v170
    %v2153 = vunpack.c.h.b16 %v170
    %v2154 = vunpack.c.l.b16 %v171
    %v2155 = vunpack.c.h.b16 %v171
    %v2156 = vunpack.c.l.b16 %v172
    %v2157 = vunpack.c.h.b16 %v172
    %v2158 = vunpack.c.l.b16 %v173
    %v2159 = vunpack.c.h.b16 %v173
    %v2160 = vunpack.c.l.b16 %v174
    %v2161 = vunpack.c.h.b16 %v174
    %v2162 = vunpack.c.l.b16 %v175
    %v2163 = vunpack.c.h.b16 %v175
    %v2164 = vunpack.c.l.b16 %v176
    %v2165 = vunpack.c.h.b16 %v176
    %v2166 = vunpack.c.l.b16 %v177
    %v2167 = vunpack.c.h.b16 %v177
    %v2168 = vunpack.c.l.b16 %v178
    %v2169 = vunpack.c.h.b16 %v178
    %v2170 = vunpack.c.l.b16 %v179
    %v2171 = vunpack.c.h.b16 %v179
    %v2172 = vunpack.c.l.b16 %v180
    %v2173 = vunpack.c.h.b16 %v180
    %v2174 = vunpack.c.l.b16 %v181
    %v2175 = vunpack.c.h.b16 %v181
    %v2176 = vunpack.c.l.b16 %v182
    %v2177 = vunpack.c.h.b16 %v182
    %v2178 = vunpack.c.l.b16 %v183
    %v2179 = vunpack.c.h.b16 %v183
    %v2180 = vunpack.c.l.b16 %v184
    %v2181 = vunpack.c.h.b16 %v184
    %v2182 = vunpack.c.l.b16 %v185
    %v2183 = vunpack.c.h.b16 %v185
    %v2184 = vunpack.c.l.b16 %v186
    %v2185 = vunpack.c.h.b16 %v186
    %v2186 = vunpack.c.l.b16 %v187
    %v2187 = vunpack.c.h.b16 %v187
    %v2188 = vunpack.c.l.b16 %v188
    %v2189 = vunpack.c.h.b16 %v188
    %v2190 = vunpack.c.l.b16 %v189
    %v2191 = vunpack.c.h.b16 %v189
    %v2192 = vunpack.c.l.b16 %v190
    %v2193 = vunpack.c.h.b16 %v190
    %v2194 = vunpack.c.l.b16 %v191
    %v2195 = vunpack.c.h.b16 %v191
    %v2196 = vunpack.c.l.b16 %v192
    %v2197 = vunpack.c.h.b16 %v192
    %v2198 = vunpack.c.l.b16 %v193
    %v2199 = vunpack.c.h.b16 %v193
    %v2200 = vunpack.c.l.b16 %v194
    %v2201 = vunpack.c.h.b16 %v194
    %v2202 = vunpack.c.l.b16 %v195
    %v2203 = vunpack.c.h.b16 %v195
    %v2204 = vunpack.c.l.b16 %v196
    %v2205 = vunpack.c.h.b16 %v196
    %v2206 = vunpack.c.l.b16 %v197
    %v2207 = vunpack.c.h.b16 %v197
    %v2208 = vunpack.c.l.b16 %v198
    %v2209 = vunpack.c.h.b16 %v198
    %v2210 = vunpack.c.l.b16 %v199
    %v2211 = vunpack.c.h.b16 %v199
    %v2212 = vunpack.c.l.b16 %v200
    %v2213 = vunpack.c.h.b16 %v200
    %v2214 = vunpack.c.l.b16 %v201
    %v2215 = vunpack.c.h.b16 %v201
    %v2216 = vunpack.c.l.b16 %v202
    %v2217 = vunpack.c.h.b16 %v202
    %v2218 = vunpack.c.l.b16 %v203
    %v2219 = vunpack.c.h.b16 %v203
    %v2220 = vunpack.c.l.b16 %v204
    %v2221 = vunpack.c.h.b16 %v204
    %v2222 = vunpack.c.l.b16 %v205
    %v2223 = vunpack.c.h.b16 %v205
    %v2224 = vunpack.c.l.b16 %v206
    %v2225 = vunpack.c.h.b16 %v206
    %v2226 = vunpack.c.l.b16 %v207
    %v2227 = vunpack.c.h.b16 %v207
    %v2228 = vunpack.c.l.b16 %v208
    %v2229 = vunpack.c.h.b16 %v208
    %v2230 = vunpack.c.l.b16 %v209
    %v2231 = vunpack.c.h.b16 %v209
    %v2232 = vunpack.c.l.b16 %v210
    %v2233 = vunpack.c.h.b16 %v210
    %v2234 = vunpack.c.l.b16 %v211
    %v2235 = vunpack.c.h.b16 %v211
    %v2236 = vunpack.c.l.b16 %v212
    %v2237 = vunpack.c.h.b16 %v212
    %v2238 = vunpack.c.l.b16 %v213
    %v2239 = vunpack.c.h.b16 %v213
    %v2240 = vunpack.c.l.b16 %v214
    %v2241 = vunpack.c.h.b16 %v214
    %v2242 = vunpack.c.l.b16 %v215
    %v2243 = vunpack.c.h.b16 %v215
    %v2244 = vunpack.c.l.b16 %v216
    %v2245 = vunpack.c.h.b16 %v216
    %v2246 = vunpack.c.l.b16 %v217
    %v2247 = vunpack.c.h.b16 %v217
    %v2248 = vunpack.c.l.b16 %v218
    %v2249 = vunpack.c.h.b16 %v218
    %v2250 = vunpack.c.l.b16 %v219
    %v2251 = vunpack.c.h.b16 %v219
    %v2252 = vunpack.c.l.b16 %v220
    %v2253 = vunpack.c.h.b16 %v220
    %v2254 = vunpack.c.l.b16 %v221
    %v2255 = vunpack.c.h.b16 %v221
    %v2256 = vunpack.c.l.b16 %v222
    %v2257 = vunpack.c.h.b16 %v222
    %v2258 = vunpack.c.l.b16 %v223
    %v2259 = vunpack.c.h.b16 %v223
    %v2260 = vunpack.c.l.b16 %v224
    %v2261 = vunpack.c.h.b16 %v224
    %v2262 = vunpack.c.l.b16 %v225
    %v2263 = vunpack.c.h.b16 %v225
    %v2264 = vunpack.c.l.b16 %v226
    %v2265 = vunpack.c.h.b16 %v226
    %v2266 = vunpack.c.l.b16 %v227
    %v2267 = vunpack.c.h.b16 %v227
    %v2268 = vunpack.c.l.b16 %v228
    %v2269 = vunpack.c.h.b16 %v228
    %v2270 = vunpack.c.l.b16 %v229
    %v2271 = vunpack.c.h.b16 %v229
    %v2272 = vunpack.c.l.b16 %v230
    %v2273 = vunpack.c.h.b16 %v230
    %v2274 = vunpack.c.l.b16 %v231
    %v2275 = vunpack.c.h.b16 %v231
    %v2276 = vunpack.c.l.b16 %v232
    %v2277 = vunpack.c.h.b16 %v232
    %v2278 = vunpack.c.l.b16 %v233
    %v2279 = vunpack.c.h.b16 %v233
    %v2280 = vunpack.c.l.b16 %v234
    %v2281 = vunpack.c.h.b16 %v234
    %v2282 = vunpack.c.l.b16 %v235
    %v2283 = vunpack.c.h.b16 %v235
    %v2284 = vunpack.c.l.b16 %v236
    %v2285 = vunpack.c.h.b16 %v236
    %v2286 = vunpack.c.l.b16 %v237
    %v2287 = vunpack.c.h.b16 %v237
    %v2288 = vunpack.c.l.b16 %v238
    %v2289 = vunpack.c.h.b16 %v238
    %v2290 = vunpack.c.l.b16 %v239
    %v2291 = vunpack.c.h.b16 %v239
    %v2292 = vunpack.c.l.b16 %v240
    %v2293 = vunpack.c.h.b16 %v240
    %v2294 = vunpack.c.l.b16 %v241
    %v2295 = vunpack.c.h.b16 %v241
    %v2296 = vunpack.c.l.b16 %v242
    %v2297 = vunpack.c.h.b16 %v242
    %v2298 = vunpack.c.l.b16 %v243
    %v2299 = vunpack.c.h.b16 %v243
    %v2300 = vunpack.c.l.b16 %v244
    %v2301 = vunpack.c.h.b16 %v244
    %v2302 = vunpack.c.l.b16 %v245
    %v2303 = vunpack.c.h.b16 %v245
    %v2304 = vunpack.c.l.b16 %v246
    %v2305 = vunpack.c.h.b16 %v246
    %v2306 = vunpack.c.l.b16 %v247
    %v2307 = vunpack.c.h.b16 %v247
    %v2308 = vunpack.c.l.b16 %v248
    %v2309 = vunpack.c.h.b16 %v248
    %v2310 = vunpack.c.l.b16 %v249
    %v2311 = vunpack.c.h.b16 %v249
    %v2312 = vunpack.c.l.b16 %v250
    %v2313 = vunpack.c.h.b16 %v250
    %v2314 = vunpack.c.l.b16 %v251
    %v2315 = vunpack.c.h.b16 %v251
    %v2316 = vunpack.c.l.b16 %v252
    %v2317 = vunpack.c.h.b16 %v252
    %v2318 = vunpack.c.l.b16 %v253
    %v2319 = vunpack.c.h.b16 %v253
    %v2320 = vunpack.c.l.b16 %v254
    %v2321 = vunpack.c.h.b16 %v254
    %v2322 = vunpack.c.l.b16 %v255
    %v2323 = vunpack.c.h.b16 %v255
    %v2324 = vunpack.c.l.b16 %v256
    %v2325 = vunpack.c.h.b16 %v256
    %v2326 = vunpack.c.l.b16 %v257
    %v2327 = vunpack.c.h.b16 %v257
    %v2328 = vunpack.c.l.b16 %v258
    %v2329 = vunpack.c.h.b16 %v258
    %v2330 = vunpack.c.l.b16 %v259
    %v2331 = vunpack.c.h.b16 %v259
    %v2332 = vunpack.c.l.b16 %v260
    %v2333 = vunpack.c.h.b16 %v260
    %v2334 = vunpack.c.l.b16 %v261
    %v2335 = vunpack.c.h.b16 %v261
    %v2336 = vunpack.c.l.b16 %v262
    %v2337 = vunpack.c.h.b16 %v262
    %v2338 = vunpack.c.l.b16 %v263
    %v2339 = vunpack.c.h.b16 %v263
    %v2340 = vunpack.c.l.b16 %v264
    %v2341 = vunpack.c.h.b16 %v264
    %v2342 = vunpack.c.l.b16 %v265
    %v2343 = vunpack.c.h.b16 %v265
    %v2344 = vunpack.c.l.b16 %v266
    %v2345 = vunpack.c.h.b16 %v266
    %v2346 = vunpack.c.l.b16 %v267
    %v2347 = vunpack.c.h.b16 %v267
    %v2348 = vunpack.c.l.b16 %v268
    %v2349 = vunpack.c.h.b16 %v268
    %v2350 = vunpack.c.l.b16 %v269
    %v2351 = vunpack.c.h.b16 %v269
    %v2352 = vunpack.c.l.b16 %v270
    %v2353 = vunpack.c.h.b16 %v270
    %v2354 = vunpack.c.l.b16 %v271
    %v2355 = vunpack.c.h.b16 %v271
    %v2356 = vunpack.c.l.b16 %v272
    %v2357 = vunpack.c.h.b16 %v272
    %v2358 = vunpack.c.l.b16 %v273
    %v2359 = vunpack.c.h.b16 %v273
    %v2360 = vunpack.c.l.b16 %v274
    %v2361 = vunpack.c.h.b16 %v274
    %v2362 = vunpack.c.l.b16 %v275
    %v2363 = vunpack.c.h.b16 %v275
    %v2364 = vunpack.c.l.b16 %v276
    %v2365 = vunpack.c.h.b16 %v276
    %v2366 = vunpack.c.l.b16 %v277
    %v2367 = vunpack.c.h.b16 %v277
    %v2368 = vunpack.c.l.b16 %v278
    %v2369 = vunpack.c.h.b16 %v278
    %v2370 = vunpack.c.l.b16 %v279
    %v2371 = vunpack.c.h.b16 %v279
    %v2372 = vunpack.c.l.b16 %v280
    %v2373 = vunpack.c.h.b16 %v280
    %v2374 = vunpack.c.l.b16 %v281
    %v2375 = vunpack.c.h.b16 %v281
    %v2376 = vunpack.c.l.b16 %v282
    %v2377 = vunpack.c.h.b16 %v282
    %v2378 = vunpack.c.l.b16 %v283
    %v2379 = vunpack.c.h.b16 %v283
    %v2380 = vunpack.c.l.b16 %v284
    %v2381 = vunpack.c.h.b16 %v284
    %v2382 = vunpack.c.l.b16 %v285
    %v2383 = vunpack.c.h.b16 %v285
    %v2384 = vunpack.c.l.b16 %v286
    %v2385 = vunpack.c.h.b16 %v286
    %v2386 = vunpack.c.l.b16 %v287
    %v2387 = vunpack.c.h.b16 %v287
    %v2388 = vunpack.c.l.b16 %v288
    %v2389 = vunpack.c.h.b16 %v288
    %v2390 = vunpack.c.l.b16 %v289
    %v2391 = vunpack.c.h.b16 %v289
    %v2392 = vunpack.c.l.b16 %v290
    %v2393 = vunpack.c.h.b16 %v290
    %v2394 = vunpack.c.l.b16 %v291
    %v2395 = vunpack.c.h.b16 %v291
    %v2396 = vunpack.c.l.b16 %v292
    %v2397 = vunpack.c.h.b16 %v292
    %v2398 = vunpack.c.l.b16 %v293
    %v2399 = vunpack.c.h.b16 %v293
    %v2400 = vunpack.c.l.b16 %v294
    %v2401 = vunpack.c.h.b16 %v294
    %v2402 = vunpack.c.l.b16 %v295
    %v2403 = vunpack.c.h.b16 %v295
    %v2404 = vunpack.c.l.b16 %v296
    %v2405 = vunpack.c.h.b16 %v296
    %v2406 = vunpack.c.l.b16 %v297
    %v2407 = vunpack.c.h.b16 %v297
    %v2408 = vunpack.c.l.b16 %v298
    %v2409 = vunpack.c.h.b16 %v298
    %v2410 = vunpack.c.l.b16 %v299
    %v2411 = vunpack.c.h.b16 %v299
    %v2412 = vunpack.c.l.b16 %v300
    %v2413 = vunpack.c.h.b16 %v300
    %v2414 = vunpack.c.l.b16 %v301
    %v2415 = vunpack.c.h.b16 %v301
    %v2416 = vunpack.c.l.b16 %v302
    %v2417 = vunpack.c.h.b16 %v302
    %v2418 = vunpack.c.l.b16 %v303
    %v2419 = vunpack.c.h.b16 %v303
    %v2420 = vunpack.c.l.b16 %v304
    %v2421 = vunpack.c.h.b16 %v304
    %v2422 = vunpack.c.l.b16 %v305
    %v2423 = vunpack.c.h.b16 %v305
    %v2424 = vunpack.c.l.b16 %v306
    %v2425 = vunpack.c.h.b16 %v306
    %v2426 = vunpack.c.l.b16 %v307
    %v2427 = vunpack.c.h.b16 %v307
    %v2428 = vunpack.c.l.b16 %v308
    %v2429 = vunpack.c.h.b16 %v308
    %v2430 = vunpack.c.l.b16 %v309
    %v2431 = vunpack.c.h.b16 %v309
    %v2432 = vunpack.c.l.b16 %v310
    %v2433 = vunpack.c.h.b16 %v310
    %v2434 = vunpack.c.l.b16 %v311
    %v2435 = vunpack.c.h.b16 %v311
    %v2436 = vunpack.c.l.b16 %v312
    %v2437 = vunpack.c.h.b16 %v312
    %v2438 = vunpack.c.l.b16 %v313
    %v2439 = vunpack.c.h.b16 %v313
    %v2440 = vunpack.c.l.b16 %v314
    %v2441 = vunpack.c.h.b16 %v314
    %v2442 = vunpack.c.l.b16 %v315
    %v2443 = vunpack.c.h.b16 %v315
    %v2444 = vunpack.c.l.b16 %v316
    %v2445 = vunpack.c.h.b16 %v316
    %v2446 = vunpack.c.l.b16 %v317
    %v2447 = vunpack.c.h.b16 %v317
    %v2448 = vunpack.c.l.b16 %v318
    %v2449 = vunpack.c.h.b16 %v318
    %v2450 = vunpack.c.l.b16 %v319
    %v2451 = vunpack.c.h.b16 %v319
    %v2452 = vunpack.c.l.b16 %v320
    %v2453 = vunpack.c.h.b16 %v320
    %v2454 = vunpack.c.l.b16 %v321
    %v2455 = vunpack.c.h.b16 %v321
    %v2456 = vunpack.c.l.b16 %v322
    %v2457 = vunpack.c.h.b16 %v322
    %v2458 = vunpack.c.l.b16 %v323
    %v2459 = vunpack.c.h.b16 %v323
    %v2460 = vunpack.c.l.b16 %v324
    %v2461 = vunpack.c.h.b16 %v324
    %v2462 = vunpack.c.l.b16 %v325
    %v2463 = vunpack.c.h.b16 %v325
    %v2464 = vunpack.c.l.b16 %v326
    %v2465 = vunpack.c.h.b16 %v326
    %v2466 = vunpack.c.l.b16 %v327
    %v2467 = vunpack.c.h.b16 %v327
    %v2468 = vunpack.c.l.b16 %v328
    %v2469 = vunpack.c.h.b16 %v328
    %v2470 = vunpack.c.l.b16 %v329
    %v2471 = vunpack.c.h.b16 %v329
    %v2472 = vunpack.c.l.b16 %v330
    %v2473 = vunpack.c.h.b16 %v330
    %v2474 = vunpack.c.l.b16 %v331
    %v2475 = vunpack.c.h.b16 %v331
    %v2476 = vunpack.c.l.b16 %v332
    %v2477 = vunpack.c.h.b16 %v332
    %v2478 = vunpack.c.l.b16 %v333
    %v2479 = vunpack.c.h.b16 %v333
    %v2480 = vunpack.c.l.b16 %v334
    %v2481 = vunpack.c.h.b16 %v334
    %v2482 = vunpack.c.l.b16 %v335
    %v2483 = vunpack.c.h.b16 %v335
    %v2484 = vunpack.c.l.b16 %v336
    %v2485 = vunpack.c.h.b16 %v336
    %v2486 = vunpack.c.l.b16 %v337
    %v2487 = vunpack.c.h.b16 %v337
    %v2488 = vunpack.c.l.b16 %v338
    %v2489 = vunpack.c.h.b16 %v338
    %v2490 = vunpack.c.l.b16 %v339
    %v2491 = vunpack.c.h.b16 %v339
    %v2492 = vunpack.c.l.b16 %v340
    %v2493 = vunpack.c.h.b16 %v340
    %v2494 = vunpack.c.l.b16 %v341
    %v2495 = vunpack.c.h.b16 %v341
    %v2496 = vunpack.c.l.b16 %v342
    %v2497 = vunpack.c.h.b16 %v342
    %v2498 = vunpack.c.l.b16 %v343
    %v2499 = vunpack.c.h.b16 %v343
    %v2500 = vunpack.c.l.b16 %v344
    %v2501 = vunpack.c.h.b16 %v344
    %v2502 = vunpack.c.l.b16 %v345
    %v2503 = vunpack.c.h.b16 %v345
    %v2504 = vunpack.c.l.b16 %v346
    %v2505 = vunpack.c.h.b16 %v346
    %v2506 = vunpack.c.l.b16 %v347
    %v2507 = vunpack.c.h.b16 %v347
    %v2508 = vunpack.c.l.b16 %v348
    %v2509 = vunpack.c.h.b16 %v348
    %v2510 = vunpack.c.l.b16 %v349
    %v2511 = vunpack.c.h.b16 %v349
    %v2512 = vunpack.c.l.b16 %v350
    %v2513 = vunpack.c.h.b16 %v350
    %v2514 = vunpack.c.l.b16 %v351
    %v2515 = vunpack.c.h.b16 %v351
    %v2516 = vunpack.c.l.b16 %v352
    %v2517 = vunpack.c.h.b16 %v352
    %v2518 = vunpack.c.l.b16 %v353
    %v2519 = vunpack.c.h.b16 %v353
    %v2520 = vunpack.c.l.b16 %v354
    %v2521 = vunpack.c.h.b16 %v354
    %v2522 = vunpack.c.l.b16 %v355
    %v2523 = vunpack.c.h.b16 %v355
    %v2524 = vunpack.c.l.b16 %v356
    %v2525 = vunpack.c.h.b16 %v356
    %v2526 = vunpack.c.l.b16 %v357
    %v2527 = vunpack.c.h.b16 %v357
    %v2528 = vunpack.c.l.b16 %v358
    %v2529 = vunpack.c.h.b16 %v358
    %v2530 = vunpack.c.l.b16 %v359
    %v2531 = vunpack.c.h.b16 %v359
    %v2532 = vunpack.c.l.b16 %v360
    %v2533 = vunpack.c.h.b16 %v360
    %v2534 = vunpack.c.l.b16 %v361
    %v2535 = vunpack.c.h.b16 %v361
    %v2536 = vunpack.c.l.b16 %v362
    %v2537 = vunpack.c.h.b16 %v362
    %v2538 = vunpack.c.l.b16 %v363
    %v2539 = vunpack.c.h.b16 %v363
    %v2540 = vunpack.c.l.b16 %v364
    %v2541 = vunpack.c.h.b16 %v364
    %v2542 = vunpack.c.l.b16 %v365
    %v2543 = vunpack.c.h.b16 %v365
    %v2544 = vunpack.c.l.b16 %v366
    %v2545 = vunpack.c.h.b16 %v366
    %v2546 = vunpack.c.l.b16 %v367
    %v2547 = vunpack.c.h.b16 %v367
    %v2548 = vunpack.c.l.b16 %v368
    %v2549 = vunpack.c.h.b16 %v368
    %v2550 = vunpack.c.l.b16 %v369
    %v2551 = vunpack.c.h.b16 %v369
    %v2552 = vunpack.c.l.b16 %v370
    %v2553 = vunpack.c.h.b16 %v370
    %v2554 = vunpack.c.l.b16 %v371
    %v2555 = vunpack.c.h.b16 %v371
    %v2556 = vunpack.c.l.b16 %v372
    %v2557 = vunpack.c.h.b16 %v372
    %v2558 = vunpack.c.l.b16 %v373
    %v2559 = vunpack.c.h.b16 %v373
    %v2560 = vunpack.c.l.b16 %v374
    %v2561 = vunpack.c.h.b16 %v374
    %v2562 = vunpack.c.l.b16 %v375
    %v2563 = vunpack.c.h.b16 %v375
    %v2564 = vunpack.c.l.b16 %v376
    %v2565 = vunpack.c.h.b16 %v376
    %v2566 = vunpack.c.l.b16 %v377
    %v2567 = vunpack.c.h.b16 %v377
    %v2568 = vunpack.c.l.b16 %v378
    %v2569 = vunpack.c.h.b16 %v378
    %v2570 = vunpack.c.l.b16 %v379
    %v2571 = vunpack.c.h.b16 %v379
    %v2572 = vunpack.c.l.b16 %v380
    %v2573 = vunpack.c.h.b16 %v380
    %v2574 = vunpack.c.l.b16 %v381
    %v2575 = vunpack.c.h.b16 %v381
    %v2576 = vunpack.c.l.b16 %v382
    %v2577 = vunpack.c.h.b16 %v382
    %v2578 = vunpack.c.l.b16 %v383
    %v2579 = vunpack.c.h.b16 %v383
    %v2580 = vunpack.c.l.b16 %v384
    %v2581 = vunpack.c.h.b16 %v384
    %v2582 = vunpack.c.l.b16 %v385
    %v2583 = vunpack.c.h.b16 %v385
    %v2584 = vunpack.c.l.b16 %v386
    %v2585 = vunpack.c.h.b16 %v386
    %v2586 = vunpack.c.l.b16 %v387
    %v2587 = vunpack.c.h.b16 %v387
    %v2588 = vunpack.c.l.b16 %v388
    %v2589 = vunpack.c.h.b16 %v388
    %v2590 = vunpack.c.l.b16 %v389
    %v2591 = vunpack.c.h.b16 %v389
    %v2592 = vunpack.c.l.b16 %v390
    %v2593 = vunpack.c.h.b16 %v390
    %v2594 = vunpack.c.l.b16 %v391
    %v2595 = vunpack.c.h.b16 %v391
    %v2596 = vunpack.c.l.b16 %v392
    %v2597 = vunpack.c.h.b16 %v392
    %v2598 = vunpack.c.l.b16 %v393
    %v2599 = vunpack.c.h.b16 %v393
    %v2600 = vunpack.c.l.b16 %v394
    %v2601 = vunpack.c.h.b16 %v394
    %v2602 = vunpack.c.l.b16 %v395
    %v2603 = vunpack.c.h.b16 %v395
    %v2604 = vunpack.c.l.b16 %v396
    %v2605 = vunpack.c.h.b16 %v396
    %v2606 = vunpack.c.l.b16 %v397
    %v2607 = vunpack.c.h.b16 %v397
    %v2608 = vunpack.c.l.b16 %v398
    %v2609 = vunpack.c.h.b16 %v398
    %v2610 = vunpack.c.l.b16 %v399
    %v2611 = vunpack.c.h.b16 %v399
    %v2612 = vunpack.c.l.b16 %v400
    %v2613 = vunpack.c.h.b16 %v400
    %v2614 = vunpack.c.l.b16 %v401
    %v2615 = vunpack.c.h.b16 %v401
    %v2616 = vunpack.c.l.b16 %v402
    %v2617 = vunpack.c.h.b16 %v402
    %v2618 = vunpack.c.l.b16 %v403
    %v2619 = vunpack.c.h.b16 %v403
    %v2620 = vunpack.c.l.b16 %v404
    %v2621 = vunpack.c.h.b16 %v404
    %v2622 = vunpack.c.l.b16 %v405
    %v2623 = vunpack.c.h.b16 %v405
    %v2624 = vunpack.c.l.b16 %v406
    %v2625 = vunpack.c.h.b16 %v406
    %v2626 = vunpack.c.l.b16 %v407
    %v2627 = vunpack.c.h.b16 %v407
    %v2628 = vunpack.c.l.b16 %v408
    %v2629 = vunpack.c.h.b16 %v408
    %v2630 = vunpack.c.l.b16 %v409
    %v2631 = vunpack.c.h.b16 %v409
    %v2632 = vunpack.c.l.b16 %v410
    %v2633 = vunpack.c.h.b16 %v410
    %v2634 = vunpack.c.l.b16 %v411
    %v2635 = vunpack.c.h.b16 %v411
    %v2636 = vunpack.c.l.b16 %v412
    %v2637 = vunpack.c.h.b16 %v412
    %v2638 = vunpack.c.l.b16 %v413
    %v2639 = vunpack.c.h.b16 %v413
    %v2640 = vunpack.c.l.b16 %v414
    %v2641 = vunpack.c.h.b16 %v414
    %v2642 = vunpack.c.l.b16 %v415
    %v2643 = vunpack.c.h.b16 %v415
    %v2644 = vunpack.c.l.b16 %v416
    %v2645 = vunpack.c.h.b16 %v416
    %v2646 = vunpack.c.l.b16 %v417
    %v2647 = vunpack.c.h.b16 %v417
    %v2648 = vunpack.c.l.b16 %v418
    %v2649 = vunpack.c.h.b16 %v418
    %v2650 = vunpack.c.l.b16 %v419
    %v2651 = vunpack.c.h.b16 %v419
    %v2652 = vunpack.c.l.b16 %v420
    %v2653 = vunpack.c.h.b16 %v420
    %v2654 = vunpack.c.l.b16 %v421
    %v2655 = vunpack.c.h.b16 %v421
    %v2656 = vunpack.c.l.b16 %v422
    %v2657 = vunpack.c.h.b16 %v422
    %v2658 = vunpack.c.l.b16 %v423
    %v2659 = vunpack.c.h.b16 %v423
    %v2660 = vunpack.c.l.b16 %v424
    %v2661 = vunpack.c.h.b16 %v424
    %v2662 = vunpack.c.l.b16 %v425
    %v2663 = vunpack.c.h.b16 %v425
    %v2664 = vunpack.c.l.b16 %v426
    %v2665 = vunpack.c.h.b16 %v426
    %v2666 = vunpack.c.l.b16 %v427
    %v2667 = vunpack.c.h.b16 %v427
    %v2668 = vunpack.c.l.b16 %v428
    %v2669 = vunpack.c.h.b16 %v428
    %v2670 = vunpack.c.l.b16 %v429
    %v2671 = vunpack.c.h.b16 %v429
    %v2672 = vunpack.c.l.b16 %v430
    %v2673 = vunpack.c.h.b16 %v430
    %v2674 = vunpack.c.l.b16 %v431
    %v2675 = vunpack.c.h.b16 %v431
    %v2676 = vunpack.c.l.b16 %v432
    %v2677 = vunpack.c.h.b16 %v432
    %v2678 = vunpack.c.l.b16 %v433
    %v2679 = vunpack.c.h.b16 %v433
    %v2680 = vunpack.c.l.b16 %v434
    %v2681 = vunpack.c.h.b16 %v434
    %v2682 = vunpack.c.l.b16 %v435
    %v2683 = vunpack.c.h.b16 %v435
    %v2684 = vunpack.c.l.b16 %v436
    %v2685 = vunpack.c.h.b16 %v436
    %v2686 = vunpack.c.l.b16 %v437
    %v2687 = vunpack.c.h.b16 %v437
    %v2688 = vunpack.c.l.b16 %v438
    %v2689 = vunpack.c.h.b16 %v438
    %v2690 = vunpack.c.l.b16 %v439
    %v2691 = vunpack.c.h.b16 %v439
    %v2692 = vunpack.c.l.b16 %v440
    %v2693 = vunpack.c.h.b16 %v440
    %v2694 = vunpack.c.l.b16 %v441
    %v2695 = vunpack.c.h.b16 %v441
    %v2696 = vunpack.c.l.b16 %v442
    %v2697 = vunpack.c.h.b16 %v442
    %v2698 = vunpack.c.l.b16 %v443
    %v2699 = vunpack.c.h.b16 %v443
    %v2700 = vunpack.c.l.b16 %v444
    %v2701 = vunpack.c.h.b16 %v444
    %v2702 = vunpack.c.l.b16 %v445
    %v2703 = vunpack.c.h.b16 %v445
    %v2704 = vunpack.c.l.b16 %v446
    %v2705 = vunpack.c.h.b16 %v446
    %v2706 = vunpack.c.l.b16 %v447
    %v2707 = vunpack.c.h.b16 %v447
    %v2708 = vunpack.c.l.b16 %v448
    %v2709 = vunpack.c.h.b16 %v448
    %v2710 = vunpack.c.l.b16 %v449
    %v2711 = vunpack.c.h.b16 %v449
    %v2712 = vunpack.c.l.b16 %v450
    %v2713 = vunpack.c.h.b16 %v450
    %v2714 = vunpack.c.l.b16 %v451
    %v2715 = vunpack.c.h.b16 %v451
    %v2716 = vunpack.c.l.b16 %v452
    %v2717 = vunpack.c.h.b16 %v452
    %v2718 = vunpack.c.l.b16 %v453
    %v2719 = vunpack.c.h.b16 %v453
    %v2720 = vunpack.c.l.b16 %v454
    %v2721 = vunpack.c.h.b16 %v454
    %v2722 = vunpack.c.l.b16 %v455
    %v2723 = vunpack.c.h.b16 %v455
    %v2724 = vunpack.c.l.b16 %v456
    %v2725 = vunpack.c.h.b16 %v456
    %v2726 = vunpack.c.l.b16 %v457
    %v2727 = vunpack.c.h.b16 %v457
    %v2728 = vunpack.c.l.b16 %v458
    %v2729 = vunpack.c.h.b16 %v458
    %v2730 = vunpack.c.l.b16 %v459
    %v2731 = vunpack.c.h.b16 %v459
    %v2732 = vunpack.c.l.b16 %v460
    %v2733 = vunpack.c.h.b16 %v460
    %v2734 = vunpack.c.l.b16 %v461
    %v2735 = vunpack.c.h.b16 %v461
    %v2736 = vunpack.c.l.b16 %v462
    %v2737 = vunpack.c.h.b16 %v462
    %v2738 = vunpack.c.l.b16 %v463
    %v2739 = vunpack.c.h.b16 %v463
    %v2740 = vunpack.c.l.b16 %v464
    %v2741 = vunpack.c.h.b16 %v464
    %v2742 = vunpack.c.l.b16 %v465
    %v2743 = vunpack.c.h.b16 %v465
    %v2744 = vunpack.c.l.b16 %v466
    %v2745 = vunpack.c.h.b16 %v466
    %v2746 = vunpack.c.l.b16 %v467
    %v2747 = vunpack.c.h.b16 %v467
    %v2748 = vunpack.c.l.b16 %v468
    %v2749 = vunpack.c.h.b16 %v468
    %v2750 = vunpack.c.l.b16 %v469
    %v2751 = vunpack.c.h.b16 %v469
    %v2752 = vunpack.c.l.b16 %v470
    %v2753 = vunpack.c.h.b16 %v470
    %v2754 = vunpack.c.l.b16 %v471
    %v2755 = vunpack.c.h.b16 %v471
    %v2756 = vunpack.c.l.b16 %v472
    %v2757 = vunpack.c.h.b16 %v472
    %v2758 = vunpack.c.l.b16 %v473
    %v2759 = vunpack.c.h.b16 %v473
    %v2760 = vunpack.c.l.b16 %v474
    %v2761 = vunpack.c.h.b16 %v474
    %v2762 = vunpack.c.l.b16 %v475
    %v2763 = vunpack.c.h.b16 %v475
    %v2764 = vunpack.c.l.b16 %v476
    %v2765 = vunpack.c.h.b16 %v476
    %v2766 = vunpack.c.l.b16 %v477
    %v2767 = vunpack.c.h.b16 %v477
    %v2768 = vunpack.c.l.b16 %v478
    %v2769 = vunpack.c.h.b16 %v478
    %v2770 = vunpack.c.l.b16 %v479
    %v2771 = vunpack.c.h.b16 %v479
    %v2772 = vunpack.c.l.b16 %v480
    %v2773 = vunpack.c.h.b16 %v480
    %v2774 = vunpack.c.l.b16 %v481
    %v2775 = vunpack.c.h.b16 %v481
    %v2776 = vunpack.c.l.b16 %v482
    %v2777 = vunpack.c.h.b16 %v482
    %v2778 = vunpack.c.l.b16 %v483
    %v2779 = vunpack.c.h.b16 %v483
    %v2780 = vunpack.c.l.b16 %v484
    %v2781 = vunpack.c.h.b16 %v484
    %v2782 = vunpack.c.l.b16 %v485
    %v2783 = vunpack.c.h.b16 %v485
    %v2784 = vunpack.c.l.b16 %v486
    %v2785 = vunpack.c.h.b16 %v486
    %v2786 = vunpack.c.l.b16 %v487
    %v2787 = vunpack.c.h.b16 %v487
    %v2788 = vunpack.c.l.b16 %v488
    %v2789 = vunpack.c.h.b16 %v488
    %v2790 = vunpack.c.l.b16 %v489
    %v2791 = vunpack.c.h.b16 %v489
    %v2792 = vunpack.c.l.b16 %v490
    %v2793 = vunpack.c.h.b16 %v490
    %v2794 = vunpack.c.l.b16 %v491
    %v2795 = vunpack.c.h.b16 %v491
    %v2796 = vunpack.c.l.b16 %v492
    %v2797 = vunpack.c.h.b16 %v492
    %v2798 = vunpack.c.l.b16 %v493
    %v2799 = vunpack.c.h.b16 %v493
    %v2800 = vunpack.c.l.b16 %v494
    %v2801 = vunpack.c.h.b16 %v494
    %v2802 = vunpack.c.l.b16 %v495
    %v2803 = vunpack.c.h.b16 %v495
    %v2804 = vunpack.c.l.b16 %v496
    %v2805 = vunpack.c.h.b16 %v496
    %v2806 = vunpack.c.l.b16 %v497
    %v2807 = vunpack.c.h.b16 %v497
    %v2808 = vunpack.c.l.b16 %v498
    %v2809 = vunpack.c.h.b16 %v498
    %v2810 = vunpack.c.l.b16 %v499
    %v2811 = vunpack.c.h.b16 %v499
    %v2812 = vunpack.c.l.b16 %v500
    %v2813 = vunpack.c.h.b16 %v500
    %v2814 = vunpack.c.l.b16 %v501
    %v2815 = vunpack.c.h.b16 %v501
    %v2816 = vunpack.c.l.b16 %v502
    %v2817 = vunpack.c.h.b16 %v502
    %v2818 = vunpack.c.l.b16 %v503
    %v2819 = vunpack.c.h.b16 %v503
    %v2820 = vunpack.c.l.b16 %v504
    %v2821 = vunpack.c.h.b16 %v504
    %v2822 = vunpack.c.l.b16 %v505
    %v2823 = vunpack.c.h.b16 %v505
    %v2824 = vunpack.c.l.b16 %v506
    %v2825 = vunpack.c.h.b16 %v506
    %v2826 = vunpack.c.l.b16 %v507
    %v2827 = vunpack.c.h.b16 %v507
    %v2828 = vunpack.c.l.b16 %v508
    %v2829 = vunpack.c.h.b16 %v508
    %v2830 = vunpack.c.l.b16 %v509
    %v2831 = vunpack.c.h.b16 %v509
    %v2832 = vunpack.c.l.b16 %v510
    %v2833 = vunpack.c.h.b16 %v510
    %v2834 = vunpack.c.l.b16 %v511
    %v2835 = vunpack.c.h.b16 %v511
    %v2836 = vunpack.c.l.b16 %v512
    %v2837 = vunpack.c.h.b16 %v512
    %v2838 = vunpack.c.l.b16 %v513
    %v2839 = vunpack.c.h.b16 %v513
    %v2840 = vunpack.c.l.b16 %v514
    %v2841 = vunpack.c.h.b16 %v514
    %v2842 = vunpack.c.l.b16 %v515
    %v2843 = vunpack.c.h.b16 %v515
    %v2844 = vunpack.c.l.b16 %v516
    %v2845 = vunpack.c.h.b16 %v516
    %v2846 = vunpack.c.l.b16 %v517
    %v2847 = vunpack.c.h.b16 %v517
    %v2848 = vunpack.c.l.b16 %v518
    %v2849 = vunpack.c.h.b16 %v518
    %v2850 = vunpack.c.l.b16 %v519
    %v2851 = vunpack.c.h.b16 %v519
    %v2852 = vunpack.c.l.b16 %v520
    %v2853 = vunpack.c.h.b16 %v520
    %v2854 = vunpack.c.l.b16 %v521
    %v2855 = vunpack.c.h.b16 %v521
    %v2856 = vunpack.c.l.b16 %v522
    %v2857 = vunpack.c.h.b16 %v522
    %v2858 = vunpack.c.l.b16 %v523
    %v2859 = vunpack.c.h.b16 %v523
    %v2860 = vunpack.c.l.b16 %v524
    %v2861 = vunpack.c.h.b16 %v524
    %v2862 = vunpack.c.l.b16 %v525
    %v2863 = vunpack.c.h.b16 %v525
    %v2864 = vunpack.c.l.b16 %v526
    %v2865 = vunpack.c.h.b16 %v526
    %v2866 = vunpack.c.l.b16 %v527
    %v2867 = vunpack.c.h.b16 %v527
    %v2868 = vunpack.c.l.b16 %v528
    %v2869 = vunpack.c.h.b16 %v528
    %v2870 = vunpack.c.l.b16 %v529
    %v2871 = vunpack.c.h.b16 %v529
    %v2872 = vunpack.c.l.b16 %v530
    %v2873 = vunpack.c.h.b16 %v530
    %v2874 = vunpack.c.l.b16 %v531
    %v2875 = vunpack.c.h.b16 %v531
    %v2876 = vunpack.c.l.b16 %v532
    %v2877 = vunpack.c.h.b16 %v532
    %v2878 = vunpack.c.l.b16 %v533
    %v2879 = vunpack.c.h.b16 %v533
    %v2880 = vunpack.c.l.b16 %v534
    %v2881 = vunpack.c.h.b16 %v534
    %v2882 = vunpack.c.l.b16 %v535
    %v2883 = vunpack.c.h.b16 %v535
    %v2884 = vunpack.c.l.b16 %v536
    %v2885 = vunpack.c.h.b16 %v536
    %v2886 = vunpack.c.l.b16 %v537
    %v2887 = vunpack.c.h.b16 %v537
    %v2888 = vunpack.c.l.b16 %v538
    %v2889 = vunpack.c.h.b16 %v538
    %v2890 = vunpack.c.l.b16 %v539
    %v2891 = vunpack.c.h.b16 %v539
    %v2892 = vunpack.c.l.b16 %v540
    %v2893 = vunpack.c.h.b16 %v540
    %v2894 = vunpack.c.l.b16 %v541
    %v2895 = vunpack.c.h.b16 %v541
    %v2896 = vunpack.c.l.b16 %v542
    %v2897 = vunpack.c.h.b16 %v542
    %v2898 = vunpack.c.l.b16 %v543
    %v2899 = vunpack.c.h.b16 %v543
    %v2900 = vunpack.c.l.b16 %v544
    %v2901 = vunpack.c.h.b16 %v544
    %v2902 = vunpack.c.l.b16 %v545
    %v2903 = vunpack.c.h.b16 %v545
    %v2904 = vunpack.c.l.b16 %v546
    %v2905 = vunpack.c.h.b16 %v546
    %v2906 = vunpack.c.l.b16 %v547
    %v2907 = vunpack.c.h.b16 %v547
    %v2908 = vunpack.c.l.b16 %v548
    %v2909 = vunpack.c.h.b16 %v548
    %v2910 = vunpack.c.l.b16 %v549
    %v2911 = vunpack.c.h.b16 %v549
    %v2912 = vunpack.c.l.b16 %v550
    %v2913 = vunpack.c.h.b16 %v550
    %v2914 = vunpack.c.l.b16 %v551
    %v2915 = vunpack.c.h.b16 %v551
    %v2916 = vunpack.c.l.b16 %v552
    %v2917 = vunpack.c.h.b16 %v552
    %v2918 = vunpack.c.l.b16 %v553
    %v2919 = vunpack.c.h.b16 %v553
    %v2920 = vunpack.c.l.b16 %v554
    %v2921 = vunpack.c.h.b16 %v554
    %v2922 = vunpack.c.l.b16 %v555
    %v2923 = vunpack.c.h.b16 %v555
    %v2924 = vunpack.c.l.b16 %v556
    %v2925 = vunpack.c.h.b16 %v556
    %v2926 = vunpack.c.l.b16 %v557
    %v2927 = vunpack.c.h.b16 %v557
    %v2928 = vunpack.c.l.b16 %v558
    %v2929 = vunpack.c.h.b16 %v558
    %v2930 = vunpack.c.l.b16 %v559
    %v2931 = vunpack.c.h.b16 %v559
    %v2932 = vunpack.c.l.b16 %v560
    %v2933 = vunpack.c.h.b16 %v560
    %v2934 = vunpack.c.l.b16 %v561
    %v2935 = vunpack.c.h.b16 %v561
    %v2936 = vunpack.c.l.b16 %v562
    %v2937 = vunpack.c.h.b16 %v562
    %v2938 = vunpack.c.l.b16 %v563
    %v2939 = vunpack.c.h.b16 %v563
    %v2940 = vunpack.c.l.b16 %v564
    %v2941 = vunpack.c.h.b16 %v564
    %v2942 = vunpack.c.l.b16 %v565
    %v2943 = vunpack.c.h.b16 %v565
    %v2944 = vunpack.c.l.b16 %v566
    %v2945 = vunpack.c.h.b16 %v566
    %v2946 = vunpack.c.l.b16 %v567
    %v2947 = vunpack.c.h.b16 %v567
    %v2948 = vunpack.c.l.b16 %v568
    %v2949 = vunpack.c.h.b16 %v568
    %v2950 = vunpack.c.l.b16 %v569
    %v2951 = vunpack.c.h.b16 %v569
    %v2952 = vunpack.c.l.b16 %v570
    %v2953 = vunpack.c.h.b16 %v570
    %v2954 = vunpack.c.l.b16 %v571
    %v2955 = vunpack.c.h.b16 %v571
    %v2956 = vunpack.c.l.b16 %v572
    %v2957 = vunpack.c.h.b16 %v572
    %v2958 = vunpack.c.l.b16 %v573
    %v2959 = vunpack.c.h.b16 %v573
    %v2960 = vunpack.c.l.b16 %v574
    %v2961 = vunpack.c.h.b16 %v574
    %v2962 = vunpack.c.l.b16 %v575
    %v2963 = vunpack.c.h.b16 %v575
    %v2964 = vunpack.c.l.b16 %v576
    %v2965 = vunpack.c.h.b16 %v576
    %v2966 = vunpack.c.l.b16 %v577
    %v2967 = vunpack.c.h.b16 %v577
    %v2968 = vunpack.c.l.b16 %v578
    %v2969 = vunpack.c.h.b16 %v578
    %v2970 = vunpack.c.l.b16 %v579
    %v2971 = vunpack.c.h.b16 %v579
    %v2972 = vunpack.c.l.b16 %v580
    %v2973 = vunpack.c.h.b16 %v580
    %v2974 = vunpack.c.l.b16 %v581
    %v2975 = vunpack.c.h.b16 %v581
    %v2976 = vunpack.c.l.b16 %v582
    %v2977 = vunpack.c.h.b16 %v582
    %v2978 = vunpack.c.l.b16 %v583
    %v2979 = vunpack.c.h.b16 %v583
    %v2980 = vunpack.c.l.b16 %v584
    %v2981 = vunpack.c.h.b16 %v584
    %v2982 = vunpack.c.l.b16 %v585
    %v2983 = vunpack.c.h.b16 %v585
    %v2984 = vunpack.c.l.b16 %v586
    %v2985 = vunpack.c.h.b16 %v586
    %v2986 = vunpack.c.l.b16 %v587
    %v2987 = vunpack.c.h.b16 %v587
    %v2988 = vunpack.c.l.b16 %v588
    %v2989 = vunpack.c.h.b16 %v588
    %v2990 = vunpack.c.l.b16 %v589
    %v2991 = vunpack.c.h.b16 %v589
    %v2992 = vunpack.c.l.b16 %v590
    %v2993 = vunpack.c.h.b16 %v590
    %v2994 = vunpack.c.l.b16 %v591
    %v2995 = vunpack.c.h.b16 %v591
    %v2996 = vunpack.c.l.b16 %v592
    %v2997 = vunpack.c.h.b16 %v592
    %v2998 = vunpack.c.l.b16 %v593
    %v2999 = vunpack.c.h.b16 %v593
    %v3000 = vunpack.c.l.b16 %v594
    %v3001 = vunpack.c.h.b16 %v594
    %v3002 = vunpack.c.l.b16 %v595
    %v3003 = vunpack.c.h.b16 %v595
    %v3004 = vunpack.c.l.b16 %v596
    %v3005 = vunpack.c.h.b16 %v596
    %v3006 = vunpack.c.l.b16 %v597
    %v3007 = vunpack.c.h.b16 %v597
    %v3008 = vunpack.c.l.b16 %v598
    %v3009 = vunpack.c.h.b16 %v598
    %v3010 = vunpack.c.l.b16 %v599
    %v3011 = vunpack.c.h.b16 %v599
    %v3012 = vunpack.c.l.b16 %v600
    %v3013 = vunpack.c.h.b16 %v600
    %v3014 = vunpack.c.l.b16 %v601
    %v3015 = vunpack.c.h.b16 %v601
    %v3016 = vunpack.c.l.b16 %v602
    %v3017 = vunpack.c.h.b16 %v602
    %v3018 = vunpack.c.l.b16 %v603
    %v3019 = vunpack.c.h.b16 %v603
    %v3020 = vunpack.c.l.b16 %v604
    %v3021 = vunpack.c.h.b16 %v604
    %v3022 = vunpack.c.l.b16 %v605
    %v3023 = vunpack.c.h.b16 %v605
    %v3024 = vunpack.c.l.b16 %v606
    %v3025 = vunpack.c.h.b16 %v606
    %v3026 = vunpack.c.l.b16 %v607
    %v3027 = vunpack.c.h.b16 %v607
    %v3028 = vunpack.c.l.b16 %v608
    %v3029 = vunpack.c.h.b16 %v608
    %v3030 = vunpack.c.l.b16 %v609
    %v3031 = vunpack.c.h.b16 %v609
    %v3032 = vunpack.c.l.b16 %v610
    %v3033 = vunpack.c.h.b16 %v610
    %v3034 = vunpack.c.l.b16 %v611
    %v3035 = vunpack.c.h.b16 %v611
    %v3036 = vunpack.c.l.b16 %v612
    %v3037 = vunpack.c.h.b16 %v612
    %v3038 = vunpack.c.l.b16 %v613
    %v3039 = vunpack.c.h.b16 %v613
    %v3040 = vunpack.c.l.b16 %v614
    %v3041 = vunpack.c.h.b16 %v614
    %v3042 = vunpack.c.l.b16 %v615
    %v3043 = vunpack.c.h.b16 %v615
    %v3044 = vunpack.c.l.b16 %v616
    %v3045 = vunpack.c.h.b16 %v616
    %v3046 = vunpack.c.l.b16 %v617
    %v3047 = vunpack.c.h.b16 %v617
    %v3048 = vunpack.c.l.b16 %v618
    %v3049 = vunpack.c.h.b16 %v618
    %v3050 = vunpack.c.l.b16 %v619
    %v3051 = vunpack.c.h.b16 %v619
    %v3052 = vunpack.c.l.b16 %v620
    %v3053 = vunpack.c.h.b16 %v620
    %v3054 = vunpack.c.l.b16 %v621
    %v3055 = vunpack.c.h.b16 %v621
    %v3056 = vunpack.c.l.b16 %v622
    %v3057 = vunpack.c.h.b16 %v622
    %v3058 = vunpack.c.l.b16 %v623
    %v3059 = vunpack.c.h.b16 %v623
    %v3060 = vunpack.c.l.b16 %v624
    %v3061 = vunpack.c.h.b16 %v624
    %v3062 = vunpack.c.l.b16 %v625
    %v3063 = vunpack.c.h.b16 %v625
    %v3064 = vunpack.c.l.b16 %v626
    %v3065 = vunpack.c.h.b16 %v626
    %v3066 = vunpack.c.l.b16 %v627
    %v3067 = vunpack.c.h.b16 %v627
    %v3068 = vunpack.c.l.b16 %v628
    %v3069 = vunpack.c.h.b16 %v628
    %v3070 = vunpack.c.l.b16 %v629
    %v3071 = vunpack.c.h.b16 %v629
    %v3072 = vunpack.c.l.b16 %v630
    %v3073 = vunpack.c.h.b16 %v630
    %v3074 = vunpack.c.l.b16 %v631
    %v3075 = vunpack.c.h.b16 %v631
    %v3076 = vunpack.c.l.b16 %v632
    %v3077 = vunpack.c.h.b16 %v632
    %v3078 = vunpack.c.l.b16 %v633
    %v3079 = vunpack.c.h.b16 %v633
    %v3080 = vunpack.c.l.b16 %v634
    %v3081 = vunpack.c.h.b16 %v634
    %v3082 = vunpack.c.l.b16 %v635
    %v3083 = vunpack.c.h.b16 %v635
    %v3084 = vunpack.c.l.b16 %v636
    %v3085 = vunpack.c.h.b16 %v636
    %v3086 = vunpack.c.l.b16 %v637
    %v3087 = vunpack.c.h.b16 %v637
    %v3088 = vunpack.c.l.b16 %v638
    %v3089 = vunpack.c.h.b16 %v638
    %v3090 = vunpack.c.l.b16 %v639
    %v3091 = vunpack.c.h.b16 %v639
    %v3092 = vunpack.c.l.b16 %v640
    %v3093 = vunpack.c.h.b16 %v640
    %v3094 = vunpack.c.l.b16 %v641
    %v3095 = vunpack.c.h.b16 %v641
    %v3096 = vunpack.c.l.b16 %v642
    %v3097 = vunpack.c.h.b16 %v642
    %v3098 = vunpack.c.l.b16 %v643
    %v3099 = vunpack.c.h.b16 %v643
    %v3100 = vunpack.c.l.b16 %v644
    %v3101 = vunpack.c.h.b16 %v644
    %v3102 = vunpack.c.l.b16 %v645
    %v3103 = vunpack.c.h.b16 %v645
    %v3104 = vunpack.c.l.b16 %v646
    %v3105 = vunpack.c.h.b16 %v646
    %v3106 = vunpack.c.l.b16 %v647
    %v3107 = vunpack.c.h.b16 %v647
    %v3108 = vunpack.c.l.b16 %v648
    %v3109 = vunpack.c.h.b16 %v648
    %v3110 = vunpack.c.l.b16 %v649
    %v3111 = vunpack.c.h.b16 %v649
    %v3112 = vunpack.c.l.b16 %v650
    %v3113 = vunpack.c.h.b16 %v650
    %v3114 = vunpack.c.l.b16 %v651
    %v3115 = vunpack.c.h.b16 %v651
    %v3116 = vunpack.c.l.b16 %v652
    %v3117 = vunpack.c.h.b16 %v652
    %v3118 = vunpack.c.l.b16 %v653
    %v3119 = vunpack.c.h.b16 %v653
    %v3120 = vunpack.c.l.b16 %v654
    %v3121 = vunpack.c.h.b16 %v654
    %v3122 = vunpack.c.l.b16 %v655
    %v3123 = vunpack.c.h.b16 %v655
    %v3124 = vunpack.c.l.b16 %v656
    %v3125 = vunpack.c.h.b16 %v656
    %v3126 = vunpack.c.l.b16 %v657
    %v3127 = vunpack.c.h.b16 %v657
    %v3128 = vunpack.c.l.b16 %v658
    %v3129 = vunpack.c.h.b16 %v658
    %v3130 = vunpack.c.l.b16 %v659
    %v3131 = vunpack.c.h.b16 %v659
    %v3132 = vunpack.c.l.b16 %v660
    %v3133 = vunpack.c.h.b16 %v660
    %v3134 = vunpack.c.l.b16 %v661
    %v3135 = vunpack.c.h.b16 %v661
    %v3136 = vunpack.c.l.b16 %v662
    %v3137 = vunpack.c.h.b16 %v662
    %v3138 = vunpack.c.l.b16 %v663
    %v3139 = vunpack.c.h.b16 %v663
    %v3140 = vunpack.c.l.b16 %v664
    %v3141 = vunpack.c.h.b16 %v664
    %v3142 = vunpack.c.l.b16 %v665
    %v3143 = vunpack.c.h.b16 %v665
    %v3144 = vunpack.c.l.b16 %v666
    %v3145 = vunpack.c.h.b16 %v666
    %v3146 = vunpack.c.l.b16 %v667
    %v3147 = vunpack.c.h.b16 %v667
    %v3148 = vunpack.c.l.b16 %v668
    %v3149 = vunpack.c.h.b16 %v668
    %v3150 = vunpack.c.l.b16 %v669
    %v3151 = vunpack.c.h.b16 %v669
    %v3152 = vunpack.c.l.b16 %v670
    %v3153 = vunpack.c.h.b16 %v670
    %v3154 = vunpack.c.l.b16 %v671
    %v3155 = vunpack.c.h.b16 %v671
    %v3156 = vunpack.c.l.b16 %v672
    %v3157 = vunpack.c.h.b16 %v672
    %v3158 = vunpack.c.l.b16 %v673
    %v3159 = vunpack.c.h.b16 %v673
    %v3160 = vunpack.c.l.b16 %v674
    %v3161 = vunpack.c.h.b16 %v674
    %v3162 = vunpack.c.l.b16 %v675
    %v3163 = vunpack.c.h.b16 %v675
    %v3164 = vunpack.c.l.b16 %v676
    %v3165 = vunpack.c.h.b16 %v676
    %v3166 = vunpack.c.l.b16 %v677
    %v3167 = vunpack.c.h.b16 %v677
    %v3168 = vunpack.c.l.b16 %v678
    %v3169 = vunpack.c.h.b16 %v678
    %v3170 = vunpack.c.l.b16 %v679
    %v3171 = vunpack.c.h.b16 %v679
    %v3172 = vunpack.c.l.b16 %v680
    %v3173 = vunpack.c.h.b16 %v680
    %v3174 = vunpack.c.l.b16 %v681
    %v3175 = vunpack.c.h.b16 %v681
    %v3176 = vunpack.c.l.b16 %v682
    %v3177 = vunpack.c.h.b16 %v682
    %v3178 = vunpack.c.l.b16 %v683
    %v3179 = vunpack.c.h.b16 %v683
    %v3180 = vunpack.c.l.b16 %v684
    %v3181 = vunpack.c.h.b16 %v684
    %v3182 = vunpack.c.l.b16 %v685
    %v3183 = vunpack.c.h.b16 %v685
    %v3184 = vunpack.c.l.b16 %v686
    %v3185 = vunpack.c.h.b16 %v686
    %v3186 = vunpack.c.l.b16 %v687
    %v3187 = vunpack.c.h.b16 %v687
    %v3188 = vunpack.c.l.b16 %v688
    %v3189 = vunpack.c.h.b16 %v688
    %v3190 = vunpack.c.l.b16 %v689
    %v3191 = vunpack.c.h.b16 %v689
    %v3192 = vunpack.c.l.b16 %v690
    %v3193 = vunpack.c.h.b16 %v690
    %v3194 = vunpack.c.l.b16 %v691
    %v3195 = vunpack.c.h.b16 %v691
    %v3196 = vunpack.c.l.b16 %v692
    %v3197 = vunpack.c.h.b16 %v692
    %v3198 = vunpack.c.l.b16 %v693
    %v3199 = vunpack.c.h.b16 %v693
    %v3200 = vunpack.c.l.b16 %v694
    %v3201 = vunpack.c.h.b16 %v694
    %v3202 = vunpack.c.l.b16 %v695
    %v3203 = vunpack.c.h.b16 %v695
    %v3204 = vunpack.c.l.b16 %v696
    %v3205 = vunpack.c.h.b16 %v696
    %v3206 = vunpack.c.l.b16 %v697
    %v3207 = vunpack.c.h.b16 %v697
    %v3208 = vunpack.c.l.b16 %v698
    %v3209 = vunpack.c.h.b16 %v698
    %v3210 = vunpack.c.l.b16 %v699
    %v3211 = vunpack.c.h.b16 %v699
    %v3212 = vunpack.c.l.b16 %v700
    %v3213 = vunpack.c.h.b16 %v700
    %v3214 = vunpack.c.l.b16 %v701
    %v3215 = vunpack.c.h.b16 %v701
    %v3216 = vunpack.c.l.b16 %v702
    %v3217 = vunpack.c.h.b16 %v702
    %v3218 = vunpack.c.l.b16 %v703
    %v3219 = vunpack.c.h.b16 %v703
    %v3220 = vunpack.c.l.b16 %v704
    %v3221 = vunpack.c.h.b16 %v704
    %v3222 = vunpack.c.l.b16 %v705
    %v3223 = vunpack.c.h.b16 %v705
    %v3224 = vunpack.c.l.b16 %v706
    %v3225 = vunpack.c.h.b16 %v706
    %v3226 = vunpack.c.l.b16 %v707
    %v3227 = vunpack.c.h.b16 %v707
    %v3228 = vunpack.c.l.b16 %v708
    %v3229 = vunpack.c.h.b16 %v708
    %v3230 = vunpack.c.l.b16 %v709
    %v3231 = vunpack.c.h.b16 %v709
    %v3232 = vunpack.c.l.b16 %v710
    %v3233 = vunpack.c.h.b16 %v710
    %v3234 = vunpack.c.l.b16 %v711
    %v3235 = vunpack.c.h.b16 %v711
    %v3236 = vunpack.c.l.b16 %v712
    %v3237 = vunpack.c.h.b16 %v712
    %v3238 = vunpack.c.l.b16 %v713
    %v3239 = vunpack.c.h.b16 %v713
    %v3240 = vunpack.c.l.b16 %v714
    %v3241 = vunpack.c.h.b16 %v714
    %v3242 = vunpack.c.l.b16 %v715
    %v3243 = vunpack.c.h.b16 %v715
    %v3244 = vunpack.c.l.b16 %v716
    %v3245 = vunpack.c.h.b16 %v716
    %v3246 = vunpack.c.l.b16 %v717
    %v3247 = vunpack.c.h.b16 %v717
    %v3248 = vunpack.c.l.b16 %v718
    %v3249 = vunpack.c.h.b16 %v718
    %v3250 = vunpack.c.l.b16 %v719
    %v3251 = vunpack.c.h.b16 %v719
    %v3252 = vunpack.c.l.b16 %v720
    %v3253 = vunpack.c.h.b16 %v720
    %v3254 = vunpack.c.l.b16 %v721
    %v3255 = vunpack.c.h.b16 %v721
    %v3256 = vunpack.c.l.b16 %v722
    %v3257 = vunpack.c.h.b16 %v722
    %v3258 = vunpack.c.l.b16 %v723
    %v3259 = vunpack.c.h.b16 %v723
    %v3260 = vunpack.c.l.b16 %v724
    %v3261 = vunpack.c.h.b16 %v724
    %v3262 = vunpack.c.l.b16 %v725
    %v3263 = vunpack.c.h.b16 %v725
    %v3264 = vunpack.c.l.b16 %v726
    %v3265 = vunpack.c.h.b16 %v726
    %v3266 = vunpack.c.l.b16 %v727
    %v3267 = vunpack.c.h.b16 %v727
    %v3268 = vunpack.c.l.b16 %v728
    %v3269 = vunpack.c.h.b16 %v728
    %v3270 = vunpack.c.l.b16 %v729
    %v3271 = vunpack.c.h.b16 %v729
    %v3272 = vunpack.c.l.b16 %v730
    %v3273 = vunpack.c.h.b16 %v730
    %v3274 = vunpack.c.l.b16 %v731
    %v3275 = vunpack.c.h.b16 %v731
    %v3276 = vunpack.c.l.b16 %v732
    %v3277 = vunpack.c.h.b16 %v732
    %v3278 = vunpack.c.l.b16 %v733
    %v3279 = vunpack.c.h.b16 %v733
    %v3280 = vunpack.c.l.b16 %v734
    %v3281 = vunpack.c.h.b16 %v734
    %v3282 = vunpack.c.l.b16 %v735
    %v3283 = vunpack.c.h.b16 %v735
    %v3284 = vunpack.c.l.b16 %v736
    %v3285 = vunpack.c.h.b16 %v736
    %v3286 = vunpack.c.l.b16 %v737
    %v3287 = vunpack.c.h.b16 %v737
    %v3288 = vunpack.c.l.b16 %v738
    %v3289 = vunpack.c.h.b16 %v738
    %v3290 = vunpack.c.l.b16 %v739
    %v3291 = vunpack.c.h.b16 %v739
    %v3292 = vunpack.c.l.b16 %v740
    %v3293 = vunpack.c.h.b16 %v740
    %v3294 = vunpack.c.l.b16 %v741
    %v3295 = vunpack.c.h.b16 %v741
    %v3296 = vunpack.c.l.b16 %v742
    %v3297 = vunpack.c.h.b16 %v742
    %v3298 = vunpack.c.l.b16 %v743
    %v3299 = vunpack.c.h.b16 %v743
    %v3300 = vunpack.c.l.b16 %v744
    %v3301 = vunpack.c.h.b16 %v744
    %v3302 = vunpack.c.l.b16 %v745
    %v3303 = vunpack.c.h.b16 %v745
    %v3304 = vunpack.c.l.b16 %v746
    %v3305 = vunpack.c.h.b16 %v746
    %v3306 = vunpack.c.l.b16 %v747
    %v3307 = vunpack.c.h.b16 %v747
    %v3308 = vunpack.c.l.b16 %v748
    %v3309 = vunpack.c.h.b16 %v748
    %v3310 = vunpack.c.l.b16 %v749
    %v3311 = vunpack.c.h.b16 %v749
    %v3312 = vunpack.c.l.b16 %v750
    %v3313 = vunpack.c.h.b16 %v750
    %v3314 = vunpack.c.l.b16 %v751
    %v3315 = vunpack.c.h.b16 %v751
    %v3316 = vunpack.c.l.b16 %v752
    %v3317 = vunpack.c.h.b16 %v752
    %v3318 = vunpack.c.l.b16 %v753
    %v3319 = vunpack.c.h.b16 %v753
    %v3320 = vunpack.c.l.b16 %v754
    %v3321 = vunpack.c.h.b16 %v754
    %v3322 = vunpack.c.l.b16 %v755
    %v3323 = vunpack.c.h.b16 %v755
    %v3324 = vunpack.c.l.b16 %v756
    %v3325 = vunpack.c.h.b16 %v756
    %v3326 = vunpack.c.l.b16 %v757
    %v3327 = vunpack.c.h.b16 %v757
    %v3328 = vunpack.c.l.b16 %v758
    %v3329 = vunpack.c.h.b16 %v758
    %v3330 = vunpack.c.l.b16 %v759
    %v3331 = vunpack.c.h.b16 %v759
    %v3332 = vunpack.c.l.b16 %v760
    %v3333 = vunpack.c.h.b16 %v760
    %v3334 = vunpack.c.l.b16 %v761
    %v3335 = vunpack.c.h.b16 %v761
    %v3336 = vunpack.c.l.b16 %v762
    %v3337 = vunpack.c.h.b16 %v762
    %v3338 = vunpack.c.l.b16 %v763
    %v3339 = vunpack.c.h.b16 %v763
    %v3340 = vunpack.c.l.b16 %v764
    %v3341 = vunpack.c.h.b16 %v764
    %v3342 = vunpack.c.l.b16 %v765
    %v3343 = vunpack.c.h.b16 %v765
    %v3344 = vunpack.c.l.b16 %v766
    %v3345 = vunpack.c.h.b16 %v766
    %v3346 = vunpack.c.l.b16 %v767
    %v3347 = vunpack.c.h.b16 %v767
    %v3348 = vunpack.c.l.b16 %v768
    %v3349 = vunpack.c.h.b16 %v768
    %v3350 = vunpack.c.l.b16 %v769
    %v3351 = vunpack.c.h.b16 %v769
    %v3352 = vunpack.c.l.b16 %v770
    %v3353 = vunpack.c.h.b16 %v770
    %v3354 = vunpack.c.l.b16 %v771
    %v3355 = vunpack.c.h.b16 %v771
    %v3356 = vunpack.c.l.b16 %v772
    %v3357 = vunpack.c.h.b16 %v772
    %v3358 = vunpack.c.l.b16 %v773
    %v3359 = vunpack.c.h.b16 %v773
    %v3360 = vunpack.c.l.b16 %v774
    %v3361 = vunpack.c.h.b16 %v774
    %v3362 = vunpack.c.l.b16 %v775
    %v3363 = vunpack.c.h.b16 %v775
    %v3364 = vunpack.c.l.b16 %v776
    %v3365 = vunpack.c.h.b16 %v776
    %v3366 = vunpack.c.l.b16 %v777
    %v3367 = vunpack.c.h.b16 %v777
    %v3368 = vunpack.c.l.b16 %v778
    %v3369 = vunpack.c.h.b16 %v778
    %v3370 = vunpack.c.l.b16 %v779
    %v3371 = vunpack.c.h.b16 %v779
    %v3372 = vunpack.c.l.b16 %v780
    %v3373 = vunpack.c.h.b16 %v780
    %v3374 = vunpack.c.l.b16 %v781
    %v3375 = vunpack.c.h.b16 %v781
    %v3376 = vunpack.c.l.b16 %v782
    %v3377 = vunpack.c.h.b16 %v782
    %v3378 = vunpack.c.l.b16 %v783
    %v3379 = vunpack.c.h.b16 %v783
    %v3380 = vunpack.c.l.b16 %v784
    %v3381 = vunpack.c.h.b16 %v784
    %v3382 = vunpack.c.l.b16 %v785
    %v3383 = vunpack.c.h.b16 %v785
    %v3384 = vunpack.c.l.b16 %v786
    %v3385 = vunpack.c.h.b16 %v786
    %v3386 = vunpack.c.l.b16 %v787
    %v3387 = vunpack.c.h.b16 %v787
    %v3388 = vunpack.c.l.b16 %v788
    %v3389 = vunpack.c.h.b16 %v788
    %v3390 = vunpack.c.l.b16 %v789
    %v3391 = vunpack.c.h.b16 %v789
    %v3392 = vunpack.c.l.b16 %v790
    %v3393 = vunpack.c.h.b16 %v790
    %v3394 = vunpack.c.l.b16 %v791
    %v3395 = vunpack.c.h.b16 %v791
    %v3396 = vunpack.c.l.b16 %v792
    %v3397 = vunpack.c.h.b16 %v792
    %v3398 = vunpack.c.l.b16 %v793
    %v3399 = vunpack.c.h.b16 %v793
    %v3400 = vunpack.c.l.b16 %v794
    %v3401 = vunpack.c.h.b16 %v794
    %v3402 = vunpack.c.l.b16 %v795
    %v3403 = vunpack.c.h.b16 %v795
    %v3404 = vunpack.c.l.b16 %v796
    %v3405 = vunpack.c.h.b16 %v796
    %v3406 = vunpack.c.l.b16 %v797
    %v3407 = vunpack.c.h.b16 %v797
    %v3408 = vunpack.c.l.b16 %v798
    %v3409 = vunpack.c.h.b16 %v798
    %v3410 = vunpack.c.l.b16 %v799
    %v3411 = vunpack.c.h.b16 %v799
    %v3412 = vunpack.c.l.b16 %v800
    %v3413 = vunpack.c.h.b16 %v800
    %v3414 = vunpack.c.l.b16 %v801
    %v3415 = vunpack.c.h.b16 %v801
    %v3416 = vunpack.c.l.b16 %v802
    %v3417 = vunpack.c.h.b16 %v802
    %v3418 = vunpack.c.l.b16 %v803
    %v3419 = vunpack.c.h.b16 %v803
    %v3420 = vunpack.c.l.b16 %v804
    %v3421 = vunpack.c.h.b16 %v804
    %v3422 = vunpack.c.l.b16 %v805
    %v3423 = vunpack.c.h.b16 %v805
    %v3424 = vunpack.c.l.b16 %v806
    %v3425 = vunpack.c.h.b16 %v806
    %v3426 = vunpack.c.l.b16 %v807
    %v3427 = vunpack.c.h.b16 %v807
    %v3428 = vunpack.c.l.b16 %v808
    %v3429 = vunpack.c.h.b16 %v808
    %v3430 = vunpack.c.l.b16 %v809
    %v3431 = vunpack.c.h.b16 %v809
    %v3432 = vunpack.c.l.b16 %v810
    %v3433 = vunpack.c.h.b16 %v810
    %v3434 = vunpack.c.l.b16 %v811
    %v3435 = vunpack.c.h.b16 %v811
    %v3436 = vunpack.c.l.b16 %v812
    %v3437 = vunpack.c.h.b16 %v812
    %v3438 = vunpack.c.l.b16 %v813
    %v3439 = vunpack.c.h.b16 %v813
    %v3440 = vunpack.c.l.b16 %v814
    %v3441 = vunpack.c.h.b16 %v814
    %v3442 = vunpack.c.l.b16 %v815
    %v3443 = vunpack.c.h.b16 %v815
    %v3444 = vunpack.c.l.b16 %v816
    %v3445 = vunpack.c.h.b16 %v816
    %v3446 = vunpack.c.l.b16 %v817
    %v3447 = vunpack.c.h.b16 %v817
    %v3448 = vunpack.c.l.b16 %v818
    %v3449 = vunpack.c.h.b16 %v818
    %v3450 = vunpack.c.l.b16 %v819
    %v3451 = vunpack.c.h.b16 %v819
    %v3452 = vunpack.c.l.b16 %v820
    %v3453 = vunpack.c.h.b16 %v820
    %v3454 = vunpack.c.l.b16 %v821
    %v3455 = vunpack.c.h.b16 %v821
    %v3456 = vunpack.c.l.b16 %v822
    %v3457 = vunpack.c.h.b16 %v822
    %v3458 = vunpack.c.l.b16 %v823
    %v3459 = vunpack.c.h.b16 %v823
    %v3460 = vunpack.c.l.b16 %v824
    %v3461 = vunpack.c.h.b16 %v824
    %v3462 = vunpack.c.l.b16 %v825
    %v3463 = vunpack.c.h.b16 %v825
    %v3464 = vunpack.c.l.b16 %v826
    %v3465 = vunpack.c.h.b16 %v826
    %v3466 = vunpack.c.l.b16 %v827
    %v3467 = vunpack.c.h.b16 %v827
    %v3468 = vunpack.c.l.b16 %v828
    %v3469 = vunpack.c.h.b16 %v828
    %v3470 = vunpack.c.l.b16 %v829
    %v3471 = vunpack.c.h.b16 %v829
    %v3472 = vunpack.c.l.b16 %v830
    %v3473 = vunpack.c.h.b16 %v830
    %v3474 = vunpack.c.l.b16 %v831
    %v3475 = vunpack.c.h.b16 %v831
    %v3476 = vunpack.c.l.b16 %v832
    %v3477 = vunpack.c.h.b16 %v832
    %v3478 = vunpack.c.l.b16 %v833
    %v3479 = vunpack.c.h.b16 %v833
    %v3480 = vunpack.c.l.b16 %v834
    %v3481 = vunpack.c.h.b16 %v834
    %v3482 = vunpack.c.l.b16 %v835
    %v3483 = vunpack.c.h.b16 %v835
    %v3484 = vunpack.c.l.b16 %v836
    %v3485 = vunpack.c.h.b16 %v836
    %v3486 = vunpack.c.l.b16 %v837
    %v3487 = vunpack.c.h.b16 %v837
    %v3488 = vunpack.c.l.b16 %v838
    %v3489 = vunpack.c.h.b16 %v838
    %v3490 = vunpack.c.l.b16 %v839
    %v3491 = vunpack.c.h.b16 %v839
    %v3492 = vunpack.c.l.b16 %v840
    %v3493 = vunpack.c.h.b16 %v840
    %v3494 = vunpack.c.l.b16 %v841
    %v3495 = vunpack.c.h.b16 %v841
    %v3496 = vunpack.c.l.b16 %v842
    %v3497 = vunpack.c.h.b16 %v842
    %v3498 = vunpack.c.l.b16 %v843
    %v3499 = vunpack.c.h.b16 %v843
    %v3500 = vunpack.c.l.b16 %v844
    %v3501 = vunpack.c.h.b16 %v844
    %v3502 = vunpack.c.l.b16 %v845
    %v3503 = vunpack.c.h.b16 %v845
    %v3504 = vunpack.c.l.b16 %v846
    %v3505 = vunpack.c.h.b16 %v846
    %v3506 = vunpack.c.l.b16 %v847
    %v3507 = vunpack.c.h.b16 %v847
    %v3508 = vunpack.c.l.b16 %v848
    %v3509 = vunpack.c.h.b16 %v848
    %v3510 = vunpack.c.l.b16 %v849
    %v3511 = vunpack.c.h.b16 %v849
    %v3512 = vunpack.c.l.b16 %v850
    %v3513 = vunpack.c.h.b16 %v850
    %v3514 = vunpack.c.l.b16 %v851
    %v3515 = vunpack.c.h.b16 %v851
    %v3516 = vunpack.c.l.b16 %v852
    %v3517 = vunpack.c.h.b16 %v852
    %v3518 = vunpack.c.l.b16 %v853
    %v3519 = vunpack.c.h.b16 %v853
    %v3520 = vunpack.c.l.b16 %v854
    %v3521 = vunpack.c.h.b16 %v854
    %v3522 = vunpack.c.l.b16 %v855
    %v3523 = vunpack.c.h.b16 %v855
    %v3524 = vunpack.c.l.b16 %v856
    %v3525 = vunpack.c.h.b16 %v856
    %v3526 = vunpack.c.l.b16 %v857
    %v3527 = vunpack.c.h.b16 %v857
    %v3528 = vunpack.c.l.b16 %v858
    %v3529 = vunpack.c.h.b16 %v858
    %v3530 = vunpack.c.l.b16 %v859
    %v3531 = vunpack.c.h.b16 %v859
    %v3532 = vunpack.c.l.b16 %v860
    %v3533 = vunpack.c.h.b16 %v860
    %v3534 = vunpack.c.l.b16 %v861
    %v3535 = vunpack.c.h.b16 %v861
    %v3536 = vunpack.c.l.b16 %v862
    %v3537 = vunpack.c.h.b16 %v862
    %v3538 = vunpack.c.l.b16 %v863
    %v3539 = vunpack.c.h.b16 %v863
    %v3540 = vunpack.c.l.b16 %v864
    %v3541 = vunpack.c.h.b16 %v864
    %v3542 = vunpack.c.l.b16 %v865
    %v3543 = vunpack.c.h.b16 %v865
    %v3544 = vunpack.c.l.b16 %v866
    %v3545 = vunpack.c.h.b16 %v866
    %v3546 = vunpack.c.l.b16 %v867
    %v3547 = vunpack.c.h.b16 %v867
    %v3548 = vunpack.c.l.b16 %v868
    %v3549 = vunpack.c.h.b16 %v868
    %v3550 = vunpack.c.l.b16 %v869
    %v3551 = vunpack.c.h.b16 %v869
    %v3552 = vunpack.c.l.b16 %v870
    %v3553 = vunpack.c.h.b16 %v870
    %v3554 = vunpack.c.l.b16 %v871
    %v3555 = vunpack.c.h.b16 %v871
    %v3556 = vunpack.c.l.b16 %v872
    %v3557 = vunpack.c.h.b16 %v872
    %v3558 = vunpack.c.l.b16 %v873
    %v3559 = vunpack.c.h.b16 %v873
    %v3560 = vunpack.c.l.b16 %v874
    %v3561 = vunpack.c.h.b16 %v874
    %v3562 = vunpack.c.l.b16 %v875
    %v3563 = vunpack.c.h.b16 %v875
    %v3564 = vunpack.c.l.b16 %v876
    %v3565 = vunpack.c.h.b16 %v876
    %v3566 = vunpack.c.l.b16 %v877
    %v3567 = vunpack.c.h.b16 %v877
    %v3568 = vunpack.c.l.b16 %v878
    %v3569 = vunpack.c.h.b16 %v878
    %v3570 = vunpack.c.l.b16 %v879
    %v3571 = vunpack.c.h.b16 %v879
    %v3572 = vunpack.c.l.b16 %v880
    %v3573 = vunpack.c.h.b16 %v880
    %v3574 = vunpack.c.l.b16 %v881
    %v3575 = vunpack.c.h.b16 %v881
    %v3576 = vunpack.c.l.b16 %v882
    %v3577 = vunpack.c.h.b16 %v882
    %v3578 = vunpack.c.l.b16 %v883
    %v3579 = vunpack.c.h.b16 %v883
    %v3580 = vunpack.c.l.b16 %v884
    %v3581 = vunpack.c.h.b16 %v884
    %v3582 = vunpack.c.l.b16 %v885
    %v3583 = vunpack.c.h.b16 %v885
    %v3584 = vunpack.c.l.b16 %v886
    %v3585 = vunpack.c.h.b16 %v886
    %v3586 = vunpack.c.l.b16 %v887
    %v3587 = vunpack.c.h.b16 %v887
    %v3588 = vunpack.c.l.b16 %v888
    %v3589 = vunpack.c.h.b16 %v888
    %v3590 = vunpack.c.l.b16 %v889
    %v3591 = vunpack.c.h.b16 %v889
    %v3592 = vunpack.c.l.b16 %v890
    %v3593 = vunpack.c.h.b16 %v890
    %v3594 = vunpack.c.l.b16 %v891
    %v3595 = vunpack.c.h.b16 %v891
    %v3596 = vunpack.c.l.b16 %v892
    %v3597 = vunpack.c.h.b16 %v892
    %v3598 = vunpack.c.l.b16 %v893
    %v3599 = vunpack.c.h.b16 %v893
    %v3600 = vunpack.c.l.b16 %v894
    %v3601 = vunpack.c.h.b16 %v894
    %v3602 = vunpack.c.l.b16 %v895
    %v3603 = vunpack.c.h.b16 %v895
    %v3604 = vunpack.c.l.b16 %v896
    %v3605 = vunpack.c.h.b16 %v896
    %v3606 = vunpack.c.l.b16 %v897
    %v3607 = vunpack.c.h.b16 %v897
    %v3608 = vunpack.c.l.b16 %v898
    %v3609 = vunpack.c.h.b16 %v898
    %v3610 = vunpack.c.l.b16 %v899
    %v3611 = vunpack.c.h.b16 %v899
    %v3612 = vunpack.c.l.b16 %v900
    %v3613 = vunpack.c.h.b16 %v900
    %v3614 = vunpack.c.l.b16 %v901
    %v3615 = vunpack.c.h.b16 %v901
    %v3616 = vunpack.c.l.b16 %v902
    %v3617 = vunpack.c.h.b16 %v902
    %v3618 = vunpack.c.l.b16 %v903
    %v3619 = vunpack.c.h.b16 %v903
    %v3620 = vunpack.c.l.b16 %v904
    %v3621 = vunpack.c.h.b16 %v904
    %v3622 = vunpack.c.l.b16 %v905
    %v3623 = vunpack.c.h.b16 %v905
    %v3624 = vunpack.c.l.b16 %v906
    %v3625 = vunpack.c.h.b16 %v906
    %v3626 = vunpack.c.l.b16 %v907
    %v3627 = vunpack.c.h.b16 %v907
    %v3628 = vunpack.c.l.b16 %v908
    %v3629 = vunpack.c.h.b16 %v908
    %v3630 = vunpack.c.l.b16 %v909
    %v3631 = vunpack.c.h.b16 %v909
    %v3632 = vunpack.c.l.b16 %v910
    %v3633 = vunpack.c.h.b16 %v910
    %v3634 = vunpack.c.l.b16 %v911
    %v3635 = vunpack.c.h.b16 %v911
    %v3636 = vunpack.c.l.b16 %v912
    %v3637 = vunpack.c.h.b16 %v912
    %v3638 = vunpack.c.l.b16 %v913
    %v3639 = vunpack.c.h.b16 %v913
    %v3640 = vunpack.c.l.b16 %v914
    %v3641 = vunpack.c.h.b16 %v914
    %v3642 = vunpack.c.l.b16 %v915
    %v3643 = vunpack.c.h.b16 %v915
    %v3644 = vunpack.c.l.b16 %v916
    %v3645 = vunpack.c.h.b16 %v916
    %v3646 = vunpack.c.l.b16 %v917
    %v3647 = vunpack.c.h.b16 %v917
    %v3648 = vunpack.c.l.b16 %v918
    %v3649 = vunpack.c.h.b16 %v918
    %v3650 = vunpack.c.l.b16 %v919
    %v3651 = vunpack.c.h.b16 %v919
    %v3652 = vunpack.c.l.b16 %v920
    %v3653 = vunpack.c.h.b16 %v920
    %v3654 = vunpack.c.l.b16 %v921
    %v3655 = vunpack.c.h.b16 %v921
    %v3656 = vunpack.c.l.b16 %v922
    %v3657 = vunpack.c.h.b16 %v922
    %v3658 = vunpack.c.l.b16 %v923
    %v3659 = vunpack.c.h.b16 %v923
    %v3660 = vunpack.c.l.b16 %v924
    %v3661 = vunpack.c.h.b16 %v924
    %v3662 = vunpack.c.l.b16 %v925
    %v3663 = vunpack.c.h.b16 %v925
    %v3664 = vunpack.c.l.b16 %v926
    %v3665 = vunpack.c.h.b16 %v926
    %v3666 = vunpack.c.l.b16 %v927
    %v3667 = vunpack.c.h.b16 %v927
    %v3668 = vunpack.c.l.b16 %v928
    %v3669 = vunpack.c.h.b16 %v928
    %v3670 = vunpack.c.l.b16 %v929
    %v3671 = vunpack.c.h.b16 %v929
    %v3672 = vunpack.c.l.b16 %v930
    %v3673 = vunpack.c.h.b16 %v930
    %v3674 = vunpack.c.l.b16 %v931
    %v3675 = vunpack.c.h.b16 %v931
    %v3676 = vunpack.c.l.b16 %v932
    %v3677 = vunpack.c.h.b16 %v932
    %v3678 = vunpack.c.l.b16 %v933
    %v3679 = vunpack.c.h.b16 %v933
    %v3680 = vunpack.c.l.b16 %v934
    %v3681 = vunpack.c.h.b16 %v934
    %v3682 = vunpack.c.l.b16 %v935
    %v3683 = vunpack.c.h.b16 %v935
    %v3684 = vunpack.c.l.b16 %v936
    %v3685 = vunpack.c.h.b16 %v936
    %v3686 = vunpack.c.l.b16 %v937
    %v3687 = vunpack.c.h.b16 %v937
    %v3688 = vunpack.c.l.b16 %v938
    %v3689 = vunpack.c.h.b16 %v938
    %v3690 = vunpack.c.l.b16 %v939
    %v3691 = vunpack.c.h.b16 %v939
    %v3692 = vunpack.c.l.b16 %v940
    %v3693 = vunpack.c.h.b16 %v940
    %v3694 = vunpack.c.l.b16 %v941
    %v3695 = vunpack.c.h.b16 %v941
    %v3696 = vunpack.c.l.b16 %v942
    %v3697 = vunpack.c.h.b16 %v942
    %v3698 = vunpack.c.l.b16 %v943
    %v3699 = vunpack.c.h.b16 %v943
    %v3700 = vunpack.c.l.b16 %v944
    %v3701 = vunpack.c.h.b16 %v944
    %v3702 = vunpack.c.l.b16 %v945
    %v3703 = vunpack.c.h.b16 %v945
    %v3704 = vunpack.c.l.b16 %v946
    %v3705 = vunpack.c.h.b16 %v946
    %v3706 = vunpack.c.l.b16 %v947
    %v3707 = vunpack.c.h.b16 %v947
    %v3708 = vpack.c.b16 %v1930, %v1916
    %v3709 = vpack.c.b16 %v1931, %v1917
    %v3710 = vpack.c.b16 %v1932, %v1918
    %v3711 = vpack.c.b16 %v1933, %v1919
    %v3712 = vpack.c.b16 %v1934, %v1920
    %v3713 = vpack.c.b16 %v1935, %v1921
    %v3714 = vpack.c.b16 %v1936, %v1922
    %v3715 = vpack.c.b16 %v1937, %v1923
    %v3716 = vpack.c.b16 %v1938, %v1924
    %v3717 = vpack.c.b16 %v1939, %v1925
    %v3718 = vpack.c.b16 %v1940, %v1926
    %v3719 = vpack.c.b16 %v1941, %v1927
    %v3720 = vpack.c.b16 %v1942, %v1928
    %v3721 = vpack.c.b16 %v1943, %v1929
    %v3722 = vpack.c.b16 %v1958, %v1944
    %v3723 = vpack.c.b16 %v1959, %v1945
    %v3724 = vpack.c.b16 %v1960, %v1946
    %v3725 = vpack.c.b16 %v1961, %v1947
    %v3726 = vpack.c.b16 %v1962, %v1948
    %v3727 = vpack.c.b16 %v1963, %v1949
    %v3728 = vpack.c.b16 %v1964, %v1950
    %v3729 = vpack.c.b16 %v1965, %v1951
    %v3730 = vpack.c.b16 %v1966, %v1952
    %v3731 = vpack.c.b16 %v1967, %v1953
    %v3732 = vpack.c.b16 %v1968, %v1954
    %v3733 = vpack.c.b16 %v1969, %v1955
    %v3734 = vpack.c.b16 %v1970, %v1956
    %v3735 = vpack.c.b16 %v1971, %v1957
    %v3736 = vpack.c.b16 %v1986, %v1972
    %v3737 = vpack.c.b16 %v1987, %v1973
    %v3738 = vpack.c.b16 %v1988, %v1974
    %v3739 = vpack.c.b16 %v1989, %v1975
    %v3740 = vpack.c.b16 %v1990, %v1976
    %v3741 = vpack.c.b16 %v1991, %v1977
    %v3742 = vpack.c.b16 %v1992, %v1978
    %v3743 = vpack.c.b16 %v1993, %v1979
    %v3744 = vpack.c.b16 %v1994, %v1980
    %v3745 = vpack.c.b16 %v1995, %v1981
    %v3746 = vpack.c.b16 %v1996, %v1982
    %v3747 = vpack.c.b16 %v1997, %v1983
    %v3748 = vpack.c.b16 %v1998, %v1984
    %v3749 = vpack.c.b16 %v1999, %v1985
    %v3750 = vpack.c.b16 %v2014, %v2000
    %v3751 = vpack.c.b16 %v2015, %v2001
    %v3752 = vpack.c.b16 %v2016, %v2002
    %v3753 = vpack.c.b16 %v2017, %v2003
    %v3754 = vpack.c.b16 %v2018, %v2004
    %v3755 = vpack.c.b16 %v2019, %v2005
    %v3756 = vpack.c.b16 %v2020, %v2006
    %v3757 = vpack.c.b16 %v2021, %v2007
    %v3758 = vpack.c.b16 %v2022, %v2008
    %v3759 = vpack.c.b16 %v2023, %v2009
    %v3760 = vpack.c.b16 %v2024, %v2010
    %v3761 = vpack.c.b16 %v2025, %v2011
    %v3762 = vpack.c.b16 %v2026, %v2012
    %v3763 = vpack.c.b16 %v2027, %v2013
    %v3764 = vpack.c.b16 %v2042, %v2028
    %v3765 = vpack.c.b16 %v2043, %v2029
    %v3766 = vpack.c.b16 %v2044, %v2030
    %v3767 = vpack.c.b16 %v2045, %v2031
    %v3768 = vpack.c.b16 %v2046, %v2032
    %v3769 = vpack.c.b16 %v2047, %v2033
    %v3770 = vpack.c.b16 %v2048, %v2034
    %v3771 = vpack.c.b16 %v2049, %v2035
    %v3772 = vpack.c.b16 %v2050, %v2036
    %v3773 = vpack.c.b16 %v2051, %v2037
    %v3774 = vpack.c.b16 %v2052, %v2038
    %v3775 = vpack.c.b16 %v2053, %v2039
    %v3776 = vpack.c.b16 %v2054, %v2040
    %v3777 = vpack.c.b16 %v2055, %v2041
    %v3778 = vpack.c.b16 %v2070, %v2056
    %v3779 = vpack.c.b16 %v2071, %v2057
    %v3780 = vpack.c.b16 %v2072, %v2058
    %v3781 = vpack.c.b16 %v2073, %v2059
    %v3782 = vpack.c.b16 %v2074, %v2060
    %v3783 = vpack.c.b16 %v2075, %v2061
    %v3784 = vpack.c.b16 %v2076, %v2062
    %v3785 = vpack.c.b16 %v2077, %v2063
    %v3786 = vpack.c.b16 %v2078, %v2064
    %v3787 = vpack.c.b16 %v2079, %v2065
    %v3788 = vpack.c.b16 %v2080, %v2066
    %v3789 = vpack.c.b16 %v2081, %v2067
    %v3790 = vpack.c.b16 %v2082, %v2068
    %v3791 = vpack.c.b16 %v2083, %v2069
    %v3792 = vpack.c.b16 %v2098, %v2084
    %v3793 = vpack.c.b16 %v2099, %v2085
    %v3794 = vpack.c.b16 %v2100, %v2086
    %v3795 = vpack.c.b16 %v2101, %v2087
    %v3796 = vpack.c.b16 %v2102, %v2088
    %v3797 = vpack.c.b16 %v2103, %v2089
    %v3798 = vpack.c.b16 %v2104, %v2090
    %v3799 = vpack.c.b16 %v2105, %v2091
    %v3800 = vpack.c.b16 %v2106, %v2092
    %v3801 = vpack.c.b16 %v2107, %v2093
    %v3802 = vpack.c.b16 %v2108, %v2094
    %v3803 = vpack.c.b16 %v2109, %v2095
    %v3804 = vpack.c.b16 %v2110, %v2096
    %v3805 = vpack.c.b16 %v2111, %v2097
    %v3806 = vpack.c.b16 %v2126, %v2112
    %v3807 = vpack.c.b16 %v2127, %v2113
    %v3808 = vpack.c.b16 %v2128, %v2114
    %v3809 = vpack.c.b16 %v2129, %v2115
    %v3810 = vpack.c.b16 %v2130, %v2116
    %v3811 = vpack.c.b16 %v2131, %v2117
    %v3812 = vpack.c.b16 %v2132, %v2118
    %v3813 = vpack.c.b16 %v2133, %v2119
    %v3814 = vpack.c.b16 %v2134, %v2120
    %v3815 = vpack.c.b16 %v2135, %v2121
    %v3816 = vpack.c.b16 %v2136, %v2122
    %v3817 = vpack.c.b16 %v2137, %v2123
    %v3818 = vpack.c.b16 %v2138, %v2124
    %v3819 = vpack.c.b16 %v2139, %v2125
    %v3820 = vpack.c.b16 %v2154, %v2140
    %v3821 = vpack.c.b16 %v2155, %v2141
    %v3822 = vpack.c.b16 %v2156, %v2142
    %v3823 = vpack.c.b16 %v2157, %v2143
    %v3824 = vpack.c.b16 %v2158, %v2144
    %v3825 = vpack.c.b16 %v2159, %v2145
    %v3826 = vpack.c.b16 %v2160, %v2146
    %v3827 = vpack.c.b16 %v2161, %v2147
    %v3828 = vpack.c.b16 %v2162, %v2148
    %v3829 = vpack.c.b16 %v2163, %v2149
    %v3830 = vpack.c.b16 %v2164, %v2150
    %v3831 = vpack.c.b16 %v2165, %v2151
    %v3832 = vpack.c.b16 %v2166, %v2152
    %v3833 = vpack.c.b16 %v2167, %v2153
    %v3834 = vpack.c.b16 %v2182, %v2168
    %v3835 = vpack.c.b16 %v2183, %v2169
    %v3836 = vpack.c.b16 %v2184, %v2170
    %v3837 = vpack.c.b16 %v2185, %v2171
    %v3838 = vpack.c.b16 %v2186, %v2172
    %v3839 = vpack.c.b16 %v2187, %v2173
    %v3840 = vpack.c.b16 %v2188, %v2174
    %v3841 = vpack.c.b16 %v2189, %v2175
    %v3842 = vpack.c.b16 %v2190, %v2176
    %v3843 = vpack.c.b16 %v2191, %v2177
    %v3844 = vpack.c.b16 %v2192, %v2178
    %v3845 = vpack.c.b16 %v2193, %v2179
    %v3846 = vpack.c.b16 %v2194, %v2180
    %v3847 = vpack.c.b16 %v2195, %v2181
    %v3848 = vpack.c.b16 %v2210, %v2196
    %v3849 = vpack.c.b16 %v2211, %v2197
    %v3850 = vpack.c.b16 %v2212, %v2198
    %v3851 = vpack.c.b16 %v2213, %v2199
    %v3852 = vpack.c.b16 %v2214, %v2200
    %v3853 = vpack.c.b16 %v2215, %v2201
    %v3854 = vpack.c.b16 %v2216, %v2202
    %v3855 = vpack.c.b16 %v2217, %v2203
    %v3856 = vpack.c.b16 %v2218, %v2204
    %v3857 = vpack.c.b16 %v2219, %v2205
    %v3858 = vpack.c.b16 %v2220, %v2206
    %v3859 = vpack.c.b16 %v2221, %v2207
    %v3860 = vpack.c.b16 %v2222, %v2208
    %v3861 = vpack.c.b16 %v2223, %v2209
    %v3862 = vpack.c.b16 %v2238, %v2224
    %v3863 = vpack.c.b16 %v2239, %v2225
    %v3864 = vpack.c.b16 %v2240, %v2226
    %v3865 = vpack.c.b16 %v2241, %v2227
    %v3866 = vpack.c.b16 %v2242, %v2228
    %v3867 = vpack.c.b16 %v2243, %v2229
    %v3868 = vpack.c.b16 %v2244, %v2230
    %v3869 = vpack.c.b16 %v2245, %v2231
    %v3870 = vpack.c.b16 %v2246, %v2232
    %v3871 = vpack.c.b16 %v2247, %v2233
    %v3872 = vpack.c.b16 %v2248, %v2234
    %v3873 = vpack.c.b16 %v2249, %v2235
    %v3874 = vpack.c.b16 %v2250, %v2236
    %v3875 = vpack.c.b16 %v2251, %v2237
    %v3876 = vpack.c.b16 %v2266, %v2252
    %v3877 = vpack.c.b16 %v2267, %v2253
    %v3878 = vpack.c.b16 %v2268, %v2254
    %v3879 = vpack.c.b16 %v2269, %v2255
    %v3880 = vpack.c.b16 %v2270, %v2256
    %v3881 = vpack.c.b16 %v2271, %v2257
    %v3882 = vpack.c.b16 %v2272, %v2258
    %v3883 = vpack.c.b16 %v2273, %v2259
    %v3884 = vpack.c.b16 %v2274, %v2260
    %v3885 = vpack.c.b16 %v2275, %v2261
    %v3886 = vpack.c.b16 %v2276, %v2262
    %v3887 = vpack.c.b16 %v2277, %v2263
    %v3888 = vpack.c.b16 %v2278, %v2264
    %v3889 = vpack.c.b16 %v2279, %v2265
    %v3890 = vpack.c.b16 %v2294, %v2280
    %v3891 = vpack.c.b16 %v2295, %v2281
    %v3892 = vpack.c.b16 %v2296, %v2282
    %v3893 = vpack.c.b16 %v2297, %v2283
    %v3894 = vpack.c.b16 %v2298, %v2284
    %v3895 = vpack.c.b16 %v2299, %v2285
    %v3896 = vpack.c.b16 %v2300, %v2286
    %v3897 = vpack.c.b16 %v2301, %v2287
    %v3898 = vpack.c.b16 %v2302, %v2288
    %v3899 = vpack.c.b16 %v2303, %v2289
    %v3900 = vpack.c.b16 %v2304, %v2290
    %v3901 = vpack.c.b16 %v2305, %v2291
    %v3902 = vpack.c.b16 %v2306, %v2292
    %v3903 = vpack.c.b16 %v2307, %v2293
    %v3904 = vpack.c.b16 %v2322, %v2308
    %v3905 = vpack.c.b16 %v2323, %v2309
    %v3906 = vpack.c.b16 %v2324, %v2310
    %v3907 = vpack.c.b16 %v2325, %v2311
    %v3908 = vpack.c.b16 %v2326, %v2312
    %v3909 = vpack.c.b16 %v2327, %v2313
    %v3910 = vpack.c.b16 %v2328, %v2314
    %v3911 = vpack.c.b16 %v2329, %v2315
    %v3912 = vpack.c.b16 %v2330, %v2316
    %v3913 = vpack.c.b16 %v2331, %v2317
    %v3914 = vpack.c.b16 %v2332, %v2318
    %v3915 = vpack.c.b16 %v2333, %v2319
    %v3916 = vpack.c.b16 %v2334, %v2320
    %v3917 = vpack.c.b16 %v2335, %v2321
    %v3918 = vpack.c.b16 %v2350, %v2336
    %v3919 = vpack.c.b16 %v2351, %v2337
    %v3920 = vpack.c.b16 %v2352, %v2338
    %v3921 = vpack.c.b16 %v2353, %v2339
    %v3922 = vpack.c.b16 %v2354, %v2340
    %v3923 = vpack.c.b16 %v2355, %v2341
    %v3924 = vpack.c.b16 %v2356, %v2342
    %v3925 = vpack.c.b16 %v2357, %v2343
    %v3926 = vpack.c.b16 %v2358, %v2344
    %v3927 = vpack.c.b16 %v2359, %v2345
    %v3928 = vpack.c.b16 %v2360, %v2346
    %v3929 = vpack.c.b16 %v2361, %v2347
    %v3930 = vpack.c.b16 %v2362, %v2348
    %v3931 = vpack.c.b16 %v2363, %v2349
    %v3932 = vpack.c.b16 %v2378, %v2364
    %v3933 = vpack.c.b16 %v2379, %v2365
    %v3934 = vpack.c.b16 %v2380, %v2366
    %v3935 = vpack.c.b16 %v2381, %v2367
    %v3936 = vpack.c.b16 %v2382, %v2368
    %v3937 = vpack.c.b16 %v2383, %v2369
    %v3938 = vpack.c.b16 %v2384, %v2370
    %v3939 = vpack.c.b16 %v2385, %v2371
    %v3940 = vpack.c.b16 %v2386, %v2372
    %v3941 = vpack.c.b16 %v2387, %v2373
    %v3942 = vpack.c.b16 %v2388, %v2374
    %v3943 = vpack.c.b16 %v2389, %v2375
    %v3944 = vpack.c.b16 %v2390, %v2376
    %v3945 = vpack.c.b16 %v2391, %v2377
    %v3946 = vpack.c.b16 %v2406, %v2392
    %v3947 = vpack.c.b16 %v2407, %v2393
    %v3948 = vpack.c.b16 %v2408, %v2394
    %v3949 = vpack.c.b16 %v2409, %v2395
    %v3950 = vpack.c.b16 %v2410, %v2396
    %v3951 = vpack.c.b16 %v2411, %v2397
    %v3952 = vpack.c.b16 %v2412, %v2398
    %v3953 = vpack.c.b16 %v2413, %v2399
    %v3954 = vpack.c.b16 %v2414, %v2400
    %v3955 = vpack.c.b16 %v2415, %v2401
    %v3956 = vpack.c.b16 %v2416, %v2402
    %v3957 = vpack.c.b16 %v2417, %v2403
    %v3958 = vpack.c.b16 %v2418, %v2404
    %v3959 = vpack.c.b16 %v2419, %v2405
    %v3960 = vpack.c.b16 %v2434, %v2420
    %v3961 = vpack.c.b16 %v2435, %v2421
    %v3962 = vpack.c.b16 %v2436, %v2422
    %v3963 = vpack.c.b16 %v2437, %v2423
    %v3964 = vpack.c.b16 %v2438, %v2424
    %v3965 = vpack.c.b16 %v2439, %v2425
    %v3966 = vpack.c.b16 %v2440, %v2426
    %v3967 = vpack.c.b16 %v2441, %v2427
    %v3968 = vpack.c.b16 %v2442, %v2428
    %v3969 = vpack.c.b16 %v2443, %v2429
    %v3970 = vpack.c.b16 %v2444, %v2430
    %v3971 = vpack.c.b16 %v2445, %v2431
    %v3972 = vpack.c.b16 %v2446, %v2432
    %v3973 = vpack.c.b16 %v2447, %v2433
    %v3974 = vpack.c.b16 %v2462, %v2448
    %v3975 = vpack.c.b16 %v2463, %v2449
    %v3976 = vpack.c.b16 %v2464, %v2450
    %v3977 = vpack.c.b16 %v2465, %v2451
    %v3978 = vpack.c.b16 %v2466, %v2452
    %v3979 = vpack.c.b16 %v2467, %v2453
    %v3980 = vpack.c.b16 %v2468, %v2454
    %v3981 = vpack.c.b16 %v2469, %v2455
    %v3982 = vpack.c.b16 %v2470, %v2456
    %v3983 = vpack.c.b16 %v2471, %v2457
    %v3984 = vpack.c.b16 %v2472, %v2458
    %v3985 = vpack.c.b16 %v2473, %v2459
    %v3986 = vpack.c.b16 %v2474, %v2460
    %v3987 = vpack.c.b16 %v2475, %v2461
    %v3988 = vpack.c.b16 %v2490, %v2476
    %v3989 = vpack.c.b16 %v2491, %v2477
    %v3990 = vpack.c.b16 %v2492, %v2478
    %v3991 = vpack.c.b16 %v2493, %v2479
    %v3992 = vpack.c.b16 %v2494, %v2480
    %v3993 = vpack.c.b16 %v2495, %v2481
    %v3994 = vpack.c.b16 %v2496, %v2482
    %v3995 = vpack.c.b16 %v2497, %v2483
    %v3996 = vpack.c.b16 %v2498, %v2484
    %v3997 = vpack.c.b16 %v2499, %v2485
    %v3998 = vpack.c.b16 %v2500, %v2486
    %v3999 = vpack.c.b16 %v2501, %v2487
    %v4000 = vpack.c.b16 %v2502, %v2488
    %v4001 = vpack.c.b16 %v2503, %v2489
    %v4002 = vpack.c.b16 %v2518, %v2504
    %v4003 = vpack.c.b16 %v2519, %v2505
    %v4004 = vpack.c.b16 %v2520, %v2506
    %v4005 = vpack.c.b16 %v2521, %v2507
    %v4006 = vpack.c.b16 %v2522, %v2508
    %v4007 = vpack.c.b16 %v2523, %v2509
    %v4008 = vpack.c.b16 %v2524, %v2510
    %v4009 = vpack.c.b16 %v2525, %v2511
    %v4010 = vpack.c.b16 %v2526, %v2512
    %v4011 = vpack.c.b16 %v2527, %v2513
    %v4012 = vpack.c.b16 %v2528, %v2514
    %v4013 = vpack.c.b16 %v2529, %v2515
    %v4014 = vpack.c.b16 %v2530, %v2516
    %v4015 = vpack.c.b16 %v2531, %v2517
    %v4016 = vpack.c.b16 %v2546, %v2532
    %v4017 = vpack.c.b16 %v2547, %v2533
    %v4018 = vpack.c.b16 %v2548, %v2534
    %v4019 = vpack.c.b16 %v2549, %v2535
    %v4020 = vpack.c.b16 %v2550, %v2536
    %v4021 = vpack.c.b16 %v2551, %v2537
    %v4022 = vpack.c.b16 %v2552, %v2538
    %v4023 = vpack.c.b16 %v2553, %v2539
    %v4024 = vpack.c.b16 %v2554, %v2540
    %v4025 = vpack.c.b16 %v2555, %v2541
    %v4026 = vpack.c.b16 %v2556, %v2542
    %v4027 = vpack.c.b16 %v2557, %v2543
    %v4028 = vpack.c.b16 %v2558, %v2544
    %v4029 = vpack.c.b16 %v2559, %v2545
    %v4030 = vpack.c.b16 %v2574, %v2560
    %v4031 = vpack.c.b16 %v2575, %v2561
    %v4032 = vpack.c.b16 %v2576, %v2562
    %v4033 = vpack.c.b16 %v2577, %v2563
    %v4034 = vpack.c.b16 %v2578, %v2564
    %v4035 = vpack.c.b16 %v2579, %v2565
    %v4036 = vpack.c.b16 %v2580, %v2566
    %v4037 = vpack.c.b16 %v2581, %v2567
    %v4038 = vpack.c.b16 %v2582, %v2568
    %v4039 = vpack.c.b16 %v2583, %v2569
    %v4040 = vpack.c.b16 %v2584, %v2570
    %v4041 = vpack.c.b16 %v2585, %v2571
    %v4042 = vpack.c.b16 %v2586, %v2572
    %v4043 = vpack.c.b16 %v2587, %v2573
    %v4044 = vpack.c.b16 %v2602, %v2588
    %v4045 = vpack.c.b16 %v2603, %v2589
    %v4046 = vpack.c.b16 %v2604, %v2590
    %v4047 = vpack.c.b16 %v2605, %v2591
    %v4048 = vpack.c.b16 %v2606, %v2592
    %v4049 = vpack.c.b16 %v2607, %v2593
    %v4050 = vpack.c.b16 %v2608, %v2594
    %v4051 = vpack.c.b16 %v2609, %v2595
    %v4052 = vpack.c.b16 %v2610, %v2596
    %v4053 = vpack.c.b16 %v2611, %v2597
    %v4054 = vpack.c.b16 %v2612, %v2598
    %v4055 = vpack.c.b16 %v2613, %v2599
    %v4056 = vpack.c.b16 %v2614, %v2600
    %v4057 = vpack.c.b16 %v2615, %v2601
    %v4058 = vpack.c.b16 %v2630, %v2616
    %v4059 = vpack.c.b16 %v2631, %v2617
    %v4060 = vpack.c.b16 %v2632, %v2618
    %v4061 = vpack.c.b16 %v2633, %v2619
    %v4062 = vpack.c.b16 %v2634, %v2620
    %v4063 = vpack.c.b16 %v2635, %v2621
    %v4064 = vpack.c.b16 %v2636, %v2622
    %v4065 = vpack.c.b16 %v2637, %v2623
    %v4066 = vpack.c.b16 %v2638, %v2624
    %v4067 = vpack.c.b16 %v2639, %v2625
    %v4068 = vpack.c.b16 %v2640, %v2626
    %v4069 = vpack.c.b16 %v2641, %v2627
    %v4070 = vpack.c.b16 %v2642, %v2628
    %v4071 = vpack.c.b16 %v2643, %v2629
    %v4072 = vpack.c.b16 %v2658, %v2644
    %v4073 = vpack.c.b16 %v2659, %v2645
    %v4074 = vpack.c.b16 %v2660, %v2646
    %v4075 = vpack.c.b16 %v2661, %v2647
    %v4076 = vpack.c.b16 %v2662, %v2648
    %v4077 = vpack.c.b16 %v2663, %v2649
    %v4078 = vpack.c.b16 %v2664, %v2650
    %v4079 = vpack.c.b16 %v2665, %v2651
    %v4080 = vpack.c.b16 %v2666, %v2652
    %v4081 = vpack.c.b16 %v2667, %v2653
    %v4082 = vpack.c.b16 %v2668, %v2654
    %v4083 = vpack.c.b16 %v2669, %v2655
    %v4084 = vpack.c.b16 %v2670, %v2656
    %v4085 = vpack.c.b16 %v2671, %v2657
    %v4086 = vpack.c.b16 %v2686, %v2672
    %v4087 = vpack.c.b16 %v2687, %v2673
    %v4088 = vpack.c.b16 %v2688, %v2674
    %v4089 = vpack.c.b16 %v2689, %v2675
    %v4090 = vpack.c.b16 %v2690, %v2676
    %v4091 = vpack.c.b16 %v2691, %v2677
    %v4092 = vpack.c.b16 %v2692, %v2678
    %v4093 = vpack.c.b16 %v2693, %v2679
    %v4094 = vpack.c.b16 %v2694, %v2680
    %v4095 = vpack.c.b16 %v2695, %v2681
    %v4096 = vpack.c.b16 %v2696, %v2682
    %v4097 = vpack.c.b16 %v2697, %v2683
    %v4098 = vpack.c.b16 %v2698, %v2684
    %v4099 = vpack.c.b16 %v2699, %v2685
    %v4100 = vpack.c.b16 %v2714, %v2700
    %v4101 = vpack.c.b16 %v2715, %v2701
    %v4102 = vpack.c.b16 %v2716, %v2702
    %v4103 = vpack.c.b16 %v2717, %v2703
    %v4104 = vpack.c.b16 %v2718, %v2704
    %v4105 = vpack.c.b16 %v2719, %v2705
    %v4106 = vpack.c.b16 %v2720, %v2706
    %v4107 = vpack.c.b16 %v2721, %v2707
    %v4108 = vpack.c.b16 %v2722, %v2708
    %v4109 = vpack.c.b16 %v2723, %v2709
    %v4110 = vpack.c.b16 %v2724, %v2710
    %v4111 = vpack.c.b16 %v2725, %v2711
    %v4112 = vpack.c.b16 %v2726, %v2712
    %v4113 = vpack.c.b16 %v2727, %v2713
    %v4114 = vpack.c.b16 %v2742, %v2728
    %v4115 = vpack.c.b16 %v2743, %v2729
    %v4116 = vpack.c.b16 %v2744, %v2730
    %v4117 = vpack.c.b16 %v2745, %v2731
    %v4118 = vpack.c.b16 %v2746, %v2732
    %v4119 = vpack.c.b16 %v2747, %v2733
    %v4120 = vpack.c.b16 %v2748, %v2734
    %v4121 = vpack.c.b16 %v2749, %v2735
    %v4122 = vpack.c.b16 %v2750, %v2736
    %v4123 = vpack.c.b16 %v2751, %v2737
    %v4124 = vpack.c.b16 %v2752, %v2738
    %v4125 = vpack.c.b16 %v2753, %v2739
    %v4126 = vpack.c.b16 %v2754, %v2740
    %v4127 = vpack.c.b16 %v2755, %v2741
    %v4128 = vpack.c.b16 %v2770, %v2756
    %v4129 = vpack.c.b16 %v2771, %v2757
    %v4130 = vpack.c.b16 %v2772, %v2758
    %v4131 = vpack.c.b16 %v2773, %v2759
    %v4132 = vpack.c.b16 %v2774, %v2760
    %v4133 = vpack.c.b16 %v2775, %v2761
    %v4134 = vpack.c.b16 %v2776, %v2762
    %v4135 = vpack.c.b16 %v2777, %v2763
    %v4136 = vpack.c.b16 %v2778, %v2764
    %v4137 = vpack.c.b16 %v2779, %v2765
    %v4138 = vpack.c.b16 %v2780, %v2766
    %v4139 = vpack.c.b16 %v2781, %v2767
    %v4140 = vpack.c.b16 %v2782, %v2768
    %v4141 = vpack.c.b16 %v2783, %v2769
    %v4142 = vpack.c.b16 %v2798, %v2784
    %v4143 = vpack.c.b16 %v2799, %v2785
    %v4144 = vpack.c.b16 %v2800, %v2786
    %v4145 = vpack.c.b16 %v2801, %v2787
    %v4146 = vpack.c.b16 %v2802, %v2788
    %v4147 = vpack.c.b16 %v2803, %v2789
    %v4148 = vpack.c.b16 %v2804, %v2790
    %v4149 = vpack.c.b16 %v2805, %v2791
    %v4150 = vpack.c.b16 %v2806, %v2792
    %v4151 = vpack.c.b16 %v2807, %v2793
    %v4152 = vpack.c.b16 %v2808, %v2794
    %v4153 = vpack.c.b16 %v2809, %v2795
    %v4154 = vpack.c.b16 %v2810, %v2796
    %v4155 = vpack.c.b16 %v2811, %v2797
    %v4156 = vpack.c.b16 %v2826, %v2812
    %v4157 = vpack.c.b16 %v2827, %v2813
    %v4158 = vpack.c.b16 %v2828, %v2814
    %v4159 = vpack.c.b16 %v2829, %v2815
    %v4160 = vpack.c.b16 %v2830, %v2816
    %v4161 = vpack.c.b16 %v2831, %v2817
    %v4162 = vpack.c.b16 %v2832, %v2818
    %v4163 = vpack.c.b16 %v2833, %v2819
    %v4164 = vpack.c.b16 %v2834, %v2820
    %v4165 = vpack.c.b16 %v2835, %v2821
    %v4166 = vpack.c.b16 %v2836, %v2822
    %v4167 = vpack.c.b16 %v2837, %v2823
    %v4168 = vpack.c.b16 %v2838, %v2824
    %v4169 = vpack.c.b16 %v2839, %v2825
    %v4170 = vpack.c.b16 %v2854, %v2840
    %v4171 = vpack.c.b16 %v2855, %v2841
    %v4172 = vpack.c.b16 %v2856, %v2842
    %v4173 = vpack.c.b16 %v2857, %v2843
    %v4174 = vpack.c.b16 %v2858, %v2844
    %v4175 = vpack.c.b16 %v2859, %v2845
    %v4176 = vpack.c.b16 %v2860, %v2846
    %v4177 = vpack.c.b16 %v2861, %v2847
    %v4178 = vpack.c.b16 %v2862, %v2848
    %v4179 = vpack.c.b16 %v2863, %v2849
    %v4180 = vpack.c.b16 %v2864, %v2850
    %v4181 = vpack.c.b16 %v2865, %v2851
    %v4182 = vpack.c.b16 %v2866, %v2852
    %v4183 = vpack.c.b16 %v2867, %v2853
    %v4184 = vpack.c.b16 %v2882, %v2868
    %v4185 = vpack.c.b16 %v2883, %v2869
    %v4186 = vpack.c.b16 %v2884, %v2870
    %v4187 = vpack.c.b16 %v2885, %v2871
    %v4188 = vpack.c.b16 %v2886, %v2872
    %v4189 = vpack.c.b16 %v2887, %v2873
    %v4190 = vpack.c.b16 %v2888, %v2874
    %v4191 = vpack.c.b16 %v2889, %v2875
    %v4192 = vpack.c.b16 %v2890, %v2876
    %v4193 = vpack.c.b16 %v2891, %v2877
    %v4194 = vpack.c.b16 %v2892, %v2878
    %v4195 = vpack.c.b16 %v2893, %v2879
    %v4196 = vpack.c.b16 %v2894, %v2880
    %v4197 = vpack.c.b16 %v2895, %v2881
    %v4198 = vpack.c.b16 %v2910, %v2896
    %v4199 = vpack.c.b16 %v2911, %v2897
    %v4200 = vpack.c.b16 %v2912, %v2898
    %v4201 = vpack.c.b16 %v2913, %v2899
    %v4202 = vpack.c.b16 %v2914, %v2900
    %v4203 = vpack.c.b16 %v2915, %v2901
    %v4204 = vpack.c.b16 %v2916, %v2902
    %v4205 = vpack.c.b16 %v2917, %v2903
    %v4206 = vpack.c.b16 %v2918, %v2904
    %v4207 = vpack.c.b16 %v2919, %v2905
    %v4208 = vpack.c.b16 %v2920, %v2906
    %v4209 = vpack.c.b16 %v2921, %v2907
    %v4210 = vpack.c.b16 %v2922, %v2908
    %v4211 = vpack.c.b16 %v2923, %v2909
    %v4212 = vpack.c.b16 %v2938, %v2924
    %v4213 = vpack.c.b16 %v2939, %v2925
    %v4214 = vpack.c.b16 %v2940, %v2926
    %v4215 = vpack.c.b16 %v2941, %v2927
    %v4216 = vpack.c.b16 %v2942, %v2928
    %v4217 = vpack.c.b16 %v2943, %v2929
    %v4218 = vpack.c.b16 %v2944, %v2930
    %v4219 = vpack.c.b16 %v2945, %v2931
    %v4220 = vpack.c.b16 %v2946, %v2932
    %v4221 = vpack.c.b16 %v2947, %v2933
    %v4222 = vpack.c.b16 %v2948, %v2934
    %v4223 = vpack.c.b16 %v2949, %v2935
    %v4224 = vpack.c.b16 %v2950, %v2936
    %v4225 = vpack.c.b16 %v2951, %v2937
    %v4226 = vpack.c.b16 %v2966, %v2952
    %v4227 = vpack.c.b16 %v2967, %v2953
    %v4228 = vpack.c.b16 %v2968, %v2954
    %v4229 = vpack.c.b16 %v2969, %v2955
    %v4230 = vpack.c.b16 %v2970, %v2956
    %v4231 = vpack.c.b16 %v2971, %v2957
    %v4232 = vpack.c.b16 %v2972, %v2958
    %v4233 = vpack.c.b16 %v2973, %v2959
    %v4234 = vpack.c.b16 %v2974, %v2960
    %v4235 = vpack.c.b16 %v2975, %v2961
    %v4236 = vpack.c.b16 %v2976, %v2962
    %v4237 = vpack.c.b16 %v2977, %v2963
    %v4238 = vpack.c.b16 %v2978, %v2964
    %v4239 = vpack.c.b16 %v2979, %v2965
    %v4240 = vpack.c.b16 %v2994, %v2980
    %v4241 = vpack.c.b16 %v2995, %v2981
    %v4242 = vpack.c.b16 %v2996, %v2982
    %v4243 = vpack.c.b16 %v2997, %v2983
    %v4244 = vpack.c.b16 %v2998, %v2984
    %v4245 = vpack.c.b16 %v2999, %v2985
    %v4246 = vpack.c.b16 %v3000, %v2986
    %v4247 = vpack.c.b16 %v3001, %v2987
    %v4248 = vpack.c.b16 %v3002, %v2988
    %v4249 = vpack.c.b16 %v3003, %v2989
    %v4250 = vpack.c.b16 %v3004, %v2990
    %v4251 = vpack.c.b16 %v3005, %v2991
    %v4252 = vpack.c.b16 %v3006, %v2992
    %v4253 = vpack.c.b16 %v3007, %v2993
    %v4254 = vpack.c.b16 %v3022, %v3008
    %v4255 = vpack.c.b16 %v3023, %v3009
    %v4256 = vpack.c.b16 %v3024, %v3010
    %v4257 = vpack.c.b16 %v3025, %v3011
    %v4258 = vpack.c.b16 %v3026, %v3012
    %v4259 = vpack.c.b16 %v3027, %v3013
    %v4260 = vpack.c.b16 %v3028, %v3014
    %v4261 = vpack.c.b16 %v3029, %v3015
    %v4262 = vpack.c.b16 %v3030, %v3016
    %v4263 = vpack.c.b16 %v3031, %v3017
    %v4264 = vpack.c.b16 %v3032, %v3018
    %v4265 = vpack.c.b16 %v3033, %v3019
    %v4266 = vpack.c.b16 %v3034, %v3020
    %v4267 = vpack.c.b16 %v3035, %v3021
    %v4268 = vpack.c.b16 %v3050, %v3036
    %v4269 = vpack.c.b16 %v3051, %v3037
    %v4270 = vpack.c.b16 %v3052, %v3038
    %v4271 = vpack.c.b16 %v3053, %v3039
    %v4272 = vpack.c.b16 %v3054, %v3040
    %v4273 = vpack.c.b16 %v3055, %v3041
    %v4274 = vpack.c.b16 %v3056, %v3042
    %v4275 = vpack.c.b16 %v3057, %v3043
    %v4276 = vpack.c.b16 %v3058, %v3044
    %v4277 = vpack.c.b16 %v3059, %v3045
    %v4278 = vpack.c.b16 %v3060, %v3046
    %v4279 = vpack.c.b16 %v3061, %v3047
    %v4280 = vpack.c.b16 %v3062, %v3048
    %v4281 = vpack.c.b16 %v3063, %v3049
    %v4282 = vpack.c.b16 %v3078, %v3064
    %v4283 = vpack.c.b16 %v3079, %v3065
    %v4284 = vpack.c.b16 %v3080, %v3066
    %v4285 = vpack.c.b16 %v3081, %v3067
    %v4286 = vpack.c.b16 %v3082, %v3068
    %v4287 = vpack.c.b16 %v3083, %v3069
    %v4288 = vpack.c.b16 %v3084, %v3070
    %v4289 = vpack.c.b16 %v3085, %v3071
    %v4290 = vpack.c.b16 %v3086, %v3072
    %v4291 = vpack.c.b16 %v3087, %v3073
    %v4292 = vpack.c.b16 %v3088, %v3074
    %v4293 = vpack.c.b16 %v3089, %v3075
    %v4294 = vpack.c.b16 %v3090, %v3076
    %v4295 = vpack.c.b16 %v3091, %v3077
    %v4296 = vpack.c.b16 %v3106, %v3092
    %v4297 = vpack.c.b16 %v3107, %v3093
    %v4298 = vpack.c.b16 %v3108, %v3094
    %v4299 = vpack.c.b16 %v3109, %v3095
    %v4300 = vpack.c.b16 %v3110, %v3096
    %v4301 = vpack.c.b16 %v3111, %v3097
    %v4302 = vpack.c.b16 %v3112, %v3098
    %v4303 = vpack.c.b16 %v3113, %v3099
    %v4304 = vpack.c.b16 %v3114, %v3100
    %v4305 = vpack.c.b16 %v3115, %v3101
    %v4306 = vpack.c.b16 %v3116, %v3102
    %v4307 = vpack.c.b16 %v3117, %v3103
    %v4308 = vpack.c.b16 %v3118, %v3104
    %v4309 = vpack.c.b16 %v3119, %v3105
    %v4310 = vpack.c.b16 %v3134, %v3120
    %v4311 = vpack.c.b16 %v3135, %v3121
    %v4312 = vpack.c.b16 %v3136, %v3122
    %v4313 = vpack.c.b16 %v3137, %v3123
    %v4314 = vpack.c.b16 %v3138, %v3124
    %v4315 = vpack.c.b16 %v3139, %v3125
    %v4316 = vpack.c.b16 %v3140, %v3126
    %v4317 = vpack.c.b16 %v3141, %v3127
    %v4318 = vpack.c.b16 %v3142, %v3128
    %v4319 = vpack.c.b16 %v3143, %v3129
    %v4320 = vpack.c.b16 %v3144, %v3130
    %v4321 = vpack.c.b16 %v3145, %v3131
    %v4322 = vpack.c.b16 %v3146, %v3132
    %v4323 = vpack.c.b16 %v3147, %v3133
    %v4324 = vpack.c.b16 %v3162, %v3148
    %v4325 = vpack.c.b16 %v3163, %v3149
    %v4326 = vpack.c.b16 %v3164, %v3150
    %v4327 = vpack.c.b16 %v3165, %v3151
    %v4328 = vpack.c.b16 %v3166, %v3152
    %v4329 = vpack.c.b16 %v3167, %v3153
    %v4330 = vpack.c.b16 %v3168, %v3154
    %v4331 = vpack.c.b16 %v3169, %v3155
    %v4332 = vpack.c.b16 %v3170, %v3156
    %v4333 = vpack.c.b16 %v3171, %v3157
    %v4334 = vpack.c.b16 %v3172, %v3158
    %v4335 = vpack.c.b16 %v3173, %v3159
    %v4336 = vpack.c.b16 %v3174, %v3160
    %v4337 = vpack.c.b16 %v3175, %v3161
    %v4338 = vpack.c.b16 %v3190, %v3176
    %v4339 = vpack.c.b16 %v3191, %v3177
    %v4340 = vpack.c.b16 %v3192, %v3178
    %v4341 = vpack.c.b16 %v3193, %v3179
    %v4342 = vpack.c.b16 %v3194, %v3180
    %v4343 = vpack.c.b16 %v3195, %v3181
    %v4344 = vpack.c.b16 %v3196, %v3182
    %v4345 = vpack.c.b16 %v3197, %v3183
    %v4346 = vpack.c.b16 %v3198, %v3184
    %v4347 = vpack.c.b16 %v3199, %v3185
    %v4348 = vpack.c.b16 %v3200, %v3186
    %v4349 = vpack.c.b16 %v3201, %v3187
    %v4350 = vpack.c.b16 %v3202, %v3188
    %v4351 = vpack.c.b16 %v3203, %v3189
    %v4352 = vpack.c.b16 %v3218, %v3204
    %v4353 = vpack.c.b16 %v3219, %v3205
    %v4354 = vpack.c.b16 %v3220, %v3206
    %v4355 = vpack.c.b16 %v3221, %v3207
    %v4356 = vpack.c.b16 %v3222, %v3208
    %v4357 = vpack.c.b16 %v3223, %v3209
    %v4358 = vpack.c.b16 %v3224, %v3210
    %v4359 = vpack.c.b16 %v3225, %v3211
    %v4360 = vpack.c.b16 %v3226, %v3212
    %v4361 = vpack.c.b16 %v3227, %v3213
    %v4362 = vpack.c.b16 %v3228, %v3214
    %v4363 = vpack.c.b16 %v3229, %v3215
    %v4364 = vpack.c.b16 %v3230, %v3216
    %v4365 = vpack.c.b16 %v3231, %v3217
    %v4366 = vpack.c.b16 %v3246, %v3232
    %v4367 = vpack.c.b16 %v3247, %v3233
    %v4368 = vpack.c.b16 %v3248, %v3234
    %v4369 = vpack.c.b16 %v3249, %v3235
    %v4370 = vpack.c.b16 %v3250, %v3236
    %v4371 = vpack.c.b16 %v3251, %v3237
    %v4372 = vpack.c.b16 %v3252, %v3238
    %v4373 = vpack.c.b16 %v3253, %v3239
    %v4374 = vpack.c.b16 %v3254, %v3240
    %v4375 = vpack.c.b16 %v3255, %v3241
    %v4376 = vpack.c.b16 %v3256, %v3242
    %v4377 = vpack.c.b16 %v3257, %v3243
    %v4378 = vpack.c.b16 %v3258, %v3244
    %v4379 = vpack.c.b16 %v3259, %v3245
    %v4380 = vpack.c.b16 %v3274, %v3260
    %v4381 = vpack.c.b16 %v3275, %v3261
    %v4382 = vpack.c.b16 %v3276, %v3262
    %v4383 = vpack.c.b16 %v3277, %v3263
    %v4384 = vpack.c.b16 %v3278, %v3264
    %v4385 = vpack.c.b16 %v3279, %v3265
    %v4386 = vpack.c.b16 %v3280, %v3266
    %v4387 = vpack.c.b16 %v3281, %v3267
    %v4388 = vpack.c.b16 %v3282, %v3268
    %v4389 = vpack.c.b16 %v3283, %v3269
    %v4390 = vpack.c.b16 %v3284, %v3270
    %v4391 = vpack.c.b16 %v3285, %v3271
    %v4392 = vpack.c.b16 %v3286, %v3272
    %v4393 = vpack.c.b16 %v3287, %v3273
    %v4394 = vpack.c.b16 %v3302, %v3288
    %v4395 = vpack.c.b16 %v3303, %v3289
    %v4396 = vpack.c.b16 %v3304, %v3290
    %v4397 = vpack.c.b16 %v3305, %v3291
    %v4398 = vpack.c.b16 %v3306, %v3292
    %v4399 = vpack.c.b16 %v3307, %v3293
    %v4400 = vpack.c.b16 %v3308, %v3294
    %v4401 = vpack.c.b16 %v3309, %v3295
    %v4402 = vpack.c.b16 %v3310, %v3296
    %v4403 = vpack.c.b16 %v3311, %v3297
    %v4404 = vpack.c.b16 %v3312, %v3298
    %v4405 = vpack.c.b16 %v3313, %v3299
    %v4406 = vpack.c.b16 %v3314, %v3300
    %v4407 = vpack.c.b16 %v3315, %v3301
    %v4408 = vpack.c.b16 %v3330, %v3316
    %v4409 = vpack.c.b16 %v3331, %v3317
    %v4410 = vpack.c.b16 %v3332, %v3318
    %v4411 = vpack.c.b16 %v3333, %v3319
    %v4412 = vpack.c.b16 %v3334, %v3320
    %v4413 = vpack.c.b16 %v3335, %v3321
    %v4414 = vpack.c.b16 %v3336, %v3322
    %v4415 = vpack.c.b16 %v3337, %v3323
    %v4416 = vpack.c.b16 %v3338, %v3324
    %v4417 = vpack.c.b16 %v3339, %v3325
    %v4418 = vpack.c.b16 %v3340, %v3326
    %v4419 = vpack.c.b16 %v3341, %v3327
    %v4420 = vpack.c.b16 %v3342, %v3328
    %v4421 = vpack.c.b16 %v3343, %v3329
    %v4422 = vpack.c.b16 %v3358, %v3344
    %v4423 = vpack.c.b16 %v3359, %v3345
    %v4424 = vpack.c.b16 %v3360, %v3346
    %v4425 = vpack.c.b16 %v3361, %v3347
    %v4426 = vpack.c.b16 %v3362, %v3348
    %v4427 = vpack.c.b16 %v3363, %v3349
    %v4428 = vpack.c.b16 %v3364, %v3350
    %v4429 = vpack.c.b16 %v3365, %v3351
    %v4430 = vpack.c.b16 %v3366, %v3352
    %v4431 = vpack.c.b16 %v3367, %v3353
    %v4432 = vpack.c.b16 %v3368, %v3354
    %v4433 = vpack.c.b16 %v3369, %v3355
    %v4434 = vpack.c.b16 %v3370, %v3356
    %v4435 = vpack.c.b16 %v3371, %v3357
    %v4436 = vpack.c.b16 %v3386, %v3372
    %v4437 = vpack.c.b16 %v3387, %v3373
    %v4438 = vpack.c.b16 %v3388, %v3374
    %v4439 = vpack.c.b16 %v3389, %v3375
    %v4440 = vpack.c.b16 %v3390, %v3376
    %v4441 = vpack.c.b16 %v3391, %v3377
    %v4442 = vpack.c.b16 %v3392, %v3378
    %v4443 = vpack.c.b16 %v3393, %v3379
    %v4444 = vpack.c.b16 %v3394, %v3380
    %v4445 = vpack.c.b16 %v3395, %v3381
    %v4446 = vpack.c.b16 %v3396, %v3382
    %v4447 = vpack.c.b16 %v3397, %v3383
    %v4448 = vpack.c.b16 %v3398, %v3384
    %v4449 = vpack.c.b16 %v3399, %v3385
    %v4450 = vpack.c.b16 %v3414, %v3400
    %v4451 = vpack.c.b16 %v3415, %v3401
    %v4452 = vpack.c.b16 %v3416, %v3402
    %v4453 = vpack.c.b16 %v3417, %v3403
    %v4454 = vpack.c.b16 %v3418, %v3404
    %v4455 = vpack.c.b16 %v3419, %v3405
    %v4456 = vpack.c.b16 %v3420, %v3406
    %v4457 = vpack.c.b16 %v3421, %v3407
    %v4458 = vpack.c.b16 %v3422, %v3408
    %v4459 = vpack.c.b16 %v3423, %v3409
    %v4460 = vpack.c.b16 %v3424, %v3410
    %v4461 = vpack.c.b16 %v3425, %v3411
    %v4462 = vpack.c.b16 %v3426, %v3412
    %v4463 = vpack.c.b16 %v3427, %v3413
    %v4464 = vpack.c.b16 %v3442, %v3428
    %v4465 = vpack.c.b16 %v3443, %v3429
    %v4466 = vpack.c.b16 %v3444, %v3430
    %v4467 = vpack.c.b16 %v3445, %v3431
    %v4468 = vpack.c.b16 %v3446, %v3432
    %v4469 = vpack.c.b16 %v3447, %v3433
    %v4470 = vpack.c.b16 %v3448, %v3434
    %v4471 = vpack.c.b16 %v3449, %v3435
    %v4472 = vpack.c.b16 %v3450, %v3436
    %v4473 = vpack.c.b16 %v3451, %v3437
    %v4474 = vpack.c.b16 %v3452, %v3438
    %v4475 = vpack.c.b16 %v3453, %v3439
    %v4476 = vpack.c.b16 %v3454, %v3440
    %v4477 = vpack.c.b16 %v3455, %v3441
    %v4478 = vpack.c.b16 %v3470, %v3456
    %v4479 = vpack.c.b16 %v3471, %v3457
    %v4480 = vpack.c.b16 %v3472, %v3458
    %v4481 = vpack.c.b16 %v3473, %v3459
    %v4482 = vpack.c.b16 %v3474, %v3460
    %v4483 = vpack.c.b16 %v3475, %v3461
    %v4484 = vpack.c.b16 %v3476, %v3462
    %v4485 = vpack.c.b16 %v3477, %v3463
    %v4486 = vpack.c.b16 %v3478, %v3464
    %v4487 = vpack.c.b16 %v3479, %v3465
    %v4488 = vpack.c.b16 %v3480, %v3466
    %v4489 = vpack.c.b16 %v3481, %v3467
    %v4490 = vpack.c.b16 %v3482, %v3468
    %v4491 = vpack.c.b16 %v3483, %v3469
    %v4492 = vpack.c.b16 %v3498, %v3484
    %v4493 = vpack.c.b16 %v3499, %v3485
    %v4494 = vpack.c.b16 %v3500, %v3486
    %v4495 = vpack.c.b16 %v3501, %v3487
    %v4496 = vpack.c.b16 %v3502, %v3488
    %v4497 = vpack.c.b16 %v3503, %v3489
    %v4498 = vpack.c.b16 %v3504, %v3490
    %v4499 = vpack.c.b16 %v3505, %v3491
    %v4500 = vpack.c.b16 %v3506, %v3492
    %v4501 = vpack.c.b16 %v3507, %v3493
    %v4502 = vpack.c.b16 %v3508, %v3494
    %v4503 = vpack.c.b16 %v3509, %v3495
    %v4504 = vpack.c.b16 %v3510, %v3496
    %v4505 = vpack.c.b16 %v3511, %v3497
    %v4506 = vpack.c.b16 %v3526, %v3512
    %v4507 = vpack.c.b16 %v3527, %v3513
    %v4508 = vpack.c.b16 %v3528, %v3514
    %v4509 = vpack.c.b16 %v3529, %v3515
    %v4510 = vpack.c.b16 %v3530, %v3516
    %v4511 = vpack.c.b16 %v3531, %v3517
    %v4512 = vpack.c.b16 %v3532, %v3518
    %v4513 = vpack.c.b16 %v3533, %v3519
    %v4514 = vpack.c.b16 %v3534, %v3520
    %v4515 = vpack.c.b16 %v3535, %v3521
    %v4516 = vpack.c.b16 %v3536, %v3522
    %v4517 = vpack.c.b16 %v3537, %v3523
    %v4518 = vpack.c.b16 %v3538, %v3524
    %v4519 = vpack.c.b16 %v3539, %v3525
    %v4520 = vpack.c.b16 %v3554, %v3540
    %v4521 = vpack.c.b16 %v3555, %v3541
    %v4522 = vpack.c.b16 %v3556, %v3542
    %v4523 = vpack.c.b16 %v3557, %v3543
    %v4524 = vpack.c.b16 %v3558, %v3544
    %v4525 = vpack.c.b16 %v3559, %v3545
    %v4526 = vpack.c.b16 %v3560, %v3546
    %v4527 = vpack.c.b16 %v3561, %v3547
    %v4528 = vpack.c.b16 %v3562, %v3548
    %v4529 = vpack.c.b16 %v3563, %v3549
    %v4530 = vpack.c.b16 %v3564, %v3550
    %v4531 = vpack.c.b16 %v3565, %v3551
    %v4532 = vpack.c.b16 %v3566, %v3552
    %v4533 = vpack.c.b16 %v3567, %v3553
    %v4534 = vpack.c.b16 %v3582, %v3568
    %v4535 = vpack.c.b16 %v3583, %v3569
    %v4536 = vpack.c.b16 %v3584, %v3570
    %v4537 = vpack.c.b16 %v3585, %v3571
    %v4538 = vpack.c.b16 %v3586, %v3572
    %v4539 = vpack.c.b16 %v3587, %v3573
    %v4540 = vpack.c.b16 %v3588, %v3574
    %v4541 = vpack.c.b16 %v3589, %v3575
    %v4542 = vpack.c.b16 %v3590, %v3576
    %v4543 = vpack.c.b16 %v3591, %v3577
    %v4544 = vpack.c.b16 %v3592, %v3578
    %v4545 = vpack.c.b16 %v3593, %v3579
    %v4546 = vpack.c.b16 %v3594, %v3580
    %v4547 = vpack.c.b16 %v3595, %v3581
    %v4548 = vpack.c.b16 %v3610, %v3596
    %v4549 = vpack.c.b16 %v3611, %v3597
    %v4550 = vpack.c.b16 %v3612, %v3598
    %v4551 = vpack.c.b16 %v3613, %v3599
    %v4552 = vpack.c.b16 %v3614, %v3600
    %v4553 = vpack.c.b16 %v3615, %v3601
    %v4554 = vpack.c.b16 %v3616, %v3602
    %v4555 = vpack.c.b16 %v3617, %v3603
    %v4556 = vpack.c.b16 %v3618, %v3604
    %v4557 = vpack.c.b16 %v3619, %v3605
    %v4558 = vpack.c.b16 %v3620, %v3606
    %v4559 = vpack.c.b16 %v3621, %v3607
    %v4560 = vpack.c.b16 %v3622, %v3608
    %v4561 = vpack.c.b16 %v3623, %v3609
    %v4562 = vpack.c.b16 %v3638, %v3624
    %v4563 = vpack.c.b16 %v3639, %v3625
    %v4564 = vpack.c.b16 %v3640, %v3626
    %v4565 = vpack.c.b16 %v3641, %v3627
    %v4566 = vpack.c.b16 %v3642, %v3628
    %v4567 = vpack.c.b16 %v3643, %v3629
    %v4568 = vpack.c.b16 %v3644, %v3630
    %v4569 = vpack.c.b16 %v3645, %v3631
    %v4570 = vpack.c.b16 %v3646, %v3632
    %v4571 = vpack.c.b16 %v3647, %v3633
    %v4572 = vpack.c.b16 %v3648, %v3634
    %v4573 = vpack.c.b16 %v3649, %v3635
    %v4574 = vpack.c.b16 %v3650, %v3636
    %v4575 = vpack.c.b16 %v3651, %v3637
    %v4576 = vpack.c.b16 %v3666, %v3652
    %v4577 = vpack.c.b16 %v3667, %v3653
    %v4578 = vpack.c.b16 %v3668, %v3654
    %v4579 = vpack.c.b16 %v3669, %v3655
    %v4580 = vpack.c.b16 %v3670, %v3656
    %v4581 = vpack.c.b16 %v3671, %v3657
    %v4582 = vpack.c.b16 %v3672, %v3658
    %v4583 = vpack.c.b16 %v3673, %v3659
    %v4584 = vpack.c.b16 %v3674, %v3660
    %v4585 = vpack.c.b16 %v3675, %v3661
    %v4586 = vpack.c.b16 %v3676, %v3662
    %v4587 = vpack.c.b16 %v3677, %v3663
    %v4588 = vpack.c.b16 %v3678, %v3664
    %v4589 = vpack.c.b16 %v3679, %v3665
    %v4590 = vpack.c.b16 %v3694, %v3680
    %v4591 = vpack.c.b16 %v3695, %v3681
    %v4592 = vpack.c.b16 %v3696, %v3682
    %v4593 = vpack.c.b16 %v3697, %v3683
    %v4594 = vpack.c.b16 %v3698, %v3684
    %v4595 = vpack.c.b16 %v3699, %v3685
    %v4596 = vpack.c.b16 %v3700, %v3686
    %v4597 = vpack.c.b16 %v3701, %v3687
    %v4598 = vpack.c.b16 %v3702, %v3688
    %v4599 = vpack.c.b16 %v3703, %v3689
    %v4600 = vpack.c.b16 %v3704, %v3690
    %v4601 = vpack.c.b16 %v3705, %v3691
    %v4602 = vpack.c.b16 %v3706, %v3692
    %v4603 = vpack.c.b16 %v3707, %v3693
    %5500 = vmatpush.bf16.msra.mxu0 %v3806
    %5501 = vmatpush.bf16.msra.mxu0 %v3792
    %5502 = vmatpush.bf16.msra.mxu0 %v3778
    %5503 = vmatpush.bf16.msra.mxu0 %v3764
    %5504 = vmatpush.bf16.msra.mxu0 %v3750
    %5505 = vmatpush.bf16.msra.mxu0 %v3736
    %5506 = vmatpush.bf16.msra.mxu0 %v3722
    %5507 = vmatpush.bf16.msra.mxu0 %v3708
    %5508 = vmatmul.bf16.gmra.mxu0 %v1004
    %v5509 = vpop.f32.mrf.mxu0
    %v5510 = vadd.f32 %v952, %v5509
    %v5511 = vpop.f32.mrf.mxu0
    %v5512 = vadd.f32 %v952, %v5511
    %5513 = vdwg.mxu0
    %5514 = vmatpush.bf16.msra.mxu0 %v3918
    %5515 = vmatpush.bf16.msra.mxu0 %v3904
    %5516 = vmatpush.bf16.msra.mxu0 %v3890
    %5517 = vmatpush.bf16.msra.mxu0 %v3876
    %5518 = vmatpush.bf16.msra.mxu0 %v3862
    %5519 = vmatpush.bf16.msra.mxu0 %v3848
    %5520 = vmatpush.bf16.msra.mxu0 %v3834
    %5521 = vmatpush.bf16.msra.mxu0 %v3820
    %5522 = vmatmul.bf16.gmra.mxu0 %v1005
    %v5523 = vpop.f32.mrf.mxu0
    %v5524 = vadd.f32 %v5510, %v5523
    %v5525 = vpop.f32.mrf.mxu0
    %v5526 = vadd.f32 %v5512, %v5525
    %5527 = vdwg.mxu0
    %5528 = vmatpush.bf16.msra.mxu0 %v4030
    %5529 = vmatpush.bf16.msra.mxu0 %v4016
    %5530 = vmatpush.bf16.msra.mxu0 %v4002
    %5531 = vmatpush.bf16.msra.mxu0 %v3988
    %5532 = vmatpush.bf16.msra.mxu0 %v3974
    %5533 = vmatpush.bf16.msra.mxu0 %v3960
    %5534 = vmatpush.bf16.msra.mxu0 %v3946
    %5535 = vmatpush.bf16.msra.mxu0 %v3932
    %5536 = vmatmul.bf16.gmra.mxu0 %v1006
    %v5537 = vpop.f32.mrf.mxu0
    %v5538 = vadd.f32 %v5524, %v5537
    %v5539 = vpop.f32.mrf.mxu0
    %v5540 = vadd.f32 %v5526, %v5539
    %5541 = vdwg.mxu0
    %5542 = vmatpush.bf16.msra.mxu0 %v4142
    %5543 = vmatpush.bf16.msra.mxu0 %v4128
    %5544 = vmatpush.bf16.msra.mxu0 %v4114
    %5545 = vmatpush.bf16.msra.mxu0 %v4100
    %5546 = vmatpush.bf16.msra.mxu0 %v4086
    %5547 = vmatpush.bf16.msra.mxu0 %v4072
    %5548 = vmatpush.bf16.msra.mxu0 %v4058
    %5549 = vmatpush.bf16.msra.mxu0 %v4044
    %5550 = vmatmul.bf16.gmra.mxu0 %v1007
    %v5551 = vpop.f32.mrf.mxu0
    %v5552 = vadd.f32 %v5538, %v5551
    %v5553 = vpop.f32.mrf.mxu0
    %v5554 = vadd.f32 %v5540, %v5553
    %5555 = vdwg.mxu0
    %5556 = vmatpush.bf16.msra.mxu0 %v4254
    %5557 = vmatpush.bf16.msra.mxu0 %v4240
    %5558 = vmatpush.bf16.msra.mxu0 %v4226
    %5559 = vmatpush.bf16.msra.mxu0 %v4212
    %5560 = vmatpush.bf16.msra.mxu0 %v4198
    %5561 = vmatpush.bf16.msra.mxu0 %v4184
    %5562 = vmatpush.bf16.msra.mxu0 %v4170
    %5563 = vmatpush.bf16.msra.mxu0 %v4156
    %5564 = vmatmul.bf16.gmra.mxu0 %v1008
    %v5565 = vpop.f32.mrf.mxu0
    %v5566 = vadd.f32 %v5552, %v5565
    %v5567 = vpop.f32.mrf.mxu0
    %v5568 = vadd.f32 %v5554, %v5567
    %5569 = vdwg.mxu0
    %5570 = vmatpush.bf16.msra.mxu0 %v4366
    %5571 = vmatpush.bf16.msra.mxu0 %v4352
    %5572 = vmatpush.bf16.msra.mxu0 %v4338
    %5573 = vmatpush.bf16.msra.mxu0 %v4324
    %5574 = vmatpush.bf16.msra.mxu0 %v4310
    %5575 = vmatpush.bf16.msra.mxu0 %v4296
    %5576 = vmatpush.bf16.msra.mxu0 %v4282
    %5577 = vmatpush.bf16.msra.mxu0 %v4268
    %5578 = vmatmul.bf16.gmra.mxu0 %v1009
    %v5579 = vpop.f32.mrf.mxu0
    %v5580 = vadd.f32 %v5566, %v5579
    %v5581 = vpop.f32.mrf.mxu0
    %v5582 = vadd.f32 %v5568, %v5581
    %5583 = vdwg.mxu0
    %5584 = vmatpush.bf16.msra.mxu0 %v4478
    %5585 = vmatpush.bf16.msra.mxu0 %v4464
    %5586 = vmatpush.bf16.msra.mxu0 %v4450
    %5587 = vmatpush.bf16.msra.mxu0 %v4436
    %5588 = vmatpush.bf16.msra.mxu0 %v4422
    %5589 = vmatpush.bf16.msra.mxu0 %v4408
    %5590 = vmatpush.bf16.msra.mxu0 %v4394
    %5591 = vmatpush.bf16.msra.mxu0 %v4380
    %5592 = vmatmul.bf16.gmra.mxu0 %v1010
    %v5593 = vpop.f32.mrf.mxu0
    %v5594 = vadd.f32 %v5580, %v5593
    %v5595 = vpop.f32.mrf.mxu0
    %v5596 = vadd.f32 %v5582, %v5595
    %5597 = vdwg.mxu0
    %5598 = vmatpush.bf16.msra.mxu0 %v4590
    %5599 = vmatpush.bf16.msra.mxu0 %v4576
    %5600 = vmatpush.bf16.msra.mxu0 %v4562
    %5601 = vmatpush.bf16.msra.mxu0 %v4548
    %5602 = vmatpush.bf16.msra.mxu0 %v4534
    %5603 = vmatpush.bf16.msra.mxu0 %v4520
    %5604 = vmatpush.bf16.msra.mxu0 %v4506
    %5605 = vmatpush.bf16.msra.mxu0 %v4492
    %5606 = vmatmul.bf16.gmra.mxu0 %v1011
    %v5607 = vpop.f32.mrf.mxu0
    %v5608 = vadd.f32 %v5594, %v5607
    %v5609 = vpop.f32.mrf.mxu0
    %v5610 = vadd.f32 %v5596, %v5609
    %5611 = vdwg.mxu0
    %5612 = vmatpush.bf16.msra.mxu0 %v3807
    %5613 = vmatpush.bf16.msra.mxu0 %v3793
    %5614 = vmatpush.bf16.msra.mxu0 %v3779
    %5615 = vmatpush.bf16.msra.mxu0 %v3765
    %5616 = vmatpush.bf16.msra.mxu0 %v3751
    %5617 = vmatpush.bf16.msra.mxu0 %v3737
    %5618 = vmatpush.bf16.msra.mxu0 %v3723
    %5619 = vmatpush.bf16.msra.mxu0 %v3709
    %5620 = vmatmul.bf16.gmra.mxu0 %v1004
    %v5621 = vpop.f32.mrf.mxu0
    %v5622 = vadd.f32 %v953, %v5621
    %v5623 = vpop.f32.mrf.mxu0
    %v5624 = vadd.f32 %v953, %v5623
    %5625 = vdwg.mxu0
    %5626 = vmatpush.bf16.msra.mxu0 %v3919
    %5627 = vmatpush.bf16.msra.mxu0 %v3905
    %5628 = vmatpush.bf16.msra.mxu0 %v3891
    %5629 = vmatpush.bf16.msra.mxu0 %v3877
    %5630 = vmatpush.bf16.msra.mxu0 %v3863
    %5631 = vmatpush.bf16.msra.mxu0 %v3849
    %5632 = vmatpush.bf16.msra.mxu0 %v3835
    %5633 = vmatpush.bf16.msra.mxu0 %v3821
    %5634 = vmatmul.bf16.gmra.mxu0 %v1005
    %v5635 = vpop.f32.mrf.mxu0
    %v5636 = vadd.f32 %v5622, %v5635
    %v5637 = vpop.f32.mrf.mxu0
    %v5638 = vadd.f32 %v5624, %v5637
    %5639 = vdwg.mxu0
    %5640 = vmatpush.bf16.msra.mxu0 %v4031
    %5641 = vmatpush.bf16.msra.mxu0 %v4017
    %5642 = vmatpush.bf16.msra.mxu0 %v4003
    %5643 = vmatpush.bf16.msra.mxu0 %v3989
    %5644 = vmatpush.bf16.msra.mxu0 %v3975
    %5645 = vmatpush.bf16.msra.mxu0 %v3961
    %5646 = vmatpush.bf16.msra.mxu0 %v3947
    %5647 = vmatpush.bf16.msra.mxu0 %v3933
    %5648 = vmatmul.bf16.gmra.mxu0 %v1006
    %v5649 = vpop.f32.mrf.mxu0
    %v5650 = vadd.f32 %v5636, %v5649
    %v5651 = vpop.f32.mrf.mxu0
    %v5652 = vadd.f32 %v5638, %v5651
    %5653 = vdwg.mxu0
    %5654 = vmatpush.bf16.msra.mxu0 %v4143
    %5655 = vmatpush.bf16.msra.mxu0 %v4129
    %5656 = vmatpush.bf16.msra.mxu0 %v4115
    %5657 = vmatpush.bf16.msra.mxu0 %v4101
    %5658 = vmatpush.bf16.msra.mxu0 %v4087
    %5659 = vmatpush.bf16.msra.mxu0 %v4073
    %5660 = vmatpush.bf16.msra.mxu0 %v4059
    %5661 = vmatpush.bf16.msra.mxu0 %v4045
    %5662 = vmatmul.bf16.gmra.mxu0 %v1007
    %v5663 = vpop.f32.mrf.mxu0
    %v5664 = vadd.f32 %v5650, %v5663
    %v5665 = vpop.f32.mrf.mxu0
    %v5666 = vadd.f32 %v5652, %v5665
    %5667 = vdwg.mxu0
    %5668 = vmatpush.bf16.msra.mxu0 %v4255
    %5669 = vmatpush.bf16.msra.mxu0 %v4241
    %5670 = vmatpush.bf16.msra.mxu0 %v4227
    %5671 = vmatpush.bf16.msra.mxu0 %v4213
    %5672 = vmatpush.bf16.msra.mxu0 %v4199
    %5673 = vmatpush.bf16.msra.mxu0 %v4185
    %5674 = vmatpush.bf16.msra.mxu0 %v4171
    %5675 = vmatpush.bf16.msra.mxu0 %v4157
    %5676 = vmatmul.bf16.gmra.mxu0 %v1008
    %v5677 = vpop.f32.mrf.mxu0
    %v5678 = vadd.f32 %v5664, %v5677
    %v5679 = vpop.f32.mrf.mxu0
    %v5680 = vadd.f32 %v5666, %v5679
    %5681 = vdwg.mxu0
    %5682 = vmatpush.bf16.msra.mxu0 %v4367
    %5683 = vmatpush.bf16.msra.mxu0 %v4353
    %5684 = vmatpush.bf16.msra.mxu0 %v4339
    %5685 = vmatpush.bf16.msra.mxu0 %v4325
    %5686 = vmatpush.bf16.msra.mxu0 %v4311
    %5687 = vmatpush.bf16.msra.mxu0 %v4297
    %5688 = vmatpush.bf16.msra.mxu0 %v4283
    %5689 = vmatpush.bf16.msra.mxu0 %v4269
    %5690 = vmatmul.bf16.gmra.mxu0 %v1009
    %v5691 = vpop.f32.mrf.mxu0
    %v5692 = vadd.f32 %v5678, %v5691
    %v5693 = vpop.f32.mrf.mxu0
    %v5694 = vadd.f32 %v5680, %v5693
    %5695 = vdwg.mxu0
    %5696 = vmatpush.bf16.msra.mxu0 %v4479
    %5697 = vmatpush.bf16.msra.mxu0 %v4465
    %5698 = vmatpush.bf16.msra.mxu0 %v4451
    %5699 = vmatpush.bf16.msra.mxu0 %v4437
    %5700 = vmatpush.bf16.msra.mxu0 %v4423
    %5701 = vmatpush.bf16.msra.mxu0 %v4409
    %5702 = vmatpush.bf16.msra.mxu0 %v4395
    %5703 = vmatpush.bf16.msra.mxu0 %v4381
    %5704 = vmatmul.bf16.gmra.mxu0 %v1010
    %v5705 = vpop.f32.mrf.mxu0
    %v5706 = vadd.f32 %v5692, %v5705
    %v5707 = vpop.f32.mrf.mxu0
    %v5708 = vadd.f32 %v5694, %v5707
    %5709 = vdwg.mxu0
    %5710 = vmatpush.bf16.msra.mxu0 %v4591
    %5711 = vmatpush.bf16.msra.mxu0 %v4577
    %5712 = vmatpush.bf16.msra.mxu0 %v4563
    %5713 = vmatpush.bf16.msra.mxu0 %v4549
    %5714 = vmatpush.bf16.msra.mxu0 %v4535
    %5715 = vmatpush.bf16.msra.mxu0 %v4521
    %5716 = vmatpush.bf16.msra.mxu0 %v4507
    %5717 = vmatpush.bf16.msra.mxu0 %v4493
    %5718 = vmatmul.bf16.gmra.mxu0 %v1011
    %v5719 = vpop.f32.mrf.mxu0
    %v5720 = vadd.f32 %v5706, %v5719
    %v5721 = vpop.f32.mrf.mxu0
    %v5722 = vadd.f32 %v5708, %v5721
    %5723 = vdwg.mxu0
    %5724 = vmatpush.bf16.msra.mxu0 %v3808
    %5725 = vmatpush.bf16.msra.mxu0 %v3794
    %5726 = vmatpush.bf16.msra.mxu0 %v3780
    %5727 = vmatpush.bf16.msra.mxu0 %v3766
    %5728 = vmatpush.bf16.msra.mxu0 %v3752
    %5729 = vmatpush.bf16.msra.mxu0 %v3738
    %5730 = vmatpush.bf16.msra.mxu0 %v3724
    %5731 = vmatpush.bf16.msra.mxu0 %v3710
    %5732 = vmatmul.bf16.gmra.mxu0 %v1004
    %v5733 = vpop.f32.mrf.mxu0
    %v5734 = vadd.f32 %v954, %v5733
    %v5735 = vpop.f32.mrf.mxu0
    %v5736 = vadd.f32 %v954, %v5735
    %5737 = vdwg.mxu0
    %5738 = vmatpush.bf16.msra.mxu0 %v3920
    %5739 = vmatpush.bf16.msra.mxu0 %v3906
    %5740 = vmatpush.bf16.msra.mxu0 %v3892
    %5741 = vmatpush.bf16.msra.mxu0 %v3878
    %5742 = vmatpush.bf16.msra.mxu0 %v3864
    %5743 = vmatpush.bf16.msra.mxu0 %v3850
    %5744 = vmatpush.bf16.msra.mxu0 %v3836
    %5745 = vmatpush.bf16.msra.mxu0 %v3822
    %5746 = vmatmul.bf16.gmra.mxu0 %v1005
    %v5747 = vpop.f32.mrf.mxu0
    %v5748 = vadd.f32 %v5734, %v5747
    %v5749 = vpop.f32.mrf.mxu0
    %v5750 = vadd.f32 %v5736, %v5749
    %5751 = vdwg.mxu0
    %5752 = vmatpush.bf16.msra.mxu0 %v4032
    %5753 = vmatpush.bf16.msra.mxu0 %v4018
    %5754 = vmatpush.bf16.msra.mxu0 %v4004
    %5755 = vmatpush.bf16.msra.mxu0 %v3990
    %5756 = vmatpush.bf16.msra.mxu0 %v3976
    %5757 = vmatpush.bf16.msra.mxu0 %v3962
    %5758 = vmatpush.bf16.msra.mxu0 %v3948
    %5759 = vmatpush.bf16.msra.mxu0 %v3934
    %5760 = vmatmul.bf16.gmra.mxu0 %v1006
    %v5761 = vpop.f32.mrf.mxu0
    %v5762 = vadd.f32 %v5748, %v5761
    %v5763 = vpop.f32.mrf.mxu0
    %v5764 = vadd.f32 %v5750, %v5763
    %5765 = vdwg.mxu0
    %5766 = vmatpush.bf16.msra.mxu0 %v4144
    %5767 = vmatpush.bf16.msra.mxu0 %v4130
    %5768 = vmatpush.bf16.msra.mxu0 %v4116
    %5769 = vmatpush.bf16.msra.mxu0 %v4102
    %5770 = vmatpush.bf16.msra.mxu0 %v4088
    %5771 = vmatpush.bf16.msra.mxu0 %v4074
    %5772 = vmatpush.bf16.msra.mxu0 %v4060
    %5773 = vmatpush.bf16.msra.mxu0 %v4046
    %5774 = vmatmul.bf16.gmra.mxu0 %v1007
    %v5775 = vpop.f32.mrf.mxu0
    %v5776 = vadd.f32 %v5762, %v5775
    %v5777 = vpop.f32.mrf.mxu0
    %v5778 = vadd.f32 %v5764, %v5777
    %5779 = vdwg.mxu0
    %5780 = vmatpush.bf16.msra.mxu0 %v4256
    %5781 = vmatpush.bf16.msra.mxu0 %v4242
    %5782 = vmatpush.bf16.msra.mxu0 %v4228
    %5783 = vmatpush.bf16.msra.mxu0 %v4214
    %5784 = vmatpush.bf16.msra.mxu0 %v4200
    %5785 = vmatpush.bf16.msra.mxu0 %v4186
    %5786 = vmatpush.bf16.msra.mxu0 %v4172
    %5787 = vmatpush.bf16.msra.mxu0 %v4158
    %5788 = vmatmul.bf16.gmra.mxu0 %v1008
    %v5789 = vpop.f32.mrf.mxu0
    %v5790 = vadd.f32 %v5776, %v5789
    %v5791 = vpop.f32.mrf.mxu0
    %v5792 = vadd.f32 %v5778, %v5791
    %5793 = vdwg.mxu0
    %5794 = vmatpush.bf16.msra.mxu0 %v4368
    %5795 = vmatpush.bf16.msra.mxu0 %v4354
    %5796 = vmatpush.bf16.msra.mxu0 %v4340
    %5797 = vmatpush.bf16.msra.mxu0 %v4326
    %5798 = vmatpush.bf16.msra.mxu0 %v4312
    %5799 = vmatpush.bf16.msra.mxu0 %v4298
    %5800 = vmatpush.bf16.msra.mxu0 %v4284
    %5801 = vmatpush.bf16.msra.mxu0 %v4270
    %5802 = vmatmul.bf16.gmra.mxu0 %v1009
    %v5803 = vpop.f32.mrf.mxu0
    %v5804 = vadd.f32 %v5790, %v5803
    %v5805 = vpop.f32.mrf.mxu0
    %v5806 = vadd.f32 %v5792, %v5805
    %5807 = vdwg.mxu0
    %5808 = vmatpush.bf16.msra.mxu0 %v4480
    %5809 = vmatpush.bf16.msra.mxu0 %v4466
    %5810 = vmatpush.bf16.msra.mxu0 %v4452
    %5811 = vmatpush.bf16.msra.mxu0 %v4438
    %5812 = vmatpush.bf16.msra.mxu0 %v4424
    %5813 = vmatpush.bf16.msra.mxu0 %v4410
    %5814 = vmatpush.bf16.msra.mxu0 %v4396
    %5815 = vmatpush.bf16.msra.mxu0 %v4382
    %5816 = vmatmul.bf16.gmra.mxu0 %v1010
    %v5817 = vpop.f32.mrf.mxu0
    %v5818 = vadd.f32 %v5804, %v5817
    %v5819 = vpop.f32.mrf.mxu0
    %v5820 = vadd.f32 %v5806, %v5819
    %5821 = vdwg.mxu0
    %5822 = vmatpush.bf16.msra.mxu0 %v4592
    %5823 = vmatpush.bf16.msra.mxu0 %v4578
    %5824 = vmatpush.bf16.msra.mxu0 %v4564
    %5825 = vmatpush.bf16.msra.mxu0 %v4550
    %5826 = vmatpush.bf16.msra.mxu0 %v4536
    %5827 = vmatpush.bf16.msra.mxu0 %v4522
    %5828 = vmatpush.bf16.msra.mxu0 %v4508
    %5829 = vmatpush.bf16.msra.mxu0 %v4494
    %5830 = vmatmul.bf16.gmra.mxu0 %v1011
    %v5831 = vpop.f32.mrf.mxu0
    %v5832 = vadd.f32 %v5818, %v5831
    %v5833 = vpop.f32.mrf.mxu0
    %v5834 = vadd.f32 %v5820, %v5833
    %5835 = vdwg.mxu0
    %5836 = vmatpush.bf16.msra.mxu0 %v3809
    %5837 = vmatpush.bf16.msra.mxu0 %v3795
    %5838 = vmatpush.bf16.msra.mxu0 %v3781
    %5839 = vmatpush.bf16.msra.mxu0 %v3767
    %5840 = vmatpush.bf16.msra.mxu0 %v3753
    %5841 = vmatpush.bf16.msra.mxu0 %v3739
    %5842 = vmatpush.bf16.msra.mxu0 %v3725
    %5843 = vmatpush.bf16.msra.mxu0 %v3711
    %5844 = vmatmul.bf16.gmra.mxu0 %v1004
    %v5845 = vpop.f32.mrf.mxu0
    %v5846 = vadd.f32 %v955, %v5845
    %v5847 = vpop.f32.mrf.mxu0
    %v5848 = vadd.f32 %v955, %v5847
    %5849 = vdwg.mxu0
    %5850 = vmatpush.bf16.msra.mxu0 %v3921
    %5851 = vmatpush.bf16.msra.mxu0 %v3907
    %5852 = vmatpush.bf16.msra.mxu0 %v3893
    %5853 = vmatpush.bf16.msra.mxu0 %v3879
    %5854 = vmatpush.bf16.msra.mxu0 %v3865
    %5855 = vmatpush.bf16.msra.mxu0 %v3851
    %5856 = vmatpush.bf16.msra.mxu0 %v3837
    %5857 = vmatpush.bf16.msra.mxu0 %v3823
    %5858 = vmatmul.bf16.gmra.mxu0 %v1005
    %v5859 = vpop.f32.mrf.mxu0
    %v5860 = vadd.f32 %v5846, %v5859
    %v5861 = vpop.f32.mrf.mxu0
    %v5862 = vadd.f32 %v5848, %v5861
    %5863 = vdwg.mxu0
    %5864 = vmatpush.bf16.msra.mxu0 %v4033
    %5865 = vmatpush.bf16.msra.mxu0 %v4019
    %5866 = vmatpush.bf16.msra.mxu0 %v4005
    %5867 = vmatpush.bf16.msra.mxu0 %v3991
    %5868 = vmatpush.bf16.msra.mxu0 %v3977
    %5869 = vmatpush.bf16.msra.mxu0 %v3963
    %5870 = vmatpush.bf16.msra.mxu0 %v3949
    %5871 = vmatpush.bf16.msra.mxu0 %v3935
    %5872 = vmatmul.bf16.gmra.mxu0 %v1006
    %v5873 = vpop.f32.mrf.mxu0
    %v5874 = vadd.f32 %v5860, %v5873
    %v5875 = vpop.f32.mrf.mxu0
    %v5876 = vadd.f32 %v5862, %v5875
    %5877 = vdwg.mxu0
    %5878 = vmatpush.bf16.msra.mxu0 %v4145
    %5879 = vmatpush.bf16.msra.mxu0 %v4131
    %5880 = vmatpush.bf16.msra.mxu0 %v4117
    %5881 = vmatpush.bf16.msra.mxu0 %v4103
    %5882 = vmatpush.bf16.msra.mxu0 %v4089
    %5883 = vmatpush.bf16.msra.mxu0 %v4075
    %5884 = vmatpush.bf16.msra.mxu0 %v4061
    %5885 = vmatpush.bf16.msra.mxu0 %v4047
    %5886 = vmatmul.bf16.gmra.mxu0 %v1007
    %v5887 = vpop.f32.mrf.mxu0
    %v5888 = vadd.f32 %v5874, %v5887
    %v5889 = vpop.f32.mrf.mxu0
    %v5890 = vadd.f32 %v5876, %v5889
    %5891 = vdwg.mxu0
    %5892 = vmatpush.bf16.msra.mxu0 %v4257
    %5893 = vmatpush.bf16.msra.mxu0 %v4243
    %5894 = vmatpush.bf16.msra.mxu0 %v4229
    %5895 = vmatpush.bf16.msra.mxu0 %v4215
    %5896 = vmatpush.bf16.msra.mxu0 %v4201
    %5897 = vmatpush.bf16.msra.mxu0 %v4187
    %5898 = vmatpush.bf16.msra.mxu0 %v4173
    %5899 = vmatpush.bf16.msra.mxu0 %v4159
    %5900 = vmatmul.bf16.gmra.mxu0 %v1008
    %v5901 = vpop.f32.mrf.mxu0
    %v5902 = vadd.f32 %v5888, %v5901
    %v5903 = vpop.f32.mrf.mxu0
    %v5904 = vadd.f32 %v5890, %v5903
    %5905 = vdwg.mxu0
    %5906 = vmatpush.bf16.msra.mxu0 %v4369
    %5907 = vmatpush.bf16.msra.mxu0 %v4355
    %5908 = vmatpush.bf16.msra.mxu0 %v4341
    %5909 = vmatpush.bf16.msra.mxu0 %v4327
    %5910 = vmatpush.bf16.msra.mxu0 %v4313
    %5911 = vmatpush.bf16.msra.mxu0 %v4299
    %5912 = vmatpush.bf16.msra.mxu0 %v4285
    %5913 = vmatpush.bf16.msra.mxu0 %v4271
    %5914 = vmatmul.bf16.gmra.mxu0 %v1009
    %v5915 = vpop.f32.mrf.mxu0
    %v5916 = vadd.f32 %v5902, %v5915
    %v5917 = vpop.f32.mrf.mxu0
    %v5918 = vadd.f32 %v5904, %v5917
    %5919 = vdwg.mxu0
    %5920 = vmatpush.bf16.msra.mxu0 %v4481
    %5921 = vmatpush.bf16.msra.mxu0 %v4467
    %5922 = vmatpush.bf16.msra.mxu0 %v4453
    %5923 = vmatpush.bf16.msra.mxu0 %v4439
    %5924 = vmatpush.bf16.msra.mxu0 %v4425
    %5925 = vmatpush.bf16.msra.mxu0 %v4411
    %5926 = vmatpush.bf16.msra.mxu0 %v4397
    %5927 = vmatpush.bf16.msra.mxu0 %v4383
    %5928 = vmatmul.bf16.gmra.mxu0 %v1010
    %v5929 = vpop.f32.mrf.mxu0
    %v5930 = vadd.f32 %v5916, %v5929
    %v5931 = vpop.f32.mrf.mxu0
    %v5932 = vadd.f32 %v5918, %v5931
    %5933 = vdwg.mxu0
    %5934 = vmatpush.bf16.msra.mxu0 %v4593
    %5935 = vmatpush.bf16.msra.mxu0 %v4579
    %5936 = vmatpush.bf16.msra.mxu0 %v4565
    %5937 = vmatpush.bf16.msra.mxu0 %v4551
    %5938 = vmatpush.bf16.msra.mxu0 %v4537
    %5939 = vmatpush.bf16.msra.mxu0 %v4523
    %5940 = vmatpush.bf16.msra.mxu0 %v4509
    %5941 = vmatpush.bf16.msra.mxu0 %v4495
    %5942 = vmatmul.bf16.gmra.mxu0 %v1011
    %v5943 = vpop.f32.mrf.mxu0
    %v5944 = vadd.f32 %v5930, %v5943
    %v5945 = vpop.f32.mrf.mxu0
    %v5946 = vadd.f32 %v5932, %v5945
    %5947 = vdwg.mxu0
    %5948 = vmatpush.bf16.msra.mxu0 %v3810
    %5949 = vmatpush.bf16.msra.mxu0 %v3796
    %5950 = vmatpush.bf16.msra.mxu0 %v3782
    %5951 = vmatpush.bf16.msra.mxu0 %v3768
    %5952 = vmatpush.bf16.msra.mxu0 %v3754
    %5953 = vmatpush.bf16.msra.mxu0 %v3740
    %5954 = vmatpush.bf16.msra.mxu0 %v3726
    %5955 = vmatpush.bf16.msra.mxu0 %v3712
    %5956 = vmatmul.bf16.gmra.mxu0 %v1004
    %v5957 = vpop.f32.mrf.mxu0
    %v5958 = vadd.f32 %v956, %v5957
    %v5959 = vpop.f32.mrf.mxu0
    %v5960 = vadd.f32 %v956, %v5959
    %5961 = vdwg.mxu0
    %5962 = vmatpush.bf16.msra.mxu0 %v3922
    %5963 = vmatpush.bf16.msra.mxu0 %v3908
    %5964 = vmatpush.bf16.msra.mxu0 %v3894
    %5965 = vmatpush.bf16.msra.mxu0 %v3880
    %5966 = vmatpush.bf16.msra.mxu0 %v3866
    %5967 = vmatpush.bf16.msra.mxu0 %v3852
    %5968 = vmatpush.bf16.msra.mxu0 %v3838
    %5969 = vmatpush.bf16.msra.mxu0 %v3824
    %5970 = vmatmul.bf16.gmra.mxu0 %v1005
    %v5971 = vpop.f32.mrf.mxu0
    %v5972 = vadd.f32 %v5958, %v5971
    %v5973 = vpop.f32.mrf.mxu0
    %v5974 = vadd.f32 %v5960, %v5973
    %5975 = vdwg.mxu0
    %5976 = vmatpush.bf16.msra.mxu0 %v4034
    %5977 = vmatpush.bf16.msra.mxu0 %v4020
    %5978 = vmatpush.bf16.msra.mxu0 %v4006
    %5979 = vmatpush.bf16.msra.mxu0 %v3992
    %5980 = vmatpush.bf16.msra.mxu0 %v3978
    %5981 = vmatpush.bf16.msra.mxu0 %v3964
    %5982 = vmatpush.bf16.msra.mxu0 %v3950
    %5983 = vmatpush.bf16.msra.mxu0 %v3936
    %5984 = vmatmul.bf16.gmra.mxu0 %v1006
    %v5985 = vpop.f32.mrf.mxu0
    %v5986 = vadd.f32 %v5972, %v5985
    %v5987 = vpop.f32.mrf.mxu0
    %v5988 = vadd.f32 %v5974, %v5987
    %5989 = vdwg.mxu0
    %5990 = vmatpush.bf16.msra.mxu0 %v4146
    %5991 = vmatpush.bf16.msra.mxu0 %v4132
    %5992 = vmatpush.bf16.msra.mxu0 %v4118
    %5993 = vmatpush.bf16.msra.mxu0 %v4104
    %5994 = vmatpush.bf16.msra.mxu0 %v4090
    %5995 = vmatpush.bf16.msra.mxu0 %v4076
    %5996 = vmatpush.bf16.msra.mxu0 %v4062
    %5997 = vmatpush.bf16.msra.mxu0 %v4048
    %5998 = vmatmul.bf16.gmra.mxu0 %v1007
    %v5999 = vpop.f32.mrf.mxu0
    %v6000 = vadd.f32 %v5986, %v5999
    %v6001 = vpop.f32.mrf.mxu0
    %v6002 = vadd.f32 %v5988, %v6001
    %6003 = vdwg.mxu0
    %6004 = vmatpush.bf16.msra.mxu0 %v4258
    %6005 = vmatpush.bf16.msra.mxu0 %v4244
    %6006 = vmatpush.bf16.msra.mxu0 %v4230
    %6007 = vmatpush.bf16.msra.mxu0 %v4216
    %6008 = vmatpush.bf16.msra.mxu0 %v4202
    %6009 = vmatpush.bf16.msra.mxu0 %v4188
    %6010 = vmatpush.bf16.msra.mxu0 %v4174
    %6011 = vmatpush.bf16.msra.mxu0 %v4160
    %6012 = vmatmul.bf16.gmra.mxu0 %v1008
    %v6013 = vpop.f32.mrf.mxu0
    %v6014 = vadd.f32 %v6000, %v6013
    %v6015 = vpop.f32.mrf.mxu0
    %v6016 = vadd.f32 %v6002, %v6015
    %6017 = vdwg.mxu0
    %6018 = vmatpush.bf16.msra.mxu0 %v4370
    %6019 = vmatpush.bf16.msra.mxu0 %v4356
    %6020 = vmatpush.bf16.msra.mxu0 %v4342
    %6021 = vmatpush.bf16.msra.mxu0 %v4328
    %6022 = vmatpush.bf16.msra.mxu0 %v4314
    %6023 = vmatpush.bf16.msra.mxu0 %v4300
    %6024 = vmatpush.bf16.msra.mxu0 %v4286
    %6025 = vmatpush.bf16.msra.mxu0 %v4272
    %6026 = vmatmul.bf16.gmra.mxu0 %v1009
    %v6027 = vpop.f32.mrf.mxu0
    %v6028 = vadd.f32 %v6014, %v6027
    %v6029 = vpop.f32.mrf.mxu0
    %v6030 = vadd.f32 %v6016, %v6029
    %6031 = vdwg.mxu0
    %6032 = vmatpush.bf16.msra.mxu0 %v4482
    %6033 = vmatpush.bf16.msra.mxu0 %v4468
    %6034 = vmatpush.bf16.msra.mxu0 %v4454
    %6035 = vmatpush.bf16.msra.mxu0 %v4440
    %6036 = vmatpush.bf16.msra.mxu0 %v4426
    %6037 = vmatpush.bf16.msra.mxu0 %v4412
    %6038 = vmatpush.bf16.msra.mxu0 %v4398
    %6039 = vmatpush.bf16.msra.mxu0 %v4384
    %6040 = vmatmul.bf16.gmra.mxu0 %v1010
    %v6041 = vpop.f32.mrf.mxu0
    %v6042 = vadd.f32 %v6028, %v6041
    %v6043 = vpop.f32.mrf.mxu0
    %v6044 = vadd.f32 %v6030, %v6043
    %6045 = vdwg.mxu0
    %6046 = vmatpush.bf16.msra.mxu0 %v4594
    %6047 = vmatpush.bf16.msra.mxu0 %v4580
    %6048 = vmatpush.bf16.msra.mxu0 %v4566
    %6049 = vmatpush.bf16.msra.mxu0 %v4552
    %6050 = vmatpush.bf16.msra.mxu0 %v4538
    %6051 = vmatpush.bf16.msra.mxu0 %v4524
    %6052 = vmatpush.bf16.msra.mxu0 %v4510
    %6053 = vmatpush.bf16.msra.mxu0 %v4496
    %6054 = vmatmul.bf16.gmra.mxu0 %v1011
    %v6055 = vpop.f32.mrf.mxu0
    %v6056 = vadd.f32 %v6042, %v6055
    %v6057 = vpop.f32.mrf.mxu0
    %v6058 = vadd.f32 %v6044, %v6057
    %6059 = vdwg.mxu0
    %6060 = vmatpush.bf16.msra.mxu0 %v3811
    %6061 = vmatpush.bf16.msra.mxu0 %v3797
    %6062 = vmatpush.bf16.msra.mxu0 %v3783
    %6063 = vmatpush.bf16.msra.mxu0 %v3769
    %6064 = vmatpush.bf16.msra.mxu0 %v3755
    %6065 = vmatpush.bf16.msra.mxu0 %v3741
    %6066 = vmatpush.bf16.msra.mxu0 %v3727
    %6067 = vmatpush.bf16.msra.mxu0 %v3713
    %6068 = vmatmul.bf16.gmra.mxu0 %v1004
    %v6069 = vpop.f32.mrf.mxu0
    %v6070 = vadd.f32 %v957, %v6069
    %v6071 = vpop.f32.mrf.mxu0
    %v6072 = vadd.f32 %v957, %v6071
    %6073 = vdwg.mxu0
    %6074 = vmatpush.bf16.msra.mxu0 %v3923
    %6075 = vmatpush.bf16.msra.mxu0 %v3909
    %6076 = vmatpush.bf16.msra.mxu0 %v3895
    %6077 = vmatpush.bf16.msra.mxu0 %v3881
    %6078 = vmatpush.bf16.msra.mxu0 %v3867
    %6079 = vmatpush.bf16.msra.mxu0 %v3853
    %6080 = vmatpush.bf16.msra.mxu0 %v3839
    %6081 = vmatpush.bf16.msra.mxu0 %v3825
    %6082 = vmatmul.bf16.gmra.mxu0 %v1005
    %v6083 = vpop.f32.mrf.mxu0
    %v6084 = vadd.f32 %v6070, %v6083
    %v6085 = vpop.f32.mrf.mxu0
    %v6086 = vadd.f32 %v6072, %v6085
    %6087 = vdwg.mxu0
    %6088 = vmatpush.bf16.msra.mxu0 %v4035
    %6089 = vmatpush.bf16.msra.mxu0 %v4021
    %6090 = vmatpush.bf16.msra.mxu0 %v4007
    %6091 = vmatpush.bf16.msra.mxu0 %v3993
    %6092 = vmatpush.bf16.msra.mxu0 %v3979
    %6093 = vmatpush.bf16.msra.mxu0 %v3965
    %6094 = vmatpush.bf16.msra.mxu0 %v3951
    %6095 = vmatpush.bf16.msra.mxu0 %v3937
    %6096 = vmatmul.bf16.gmra.mxu0 %v1006
    %v6097 = vpop.f32.mrf.mxu0
    %v6098 = vadd.f32 %v6084, %v6097
    %v6099 = vpop.f32.mrf.mxu0
    %v6100 = vadd.f32 %v6086, %v6099
    %6101 = vdwg.mxu0
    %6102 = vmatpush.bf16.msra.mxu0 %v4147
    %6103 = vmatpush.bf16.msra.mxu0 %v4133
    %6104 = vmatpush.bf16.msra.mxu0 %v4119
    %6105 = vmatpush.bf16.msra.mxu0 %v4105
    %6106 = vmatpush.bf16.msra.mxu0 %v4091
    %6107 = vmatpush.bf16.msra.mxu0 %v4077
    %6108 = vmatpush.bf16.msra.mxu0 %v4063
    %6109 = vmatpush.bf16.msra.mxu0 %v4049
    %6110 = vmatmul.bf16.gmra.mxu0 %v1007
    %v6111 = vpop.f32.mrf.mxu0
    %v6112 = vadd.f32 %v6098, %v6111
    %v6113 = vpop.f32.mrf.mxu0
    %v6114 = vadd.f32 %v6100, %v6113
    %6115 = vdwg.mxu0
    %6116 = vmatpush.bf16.msra.mxu0 %v4259
    %6117 = vmatpush.bf16.msra.mxu0 %v4245
    %6118 = vmatpush.bf16.msra.mxu0 %v4231
    %6119 = vmatpush.bf16.msra.mxu0 %v4217
    %6120 = vmatpush.bf16.msra.mxu0 %v4203
    %6121 = vmatpush.bf16.msra.mxu0 %v4189
    %6122 = vmatpush.bf16.msra.mxu0 %v4175
    %6123 = vmatpush.bf16.msra.mxu0 %v4161
    %6124 = vmatmul.bf16.gmra.mxu0 %v1008
    %v6125 = vpop.f32.mrf.mxu0
    %v6126 = vadd.f32 %v6112, %v6125
    %v6127 = vpop.f32.mrf.mxu0
    %v6128 = vadd.f32 %v6114, %v6127
    %6129 = vdwg.mxu0
    %6130 = vmatpush.bf16.msra.mxu0 %v4371
    %6131 = vmatpush.bf16.msra.mxu0 %v4357
    %6132 = vmatpush.bf16.msra.mxu0 %v4343
    %6133 = vmatpush.bf16.msra.mxu0 %v4329
    %6134 = vmatpush.bf16.msra.mxu0 %v4315
    %6135 = vmatpush.bf16.msra.mxu0 %v4301
    %6136 = vmatpush.bf16.msra.mxu0 %v4287
    %6137 = vmatpush.bf16.msra.mxu0 %v4273
    %6138 = vmatmul.bf16.gmra.mxu0 %v1009
    %v6139 = vpop.f32.mrf.mxu0
    %v6140 = vadd.f32 %v6126, %v6139
    %v6141 = vpop.f32.mrf.mxu0
    %v6142 = vadd.f32 %v6128, %v6141
    %6143 = vdwg.mxu0
    %6144 = vmatpush.bf16.msra.mxu0 %v4483
    %6145 = vmatpush.bf16.msra.mxu0 %v4469
    %6146 = vmatpush.bf16.msra.mxu0 %v4455
    %6147 = vmatpush.bf16.msra.mxu0 %v4441
    %6148 = vmatpush.bf16.msra.mxu0 %v4427
    %6149 = vmatpush.bf16.msra.mxu0 %v4413
    %6150 = vmatpush.bf16.msra.mxu0 %v4399
    %6151 = vmatpush.bf16.msra.mxu0 %v4385
    %6152 = vmatmul.bf16.gmra.mxu0 %v1010
    %v6153 = vpop.f32.mrf.mxu0
    %v6154 = vadd.f32 %v6140, %v6153
    %v6155 = vpop.f32.mrf.mxu0
    %v6156 = vadd.f32 %v6142, %v6155
    %6157 = vdwg.mxu0
    %6158 = vmatpush.bf16.msra.mxu0 %v4595
    %6159 = vmatpush.bf16.msra.mxu0 %v4581
    %6160 = vmatpush.bf16.msra.mxu0 %v4567
    %6161 = vmatpush.bf16.msra.mxu0 %v4553
    %6162 = vmatpush.bf16.msra.mxu0 %v4539
    %6163 = vmatpush.bf16.msra.mxu0 %v4525
    %6164 = vmatpush.bf16.msra.mxu0 %v4511
    %6165 = vmatpush.bf16.msra.mxu0 %v4497
    %6166 = vmatmul.bf16.gmra.mxu0 %v1011
    %v6167 = vpop.f32.mrf.mxu0
    %v6168 = vadd.f32 %v6154, %v6167
    %v6169 = vpop.f32.mrf.mxu0
    %v6170 = vadd.f32 %v6156, %v6169
    %6171 = vdwg.mxu0
    %6172 = vmatpush.bf16.msra.mxu0 %v3812
    %6173 = vmatpush.bf16.msra.mxu0 %v3798
    %6174 = vmatpush.bf16.msra.mxu0 %v3784
    %6175 = vmatpush.bf16.msra.mxu0 %v3770
    %6176 = vmatpush.bf16.msra.mxu0 %v3756
    %6177 = vmatpush.bf16.msra.mxu0 %v3742
    %6178 = vmatpush.bf16.msra.mxu0 %v3728
    %6179 = vmatpush.bf16.msra.mxu0 %v3714
    %6180 = vmatmul.bf16.gmra.mxu0 %v1004
    %v6181 = vpop.f32.mrf.mxu0
    %v6182 = vadd.f32 %v958, %v6181
    %v6183 = vpop.f32.mrf.mxu0
    %v6184 = vadd.f32 %v958, %v6183
    %6185 = vdwg.mxu0
    %6186 = vmatpush.bf16.msra.mxu0 %v3924
    %6187 = vmatpush.bf16.msra.mxu0 %v3910
    %6188 = vmatpush.bf16.msra.mxu0 %v3896
    %6189 = vmatpush.bf16.msra.mxu0 %v3882
    %6190 = vmatpush.bf16.msra.mxu0 %v3868
    %6191 = vmatpush.bf16.msra.mxu0 %v3854
    %6192 = vmatpush.bf16.msra.mxu0 %v3840
    %6193 = vmatpush.bf16.msra.mxu0 %v3826
    %6194 = vmatmul.bf16.gmra.mxu0 %v1005
    %v6195 = vpop.f32.mrf.mxu0
    %v6196 = vadd.f32 %v6182, %v6195
    %v6197 = vpop.f32.mrf.mxu0
    %v6198 = vadd.f32 %v6184, %v6197
    %6199 = vdwg.mxu0
    %6200 = vmatpush.bf16.msra.mxu0 %v4036
    %6201 = vmatpush.bf16.msra.mxu0 %v4022
    %6202 = vmatpush.bf16.msra.mxu0 %v4008
    %6203 = vmatpush.bf16.msra.mxu0 %v3994
    %6204 = vmatpush.bf16.msra.mxu0 %v3980
    %6205 = vmatpush.bf16.msra.mxu0 %v3966
    %6206 = vmatpush.bf16.msra.mxu0 %v3952
    %6207 = vmatpush.bf16.msra.mxu0 %v3938
    %6208 = vmatmul.bf16.gmra.mxu0 %v1006
    %v6209 = vpop.f32.mrf.mxu0
    %v6210 = vadd.f32 %v6196, %v6209
    %v6211 = vpop.f32.mrf.mxu0
    %v6212 = vadd.f32 %v6198, %v6211
    %6213 = vdwg.mxu0
    %6214 = vmatpush.bf16.msra.mxu0 %v4148
    %6215 = vmatpush.bf16.msra.mxu0 %v4134
    %6216 = vmatpush.bf16.msra.mxu0 %v4120
    %6217 = vmatpush.bf16.msra.mxu0 %v4106
    %6218 = vmatpush.bf16.msra.mxu0 %v4092
    %6219 = vmatpush.bf16.msra.mxu0 %v4078
    %6220 = vmatpush.bf16.msra.mxu0 %v4064
    %6221 = vmatpush.bf16.msra.mxu0 %v4050
    %6222 = vmatmul.bf16.gmra.mxu0 %v1007
    %v6223 = vpop.f32.mrf.mxu0
    %v6224 = vadd.f32 %v6210, %v6223
    %v6225 = vpop.f32.mrf.mxu0
    %v6226 = vadd.f32 %v6212, %v6225
    %6227 = vdwg.mxu0
    %6228 = vmatpush.bf16.msra.mxu0 %v4260
    %6229 = vmatpush.bf16.msra.mxu0 %v4246
    %6230 = vmatpush.bf16.msra.mxu0 %v4232
    %6231 = vmatpush.bf16.msra.mxu0 %v4218
    %6232 = vmatpush.bf16.msra.mxu0 %v4204
    %6233 = vmatpush.bf16.msra.mxu0 %v4190
    %6234 = vmatpush.bf16.msra.mxu0 %v4176
    %6235 = vmatpush.bf16.msra.mxu0 %v4162
    %6236 = vmatmul.bf16.gmra.mxu0 %v1008
    %v6237 = vpop.f32.mrf.mxu0
    %v6238 = vadd.f32 %v6224, %v6237
    %v6239 = vpop.f32.mrf.mxu0
    %v6240 = vadd.f32 %v6226, %v6239
    %6241 = vdwg.mxu0
    %6242 = vmatpush.bf16.msra.mxu0 %v4372
    %6243 = vmatpush.bf16.msra.mxu0 %v4358
    %6244 = vmatpush.bf16.msra.mxu0 %v4344
    %6245 = vmatpush.bf16.msra.mxu0 %v4330
    %6246 = vmatpush.bf16.msra.mxu0 %v4316
    %6247 = vmatpush.bf16.msra.mxu0 %v4302
    %6248 = vmatpush.bf16.msra.mxu0 %v4288
    %6249 = vmatpush.bf16.msra.mxu0 %v4274
    %6250 = vmatmul.bf16.gmra.mxu0 %v1009
    %v6251 = vpop.f32.mrf.mxu0
    %v6252 = vadd.f32 %v6238, %v6251
    %v6253 = vpop.f32.mrf.mxu0
    %v6254 = vadd.f32 %v6240, %v6253
    %6255 = vdwg.mxu0
    %6256 = vmatpush.bf16.msra.mxu0 %v4484
    %6257 = vmatpush.bf16.msra.mxu0 %v4470
    %6258 = vmatpush.bf16.msra.mxu0 %v4456
    %6259 = vmatpush.bf16.msra.mxu0 %v4442
    %6260 = vmatpush.bf16.msra.mxu0 %v4428
    %6261 = vmatpush.bf16.msra.mxu0 %v4414
    %6262 = vmatpush.bf16.msra.mxu0 %v4400
    %6263 = vmatpush.bf16.msra.mxu0 %v4386
    %6264 = vmatmul.bf16.gmra.mxu0 %v1010
    %v6265 = vpop.f32.mrf.mxu0
    %v6266 = vadd.f32 %v6252, %v6265
    %v6267 = vpop.f32.mrf.mxu0
    %v6268 = vadd.f32 %v6254, %v6267
    %6269 = vdwg.mxu0
    %6270 = vmatpush.bf16.msra.mxu0 %v4596
    %6271 = vmatpush.bf16.msra.mxu0 %v4582
    %6272 = vmatpush.bf16.msra.mxu0 %v4568
    %6273 = vmatpush.bf16.msra.mxu0 %v4554
    %6274 = vmatpush.bf16.msra.mxu0 %v4540
    %6275 = vmatpush.bf16.msra.mxu0 %v4526
    %6276 = vmatpush.bf16.msra.mxu0 %v4512
    %6277 = vmatpush.bf16.msra.mxu0 %v4498
    %6278 = vmatmul.bf16.gmra.mxu0 %v1011
    %v6279 = vpop.f32.mrf.mxu0
    %v6280 = vadd.f32 %v6266, %v6279
    %v6281 = vpop.f32.mrf.mxu0
    %v6282 = vadd.f32 %v6268, %v6281
    %6283 = vdwg.mxu0
    %6284 = vmatpush.bf16.msra.mxu0 %v3813
    %6285 = vmatpush.bf16.msra.mxu0 %v3799
    %6286 = vmatpush.bf16.msra.mxu0 %v3785
    %6287 = vmatpush.bf16.msra.mxu0 %v3771
    %6288 = vmatpush.bf16.msra.mxu0 %v3757
    %6289 = vmatpush.bf16.msra.mxu0 %v3743
    %6290 = vmatpush.bf16.msra.mxu0 %v3729
    %6291 = vmatpush.bf16.msra.mxu0 %v3715
    %6292 = vmatmul.bf16.gmra.mxu0 %v1004
    %v6293 = vpop.f32.mrf.mxu0
    %v6294 = vadd.f32 %v959, %v6293
    %v6295 = vpop.f32.mrf.mxu0
    %v6296 = vadd.f32 %v959, %v6295
    %6297 = vdwg.mxu0
    %6298 = vmatpush.bf16.msra.mxu0 %v3925
    %6299 = vmatpush.bf16.msra.mxu0 %v3911
    %6300 = vmatpush.bf16.msra.mxu0 %v3897
    %6301 = vmatpush.bf16.msra.mxu0 %v3883
    %6302 = vmatpush.bf16.msra.mxu0 %v3869
    %6303 = vmatpush.bf16.msra.mxu0 %v3855
    %6304 = vmatpush.bf16.msra.mxu0 %v3841
    %6305 = vmatpush.bf16.msra.mxu0 %v3827
    %6306 = vmatmul.bf16.gmra.mxu0 %v1005
    %v6307 = vpop.f32.mrf.mxu0
    %v6308 = vadd.f32 %v6294, %v6307
    %v6309 = vpop.f32.mrf.mxu0
    %v6310 = vadd.f32 %v6296, %v6309
    %6311 = vdwg.mxu0
    %6312 = vmatpush.bf16.msra.mxu0 %v4037
    %6313 = vmatpush.bf16.msra.mxu0 %v4023
    %6314 = vmatpush.bf16.msra.mxu0 %v4009
    %6315 = vmatpush.bf16.msra.mxu0 %v3995
    %6316 = vmatpush.bf16.msra.mxu0 %v3981
    %6317 = vmatpush.bf16.msra.mxu0 %v3967
    %6318 = vmatpush.bf16.msra.mxu0 %v3953
    %6319 = vmatpush.bf16.msra.mxu0 %v3939
    %6320 = vmatmul.bf16.gmra.mxu0 %v1006
    %v6321 = vpop.f32.mrf.mxu0
    %v6322 = vadd.f32 %v6308, %v6321
    %v6323 = vpop.f32.mrf.mxu0
    %v6324 = vadd.f32 %v6310, %v6323
    %6325 = vdwg.mxu0
    %6326 = vmatpush.bf16.msra.mxu0 %v4149
    %6327 = vmatpush.bf16.msra.mxu0 %v4135
    %6328 = vmatpush.bf16.msra.mxu0 %v4121
    %6329 = vmatpush.bf16.msra.mxu0 %v4107
    %6330 = vmatpush.bf16.msra.mxu0 %v4093
    %6331 = vmatpush.bf16.msra.mxu0 %v4079
    %6332 = vmatpush.bf16.msra.mxu0 %v4065
    %6333 = vmatpush.bf16.msra.mxu0 %v4051
    %6334 = vmatmul.bf16.gmra.mxu0 %v1007
    %v6335 = vpop.f32.mrf.mxu0
    %v6336 = vadd.f32 %v6322, %v6335
    %v6337 = vpop.f32.mrf.mxu0
    %v6338 = vadd.f32 %v6324, %v6337
    %6339 = vdwg.mxu0
    %6340 = vmatpush.bf16.msra.mxu0 %v4261
    %6341 = vmatpush.bf16.msra.mxu0 %v4247
    %6342 = vmatpush.bf16.msra.mxu0 %v4233
    %6343 = vmatpush.bf16.msra.mxu0 %v4219
    %6344 = vmatpush.bf16.msra.mxu0 %v4205
    %6345 = vmatpush.bf16.msra.mxu0 %v4191
    %6346 = vmatpush.bf16.msra.mxu0 %v4177
    %6347 = vmatpush.bf16.msra.mxu0 %v4163
    %6348 = vmatmul.bf16.gmra.mxu0 %v1008
    %v6349 = vpop.f32.mrf.mxu0
    %v6350 = vadd.f32 %v6336, %v6349
    %v6351 = vpop.f32.mrf.mxu0
    %v6352 = vadd.f32 %v6338, %v6351
    %6353 = vdwg.mxu0
    %6354 = vmatpush.bf16.msra.mxu0 %v4373
    %6355 = vmatpush.bf16.msra.mxu0 %v4359
    %6356 = vmatpush.bf16.msra.mxu0 %v4345
    %6357 = vmatpush.bf16.msra.mxu0 %v4331
    %6358 = vmatpush.bf16.msra.mxu0 %v4317
    %6359 = vmatpush.bf16.msra.mxu0 %v4303
    %6360 = vmatpush.bf16.msra.mxu0 %v4289
    %6361 = vmatpush.bf16.msra.mxu0 %v4275
    %6362 = vmatmul.bf16.gmra.mxu0 %v1009
    %v6363 = vpop.f32.mrf.mxu0
    %v6364 = vadd.f32 %v6350, %v6363
    %v6365 = vpop.f32.mrf.mxu0
    %v6366 = vadd.f32 %v6352, %v6365
    %6367 = vdwg.mxu0
    %6368 = vmatpush.bf16.msra.mxu0 %v4485
    %6369 = vmatpush.bf16.msra.mxu0 %v4471
    %6370 = vmatpush.bf16.msra.mxu0 %v4457
    %6371 = vmatpush.bf16.msra.mxu0 %v4443
    %6372 = vmatpush.bf16.msra.mxu0 %v4429
    %6373 = vmatpush.bf16.msra.mxu0 %v4415
    %6374 = vmatpush.bf16.msra.mxu0 %v4401
    %6375 = vmatpush.bf16.msra.mxu0 %v4387
    %6376 = vmatmul.bf16.gmra.mxu0 %v1010
    %v6377 = vpop.f32.mrf.mxu0
    %v6378 = vadd.f32 %v6364, %v6377
    %v6379 = vpop.f32.mrf.mxu0
    %v6380 = vadd.f32 %v6366, %v6379
    %6381 = vdwg.mxu0
    %6382 = vmatpush.bf16.msra.mxu0 %v4597
    %6383 = vmatpush.bf16.msra.mxu0 %v4583
    %6384 = vmatpush.bf16.msra.mxu0 %v4569
    %6385 = vmatpush.bf16.msra.mxu0 %v4555
    %6386 = vmatpush.bf16.msra.mxu0 %v4541
    %6387 = vmatpush.bf16.msra.mxu0 %v4527
    %6388 = vmatpush.bf16.msra.mxu0 %v4513
    %6389 = vmatpush.bf16.msra.mxu0 %v4499
    %6390 = vmatmul.bf16.gmra.mxu0 %v1011
    %v6391 = vpop.f32.mrf.mxu0
    %v6392 = vadd.f32 %v6378, %v6391
    %v6393 = vpop.f32.mrf.mxu0
    %v6394 = vadd.f32 %v6380, %v6393
    %6395 = vdwg.mxu0
    %6396 = vmatpush.bf16.msra.mxu0 %v3814
    %6397 = vmatpush.bf16.msra.mxu0 %v3800
    %6398 = vmatpush.bf16.msra.mxu0 %v3786
    %6399 = vmatpush.bf16.msra.mxu0 %v3772
    %6400 = vmatpush.bf16.msra.mxu0 %v3758
    %6401 = vmatpush.bf16.msra.mxu0 %v3744
    %6402 = vmatpush.bf16.msra.mxu0 %v3730
    %6403 = vmatpush.bf16.msra.mxu0 %v3716
    %6404 = vmatmul.bf16.gmra.mxu0 %v1004
    %v6405 = vpop.f32.mrf.mxu0
    %v6406 = vadd.f32 %v960, %v6405
    %v6407 = vpop.f32.mrf.mxu0
    %v6408 = vadd.f32 %v960, %v6407
    %6409 = vdwg.mxu0
    %6410 = vmatpush.bf16.msra.mxu0 %v3926
    %6411 = vmatpush.bf16.msra.mxu0 %v3912
    %6412 = vmatpush.bf16.msra.mxu0 %v3898
    %6413 = vmatpush.bf16.msra.mxu0 %v3884
    %6414 = vmatpush.bf16.msra.mxu0 %v3870
    %6415 = vmatpush.bf16.msra.mxu0 %v3856
    %6416 = vmatpush.bf16.msra.mxu0 %v3842
    %6417 = vmatpush.bf16.msra.mxu0 %v3828
    %6418 = vmatmul.bf16.gmra.mxu0 %v1005
    %v6419 = vpop.f32.mrf.mxu0
    %v6420 = vadd.f32 %v6406, %v6419
    %v6421 = vpop.f32.mrf.mxu0
    %v6422 = vadd.f32 %v6408, %v6421
    %6423 = vdwg.mxu0
    %6424 = vmatpush.bf16.msra.mxu0 %v4038
    %6425 = vmatpush.bf16.msra.mxu0 %v4024
    %6426 = vmatpush.bf16.msra.mxu0 %v4010
    %6427 = vmatpush.bf16.msra.mxu0 %v3996
    %6428 = vmatpush.bf16.msra.mxu0 %v3982
    %6429 = vmatpush.bf16.msra.mxu0 %v3968
    %6430 = vmatpush.bf16.msra.mxu0 %v3954
    %6431 = vmatpush.bf16.msra.mxu0 %v3940
    %6432 = vmatmul.bf16.gmra.mxu0 %v1006
    %v6433 = vpop.f32.mrf.mxu0
    %v6434 = vadd.f32 %v6420, %v6433
    %v6435 = vpop.f32.mrf.mxu0
    %v6436 = vadd.f32 %v6422, %v6435
    %6437 = vdwg.mxu0
    %6438 = vmatpush.bf16.msra.mxu0 %v4150
    %6439 = vmatpush.bf16.msra.mxu0 %v4136
    %6440 = vmatpush.bf16.msra.mxu0 %v4122
    %6441 = vmatpush.bf16.msra.mxu0 %v4108
    %6442 = vmatpush.bf16.msra.mxu0 %v4094
    %6443 = vmatpush.bf16.msra.mxu0 %v4080
    %6444 = vmatpush.bf16.msra.mxu0 %v4066
    %6445 = vmatpush.bf16.msra.mxu0 %v4052
    %6446 = vmatmul.bf16.gmra.mxu0 %v1007
    %v6447 = vpop.f32.mrf.mxu0
    %v6448 = vadd.f32 %v6434, %v6447
    %v6449 = vpop.f32.mrf.mxu0
    %v6450 = vadd.f32 %v6436, %v6449
    %6451 = vdwg.mxu0
    %6452 = vmatpush.bf16.msra.mxu0 %v4262
    %6453 = vmatpush.bf16.msra.mxu0 %v4248
    %6454 = vmatpush.bf16.msra.mxu0 %v4234
    %6455 = vmatpush.bf16.msra.mxu0 %v4220
    %6456 = vmatpush.bf16.msra.mxu0 %v4206
    %6457 = vmatpush.bf16.msra.mxu0 %v4192
    %6458 = vmatpush.bf16.msra.mxu0 %v4178
    %6459 = vmatpush.bf16.msra.mxu0 %v4164
    %6460 = vmatmul.bf16.gmra.mxu0 %v1008
    %v6461 = vpop.f32.mrf.mxu0
    %v6462 = vadd.f32 %v6448, %v6461
    %v6463 = vpop.f32.mrf.mxu0
    %v6464 = vadd.f32 %v6450, %v6463
    %6465 = vdwg.mxu0
    %6466 = vmatpush.bf16.msra.mxu0 %v4374
    %6467 = vmatpush.bf16.msra.mxu0 %v4360
    %6468 = vmatpush.bf16.msra.mxu0 %v4346
    %6469 = vmatpush.bf16.msra.mxu0 %v4332
    %6470 = vmatpush.bf16.msra.mxu0 %v4318
    %6471 = vmatpush.bf16.msra.mxu0 %v4304
    %6472 = vmatpush.bf16.msra.mxu0 %v4290
    %6473 = vmatpush.bf16.msra.mxu0 %v4276
    %6474 = vmatmul.bf16.gmra.mxu0 %v1009
    %v6475 = vpop.f32.mrf.mxu0
    %v6476 = vadd.f32 %v6462, %v6475
    %v6477 = vpop.f32.mrf.mxu0
    %v6478 = vadd.f32 %v6464, %v6477
    %6479 = vdwg.mxu0
    %6480 = vmatpush.bf16.msra.mxu0 %v4486
    %6481 = vmatpush.bf16.msra.mxu0 %v4472
    %6482 = vmatpush.bf16.msra.mxu0 %v4458
    %6483 = vmatpush.bf16.msra.mxu0 %v4444
    %6484 = vmatpush.bf16.msra.mxu0 %v4430
    %6485 = vmatpush.bf16.msra.mxu0 %v4416
    %6486 = vmatpush.bf16.msra.mxu0 %v4402
    %6487 = vmatpush.bf16.msra.mxu0 %v4388
    %6488 = vmatmul.bf16.gmra.mxu0 %v1010
    %v6489 = vpop.f32.mrf.mxu0
    %v6490 = vadd.f32 %v6476, %v6489
    %v6491 = vpop.f32.mrf.mxu0
    %v6492 = vadd.f32 %v6478, %v6491
    %6493 = vdwg.mxu0
    %6494 = vmatpush.bf16.msra.mxu0 %v4598
    %6495 = vmatpush.bf16.msra.mxu0 %v4584
    %6496 = vmatpush.bf16.msra.mxu0 %v4570
    %6497 = vmatpush.bf16.msra.mxu0 %v4556
    %6498 = vmatpush.bf16.msra.mxu0 %v4542
    %6499 = vmatpush.bf16.msra.mxu0 %v4528
    %6500 = vmatpush.bf16.msra.mxu0 %v4514
    %6501 = vmatpush.bf16.msra.mxu0 %v4500
    %6502 = vmatmul.bf16.gmra.mxu0 %v1011
    %v6503 = vpop.f32.mrf.mxu0
    %v6504 = vadd.f32 %v6490, %v6503
    %v6505 = vpop.f32.mrf.mxu0
    %v6506 = vadd.f32 %v6492, %v6505
    %6507 = vdwg.mxu0
    %6508 = vmatpush.bf16.msra.mxu0 %v3815
    %6509 = vmatpush.bf16.msra.mxu0 %v3801
    %6510 = vmatpush.bf16.msra.mxu0 %v3787
    %6511 = vmatpush.bf16.msra.mxu0 %v3773
    %6512 = vmatpush.bf16.msra.mxu0 %v3759
    %6513 = vmatpush.bf16.msra.mxu0 %v3745
    %6514 = vmatpush.bf16.msra.mxu0 %v3731
    %6515 = vmatpush.bf16.msra.mxu0 %v3717
    %6516 = vmatmul.bf16.gmra.mxu0 %v1004
    %v6517 = vpop.f32.mrf.mxu0
    %v6518 = vadd.f32 %v961, %v6517
    %v6519 = vpop.f32.mrf.mxu0
    %v6520 = vadd.f32 %v961, %v6519
    %6521 = vdwg.mxu0
    %6522 = vmatpush.bf16.msra.mxu0 %v3927
    %6523 = vmatpush.bf16.msra.mxu0 %v3913
    %6524 = vmatpush.bf16.msra.mxu0 %v3899
    %6525 = vmatpush.bf16.msra.mxu0 %v3885
    %6526 = vmatpush.bf16.msra.mxu0 %v3871
    %6527 = vmatpush.bf16.msra.mxu0 %v3857
    %6528 = vmatpush.bf16.msra.mxu0 %v3843
    %6529 = vmatpush.bf16.msra.mxu0 %v3829
    %6530 = vmatmul.bf16.gmra.mxu0 %v1005
    %v6531 = vpop.f32.mrf.mxu0
    %v6532 = vadd.f32 %v6518, %v6531
    %v6533 = vpop.f32.mrf.mxu0
    %v6534 = vadd.f32 %v6520, %v6533
    %6535 = vdwg.mxu0
    %6536 = vmatpush.bf16.msra.mxu0 %v4039
    %6537 = vmatpush.bf16.msra.mxu0 %v4025
    %6538 = vmatpush.bf16.msra.mxu0 %v4011
    %6539 = vmatpush.bf16.msra.mxu0 %v3997
    %6540 = vmatpush.bf16.msra.mxu0 %v3983
    %6541 = vmatpush.bf16.msra.mxu0 %v3969
    %6542 = vmatpush.bf16.msra.mxu0 %v3955
    %6543 = vmatpush.bf16.msra.mxu0 %v3941
    %6544 = vmatmul.bf16.gmra.mxu0 %v1006
    %v6545 = vpop.f32.mrf.mxu0
    %v6546 = vadd.f32 %v6532, %v6545
    %v6547 = vpop.f32.mrf.mxu0
    %v6548 = vadd.f32 %v6534, %v6547
    %6549 = vdwg.mxu0
    %6550 = vmatpush.bf16.msra.mxu0 %v4151
    %6551 = vmatpush.bf16.msra.mxu0 %v4137
    %6552 = vmatpush.bf16.msra.mxu0 %v4123
    %6553 = vmatpush.bf16.msra.mxu0 %v4109
    %6554 = vmatpush.bf16.msra.mxu0 %v4095
    %6555 = vmatpush.bf16.msra.mxu0 %v4081
    %6556 = vmatpush.bf16.msra.mxu0 %v4067
    %6557 = vmatpush.bf16.msra.mxu0 %v4053
    %6558 = vmatmul.bf16.gmra.mxu0 %v1007
    %v6559 = vpop.f32.mrf.mxu0
    %v6560 = vadd.f32 %v6546, %v6559
    %v6561 = vpop.f32.mrf.mxu0
    %v6562 = vadd.f32 %v6548, %v6561
    %6563 = vdwg.mxu0
    %6564 = vmatpush.bf16.msra.mxu0 %v4263
    %6565 = vmatpush.bf16.msra.mxu0 %v4249
    %6566 = vmatpush.bf16.msra.mxu0 %v4235
    %6567 = vmatpush.bf16.msra.mxu0 %v4221
    %6568 = vmatpush.bf16.msra.mxu0 %v4207
    %6569 = vmatpush.bf16.msra.mxu0 %v4193
    %6570 = vmatpush.bf16.msra.mxu0 %v4179
    %6571 = vmatpush.bf16.msra.mxu0 %v4165
    %6572 = vmatmul.bf16.gmra.mxu0 %v1008
    %v6573 = vpop.f32.mrf.mxu0
    %v6574 = vadd.f32 %v6560, %v6573
    %v6575 = vpop.f32.mrf.mxu0
    %v6576 = vadd.f32 %v6562, %v6575
    %6577 = vdwg.mxu0
    %6578 = vmatpush.bf16.msra.mxu0 %v4375
    %6579 = vmatpush.bf16.msra.mxu0 %v4361
    %6580 = vmatpush.bf16.msra.mxu0 %v4347
    %6581 = vmatpush.bf16.msra.mxu0 %v4333
    %6582 = vmatpush.bf16.msra.mxu0 %v4319
    %6583 = vmatpush.bf16.msra.mxu0 %v4305
    %6584 = vmatpush.bf16.msra.mxu0 %v4291
    %6585 = vmatpush.bf16.msra.mxu0 %v4277
    %6586 = vmatmul.bf16.gmra.mxu0 %v1009
    %v6587 = vpop.f32.mrf.mxu0
    %v6588 = vadd.f32 %v6574, %v6587
    %v6589 = vpop.f32.mrf.mxu0
    %v6590 = vadd.f32 %v6576, %v6589
    %6591 = vdwg.mxu0
    %6592 = vmatpush.bf16.msra.mxu0 %v4487
    %6593 = vmatpush.bf16.msra.mxu0 %v4473
    %6594 = vmatpush.bf16.msra.mxu0 %v4459
    %6595 = vmatpush.bf16.msra.mxu0 %v4445
    %6596 = vmatpush.bf16.msra.mxu0 %v4431
    %6597 = vmatpush.bf16.msra.mxu0 %v4417
    %6598 = vmatpush.bf16.msra.mxu0 %v4403
    %6599 = vmatpush.bf16.msra.mxu0 %v4389
    %6600 = vmatmul.bf16.gmra.mxu0 %v1010
    %v6601 = vpop.f32.mrf.mxu0
    %v6602 = vadd.f32 %v6588, %v6601
    %v6603 = vpop.f32.mrf.mxu0
    %v6604 = vadd.f32 %v6590, %v6603
    %6605 = vdwg.mxu0
    %6606 = vmatpush.bf16.msra.mxu0 %v4599
    %6607 = vmatpush.bf16.msra.mxu0 %v4585
    %6608 = vmatpush.bf16.msra.mxu0 %v4571
    %6609 = vmatpush.bf16.msra.mxu0 %v4557
    %6610 = vmatpush.bf16.msra.mxu0 %v4543
    %6611 = vmatpush.bf16.msra.mxu0 %v4529
    %6612 = vmatpush.bf16.msra.mxu0 %v4515
    %6613 = vmatpush.bf16.msra.mxu0 %v4501
    %6614 = vmatmul.bf16.gmra.mxu0 %v1011
    %v6615 = vpop.f32.mrf.mxu0
    %v6616 = vadd.f32 %v6602, %v6615
    %v6617 = vpop.f32.mrf.mxu0
    %v6618 = vadd.f32 %v6604, %v6617
    %6619 = vdwg.mxu0
    %6620 = vmatpush.bf16.msra.mxu0 %v3816
    %6621 = vmatpush.bf16.msra.mxu0 %v3802
    %6622 = vmatpush.bf16.msra.mxu0 %v3788
    %6623 = vmatpush.bf16.msra.mxu0 %v3774
    %6624 = vmatpush.bf16.msra.mxu0 %v3760
    %6625 = vmatpush.bf16.msra.mxu0 %v3746
    %6626 = vmatpush.bf16.msra.mxu0 %v3732
    %6627 = vmatpush.bf16.msra.mxu0 %v3718
    %6628 = vmatmul.bf16.gmra.mxu0 %v1004
    %v6629 = vpop.f32.mrf.mxu0
    %v6630 = vadd.f32 %v962, %v6629
    %v6631 = vpop.f32.mrf.mxu0
    %v6632 = vadd.f32 %v962, %v6631
    %6633 = vdwg.mxu0
    %6634 = vmatpush.bf16.msra.mxu0 %v3928
    %6635 = vmatpush.bf16.msra.mxu0 %v3914
    %6636 = vmatpush.bf16.msra.mxu0 %v3900
    %6637 = vmatpush.bf16.msra.mxu0 %v3886
    %6638 = vmatpush.bf16.msra.mxu0 %v3872
    %6639 = vmatpush.bf16.msra.mxu0 %v3858
    %6640 = vmatpush.bf16.msra.mxu0 %v3844
    %6641 = vmatpush.bf16.msra.mxu0 %v3830
    %6642 = vmatmul.bf16.gmra.mxu0 %v1005
    %v6643 = vpop.f32.mrf.mxu0
    %v6644 = vadd.f32 %v6630, %v6643
    %v6645 = vpop.f32.mrf.mxu0
    %v6646 = vadd.f32 %v6632, %v6645
    %6647 = vdwg.mxu0
    %6648 = vmatpush.bf16.msra.mxu0 %v4040
    %6649 = vmatpush.bf16.msra.mxu0 %v4026
    %6650 = vmatpush.bf16.msra.mxu0 %v4012
    %6651 = vmatpush.bf16.msra.mxu0 %v3998
    %6652 = vmatpush.bf16.msra.mxu0 %v3984
    %6653 = vmatpush.bf16.msra.mxu0 %v3970
    %6654 = vmatpush.bf16.msra.mxu0 %v3956
    %6655 = vmatpush.bf16.msra.mxu0 %v3942
    %6656 = vmatmul.bf16.gmra.mxu0 %v1006
    %v6657 = vpop.f32.mrf.mxu0
    %v6658 = vadd.f32 %v6644, %v6657
    %v6659 = vpop.f32.mrf.mxu0
    %v6660 = vadd.f32 %v6646, %v6659
    %6661 = vdwg.mxu0
    %6662 = vmatpush.bf16.msra.mxu0 %v4152
    %6663 = vmatpush.bf16.msra.mxu0 %v4138
    %6664 = vmatpush.bf16.msra.mxu0 %v4124
    %6665 = vmatpush.bf16.msra.mxu0 %v4110
    %6666 = vmatpush.bf16.msra.mxu0 %v4096
    %6667 = vmatpush.bf16.msra.mxu0 %v4082
    %6668 = vmatpush.bf16.msra.mxu0 %v4068
    %6669 = vmatpush.bf16.msra.mxu0 %v4054
    %6670 = vmatmul.bf16.gmra.mxu0 %v1007
    %v6671 = vpop.f32.mrf.mxu0
    %v6672 = vadd.f32 %v6658, %v6671
    %v6673 = vpop.f32.mrf.mxu0
    %v6674 = vadd.f32 %v6660, %v6673
    %6675 = vdwg.mxu0
    %6676 = vmatpush.bf16.msra.mxu0 %v4264
    %6677 = vmatpush.bf16.msra.mxu0 %v4250
    %6678 = vmatpush.bf16.msra.mxu0 %v4236
    %6679 = vmatpush.bf16.msra.mxu0 %v4222
    %6680 = vmatpush.bf16.msra.mxu0 %v4208
    %6681 = vmatpush.bf16.msra.mxu0 %v4194
    %6682 = vmatpush.bf16.msra.mxu0 %v4180
    %6683 = vmatpush.bf16.msra.mxu0 %v4166
    %6684 = vmatmul.bf16.gmra.mxu0 %v1008
    %v6685 = vpop.f32.mrf.mxu0
    %v6686 = vadd.f32 %v6672, %v6685
    %v6687 = vpop.f32.mrf.mxu0
    %v6688 = vadd.f32 %v6674, %v6687
    %6689 = vdwg.mxu0
    %6690 = vmatpush.bf16.msra.mxu0 %v4376
    %6691 = vmatpush.bf16.msra.mxu0 %v4362
    %6692 = vmatpush.bf16.msra.mxu0 %v4348
    %6693 = vmatpush.bf16.msra.mxu0 %v4334
    %6694 = vmatpush.bf16.msra.mxu0 %v4320
    %6695 = vmatpush.bf16.msra.mxu0 %v4306
    %6696 = vmatpush.bf16.msra.mxu0 %v4292
    %6697 = vmatpush.bf16.msra.mxu0 %v4278
    %6698 = vmatmul.bf16.gmra.mxu0 %v1009
    %v6699 = vpop.f32.mrf.mxu0
    %v6700 = vadd.f32 %v6686, %v6699
    %v6701 = vpop.f32.mrf.mxu0
    %v6702 = vadd.f32 %v6688, %v6701
    %6703 = vdwg.mxu0
    %6704 = vmatpush.bf16.msra.mxu0 %v4488
    %6705 = vmatpush.bf16.msra.mxu0 %v4474
    %6706 = vmatpush.bf16.msra.mxu0 %v4460
    %6707 = vmatpush.bf16.msra.mxu0 %v4446
    %6708 = vmatpush.bf16.msra.mxu0 %v4432
    %6709 = vmatpush.bf16.msra.mxu0 %v4418
    %6710 = vmatpush.bf16.msra.mxu0 %v4404
    %6711 = vmatpush.bf16.msra.mxu0 %v4390
    %6712 = vmatmul.bf16.gmra.mxu0 %v1010
    %v6713 = vpop.f32.mrf.mxu0
    %v6714 = vadd.f32 %v6700, %v6713
    %v6715 = vpop.f32.mrf.mxu0
    %v6716 = vadd.f32 %v6702, %v6715
    %6717 = vdwg.mxu0
    %6718 = vmatpush.bf16.msra.mxu0 %v4600
    %6719 = vmatpush.bf16.msra.mxu0 %v4586
    %6720 = vmatpush.bf16.msra.mxu0 %v4572
    %6721 = vmatpush.bf16.msra.mxu0 %v4558
    %6722 = vmatpush.bf16.msra.mxu0 %v4544
    %6723 = vmatpush.bf16.msra.mxu0 %v4530
    %6724 = vmatpush.bf16.msra.mxu0 %v4516
    %6725 = vmatpush.bf16.msra.mxu0 %v4502
    %6726 = vmatmul.bf16.gmra.mxu0 %v1011
    %v6727 = vpop.f32.mrf.mxu0
    %v6728 = vadd.f32 %v6714, %v6727
    %v6729 = vpop.f32.mrf.mxu0
    %v6730 = vadd.f32 %v6716, %v6729
    %6731 = vdwg.mxu0
    %6732 = vmatpush.bf16.msra.mxu0 %v3817
    %6733 = vmatpush.bf16.msra.mxu0 %v3803
    %6734 = vmatpush.bf16.msra.mxu0 %v3789
    %6735 = vmatpush.bf16.msra.mxu0 %v3775
    %6736 = vmatpush.bf16.msra.mxu0 %v3761
    %6737 = vmatpush.bf16.msra.mxu0 %v3747
    %6738 = vmatpush.bf16.msra.mxu0 %v3733
    %6739 = vmatpush.bf16.msra.mxu0 %v3719
    %6740 = vmatmul.bf16.gmra.mxu0 %v1004
    %v6741 = vpop.f32.mrf.mxu0
    %v6742 = vadd.f32 %v963, %v6741
    %v6743 = vpop.f32.mrf.mxu0
    %v6744 = vadd.f32 %v963, %v6743
    %6745 = vdwg.mxu0
    %6746 = vmatpush.bf16.msra.mxu0 %v3929
    %6747 = vmatpush.bf16.msra.mxu0 %v3915
    %6748 = vmatpush.bf16.msra.mxu0 %v3901
    %6749 = vmatpush.bf16.msra.mxu0 %v3887
    %6750 = vmatpush.bf16.msra.mxu0 %v3873
    %6751 = vmatpush.bf16.msra.mxu0 %v3859
    %6752 = vmatpush.bf16.msra.mxu0 %v3845
    %6753 = vmatpush.bf16.msra.mxu0 %v3831
    %6754 = vmatmul.bf16.gmra.mxu0 %v1005
    %v6755 = vpop.f32.mrf.mxu0
    %v6756 = vadd.f32 %v6742, %v6755
    %v6757 = vpop.f32.mrf.mxu0
    %v6758 = vadd.f32 %v6744, %v6757
    %6759 = vdwg.mxu0
    %6760 = vmatpush.bf16.msra.mxu0 %v4041
    %6761 = vmatpush.bf16.msra.mxu0 %v4027
    %6762 = vmatpush.bf16.msra.mxu0 %v4013
    %6763 = vmatpush.bf16.msra.mxu0 %v3999
    %6764 = vmatpush.bf16.msra.mxu0 %v3985
    %6765 = vmatpush.bf16.msra.mxu0 %v3971
    %6766 = vmatpush.bf16.msra.mxu0 %v3957
    %6767 = vmatpush.bf16.msra.mxu0 %v3943
    %6768 = vmatmul.bf16.gmra.mxu0 %v1006
    %v6769 = vpop.f32.mrf.mxu0
    %v6770 = vadd.f32 %v6756, %v6769
    %v6771 = vpop.f32.mrf.mxu0
    %v6772 = vadd.f32 %v6758, %v6771
    %6773 = vdwg.mxu0
    %6774 = vmatpush.bf16.msra.mxu0 %v4153
    %6775 = vmatpush.bf16.msra.mxu0 %v4139
    %6776 = vmatpush.bf16.msra.mxu0 %v4125
    %6777 = vmatpush.bf16.msra.mxu0 %v4111
    %6778 = vmatpush.bf16.msra.mxu0 %v4097
    %6779 = vmatpush.bf16.msra.mxu0 %v4083
    %6780 = vmatpush.bf16.msra.mxu0 %v4069
    %6781 = vmatpush.bf16.msra.mxu0 %v4055
    %6782 = vmatmul.bf16.gmra.mxu0 %v1007
    %v6783 = vpop.f32.mrf.mxu0
    %v6784 = vadd.f32 %v6770, %v6783
    %v6785 = vpop.f32.mrf.mxu0
    %v6786 = vadd.f32 %v6772, %v6785
    %6787 = vdwg.mxu0
    %6788 = vmatpush.bf16.msra.mxu0 %v4265
    %6789 = vmatpush.bf16.msra.mxu0 %v4251
    %6790 = vmatpush.bf16.msra.mxu0 %v4237
    %6791 = vmatpush.bf16.msra.mxu0 %v4223
    %6792 = vmatpush.bf16.msra.mxu0 %v4209
    %6793 = vmatpush.bf16.msra.mxu0 %v4195
    %6794 = vmatpush.bf16.msra.mxu0 %v4181
    %6795 = vmatpush.bf16.msra.mxu0 %v4167
    %6796 = vmatmul.bf16.gmra.mxu0 %v1008
    %v6797 = vpop.f32.mrf.mxu0
    %v6798 = vadd.f32 %v6784, %v6797
    %v6799 = vpop.f32.mrf.mxu0
    %v6800 = vadd.f32 %v6786, %v6799
    %6801 = vdwg.mxu0
    %6802 = vmatpush.bf16.msra.mxu0 %v4377
    %6803 = vmatpush.bf16.msra.mxu0 %v4363
    %6804 = vmatpush.bf16.msra.mxu0 %v4349
    %6805 = vmatpush.bf16.msra.mxu0 %v4335
    %6806 = vmatpush.bf16.msra.mxu0 %v4321
    %6807 = vmatpush.bf16.msra.mxu0 %v4307
    %6808 = vmatpush.bf16.msra.mxu0 %v4293
    %6809 = vmatpush.bf16.msra.mxu0 %v4279
    %6810 = vmatmul.bf16.gmra.mxu0 %v1009
    %v6811 = vpop.f32.mrf.mxu0
    %v6812 = vadd.f32 %v6798, %v6811
    %v6813 = vpop.f32.mrf.mxu0
    %v6814 = vadd.f32 %v6800, %v6813
    %6815 = vdwg.mxu0
    %6816 = vmatpush.bf16.msra.mxu0 %v4489
    %6817 = vmatpush.bf16.msra.mxu0 %v4475
    %6818 = vmatpush.bf16.msra.mxu0 %v4461
    %6819 = vmatpush.bf16.msra.mxu0 %v4447
    %6820 = vmatpush.bf16.msra.mxu0 %v4433
    %6821 = vmatpush.bf16.msra.mxu0 %v4419
    %6822 = vmatpush.bf16.msra.mxu0 %v4405
    %6823 = vmatpush.bf16.msra.mxu0 %v4391
    %6824 = vmatmul.bf16.gmra.mxu0 %v1010
    %v6825 = vpop.f32.mrf.mxu0
    %v6826 = vadd.f32 %v6812, %v6825
    %v6827 = vpop.f32.mrf.mxu0
    %v6828 = vadd.f32 %v6814, %v6827
    %6829 = vdwg.mxu0
    %6830 = vmatpush.bf16.msra.mxu0 %v4601
    %6831 = vmatpush.bf16.msra.mxu0 %v4587
    %6832 = vmatpush.bf16.msra.mxu0 %v4573
    %6833 = vmatpush.bf16.msra.mxu0 %v4559
    %6834 = vmatpush.bf16.msra.mxu0 %v4545
    %6835 = vmatpush.bf16.msra.mxu0 %v4531
    %6836 = vmatpush.bf16.msra.mxu0 %v4517
    %6837 = vmatpush.bf16.msra.mxu0 %v4503
    %6838 = vmatmul.bf16.gmra.mxu0 %v1011
    %v6839 = vpop.f32.mrf.mxu0
    %v6840 = vadd.f32 %v6826, %v6839
    %v6841 = vpop.f32.mrf.mxu0
    %v6842 = vadd.f32 %v6828, %v6841
    %6843 = vdwg.mxu0
    %6844 = vmatpush.bf16.msra.mxu0 %v3818
    %6845 = vmatpush.bf16.msra.mxu0 %v3804
    %6846 = vmatpush.bf16.msra.mxu0 %v3790
    %6847 = vmatpush.bf16.msra.mxu0 %v3776
    %6848 = vmatpush.bf16.msra.mxu0 %v3762
    %6849 = vmatpush.bf16.msra.mxu0 %v3748
    %6850 = vmatpush.bf16.msra.mxu0 %v3734
    %6851 = vmatpush.bf16.msra.mxu0 %v3720
    %6852 = vmatmul.bf16.gmra.mxu0 %v1004
    %v6853 = vpop.f32.mrf.mxu0
    %v6854 = vadd.f32 %v964, %v6853
    %v6855 = vpop.f32.mrf.mxu0
    %v6856 = vadd.f32 %v964, %v6855
    %6857 = vdwg.mxu0
    %6858 = vmatpush.bf16.msra.mxu0 %v3930
    %6859 = vmatpush.bf16.msra.mxu0 %v3916
    %6860 = vmatpush.bf16.msra.mxu0 %v3902
    %6861 = vmatpush.bf16.msra.mxu0 %v3888
    %6862 = vmatpush.bf16.msra.mxu0 %v3874
    %6863 = vmatpush.bf16.msra.mxu0 %v3860
    %6864 = vmatpush.bf16.msra.mxu0 %v3846
    %6865 = vmatpush.bf16.msra.mxu0 %v3832
    %6866 = vmatmul.bf16.gmra.mxu0 %v1005
    %v6867 = vpop.f32.mrf.mxu0
    %v6868 = vadd.f32 %v6854, %v6867
    %v6869 = vpop.f32.mrf.mxu0
    %v6870 = vadd.f32 %v6856, %v6869
    %6871 = vdwg.mxu0
    %6872 = vmatpush.bf16.msra.mxu0 %v4042
    %6873 = vmatpush.bf16.msra.mxu0 %v4028
    %6874 = vmatpush.bf16.msra.mxu0 %v4014
    %6875 = vmatpush.bf16.msra.mxu0 %v4000
    %6876 = vmatpush.bf16.msra.mxu0 %v3986
    %6877 = vmatpush.bf16.msra.mxu0 %v3972
    %6878 = vmatpush.bf16.msra.mxu0 %v3958
    %6879 = vmatpush.bf16.msra.mxu0 %v3944
    %6880 = vmatmul.bf16.gmra.mxu0 %v1006
    %v6881 = vpop.f32.mrf.mxu0
    %v6882 = vadd.f32 %v6868, %v6881
    %v6883 = vpop.f32.mrf.mxu0
    %v6884 = vadd.f32 %v6870, %v6883
    %6885 = vdwg.mxu0
    %6886 = vmatpush.bf16.msra.mxu0 %v4154
    %6887 = vmatpush.bf16.msra.mxu0 %v4140
    %6888 = vmatpush.bf16.msra.mxu0 %v4126
    %6889 = vmatpush.bf16.msra.mxu0 %v4112
    %6890 = vmatpush.bf16.msra.mxu0 %v4098
    %6891 = vmatpush.bf16.msra.mxu0 %v4084
    %6892 = vmatpush.bf16.msra.mxu0 %v4070
    %6893 = vmatpush.bf16.msra.mxu0 %v4056
    %6894 = vmatmul.bf16.gmra.mxu0 %v1007
    %v6895 = vpop.f32.mrf.mxu0
    %v6896 = vadd.f32 %v6882, %v6895
    %v6897 = vpop.f32.mrf.mxu0
    %v6898 = vadd.f32 %v6884, %v6897
    %6899 = vdwg.mxu0
    %6900 = vmatpush.bf16.msra.mxu0 %v4266
    %6901 = vmatpush.bf16.msra.mxu0 %v4252
    %6902 = vmatpush.bf16.msra.mxu0 %v4238
    %6903 = vmatpush.bf16.msra.mxu0 %v4224
    %6904 = vmatpush.bf16.msra.mxu0 %v4210
    %6905 = vmatpush.bf16.msra.mxu0 %v4196
    %6906 = vmatpush.bf16.msra.mxu0 %v4182
    %6907 = vmatpush.bf16.msra.mxu0 %v4168
    %6908 = vmatmul.bf16.gmra.mxu0 %v1008
    %v6909 = vpop.f32.mrf.mxu0
    %v6910 = vadd.f32 %v6896, %v6909
    %v6911 = vpop.f32.mrf.mxu0
    %v6912 = vadd.f32 %v6898, %v6911
    %6913 = vdwg.mxu0
    %6914 = vmatpush.bf16.msra.mxu0 %v4378
    %6915 = vmatpush.bf16.msra.mxu0 %v4364
    %6916 = vmatpush.bf16.msra.mxu0 %v4350
    %6917 = vmatpush.bf16.msra.mxu0 %v4336
    %6918 = vmatpush.bf16.msra.mxu0 %v4322
    %6919 = vmatpush.bf16.msra.mxu0 %v4308
    %6920 = vmatpush.bf16.msra.mxu0 %v4294
    %6921 = vmatpush.bf16.msra.mxu0 %v4280
    %6922 = vmatmul.bf16.gmra.mxu0 %v1009
    %v6923 = vpop.f32.mrf.mxu0
    %v6924 = vadd.f32 %v6910, %v6923
    %v6925 = vpop.f32.mrf.mxu0
    %v6926 = vadd.f32 %v6912, %v6925
    %6927 = vdwg.mxu0
    %6928 = vmatpush.bf16.msra.mxu0 %v4490
    %6929 = vmatpush.bf16.msra.mxu0 %v4476
    %6930 = vmatpush.bf16.msra.mxu0 %v4462
    %6931 = vmatpush.bf16.msra.mxu0 %v4448
    %6932 = vmatpush.bf16.msra.mxu0 %v4434
    %6933 = vmatpush.bf16.msra.mxu0 %v4420
    %6934 = vmatpush.bf16.msra.mxu0 %v4406
    %6935 = vmatpush.bf16.msra.mxu0 %v4392
    %6936 = vmatmul.bf16.gmra.mxu0 %v1010
    %v6937 = vpop.f32.mrf.mxu0
    %v6938 = vadd.f32 %v6924, %v6937
    %v6939 = vpop.f32.mrf.mxu0
    %v6940 = vadd.f32 %v6926, %v6939
    %6941 = vdwg.mxu0
    %6942 = vmatpush.bf16.msra.mxu0 %v4602
    %6943 = vmatpush.bf16.msra.mxu0 %v4588
    %6944 = vmatpush.bf16.msra.mxu0 %v4574
    %6945 = vmatpush.bf16.msra.mxu0 %v4560
    %6946 = vmatpush.bf16.msra.mxu0 %v4546
    %6947 = vmatpush.bf16.msra.mxu0 %v4532
    %6948 = vmatpush.bf16.msra.mxu0 %v4518
    %6949 = vmatpush.bf16.msra.mxu0 %v4504
    %6950 = vmatmul.bf16.gmra.mxu0 %v1011
    %v6951 = vpop.f32.mrf.mxu0
    %v6952 = vadd.f32 %v6938, %v6951
    %v6953 = vpop.f32.mrf.mxu0
    %v6954 = vadd.f32 %v6940, %v6953
    %6955 = vdwg.mxu0
    %6956 = vmatpush.bf16.msra.mxu0 %v3819
    %6957 = vmatpush.bf16.msra.mxu0 %v3805
    %6958 = vmatpush.bf16.msra.mxu0 %v3791
    %6959 = vmatpush.bf16.msra.mxu0 %v3777
    %6960 = vmatpush.bf16.msra.mxu0 %v3763
    %6961 = vmatpush.bf16.msra.mxu0 %v3749
    %6962 = vmatpush.bf16.msra.mxu0 %v3735
    %6963 = vmatpush.bf16.msra.mxu0 %v3721
    %6964 = vmatmul.bf16.gmra.mxu0 %v1004
    %v6965 = vpop.f32.mrf.mxu0
    %v6966 = vadd.f32 %v965, %v6965
    %v6967 = vpop.f32.mrf.mxu0
    %v6968 = vadd.f32 %v965, %v6967
    %6969 = vdwg.mxu0
    %6970 = vmatpush.bf16.msra.mxu0 %v3931
    %6971 = vmatpush.bf16.msra.mxu0 %v3917
    %6972 = vmatpush.bf16.msra.mxu0 %v3903
    %6973 = vmatpush.bf16.msra.mxu0 %v3889
    %6974 = vmatpush.bf16.msra.mxu0 %v3875
    %6975 = vmatpush.bf16.msra.mxu0 %v3861
    %6976 = vmatpush.bf16.msra.mxu0 %v3847
    %6977 = vmatpush.bf16.msra.mxu0 %v3833
    %6978 = vmatmul.bf16.gmra.mxu0 %v1005
    %v6979 = vpop.f32.mrf.mxu0
    %v6980 = vadd.f32 %v6966, %v6979
    %v6981 = vpop.f32.mrf.mxu0
    %v6982 = vadd.f32 %v6968, %v6981
    %6983 = vdwg.mxu0
    %6984 = vmatpush.bf16.msra.mxu0 %v4043
    %6985 = vmatpush.bf16.msra.mxu0 %v4029
    %6986 = vmatpush.bf16.msra.mxu0 %v4015
    %6987 = vmatpush.bf16.msra.mxu0 %v4001
    %6988 = vmatpush.bf16.msra.mxu0 %v3987
    %6989 = vmatpush.bf16.msra.mxu0 %v3973
    %6990 = vmatpush.bf16.msra.mxu0 %v3959
    %6991 = vmatpush.bf16.msra.mxu0 %v3945
    %6992 = vmatmul.bf16.gmra.mxu0 %v1006
    %v6993 = vpop.f32.mrf.mxu0
    %v6994 = vadd.f32 %v6980, %v6993
    %v6995 = vpop.f32.mrf.mxu0
    %v6996 = vadd.f32 %v6982, %v6995
    %6997 = vdwg.mxu0
    %6998 = vmatpush.bf16.msra.mxu0 %v4155
    %6999 = vmatpush.bf16.msra.mxu0 %v4141
    %7000 = vmatpush.bf16.msra.mxu0 %v4127
    %7001 = vmatpush.bf16.msra.mxu0 %v4113
    %7002 = vmatpush.bf16.msra.mxu0 %v4099
    %7003 = vmatpush.bf16.msra.mxu0 %v4085
    %7004 = vmatpush.bf16.msra.mxu0 %v4071
    %7005 = vmatpush.bf16.msra.mxu0 %v4057
    %7006 = vmatmul.bf16.gmra.mxu0 %v1007
    %v7007 = vpop.f32.mrf.mxu0
    %v7008 = vadd.f32 %v6994, %v7007
    %v7009 = vpop.f32.mrf.mxu0
    %v7010 = vadd.f32 %v6996, %v7009
    %7011 = vdwg.mxu0
    %7012 = vmatpush.bf16.msra.mxu0 %v4267
    %7013 = vmatpush.bf16.msra.mxu0 %v4253
    %7014 = vmatpush.bf16.msra.mxu0 %v4239
    %7015 = vmatpush.bf16.msra.mxu0 %v4225
    %7016 = vmatpush.bf16.msra.mxu0 %v4211
    %7017 = vmatpush.bf16.msra.mxu0 %v4197
    %7018 = vmatpush.bf16.msra.mxu0 %v4183
    %7019 = vmatpush.bf16.msra.mxu0 %v4169
    %7020 = vmatmul.bf16.gmra.mxu0 %v1008
    %v7021 = vpop.f32.mrf.mxu0
    %v7022 = vadd.f32 %v7008, %v7021
    %v7023 = vpop.f32.mrf.mxu0
    %v7024 = vadd.f32 %v7010, %v7023
    %7025 = vdwg.mxu0
    %7026 = vmatpush.bf16.msra.mxu0 %v4379
    %7027 = vmatpush.bf16.msra.mxu0 %v4365
    %7028 = vmatpush.bf16.msra.mxu0 %v4351
    %7029 = vmatpush.bf16.msra.mxu0 %v4337
    %7030 = vmatpush.bf16.msra.mxu0 %v4323
    %7031 = vmatpush.bf16.msra.mxu0 %v4309
    %7032 = vmatpush.bf16.msra.mxu0 %v4295
    %7033 = vmatpush.bf16.msra.mxu0 %v4281
    %7034 = vmatmul.bf16.gmra.mxu0 %v1009
    %v7035 = vpop.f32.mrf.mxu0
    %v7036 = vadd.f32 %v7022, %v7035
    %v7037 = vpop.f32.mrf.mxu0
    %v7038 = vadd.f32 %v7024, %v7037
    %7039 = vdwg.mxu0
    %7040 = vmatpush.bf16.msra.mxu0 %v4491
    %7041 = vmatpush.bf16.msra.mxu0 %v4477
    %7042 = vmatpush.bf16.msra.mxu0 %v4463
    %7043 = vmatpush.bf16.msra.mxu0 %v4449
    %7044 = vmatpush.bf16.msra.mxu0 %v4435
    %7045 = vmatpush.bf16.msra.mxu0 %v4421
    %7046 = vmatpush.bf16.msra.mxu0 %v4407
    %7047 = vmatpush.bf16.msra.mxu0 %v4393
    %7048 = vmatmul.bf16.gmra.mxu0 %v1010
    %v7049 = vpop.f32.mrf.mxu0
    %v7050 = vadd.f32 %v7036, %v7049
    %v7051 = vpop.f32.mrf.mxu0
    %v7052 = vadd.f32 %v7038, %v7051
    %7053 = vdwg.mxu0
    %7054 = vmatpush.bf16.msra.mxu0 %v4603
    %7055 = vmatpush.bf16.msra.mxu0 %v4589
    %7056 = vmatpush.bf16.msra.mxu0 %v4575
    %7057 = vmatpush.bf16.msra.mxu0 %v4561
    %7058 = vmatpush.bf16.msra.mxu0 %v4547
    %7059 = vmatpush.bf16.msra.mxu0 %v4533
    %7060 = vmatpush.bf16.msra.mxu0 %v4519
    %7061 = vmatpush.bf16.msra.mxu0 %v4505
    %7062 = vmatmul.bf16.gmra.mxu0 %v1011
    %v7063 = vpop.f32.mrf.mxu0
    %v7064 = vadd.f32 %v7050, %v7063
    %v7065 = vpop.f32.mrf.mxu0
    %v7066 = vadd.f32 %v7052, %v7065
    %7067 = vdwg.mxu0
    %v7068 = vtanh.pop %v5608
    %v7069 = vtanh.pop %v5720
    %v7070 = vtanh.pop %v5832
    %v7071 = vtanh.pop %v5944
    %v7072 = vtanh.pop %v6056
    %v7073 = vtanh.pop %v6168
    %v7074 = vtanh.pop %v6280
    %v7075 = vtanh.pop %v6392
    %v7076 = vtanh.pop %v6504
    %v7077 = vtanh.pop %v6616
    %v7078 = vtanh.pop %v6728
    %v7079 = vtanh.pop %v6840
    %v7080 = vtanh.pop %v6952
    %v7081 = vtanh.pop %v7064
    %v7082 = vtanh.pop %v5610
    %v7083 = vtanh.pop %v5722
    %v7084 = vtanh.pop %v5834
    %v7085 = vtanh.pop %v5946
    %v7086 = vtanh.pop %v6058
    %v7087 = vtanh.pop %v6170
    %v7088 = vtanh.pop %v6282
    %v7089 = vtanh.pop %v6394
    %v7090 = vtanh.pop %v6506
    %v7091 = vtanh.pop %v6618
    %v7092 = vtanh.pop %v6730
    %v7093 = vtanh.pop %v6842
    %v7094 = vtanh.pop %v6954
    %v7095 = vtanh.pop %v7066
    %7096 = vst [vmem:[%s3] sm:$0xff] %v7068
    %7097 = vst [vmem:[%s3 + $0x8] sm:$0xff] %v7069
    %7098 = vst [vmem:[%s3 + $0x10] sm:$0xff] %v7070
    %7099 = vst [vmem:[%s3 + $0x18] sm:$0xff] %v7071
    %7100 = vst [vmem:[%s3 + $0x20] sm:$0xff] %v7072
    %7101 = vst [vmem:[%s3 + $0x28] sm:$0xff] %v7073
    %7102 = vst [vmem:[%s3 + $0x30] sm:$0xff] %v7074
    %7103 = vst [vmem:[%s3 + $0x38] sm:$0xff] %v7075
    %7104 = vst [vmem:[%s3 + $0x40] sm:$0xff] %v7076
    %7105 = vst [vmem:[%s3 + $0x48] sm:$0xff] %v7077
    %7106 = vst [vmem:[%s3 + $0x50] sm:$0xff] %v7078
    %7107 = vst [vmem:[%s3 + $0x58] sm:$0xff] %v7079
    %7108 = vst [vmem:[%s3 + $0x60] sm:$0xff] %v7080
    %7109 = vst [vmem:[%s3 + $0x68] sm:$0xff] %v7081
    %7110 = vst [vmem:[%s3 + $0x70] sm:$0xff] %v7082
    %7111 = vst [vmem:[%s3 + $0x78] sm:$0xff] %v7083
    %7112 = vst [vmem:[%s3 + $0x80] sm:$0xff] %v7084
    %7113 = vst [vmem:[%s3 + $0x88] sm:$0xff] %v7085
    %7114 = vst [vmem:[%s3 + $0x90] sm:$0xff] %v7086
    %7115 = vst [vmem:[%s3 + $0x98] sm:$0xff] %v7087
    %7116 = vst [vmem:[%s3 + $0xa0] sm:$0xff] %v7088
    %7117 = vst [vmem:[%s3 + $0xa8] sm:$0xff] %v7089
    %7118 = vst [vmem:[%s3 + $0xb0] sm:$0xff] %v7090
    %7119 = vst [vmem:[%s3 + $0xb8] sm:$0xff] %v7091
    %7120 = vst [vmem:[%s3 + $0xc0] sm:$0xff] %v7092
    %7121 = vst [vmem:[%s3 + $0xc8] sm:$0xff] %v7093
    %7122 = vst [vmem:[%s3 + $0xd0] sm:$0xff] %v7094
    %7123 = vst [vmem:[%s3 + $0xd8] sm:$0xff] %v7095
    // Predicated region
    $region22: #{generator_forward.3} parent=1 // pred_check
      _
    $region23: #{generator_forward.3} parent=1 // pred_check_branch
      %7125 = sbr.rel (0) target = $region25
    $region24: #{generator_forward.3} parent=1 // pred_region
      _
    $region25: #{generator_forward.3} parent=1 // pred_fallthru
      _
    // Predicated region
    $region26: #{generator_forward.3} parent=1 // pred_check
      _
    $region27: #{generator_forward.3} parent=1 // pred_check_branch
      %7127 = sbr.rel (0) target = $region29
    $region28: #{generator_forward.3} parent=1 // pred_region
      _
    $region29: #{generator_forward.3} parent=1 // pred_fallthru
      _
    %7128 = vsyncpa [#allocation3], 1
    %7129 = vsyncpa [#allocation5], 1

</llo_original>
